<compile_context>
chip_gen: v7x
topology: tpu7x:2x2x1
jax: 0.10.0
libtpu: 0.0.40
codegen_flags: <defaults>
</compile_context>

<pallas_src>
import functools

import jax
import jax.numpy as jnp
from jax import lax
from jax.experimental import pallas as pl
from jax.experimental.pallas import tpu as pltpu


def _round_up(x, m):
    return ((x + m - 1) // m) * m


# ----------------------------------------------------------------------------
# Fused whole-model kernel (grid-less; both branches packed block-diagonally)
# ----------------------------------------------------------------------------
def _fused_kernel(x_ref, w0_ref, wc_ref, cb_ref, cs_ref, csh_ref,
                  wih1_ref, b1_ref, whh1_ref, w2_ref, b2_ref,
                  hw_ref, hb_ref, fcw_ref, fcb_ref,
                  o_ref, gx_ref, *, t_steps):
    """Whole CNN_LSTM_CROSS forward.

    Row layout of x / conv activations / gx:  row = l * Bp + b  (time-major,
    batch minor, Bp = batch rounded up to 8 => every dynamic slice inside the
    recurrence is 8-sublane aligned).

    Lane layout: [0,H) = time branch, [H,2H) = tf branch, [2H,HW) zero pad.
    LSTM gate blocks are GW(=128)-lane aligned, PyTorch gate order i,f,g,o.

    Shapes:
      x_ref:    (Lp*Bp, Cin0p)       packed layer-0 input
      w0_ref:   (K, Cin0p, HW)       layer-0 conv taps (block-diag, transposed)
      wc_ref:   ((n_conv-1)*K, HW, HW) conv taps for layers 1..n_conv-1
      cb/cs/csh:(n_conv, 1, HW)      conv bias / BN scale / BN shift
      wih1_ref: (HW, 4*GW)           LSTM-1 input weights  (gate-fused)
      b1_ref:   (1, 4*GW)            LSTM-1 bias (b_ih + b_hh)
      whh1_ref: (HW, 4*GW)           LSTM-1 hidden weights
      w2_ref:   (2*HW, 4*GW)         LSTM-2 [W_ih; W_hh]
      b2_ref:   (1, 4*GW)            LSTM-2 bias
      hw_ref:   (HW, NC)             packed fct/fctf head weight
      hb_ref:   (1, NC)              bt + btf
      fcw/fcb:  (NC, NC) / (1, NC)   final fc
      o_ref:    (Bp, NC)             output logits (rows >= B are garbage)
      gx_ref:   (Lp*Bp, 4*GW)        VMEM scratch for hoisted LSTM-1 projection
    """
    Bp = o_ref.shape[0]
    K = w0_ref.shape[0]
    n_conv = cb_ref.shape[0]
    HW = whh1_ref.shape[0]
    GW = whh1_ref.shape[1] // 4

    # -------- conv stack: one batched MXU matmul per tap (no per-batch loops)
    def conv_layer(xf, taps, bias, scale, shift):
        acc = jnp.dot(xf, taps[0], preferred_element_type=jnp.float32)
        for k in range(1, K):
            # row l*Bp+b of the rolled array is row (l+k)*Bp+b of xf; wrapped
            # tail rows only land past the valid length, never read downstream.
            xk = jnp.roll(xf, -k * Bp, axis=0)
            acc = acc + jnp.dot(xk, taps[k], preferred_element_type=jnp.float32)
        # Conv -> ReLU -> BatchNorm (folded inference affine)
        return jnp.maximum(acc + bias, 0.0) * scale + shift

    feat = conv_layer(x_ref[...], [w0_ref[k] for k in range(K)],
                      cb_ref[0], cs_ref[0], csh_ref[0])
    for li in range(1, n_conv):
        feat = conv_layer(feat, [wc_ref[(li - 1) * K + k] for k in range(K)],
                          cb_ref[li], cs_ref[li], csh_ref[li])

    # -------- LSTM layer-1 input projection, hoisted off the recurrence
    gx_ref[...] = jnp.dot(feat, wih1_ref[...],
                          preferred_element_type=jnp.float32) + b1_ref[...]

    # -------- interleaved 2-layer LSTM recurrence (gate-fused, fully batched)
    def one_step(t, carry):
        h1, c1, h2, c2 = carry
        row = pl.multiple_of(t * Bp, Bp)
        gx_t = gx_ref[pl.ds(row, Bp), :]                          # (Bp, 4*GW)
        # layer 1: single fused-gate matmul on the critical path
        z1 = gx_t + jnp.dot(h1, whh1_ref[...],
                            preferred_element_type=jnp.float32)
        i1 = jax.nn.sigmoid(z1[:, 0 * GW:1 * GW])
        f1 = jax.nn.sigmoid(z1[:, 1 * GW:2 * GW])
        g1 = jnp.tanh(z1[:, 2 * GW:3 * GW])
        o1 = jax.nn.sigmoid(z1[:, 3 * GW:4 * GW])
        c1 = f1 * c1 + i1 * g1
        h1 = o1 * jnp.tanh(c1)
        # layer 2 (interleaved): one [x_t, h] @ [W_ih; W_hh] matmul
        z2 = jnp.dot(jnp.concatenate([h1, h2], axis=1), w2_ref[...],
                     preferred_element_type=jnp.float32) + b2_ref[...]
        i2 = jax.nn.sigmoid(z2[:, 0 * GW:1 * GW])
        f2 = jax.nn.sigmoid(z2[:, 1 * GW:2 * GW])
        g2 = jnp.tanh(z2[:, 2 * GW:3 * GW])
        o2 = jax.nn.sigmoid(z2[:, 3 * GW:4 * GW])
        c2 = f2 * c2 + i2 * g2
        h2 = o2 * jnp.tanh(c2)
        return h1, c1, h2, c2

    # Manual unroll factor (divides t_steps) so the scheduler can overlap
    # layer-2 of step t with layer-1 of step t+1 inside one basic block.
    u = 4 if t_steps % 4 == 0 else (2 if t_steps % 2 == 0 else 1)

    def body(i, carry):
        for j in range(u):                                        # static unroll
            carry = one_step(i * u + j, carry)
        return carry

    zeros = jnp.zeros((Bp, HW), jnp.float32)
    _, _, h2, _ = lax.fori_loop(0, t_steps // u, body,
                                (zeros, zeros, zeros, zeros))

    # -------- fused heads: relu(fct(h_t) + fctf(h_tf)) @ fc  (batched)
    z = jnp.maximum(
        jnp.dot(h2, hw_ref[...], preferred_element_type=jnp.float32)
        + hb_ref[...], 0.0)
    o_ref[...] = jnp.dot(z, fcw_ref[...],
                         preferred_element_type=jnp.float32) + fcb_ref[...]


# ----------------------------------------------------------------------------
# One-time parameter packing (block-diagonal branches, gate-fused LSTM weights)
# ----------------------------------------------------------------------------
def prepare_params(params):
    dwt, dwtf = params["dwt"], params["dwtf"]
    F = dwt[0]["w"].shape[0]
    assert dwtf[0]["w"].shape[0] == F, "branches must share number_filters"
    C_t = dwt[0]["w"].shape[1]
    Freq = dwtf[0]["w"].shape[1]
    K = dwt[0]["w"].shape[2]
    n_conv = len(dwt)
    H = F
    HW = max(128, _round_up(2 * H, 128))      # packed channel / hidden width
    GW = HW                                   # per-gate block width (aligned)
    Cin0p = _round_up(C_t + Freq, 8)          # true layer-0 Cin, sublane padded

    # conv layer 0 (true input channels; time rows [0,C_t), tf rows [C_t,..))
    w0 = jnp.zeros((K, Cin0p, HW), jnp.float32)
    for k in range(K):
        w0 = w0.at[k, 0:C_t, 0:F].set(dwt[0]["w"][:, :, k].T)
        w0 = w0.at[k, C_t:C_t + Freq, F:2 * F].set(dwtf[0]["w"][:, :, k].T)

    # conv layers 1..n_conv-1, block-diagonal (time | tf)
    wc = jnp.zeros(((n_conv - 1) * K, HW, HW), jnp.float32)
    for li in range(1, n_conv):
        for k in range(K):
            idx = (li - 1) * K + k
            wc = wc.at[idx, 0:F, 0:F].set(dwt[li]["w"][:, :, k].T)
            wc = wc.at[idx, F:2 * F, F:2 * F].set(dwtf[li]["w"][:, :, k].T)

    cb = jnp.zeros((n_conv, 1, HW), jnp.float32)
    cs = jnp.zeros((n_conv, 1, HW), jnp.float32)
    csh = jnp.zeros((n_conv, 1, HW), jnp.float32)
    for li in range(n_conv):
        cb = cb.at[li, 0, 0:F].set(dwt[li]["b"])
        cb = cb.at[li, 0, F:2 * F].set(dwtf[li]["b"])
        cs = cs.at[li, 0, 0:F].set(dwt[li]["scale"])
        cs = cs.at[li, 0, F:2 * F].set(dwtf[li]["scale"])
        csh = csh.at[li, 0, 0:F].set(dwt[li]["shift"])
        csh = csh.at[li, 0, F:2 * F].set(dwtf[li]["shift"])

    def pack_lstm(pt, pf):
        w_ih_t, w_hh_t, b_ih_t, b_hh_t = pt
        w_ih_f, w_hh_f, b_ih_f, b_hh_f = pf
        assert w_ih_t.shape[1] == H and w_ih_f.shape[1] == H
        wih = jnp.zeros((HW, 4 * GW), jnp.float32)
        whh = jnp.zeros((HW, 4 * GW), jnp.float32)
        b = jnp.zeros((1, 4 * GW), jnp.float32)
        for g in range(4):                                 # PyTorch order i,f,g,o
            rsl = slice(g * H, (g + 1) * H)
            wih = wih.at[0:H, g * GW:g * GW + H].set(w_ih_t[rsl, :].T)
            wih = wih.at[H:2 * H, g * GW + H:g * GW + 2 * H].set(w_ih_f[rsl, :].T)
            whh = whh.at[0:H, g * GW:g * GW + H].set(w_hh_t[rsl, :].T)
            whh = whh.at[H:2 * H, g * GW + H:g * GW + 2 * H].set(w_hh_f[rsl, :].T)
            b = b.at[0, g * GW:g * GW + H].set((b_ih_t + b_hh_t)[rsl])
            b = b.at[0, g * GW + H:g * GW + 2 * H].set((b_ih_f + b_hh_f)[rsl])
        return wih, whh, b

    wih1, whh1, b1 = pack_lstm(params["lstm_t1"], params["lstm_tf1"])
    wih2, whh2, b2 = pack_lstm(params["lstm_t2"], params["lstm_tf2"])
    w2 = jnp.concatenate([wih2, whh2], axis=0)             # (2*HW, 4*GW)

    (wt, bt), (wtf, btf), (wfc, bfc) = params["fct"], params["fctf"], params["fc"]
    nc = wt.shape[0]
    hw = jnp.zeros((HW, nc), jnp.float32)
    hw = hw.at[0:H, :].set(wt.T)
    hw = hw.at[H:2 * H, :].set(wtf.T)
    hb = (bt + btf).reshape(1, nc)

    return dict(w0=w0, wc=wc, cb=cb, cs=cs, csh=csh,
                wih1=wih1, b1=b1, whh1=whh1, w2=w2, b2=b2,
                hw=hw, hb=hb, fcw=wfc.T, fcb=bfc.reshape(1, nc))


# ----------------------------------------------------------------------------
# Forward wrapper
# ----------------------------------------------------------------------------
def forward(prep, x_t, x_tf):
    """x_t: (B, L, C_t);  x_tf: (B, 1, Freq, L).  Returns (B, n_class)."""
    B, L, C_t = x_t.shape
    Freq = x_tf.shape[2]
    assert x_tf.shape[3] == L, "both branches must share the sequence length"
    K = prep["w0"].shape[0]
    Cin0p = prep["w0"].shape[1]
    assert C_t + Freq <= Cin0p
    GW = prep["whh1"].shape[1] // 4
    n_conv = prep["cb"].shape[0]
    nc = prep["hw"].shape[1]
    Bp = _round_up(max(B, 1), 8)
    Lp = _round_up(L, 8)
    T = L - n_conv * (K - 1)
    assert T >= 1, "sequence too short for the conv stack"

    # Pack both branch inputs into one time-major (Lp, Bp, Cin0p) block:
    # lanes [0,C_t) = time channels, [C_t,C_t+Freq) = tf frequency bins.
    xt = jnp.transpose(x_t, (1, 0, 2))                    # (L, B, C_t)
    xf = jnp.transpose(x_tf[:, 0, :, :], (2, 0, 1))       # (L, B, Freq)
    x = jnp.zeros((Lp, Bp, Cin0p), jnp.float32)
    x = x.at[:L, :B, :C_t].set(xt)
    x = x.at[:L, :B, C_t:C_t + Freq].set(xf)
    x = x.reshape(Lp * Bp, Cin0p)

    kernel = functools.partial(_fused_kernel, t_steps=T)
    operands = (x, prep["w0"], prep["wc"], prep["cb"], prep["cs"], prep["csh"],
                prep["wih1"], prep["b1"], prep["whh1"], prep["w2"], prep["b2"],
                prep["hw"], prep["hb"], prep["fcw"], prep["fcb"])
    vmem_spec = pl.BlockSpec(memory_space=pltpu.MemorySpace.VMEM)
    out = pl.pallas_call(
        kernel,
        out_shape=jax.ShapeDtypeStruct((Bp, nc), jnp.float32),
        in_specs=[vmem_spec] * len(operands),
        out_specs=vmem_spec,
        scratch_shapes=[pltpu.VMEM((Lp * Bp, 4 * GW), jnp.float32)],
    )(*operands)
    return out[:B]


# ----------------------------------------------------------------------------
# Pure-JAX reference (for correctness check)
# ----------------------------------------------------------------------------
def _ref_conv_relu_bn(x, w, b, scale, shift):
    B, C, L = x.shape
    F_, _, K = w.shape
    Lout = L - K + 1
    out = jnp.zeros((B, F_, Lout), jnp.float32)
    for k in range(K):
        out = out + jnp.einsum("fc,bcl->bfl", w[:, :, k], x[:, :, k:k + Lout])
    out = jnp.maximum(out + b[None, :, None], 0.0)
    return out * scale[None, :, None] + shift[None, :, None]


def _ref_lstm(x, w_ih, w_hh, b_ih, b_hh):
    B, T, Hin = x.shape
    H = w_hh.shape[1]

    def step(carry, xt):
        h, c = carry
        gates = xt @ w_ih.T + h @ w_hh.T + b_ih + b_hh
        i, f, g, o = jnp.split(gates, 4, axis=-1)
        c = jax.nn.sigmoid(f) * c + jax.nn.sigmoid(i) * jnp.tanh(g)
        h = jax.nn.sigmoid(o) * jnp.tanh(c)
        return (h, c), h

    init = (jnp.zeros((B, H), jnp.float32), jnp.zeros((B, H), jnp.float32))
    _, hs = lax.scan(step, init, jnp.transpose(x, (1, 0, 2)))
    return jnp.transpose(hs, (1, 0, 2))


def ref_forward(params, x_t, x_tf):
    h = jnp.transpose(x_t, (0, 2, 1))
    for p in params["dwt"]:
        h = _ref_conv_relu_bn(h, p["w"], p["b"], p["scale"], p["shift"])
    h = jnp.transpose(h, (0, 2, 1))
    h = _ref_lstm(h, *params["lstm_t1"])
    h = _ref_lstm(h, *params["lstm_t2"])
    h_t = h[:, -1, :]
    g = x_tf[:, 0, :, :]
    for p in params["dwtf"]:
        g = _ref_conv_relu_bn(g, p["w"], p["b"], p["scale"], p["shift"])
    g = jnp.transpose(g, (0, 2, 1))
    g = _ref_lstm(g, *params["lstm_tf1"])
    g = _ref_lstm(g, *params["lstm_tf2"])
    h_tf = g[:, -1, :]
    wt, bt = params["fct"]
    wtf, btf = params["fctf"]
    wfc, bfc = params["fc"]
    z = jnp.maximum(h_t @ wt.T + bt + h_tf @ wtf.T + btf, 0.0)
    return z @ wfc.T + bfc


# ----------------------------------------------------------------------------
# Deterministic parameter init (matches module __init__ shapes)
# ----------------------------------------------------------------------------
def _init_conv_block(key, cin, cout, k=5, eps=1e-5):
    k1, k2, k3, k4, k5, k6 = jax.random.split(key, 6)
    w = 0.1 * jax.random.normal(k1, (cout, cin, k), jnp.float32)
    b = 0.1 * jax.random.normal(k2, (cout,), jnp.float32)
    gamma = 1.0 + 0.1 * jax.random.normal(k3, (cout,), jnp.float32)
    beta = 0.1 * jax.random.normal(k4, (cout,), jnp.float32)
    mean = 0.1 * jax.random.normal(k5, (cout,), jnp.float32)
    var = 1.0 + 0.5 * jax.random.uniform(k6, (cout,), jnp.float32)
    scale = gamma / jnp.sqrt(var + eps)
    shift = beta - mean * scale
    return dict(w=w, b=b, scale=scale, shift=shift)


def _init_lstm(key, hin, h):
    k1, k2, k3, k4 = jax.random.split(key, 4)
    s = 0.1
    return (s * jax.random.normal(k1, (4 * h, hin), jnp.float32),
            s * jax.random.normal(k2, (4 * h, h), jnp.float32),
            s * jax.random.normal(k3, (4 * h,), jnp.float32),
            s * jax.random.normal(k4, (4 * h,), jnp.float32))


def _init_linear(key, fin, fout):
    k1, k2 = jax.random.split(key)
    return (0.1 * jax.random.normal(k1, (fout, fin), jnp.float32),
            0.1 * jax.random.normal(k2, (fout,), jnp.float32))


def init_params(key, c_t, freq_tf, nf_t, nf_tf, n_class):
    keys = jax.random.split(key, 16)
    dwt = [_init_conv_block(keys[0], c_t, nf_t)] + \
          [_init_conv_block(keys[i], nf_t, nf_t) for i in (1, 2, 3)]
    dwtf = [_init_conv_block(keys[4], freq_tf, nf_tf)] + \
           [_init_conv_block(keys[i], nf_tf, nf_tf) for i in (5, 6, 7)]
    return dict(
        dwt=dwt, dwtf=dwtf,
        lstm_t1=_init_lstm(keys[8], nf_t, nf_t),
        lstm_t2=_init_lstm(keys[9], nf_t, nf_t),
        lstm_tf1=_init_lstm(keys[10], nf_tf, nf_tf),
        lstm_tf2=_init_lstm(keys[11], nf_tf, nf_tf),
        fct=_init_linear(keys[12], nf_t, n_class),
        fctf=_init_linear(keys[13], nf_tf, n_class),
        fc=_init_linear(keys[14], n_class, n_class),
    )


# ----------------------------------------------------------------------------
if __name__ == "__main__":
    B = 2
    C_T = 4          # input_shape_t[1]  (time-branch channels)
    L = 32           # shared sequence length
    FREQ = 8         # input_shape_tf[1] (freq bins = tf-branch conv channels)
    NF = 48          # number_filters_t = number_filters_tf
    NCLASS = 6

    root = jax.random.PRNGKey(0)
    kp, kx1, kx2 = jax.random.split(root, 3)
    params = init_params(kp, C_T, FREQ, NF, NF, NCLASS)
    prep = prepare_params(params)                 # one-time param packing

    x_t = jax.random.normal(kx1, (B, L, C_T), jnp.float32)        # (B, L, C)
    x_tf = jax.random.normal(kx2, (B, 1, FREQ, L), jnp.float32)   # (B, 1, F, L)

    fwd = jax.jit(forward)
    out = jax.block_until_ready(fwd(prep, x_t, x_tf))

    ref = ref_forward(params, x_t, x_tf)
    assert out.shape == (B, NCLASS)
    err = jnp.max(jnp.abs(out - ref))
    assert jnp.allclose(out, ref, rtol=1e-3, atol=1e-3), f"max diff {err}"

    print("KERNEL_OK")
</pallas_src>

<mosaic_0001>
module attributes {stable_mosaic.version = 11 : i64} {
  func.func @_fused_kernel(%arg0: memref<256x16xf32, #tpu.memory_space<vmem>>, %arg1: memref<5x16x128xf32, #tpu.memory_space<vmem>>, %arg2: memref<15x128x128xf32, #tpu.memory_space<vmem>>, %arg3: memref<4x1x128xf32, #tpu.memory_space<vmem>>, %arg4: memref<4x1x128xf32, #tpu.memory_space<vmem>>, %arg5: memref<4x1x128xf32, #tpu.memory_space<vmem>>, %arg6: memref<128x512xf32, #tpu.memory_space<vmem>>, %arg7: memref<1x512xf32, #tpu.memory_space<vmem>>, %arg8: memref<128x512xf32, #tpu.memory_space<vmem>>, %arg9: memref<256x512xf32, #tpu.memory_space<vmem>>, %arg10: memref<1x512xf32, #tpu.memory_space<vmem>>, %arg11: memref<128x6xf32, #tpu.memory_space<vmem>>, %arg12: memref<1x6xf32, #tpu.memory_space<vmem>>, %arg13: memref<6x6xf32, #tpu.memory_space<vmem>>, %arg14: memref<1x6xf32, #tpu.memory_space<vmem>>, %arg15: memref<8x6xf32, #tpu.memory_space<vmem>>, %arg16: memref<256x512xf32, #tpu.memory_space<vmem>>) attributes {dimension_semantics = [], scalar_prefetch = 0 : i64, scratch_operands = 1 : i64, tpu.core_type = #tpu.core_type<tc>} {
    %c0 = arith.constant 0 : index
    %c0_0 = arith.constant 0 : index
    %0 = vector.load %arg0[%c0, %c0_0] : memref<256x16xf32, #tpu.memory_space<vmem>>, vector<256x16xf32>
    %c0_1 = arith.constant 0 : index
    %c0_2 = arith.constant 0 : index
    %c0_3 = arith.constant 0 : index
    %1 = vector.load %arg1[%c0_1, %c0_2, %c0_3] : memref<5x16x128xf32, #tpu.memory_space<vmem>>, vector<1x16x128xf32>
    %2 = vector.shape_cast %1 : vector<1x16x128xf32> to vector<16x128xf32>
    %c1 = arith.constant 1 : index
    %c0_4 = arith.constant 0 : index
    %c0_5 = arith.constant 0 : index
    %3 = vector.load %arg1[%c1, %c0_4, %c0_5] : memref<5x16x128xf32, #tpu.memory_space<vmem>>, vector<1x16x128xf32>
    %4 = vector.shape_cast %3 : vector<1x16x128xf32> to vector<16x128xf32>
    %c2 = arith.constant 2 : index
    %c0_6 = arith.constant 0 : index
    %c0_7 = arith.constant 0 : index
    %5 = vector.load %arg1[%c2, %c0_6, %c0_7] : memref<5x16x128xf32, #tpu.memory_space<vmem>>, vector<1x16x128xf32>
    %6 = vector.shape_cast %5 : vector<1x16x128xf32> to vector<16x128xf32>
    %c3 = arith.constant 3 : index
    %c0_8 = arith.constant 0 : index
    %c0_9 = arith.constant 0 : index
    %7 = vector.load %arg1[%c3, %c0_8, %c0_9] : memref<5x16x128xf32, #tpu.memory_space<vmem>>, vector<1x16x128xf32>
    %8 = vector.shape_cast %7 : vector<1x16x128xf32> to vector<16x128xf32>
    %c4 = arith.constant 4 : index
    %c0_10 = arith.constant 0 : index
    %c0_11 = arith.constant 0 : index
    %9 = vector.load %arg1[%c4, %c0_10, %c0_11] : memref<5x16x128xf32, #tpu.memory_space<vmem>>, vector<1x16x128xf32>
    %10 = vector.shape_cast %9 : vector<1x16x128xf32> to vector<16x128xf32>
    %c0_12 = arith.constant 0 : index
    %c0_13 = arith.constant 0 : index
    %c0_14 = arith.constant 0 : index
    %11 = vector.load %arg3[%c0_12, %c0_13, %c0_14] : memref<4x1x128xf32, #tpu.memory_space<vmem>>, vector<1x1x128xf32>
    %12 = vector.shape_cast %11 : vector<1x1x128xf32> to vector<1x128xf32>
    %c0_15 = arith.constant 0 : index
    %c0_16 = arith.constant 0 : index
    %c0_17 = arith.constant 0 : index
    %13 = vector.load %arg4[%c0_15, %c0_16, %c0_17] : memref<4x1x128xf32, #tpu.memory_space<vmem>>, vector<1x1x128xf32>
    %14 = vector.shape_cast %13 : vector<1x1x128xf32> to vector<1x128xf32>
    %c0_18 = arith.constant 0 : index
    %c0_19 = arith.constant 0 : index
    %c0_20 = arith.constant 0 : index
    %15 = vector.load %arg5[%c0_18, %c0_19, %c0_20] : memref<4x1x128xf32, #tpu.memory_space<vmem>>, vector<1x1x128xf32>
    %16 = vector.shape_cast %15 : vector<1x1x128xf32> to vector<1x128xf32>
    %cst = arith.constant dense<0.000000e+00> : vector<256x128xf32>
    %17 = tpu.matmul %0, %2, %cst {dimension_numbers = #tpu.dot_dimension_numbers<[1], [0], [0], [1], [0, 0, 1, 1], [], []>} : vector<256x16xf32>, vector<16x128xf32>, vector<256x128xf32> -> vector<256x128xf32>
    %18 = vector.extract_strided_slice %0 {offsets = [8, 0], sizes = [248, 16], strides = [1, 1]} : vector<256x16xf32> to vector<248x16xf32>
    %19 = vector.extract_strided_slice %0 {offsets = [0, 0], sizes = [8, 16], strides = [1, 1]} : vector<256x16xf32> to vector<8x16xf32>
    %20 = tpu.concatenate %18, %19 in 0 : vector<248x16xf32>, vector<8x16xf32> -> vector<256x16xf32>
    %cst_21 = arith.constant dense<0.000000e+00> : vector<256x128xf32>
    %21 = tpu.matmul %20, %4, %cst_21 {dimension_numbers = #tpu.dot_dimension_numbers<[1], [0], [0], [1], [0, 0, 1, 1], [], []>} : vector<256x16xf32>, vector<16x128xf32>, vector<256x128xf32> -> vector<256x128xf32>
    %22 = arith.addf %17, %21 : vector<256x128xf32>
    %23 = vector.extract_strided_slice %0 {offsets = [16, 0], sizes = [240, 16], strides = [1, 1]} : vector<256x16xf32> to vector<240x16xf32>
    %24 = vector.extract_strided_slice %0 {offsets = [0, 0], sizes = [16, 16], strides = [1, 1]} : vector<256x16xf32> to vector<16x16xf32>
    %25 = tpu.concatenate %23, %24 in 0 : vector<240x16xf32>, vector<16x16xf32> -> vector<256x16xf32>
    %cst_22 = arith.constant dense<0.000000e+00> : vector<256x128xf32>
    %26 = tpu.matmul %25, %6, %cst_22 {dimension_numbers = #tpu.dot_dimension_numbers<[1], [0], [0], [1], [0, 0, 1, 1], [], []>} : vector<256x16xf32>, vector<16x128xf32>, vector<256x128xf32> -> vector<256x128xf32>
    %27 = arith.addf %22, %26 : vector<256x128xf32>
    %28 = vector.extract_strided_slice %0 {offsets = [24, 0], sizes = [232, 16], strides = [1, 1]} : vector<256x16xf32> to vector<232x16xf32>
    %29 = vector.extract_strided_slice %0 {offsets = [0, 0], sizes = [24, 16], strides = [1, 1]} : vector<256x16xf32> to vector<24x16xf32>
    %30 = tpu.concatenate %28, %29 in 0 : vector<232x16xf32>, vector<24x16xf32> -> vector<256x16xf32>
    %cst_23 = arith.constant dense<0.000000e+00> : vector<256x128xf32>
    %31 = tpu.matmul %30, %8, %cst_23 {dimension_numbers = #tpu.dot_dimension_numbers<[1], [0], [0], [1], [0, 0, 1, 1], [], []>} : vector<256x16xf32>, vector<16x128xf32>, vector<256x128xf32> -> vector<256x128xf32>
    %32 = arith.addf %27, %31 : vector<256x128xf32>
    %33 = vector.extract_strided_slice %0 {offsets = [32, 0], sizes = [224, 16], strides = [1, 1]} : vector<256x16xf32> to vector<224x16xf32>
    %34 = vector.extract_strided_slice %0 {offsets = [0, 0], sizes = [32, 16], strides = [1, 1]} : vector<256x16xf32> to vector<32x16xf32>
    %35 = tpu.concatenate %33, %34 in 0 : vector<224x16xf32>, vector<32x16xf32> -> vector<256x16xf32>
    %cst_24 = arith.constant dense<0.000000e+00> : vector<256x128xf32>
    %36 = tpu.matmul %35, %10, %cst_24 {dimension_numbers = #tpu.dot_dimension_numbers<[1], [0], [0], [1], [0, 0, 1, 1], [], []>} : vector<256x16xf32>, vector<16x128xf32>, vector<256x128xf32> -> vector<256x128xf32>
    %37 = arith.addf %32, %36 : vector<256x128xf32>
    %38 = vector.broadcast %12 : vector<1x128xf32> to vector<256x128xf32>
    %39 = arith.addf %37, %38 : vector<256x128xf32>
    %cst_25 = arith.constant 0.000000e+00 : f32
    %40 = vector.broadcast %cst_25 : f32 to vector<256x128xf32>
    %41 = arith.maximumf %39, %40 : vector<256x128xf32>
    %42 = vector.broadcast %14 : vector<1x128xf32> to vector<256x128xf32>
    %43 = arith.mulf %41, %42 : vector<256x128xf32>
    %44 = vector.broadcast %16 : vector<1x128xf32> to vector<256x128xf32>
    %45 = arith.addf %43, %44 : vector<256x128xf32>
    %c0_26 = arith.constant 0 : index
    %c0_27 = arith.constant 0 : index
    %c0_28 = arith.constant 0 : index
    %46 = vector.load %arg2[%c0_26, %c0_27, %c0_28] : memref<15x128x128xf32, #tpu.memory_space<vmem>>, vector<1x128x128xf32>
    %47 = vector.shape_cast %46 : vector<1x128x128xf32> to vector<128x128xf32>
    %c1_29 = arith.constant 1 : index
    %c0_30 = arith.constant 0 : index
    %c0_31 = arith.constant 0 : index
    %48 = vector.load %arg2[%c1_29, %c0_30, %c0_31] : memref<15x128x128xf32, #tpu.memory_space<vmem>>, vector<1x128x128xf32>
    %49 = vector.shape_cast %48 : vector<1x128x128xf32> to vector<128x128xf32>
    %c2_32 = arith.constant 2 : index
    %c0_33 = arith.constant 0 : index
    %c0_34 = arith.constant 0 : index
    %50 = vector.load %arg2[%c2_32, %c0_33, %c0_34] : memref<15x128x128xf32, #tpu.memory_space<vmem>>, vector<1x128x128xf32>
    %51 = vector.shape_cast %50 : vector<1x128x128xf32> to vector<128x128xf32>
    %c3_35 = arith.constant 3 : index
    %c0_36 = arith.constant 0 : index
    %c0_37 = arith.constant 0 : index
    %52 = vector.load %arg2[%c3_35, %c0_36, %c0_37] : memref<15x128x128xf32, #tpu.memory_space<vmem>>, vector<1x128x128xf32>
    %53 = vector.shape_cast %52 : vector<1x128x128xf32> to vector<128x128xf32>
    %c4_38 = arith.constant 4 : index
    %c0_39 = arith.constant 0 : index
    %c0_40 = arith.constant 0 : index
    %54 = vector.load %arg2[%c4_38, %c0_39, %c0_40] : memref<15x128x128xf32, #tpu.memory_space<vmem>>, vector<1x128x128xf32>
    %55 = vector.shape_cast %54 : vector<1x128x128xf32> to vector<128x128xf32>
    %c1_41 = arith.constant 1 : index
    %c0_42 = arith.constant 0 : index
    %c0_43 = arith.constant 0 : index
    %56 = vector.load %arg3[%c1_41, %c0_42, %c0_43] : memref<4x1x128xf32, #tpu.memory_space<vmem>>, vector<1x1x128xf32>
    %57 = vector.shape_cast %56 : vector<1x1x128xf32> to vector<1x128xf32>
    %c1_44 = arith.constant 1 : index
    %c0_45 = arith.constant 0 : index
    %c0_46 = arith.constant 0 : index
    %58 = vector.load %arg4[%c1_44, %c0_45, %c0_46] : memref<4x1x128xf32, #tpu.memory_space<vmem>>, vector<1x1x128xf32>
    %59 = vector.shape_cast %58 : vector<1x1x128xf32> to vector<1x128xf32>
    %c1_47 = arith.constant 1 : index
    %c0_48 = arith.constant 0 : index
    %c0_49 = arith.constant 0 : index
    %60 = vector.load %arg5[%c1_47, %c0_48, %c0_49] : memref<4x1x128xf32, #tpu.memory_space<vmem>>, vector<1x1x128xf32>
    %61 = vector.shape_cast %60 : vector<1x1x128xf32> to vector<1x128xf32>
    %cst_50 = arith.constant dense<0.000000e+00> : vector<256x128xf32>
    %62 = tpu.matmul %45, %47, %cst_50 {dimension_numbers = #tpu.dot_dimension_numbers<[1], [0], [0], [1], [0, 0, 1, 1], [], []>} : vector<256x128xf32>, vector<128x128xf32>, vector<256x128xf32> -> vector<256x128xf32>
    %63 = vector.extract_strided_slice %45 {offsets = [8, 0], sizes = [248, 128], strides = [1, 1]} : vector<256x128xf32> to vector<248x128xf32>
    %64 = vector.extract_strided_slice %45 {offsets = [0, 0], sizes = [8, 128], strides = [1, 1]} : vector<256x128xf32> to vector<8x128xf32>
    %65 = tpu.concatenate %63, %64 in 0 : vector<248x128xf32>, vector<8x128xf32> -> vector<256x128xf32>
    %cst_51 = arith.constant dense<0.000000e+00> : vector<256x128xf32>
    %66 = tpu.matmul %65, %49, %cst_51 {dimension_numbers = #tpu.dot_dimension_numbers<[1], [0], [0], [1], [0, 0, 1, 1], [], []>} : vector<256x128xf32>, vector<128x128xf32>, vector<256x128xf32> -> vector<256x128xf32>
    %67 = arith.addf %62, %66 : vector<256x128xf32>
    %68 = vector.extract_strided_slice %45 {offsets = [16, 0], sizes = [240, 128], strides = [1, 1]} : vector<256x128xf32> to vector<240x128xf32>
    %69 = vector.extract_strided_slice %45 {offsets = [0, 0], sizes = [16, 128], strides = [1, 1]} : vector<256x128xf32> to vector<16x128xf32>
    %70 = tpu.concatenate %68, %69 in 0 : vector<240x128xf32>, vector<16x128xf32> -> vector<256x128xf32>
    %cst_52 = arith.constant dense<0.000000e+00> : vector<256x128xf32>
    %71 = tpu.matmul %70, %51, %cst_52 {dimension_numbers = #tpu.dot_dimension_numbers<[1], [0], [0], [1], [0, 0, 1, 1], [], []>} : vector<256x128xf32>, vector<128x128xf32>, vector<256x128xf32> -> vector<256x128xf32>
    %72 = arith.addf %67, %71 : vector<256x128xf32>
    %73 = vector.extract_strided_slice %45 {offsets = [24, 0], sizes = [232, 128], strides = [1, 1]} : vector<256x128xf32> to vector<232x128xf32>
    %74 = vector.extract_strided_slice %45 {offsets = [0, 0], sizes = [24, 128], strides = [1, 1]} : vector<256x128xf32> to vector<24x128xf32>
    %75 = tpu.concatenate %73, %74 in 0 : vector<232x128xf32>, vector<24x128xf32> -> vector<256x128xf32>
    %cst_53 = arith.constant dense<0.000000e+00> : vector<256x128xf32>
    %76 = tpu.matmul %75, %53, %cst_53 {dimension_numbers = #tpu.dot_dimension_numbers<[1], [0], [0], [1], [0, 0, 1, 1], [], []>} : vector<256x128xf32>, vector<128x128xf32>, vector<256x128xf32> -> vector<256x128xf32>
    %77 = arith.addf %72, %76 : vector<256x128xf32>
    %78 = vector.extract_strided_slice %45 {offsets = [32, 0], sizes = [224, 128], strides = [1, 1]} : vector<256x128xf32> to vector<224x128xf32>
    %79 = vector.extract_strided_slice %45 {offsets = [0, 0], sizes = [32, 128], strides = [1, 1]} : vector<256x128xf32> to vector<32x128xf32>
    %80 = tpu.concatenate %78, %79 in 0 : vector<224x128xf32>, vector<32x128xf32> -> vector<256x128xf32>
    %cst_54 = arith.constant dense<0.000000e+00> : vector<256x128xf32>
    %81 = tpu.matmul %80, %55, %cst_54 {dimension_numbers = #tpu.dot_dimension_numbers<[1], [0], [0], [1], [0, 0, 1, 1], [], []>} : vector<256x128xf32>, vector<128x128xf32>, vector<256x128xf32> -> vector<256x128xf32>
    %82 = arith.addf %77, %81 : vector<256x128xf32>
    %83 = vector.broadcast %57 : vector<1x128xf32> to vector<256x128xf32>
    %84 = arith.addf %82, %83 : vector<256x128xf32>
    %cst_55 = arith.constant 0.000000e+00 : f32
    %85 = vector.broadcast %cst_55 : f32 to vector<256x128xf32>
    %86 = arith.maximumf %84, %85 : vector<256x128xf32>
    %87 = vector.broadcast %59 : vector<1x128xf32> to vector<256x128xf32>
    %88 = arith.mulf %86, %87 : vector<256x128xf32>
    %89 = vector.broadcast %61 : vector<1x128xf32> to vector<256x128xf32>
    %90 = arith.addf %88, %89 : vector<256x128xf32>
    %c5 = arith.constant 5 : index
    %c0_56 = arith.constant 0 : index
    %c0_57 = arith.constant 0 : index
    %91 = vector.load %arg2[%c5, %c0_56, %c0_57] : memref<15x128x128xf32, #tpu.memory_space<vmem>>, vector<1x128x128xf32>
    %92 = vector.shape_cast %91 : vector<1x128x128xf32> to vector<128x128xf32>
    %c6 = arith.constant 6 : index
    %c0_58 = arith.constant 0 : index
    %c0_59 = arith.constant 0 : index
    %93 = vector.load %arg2[%c6, %c0_58, %c0_59] : memref<15x128x128xf32, #tpu.memory_space<vmem>>, vector<1x128x128xf32>
    %94 = vector.shape_cast %93 : vector<1x128x128xf32> to vector<128x128xf32>
    %c7 = arith.constant 7 : index
    %c0_60 = arith.constant 0 : index
    %c0_61 = arith.constant 0 : index
    %95 = vector.load %arg2[%c7, %c0_60, %c0_61] : memref<15x128x128xf32, #tpu.memory_space<vmem>>, vector<1x128x128xf32>
    %96 = vector.shape_cast %95 : vector<1x128x128xf32> to vector<128x128xf32>
    %c8 = arith.constant 8 : index
    %c0_62 = arith.constant 0 : index
    %c0_63 = arith.constant 0 : index
    %97 = vector.load %arg2[%c8, %c0_62, %c0_63] : memref<15x128x128xf32, #tpu.memory_space<vmem>>, vector<1x128x128xf32>
    %98 = vector.shape_cast %97 : vector<1x128x128xf32> to vector<128x128xf32>
    %c9 = arith.constant 9 : index
    %c0_64 = arith.constant 0 : index
    %c0_65 = arith.constant 0 : index
    %99 = vector.load %arg2[%c9, %c0_64, %c0_65] : memref<15x128x128xf32, #tpu.memory_space<vmem>>, vector<1x128x128xf32>
    %100 = vector.shape_cast %99 : vector<1x128x128xf32> to vector<128x128xf32>
    %c2_66 = arith.constant 2 : index
    %c0_67 = arith.constant 0 : index
    %c0_68 = arith.constant 0 : index
    %101 = vector.load %arg3[%c2_66, %c0_67, %c0_68] : memref<4x1x128xf32, #tpu.memory_space<vmem>>, vector<1x1x128xf32>
    %102 = vector.shape_cast %101 : vector<1x1x128xf32> to vector<1x128xf32>
    %c2_69 = arith.constant 2 : index
    %c0_70 = arith.constant 0 : index
    %c0_71 = arith.constant 0 : index
    %103 = vector.load %arg4[%c2_69, %c0_70, %c0_71] : memref<4x1x128xf32, #tpu.memory_space<vmem>>, vector<1x1x128xf32>
    %104 = vector.shape_cast %103 : vector<1x1x128xf32> to vector<1x128xf32>
    %c2_72 = arith.constant 2 : index
    %c0_73 = arith.constant 0 : index
    %c0_74 = arith.constant 0 : index
    %105 = vector.load %arg5[%c2_72, %c0_73, %c0_74] : memref<4x1x128xf32, #tpu.memory_space<vmem>>, vector<1x1x128xf32>
    %106 = vector.shape_cast %105 : vector<1x1x128xf32> to vector<1x128xf32>
    %cst_75 = arith.constant dense<0.000000e+00> : vector<256x128xf32>
    %107 = tpu.matmul %90, %92, %cst_75 {dimension_numbers = #tpu.dot_dimension_numbers<[1], [0], [0], [1], [0, 0, 1, 1], [], []>} : vector<256x128xf32>, vector<128x128xf32>, vector<256x128xf32> -> vector<256x128xf32>
    %108 = vector.extract_strided_slice %90 {offsets = [8, 0], sizes = [248, 128], strides = [1, 1]} : vector<256x128xf32> to vector<248x128xf32>
    %109 = vector.extract_strided_slice %90 {offsets = [0, 0], sizes = [8, 128], strides = [1, 1]} : vector<256x128xf32> to vector<8x128xf32>
    %110 = tpu.concatenate %108, %109 in 0 : vector<248x128xf32>, vector<8x128xf32> -> vector<256x128xf32>
    %cst_76 = arith.constant dense<0.000000e+00> : vector<256x128xf32>
    %111 = tpu.matmul %110, %94, %cst_76 {dimension_numbers = #tpu.dot_dimension_numbers<[1], [0], [0], [1], [0, 0, 1, 1], [], []>} : vector<256x128xf32>, vector<128x128xf32>, vector<256x128xf32> -> vector<256x128xf32>
    %112 = arith.addf %107, %111 : vector<256x128xf32>
    %113 = vector.extract_strided_slice %90 {offsets = [16, 0], sizes = [240, 128], strides = [1, 1]} : vector<256x128xf32> to vector<240x128xf32>
    %114 = vector.extract_strided_slice %90 {offsets = [0, 0], sizes = [16, 128], strides = [1, 1]} : vector<256x128xf32> to vector<16x128xf32>
    %115 = tpu.concatenate %113, %114 in 0 : vector<240x128xf32>, vector<16x128xf32> -> vector<256x128xf32>
    %cst_77 = arith.constant dense<0.000000e+00> : vector<256x128xf32>
    %116 = tpu.matmul %115, %96, %cst_77 {dimension_numbers = #tpu.dot_dimension_numbers<[1], [0], [0], [1], [0, 0, 1, 1], [], []>} : vector<256x128xf32>, vector<128x128xf32>, vector<256x128xf32> -> vector<256x128xf32>
    %117 = arith.addf %112, %116 : vector<256x128xf32>
    %118 = vector.extract_strided_slice %90 {offsets = [24, 0], sizes = [232, 128], strides = [1, 1]} : vector<256x128xf32> to vector<232x128xf32>
    %119 = vector.extract_strided_slice %90 {offsets = [0, 0], sizes = [24, 128], strides = [1, 1]} : vector<256x128xf32> to vector<24x128xf32>
    %120 = tpu.concatenate %118, %119 in 0 : vector<232x128xf32>, vector<24x128xf32> -> vector<256x128xf32>
    %cst_78 = arith.constant dense<0.000000e+00> : vector<256x128xf32>
    %121 = tpu.matmul %120, %98, %cst_78 {dimension_numbers = #tpu.dot_dimension_numbers<[1], [0], [0], [1], [0, 0, 1, 1], [], []>} : vector<256x128xf32>, vector<128x128xf32>, vector<256x128xf32> -> vector<256x128xf32>
    %122 = arith.addf %117, %121 : vector<256x128xf32>
    %123 = vector.extract_strided_slice %90 {offsets = [32, 0], sizes = [224, 128], strides = [1, 1]} : vector<256x128xf32> to vector<224x128xf32>
    %124 = vector.extract_strided_slice %90 {offsets = [0, 0], sizes = [32, 128], strides = [1, 1]} : vector<256x128xf32> to vector<32x128xf32>
    %125 = tpu.concatenate %123, %124 in 0 : vector<224x128xf32>, vector<32x128xf32> -> vector<256x128xf32>
    %cst_79 = arith.constant dense<0.000000e+00> : vector<256x128xf32>
    %126 = tpu.matmul %125, %100, %cst_79 {dimension_numbers = #tpu.dot_dimension_numbers<[1], [0], [0], [1], [0, 0, 1, 1], [], []>} : vector<256x128xf32>, vector<128x128xf32>, vector<256x128xf32> -> vector<256x128xf32>
    %127 = arith.addf %122, %126 : vector<256x128xf32>
    %128 = vector.broadcast %102 : vector<1x128xf32> to vector<256x128xf32>
    %129 = arith.addf %127, %128 : vector<256x128xf32>
    %cst_80 = arith.constant 0.000000e+00 : f32
    %130 = vector.broadcast %cst_80 : f32 to vector<256x128xf32>
    %131 = arith.maximumf %129, %130 : vector<256x128xf32>
    %132 = vector.broadcast %104 : vector<1x128xf32> to vector<256x128xf32>
    %133 = arith.mulf %131, %132 : vector<256x128xf32>
    %134 = vector.broadcast %106 : vector<1x128xf32> to vector<256x128xf32>
    %135 = arith.addf %133, %134 : vector<256x128xf32>
    %c10 = arith.constant 10 : index
    %c0_81 = arith.constant 0 : index
    %c0_82 = arith.constant 0 : index
    %136 = vector.load %arg2[%c10, %c0_81, %c0_82] : memref<15x128x128xf32, #tpu.memory_space<vmem>>, vector<1x128x128xf32>
    %137 = vector.shape_cast %136 : vector<1x128x128xf32> to vector<128x128xf32>
    %c11 = arith.constant 11 : index
    %c0_83 = arith.constant 0 : index
    %c0_84 = arith.constant 0 : index
    %138 = vector.load %arg2[%c11, %c0_83, %c0_84] : memref<15x128x128xf32, #tpu.memory_space<vmem>>, vector<1x128x128xf32>
    %139 = vector.shape_cast %138 : vector<1x128x128xf32> to vector<128x128xf32>
    %c12 = arith.constant 12 : index
    %c0_85 = arith.constant 0 : index
    %c0_86 = arith.constant 0 : index
    %140 = vector.load %arg2[%c12, %c0_85, %c0_86] : memref<15x128x128xf32, #tpu.memory_space<vmem>>, vector<1x128x128xf32>
    %141 = vector.shape_cast %140 : vector<1x128x128xf32> to vector<128x128xf32>
    %c13 = arith.constant 13 : index
    %c0_87 = arith.constant 0 : index
    %c0_88 = arith.constant 0 : index
    %142 = vector.load %arg2[%c13, %c0_87, %c0_88] : memref<15x128x128xf32, #tpu.memory_space<vmem>>, vector<1x128x128xf32>
    %143 = vector.shape_cast %142 : vector<1x128x128xf32> to vector<128x128xf32>
    %c14 = arith.constant 14 : index
    %c0_89 = arith.constant 0 : index
    %c0_90 = arith.constant 0 : index
    %144 = vector.load %arg2[%c14, %c0_89, %c0_90] : memref<15x128x128xf32, #tpu.memory_space<vmem>>, vector<1x128x128xf32>
    %145 = vector.shape_cast %144 : vector<1x128x128xf32> to vector<128x128xf32>
    %c3_91 = arith.constant 3 : index
    %c0_92 = arith.constant 0 : index
    %c0_93 = arith.constant 0 : index
    %146 = vector.load %arg3[%c3_91, %c0_92, %c0_93] : memref<4x1x128xf32, #tpu.memory_space<vmem>>, vector<1x1x128xf32>
    %147 = vector.shape_cast %146 : vector<1x1x128xf32> to vector<1x128xf32>
    %c3_94 = arith.constant 3 : index
    %c0_95 = arith.constant 0 : index
    %c0_96 = arith.constant 0 : index
    %148 = vector.load %arg4[%c3_94, %c0_95, %c0_96] : memref<4x1x128xf32, #tpu.memory_space<vmem>>, vector<1x1x128xf32>
    %149 = vector.shape_cast %148 : vector<1x1x128xf32> to vector<1x128xf32>
    %c3_97 = arith.constant 3 : index
    %c0_98 = arith.constant 0 : index
    %c0_99 = arith.constant 0 : index
    %150 = vector.load %arg5[%c3_97, %c0_98, %c0_99] : memref<4x1x128xf32, #tpu.memory_space<vmem>>, vector<1x1x128xf32>
    %151 = vector.shape_cast %150 : vector<1x1x128xf32> to vector<1x128xf32>
    %cst_100 = arith.constant dense<0.000000e+00> : vector<256x128xf32>
    %152 = tpu.matmul %135, %137, %cst_100 {dimension_numbers = #tpu.dot_dimension_numbers<[1], [0], [0], [1], [0, 0, 1, 1], [], []>} : vector<256x128xf32>, vector<128x128xf32>, vector<256x128xf32> -> vector<256x128xf32>
    %153 = vector.extract_strided_slice %135 {offsets = [8, 0], sizes = [248, 128], strides = [1, 1]} : vector<256x128xf32> to vector<248x128xf32>
    %154 = vector.extract_strided_slice %135 {offsets = [0, 0], sizes = [8, 128], strides = [1, 1]} : vector<256x128xf32> to vector<8x128xf32>
    %155 = tpu.concatenate %153, %154 in 0 : vector<248x128xf32>, vector<8x128xf32> -> vector<256x128xf32>
    %cst_101 = arith.constant dense<0.000000e+00> : vector<256x128xf32>
    %156 = tpu.matmul %155, %139, %cst_101 {dimension_numbers = #tpu.dot_dimension_numbers<[1], [0], [0], [1], [0, 0, 1, 1], [], []>} : vector<256x128xf32>, vector<128x128xf32>, vector<256x128xf32> -> vector<256x128xf32>
    %157 = arith.addf %152, %156 : vector<256x128xf32>
    %158 = vector.extract_strided_slice %135 {offsets = [16, 0], sizes = [240, 128], strides = [1, 1]} : vector<256x128xf32> to vector<240x128xf32>
    %159 = vector.extract_strided_slice %135 {offsets = [0, 0], sizes = [16, 128], strides = [1, 1]} : vector<256x128xf32> to vector<16x128xf32>
    %160 = tpu.concatenate %158, %159 in 0 : vector<240x128xf32>, vector<16x128xf32> -> vector<256x128xf32>
    %cst_102 = arith.constant dense<0.000000e+00> : vector<256x128xf32>
    %161 = tpu.matmul %160, %141, %cst_102 {dimension_numbers = #tpu.dot_dimension_numbers<[1], [0], [0], [1], [0, 0, 1, 1], [], []>} : vector<256x128xf32>, vector<128x128xf32>, vector<256x128xf32> -> vector<256x128xf32>
    %162 = arith.addf %157, %161 : vector<256x128xf32>
    %163 = vector.extract_strided_slice %135 {offsets = [24, 0], sizes = [232, 128], strides = [1, 1]} : vector<256x128xf32> to vector<232x128xf32>
    %164 = vector.extract_strided_slice %135 {offsets = [0, 0], sizes = [24, 128], strides = [1, 1]} : vector<256x128xf32> to vector<24x128xf32>
    %165 = tpu.concatenate %163, %164 in 0 : vector<232x128xf32>, vector<24x128xf32> -> vector<256x128xf32>
    %cst_103 = arith.constant dense<0.000000e+00> : vector<256x128xf32>
    %166 = tpu.matmul %165, %143, %cst_103 {dimension_numbers = #tpu.dot_dimension_numbers<[1], [0], [0], [1], [0, 0, 1, 1], [], []>} : vector<256x128xf32>, vector<128x128xf32>, vector<256x128xf32> -> vector<256x128xf32>
    %167 = arith.addf %162, %166 : vector<256x128xf32>
    %168 = vector.extract_strided_slice %135 {offsets = [32, 0], sizes = [224, 128], strides = [1, 1]} : vector<256x128xf32> to vector<224x128xf32>
    %169 = vector.extract_strided_slice %135 {offsets = [0, 0], sizes = [32, 128], strides = [1, 1]} : vector<256x128xf32> to vector<32x128xf32>
    %170 = tpu.concatenate %168, %169 in 0 : vector<224x128xf32>, vector<32x128xf32> -> vector<256x128xf32>
    %cst_104 = arith.constant dense<0.000000e+00> : vector<256x128xf32>
    %171 = tpu.matmul %170, %145, %cst_104 {dimension_numbers = #tpu.dot_dimension_numbers<[1], [0], [0], [1], [0, 0, 1, 1], [], []>} : vector<256x128xf32>, vector<128x128xf32>, vector<256x128xf32> -> vector<256x128xf32>
    %172 = arith.addf %167, %171 : vector<256x128xf32>
    %173 = vector.broadcast %147 : vector<1x128xf32> to vector<256x128xf32>
    %174 = arith.addf %172, %173 : vector<256x128xf32>
    %cst_105 = arith.constant 0.000000e+00 : f32
    %175 = vector.broadcast %cst_105 : f32 to vector<256x128xf32>
    %176 = arith.maximumf %174, %175 : vector<256x128xf32>
    %177 = vector.broadcast %149 : vector<1x128xf32> to vector<256x128xf32>
    %178 = arith.mulf %176, %177 : vector<256x128xf32>
    %179 = vector.broadcast %151 : vector<1x128xf32> to vector<256x128xf32>
    %180 = arith.addf %178, %179 : vector<256x128xf32>
    %c0_106 = arith.constant 0 : index
    %c0_107 = arith.constant 0 : index
    %181 = vector.load %arg6[%c0_106, %c0_107] : memref<128x512xf32, #tpu.memory_space<vmem>>, vector<128x512xf32>
    %cst_108 = arith.constant dense<0.000000e+00> : vector<256x512xf32>
    %182 = tpu.matmul %180, %181, %cst_108 {dimension_numbers = #tpu.dot_dimension_numbers<[1], [0], [0], [1], [0, 0, 1, 1], [], []>} : vector<256x128xf32>, vector<128x512xf32>, vector<256x512xf32> -> vector<256x512xf32>
    %c0_109 = arith.constant 0 : index
    %c0_110 = arith.constant 0 : index
    %183 = vector.load %arg7[%c0_109, %c0_110] : memref<1x512xf32, #tpu.memory_space<vmem>>, vector<1x512xf32>
    %184 = vector.broadcast %183 : vector<1x512xf32> to vector<256x512xf32>
    %185 = arith.addf %182, %184 : vector<256x512xf32>
    %c0_111 = arith.constant 0 : index
    %c0_112 = arith.constant 0 : index
    %186 = vector.load %arg16[%c0_111, %c0_112] : memref<256x512xf32, #tpu.memory_space<vmem>>, vector<256x512xf32>
    tpu.vector_store %arg16[%c0_111, %c0_112], %185 {strides = array<i32>} : memref<256x512xf32, #tpu.memory_space<vmem>>, vector<256x512xf32>,
    %cst_113 = arith.constant 0.000000e+00 : f32
    %187 = vector.broadcast %cst_113 : f32 to vector<8x128xf32>
    %c0_i32 = arith.constant 0 : i32
    %c4_i32 = arith.constant 4 : i32
    %188 = arith.addi %c0_i32, %c4_i32 : i32
    %c1_i32 = arith.constant 1 : i32
    %189:4 = scf.for %arg17 = %c0_i32 to %188 step %c1_i32 iter_args(%arg18 = %187, %arg19 = %187, %arg20 = %187, %arg21 = %187) -> (vector<8x128xf32>, vector<8x128xf32>, vector<8x128xf32>, vector<8x128xf32>)  : i32 {
      %c4_i32_128 = arith.constant 4 : i32
      %203 = arith.muli %arg17, %c4_i32_128 : i32
      %c0_i32_129 = arith.constant 0 : i32
      %204 = arith.addi %203, %c0_i32_129 : i32
      %c8_i32 = arith.constant 8 : i32
      %205 = arith.muli %204, %c8_i32 : i32
      %206 = tpu.assume_multiple %205, 8 : i32
      %207 = arith.index_cast %206 : i32 to index
      %c0_130 = arith.constant 0 : index
      %208 = vector.load %arg16[%207, %c0_130] : memref<256x512xf32, #tpu.memory_space<vmem>>, vector<8x512xf32>
      %c0_131 = arith.constant 0 : index
      %c0_132 = arith.constant 0 : index
      %209 = vector.load %arg8[%c0_131, %c0_132] : memref<128x512xf32, #tpu.memory_space<vmem>>, vector<128x512xf32>
      %cst_133 = arith.constant dense<0.000000e+00> : vector<8x512xf32>
      %210 = tpu.matmul %arg18, %209, %cst_133 {dimension_numbers = #tpu.dot_dimension_numbers<[1], [0], [0], [1], [0, 0, 1, 1], [], []>} : vector<8x128xf32>, vector<128x512xf32>, vector<8x512xf32> -> vector<8x512xf32>
      %211 = arith.addf %208, %210 : vector<8x512xf32>
      %212 = vector.extract_strided_slice %211 {offsets = [0, 0], sizes = [8, 128], strides = [1, 1]} : vector<8x512xf32> to vector<8x128xf32>
      %213 = arith.negf %212 : vector<8x128xf32>
      %214 = math.exp %213 : vector<8x128xf32>
      %cst_134 = arith.constant 1.000000e+00 : f32
      %215 = vector.broadcast %cst_134 : f32 to vector<8x128xf32>
      %216 = arith.addf %215, %214 : vector<8x128xf32>
      %217 = arith.divf %215, %216 : vector<8x128xf32>
      %218 = vector.extract_strided_slice %211 {offsets = [0, 128], sizes = [8, 128], strides = [1, 1]} : vector<8x512xf32> to vector<8x128xf32>
      %219 = arith.negf %218 : vector<8x128xf32>
      %220 = math.exp %219 : vector<8x128xf32>
      %cst_135 = arith.constant 1.000000e+00 : f32
      %221 = vector.broadcast %cst_135 : f32 to vector<8x128xf32>
      %222 = arith.addf %221, %220 : vector<8x128xf32>
      %223 = arith.divf %221, %222 : vector<8x128xf32>
      %224 = vector.extract_strided_slice %211 {offsets = [0, 256], sizes = [8, 128], strides = [1, 1]} : vector<8x512xf32> to vector<8x128xf32>
      %225 = math.tanh %224 : vector<8x128xf32>
      %226 = vector.extract_strided_slice %211 {offsets = [0, 384], sizes = [8, 128], strides = [1, 1]} : vector<8x512xf32> to vector<8x128xf32>
      %227 = arith.negf %226 : vector<8x128xf32>
      %228 = math.exp %227 : vector<8x128xf32>
      %cst_136 = arith.constant 1.000000e+00 : f32
      %229 = vector.broadcast %cst_136 : f32 to vector<8x128xf32>
      %230 = arith.addf %229, %228 : vector<8x128xf32>
      %231 = arith.divf %229, %230 : vector<8x128xf32>
      %232 = arith.mulf %223, %arg19 : vector<8x128xf32>
      %233 = arith.mulf %217, %225 : vector<8x128xf32>
      %234 = arith.addf %232, %233 : vector<8x128xf32>
      %235 = math.tanh %234 : vector<8x128xf32>
      %236 = arith.mulf %231, %235 : vector<8x128xf32>
      %237 = tpu.concatenate %236, %arg20 in 1 : vector<8x128xf32>, vector<8x128xf32> -> vector<8x256xf32>
      %c0_137 = arith.constant 0 : index
      %c0_138 = arith.constant 0 : index
      %238 = vector.load %arg9[%c0_137, %c0_138] : memref<256x512xf32, #tpu.memory_space<vmem>>, vector<256x512xf32>
      %cst_139 = arith.constant dense<0.000000e+00> : vector<8x512xf32>
      %239 = tpu.matmul %237, %238, %cst_139 {dimension_numbers = #tpu.dot_dimension_numbers<[1], [0], [0], [1], [0, 0, 1, 1], [], []>} : vector<8x256xf32>, vector<256x512xf32>, vector<8x512xf32> -> vector<8x512xf32>
      %c0_140 = arith.constant 0 : index
      %c0_141 = arith.constant 0 : index
      %240 = vector.load %arg10[%c0_140, %c0_141] : memref<1x512xf32, #tpu.memory_space<vmem>>, vector<1x512xf32>
      %241 = vector.broadcast %240 : vector<1x512xf32> to vector<8x512xf32>
      %242 = arith.addf %239, %241 : vector<8x512xf32>
      %243 = vector.extract_strided_slice %242 {offsets = [0, 0], sizes = [8, 128], strides = [1, 1]} : vector<8x512xf32> to vector<8x128xf32>
      %244 = arith.negf %243 : vector<8x128xf32>
      %245 = math.exp %244 : vector<8x128xf32>
      %cst_142 = arith.constant 1.000000e+00 : f32
      %246 = vector.broadcast %cst_142 : f32 to vector<8x128xf32>
      %247 = arith.addf %246, %245 : vector<8x128xf32>
      %248 = arith.divf %246, %247 : vector<8x128xf32>
      %249 = vector.extract_strided_slice %242 {offsets = [0, 128], sizes = [8, 128], strides = [1, 1]} : vector<8x512xf32> to vector<8x128xf32>
      %250 = arith.negf %249 : vector<8x128xf32>
      %251 = math.exp %250 : vector<8x128xf32>
      %cst_143 = arith.constant 1.000000e+00 : f32
      %252 = vector.broadcast %cst_143 : f32 to vector<8x128xf32>
      %253 = arith.addf %252, %251 : vector<8x128xf32>
      %254 = arith.divf %252, %253 : vector<8x128xf32>
      %255 = vector.extract_strided_slice %242 {offsets = [0, 256], sizes = [8, 128], strides = [1, 1]} : vector<8x512xf32> to vector<8x128xf32>
      %256 = math.tanh %255 : vector<8x128xf32>
      %257 = vector.extract_strided_slice %242 {offsets = [0, 384], sizes = [8, 128], strides = [1, 1]} : vector<8x512xf32> to vector<8x128xf32>
      %258 = arith.negf %257 : vector<8x128xf32>
      %259 = math.exp %258 : vector<8x128xf32>
      %cst_144 = arith.constant 1.000000e+00 : f32
      %260 = vector.broadcast %cst_144 : f32 to vector<8x128xf32>
      %261 = arith.addf %260, %259 : vector<8x128xf32>
      %262 = arith.divf %260, %261 : vector<8x128xf32>
      %263 = arith.mulf %254, %arg21 : vector<8x128xf32>
      %264 = arith.mulf %248, %256 : vector<8x128xf32>
      %265 = arith.addf %263, %264 : vector<8x128xf32>
      %266 = math.tanh %265 : vector<8x128xf32>
      %267 = arith.mulf %262, %266 : vector<8x128xf32>
      %c4_i32_145 = arith.constant 4 : i32
      %268 = arith.muli %arg17, %c4_i32_145 : i32
      %c1_i32_146 = arith.constant 1 : i32
      %269 = arith.addi %268, %c1_i32_146 : i32
      %c8_i32_147 = arith.constant 8 : i32
      %270 = arith.muli %269, %c8_i32_147 : i32
      %271 = tpu.assume_multiple %270, 8 : i32
      %272 = arith.index_cast %271 : i32 to index
      %c0_148 = arith.constant 0 : index
      %273 = vector.load %arg16[%272, %c0_148] : memref<256x512xf32, #tpu.memory_space<vmem>>, vector<8x512xf32>
      %c0_149 = arith.constant 0 : index
      %c0_150 = arith.constant 0 : index
      %274 = vector.load %arg8[%c0_149, %c0_150] : memref<128x512xf32, #tpu.memory_space<vmem>>, vector<128x512xf32>
      %cst_151 = arith.constant dense<0.000000e+00> : vector<8x512xf32>
      %275 = tpu.matmul %236, %274, %cst_151 {dimension_numbers = #tpu.dot_dimension_numbers<[1], [0], [0], [1], [0, 0, 1, 1], [], []>} : vector<8x128xf32>, vector<128x512xf32>, vector<8x512xf32> -> vector<8x512xf32>
      %276 = arith.addf %273, %275 : vector<8x512xf32>
      %277 = vector.extract_strided_slice %276 {offsets = [0, 0], sizes = [8, 128], strides = [1, 1]} : vector<8x512xf32> to vector<8x128xf32>
      %278 = arith.negf %277 : vector<8x128xf32>
      %279 = math.exp %278 : vector<8x128xf32>
      %cst_152 = arith.constant 1.000000e+00 : f32
      %280 = vector.broadcast %cst_152 : f32 to vector<8x128xf32>
      %281 = arith.addf %280, %279 : vector<8x128xf32>
      %282 = arith.divf %280, %281 : vector<8x128xf32>
      %283 = vector.extract_strided_slice %276 {offsets = [0, 128], sizes = [8, 128], strides = [1, 1]} : vector<8x512xf32> to vector<8x128xf32>
      %284 = arith.negf %283 : vector<8x128xf32>
      %285 = math.exp %284 : vector<8x128xf32>
      %cst_153 = arith.constant 1.000000e+00 : f32
      %286 = vector.broadcast %cst_153 : f32 to vector<8x128xf32>
      %287 = arith.addf %286, %285 : vector<8x128xf32>
      %288 = arith.divf %286, %287 : vector<8x128xf32>
      %289 = vector.extract_strided_slice %276 {offsets = [0, 256], sizes = [8, 128], strides = [1, 1]} : vector<8x512xf32> to vector<8x128xf32>
      %290 = math.tanh %289 : vector<8x128xf32>
      %291 = vector.extract_strided_slice %276 {offsets = [0, 384], sizes = [8, 128], strides = [1, 1]} : vector<8x512xf32> to vector<8x128xf32>
      %292 = arith.negf %291 : vector<8x128xf32>
      %293 = math.exp %292 : vector<8x128xf32>
      %cst_154 = arith.constant 1.000000e+00 : f32
      %294 = vector.broadcast %cst_154 : f32 to vector<8x128xf32>
      %295 = arith.addf %294, %293 : vector<8x128xf32>
      %296 = arith.divf %294, %295 : vector<8x128xf32>
      %297 = arith.mulf %288, %234 : vector<8x128xf32>
      %298 = arith.mulf %282, %290 : vector<8x128xf32>
      %299 = arith.addf %297, %298 : vector<8x128xf32>
      %300 = math.tanh %299 : vector<8x128xf32>
      %301 = arith.mulf %296, %300 : vector<8x128xf32>
      %302 = tpu.concatenate %301, %267 in 1 : vector<8x128xf32>, vector<8x128xf32> -> vector<8x256xf32>
      %c0_155 = arith.constant 0 : index
      %c0_156 = arith.constant 0 : index
      %303 = vector.load %arg9[%c0_155, %c0_156] : memref<256x512xf32, #tpu.memory_space<vmem>>, vector<256x512xf32>
      %cst_157 = arith.constant dense<0.000000e+00> : vector<8x512xf32>
      %304 = tpu.matmul %302, %303, %cst_157 {dimension_numbers = #tpu.dot_dimension_numbers<[1], [0], [0], [1], [0, 0, 1, 1], [], []>} : vector<8x256xf32>, vector<256x512xf32>, vector<8x512xf32> -> vector<8x512xf32>
      %c0_158 = arith.constant 0 : index
      %c0_159 = arith.constant 0 : index
      %305 = vector.load %arg10[%c0_158, %c0_159] : memref<1x512xf32, #tpu.memory_space<vmem>>, vector<1x512xf32>
      %306 = vector.broadcast %305 : vector<1x512xf32> to vector<8x512xf32>
      %307 = arith.addf %304, %306 : vector<8x512xf32>
      %308 = vector.extract_strided_slice %307 {offsets = [0, 0], sizes = [8, 128], strides = [1, 1]} : vector<8x512xf32> to vector<8x128xf32>
      %309 = arith.negf %308 : vector<8x128xf32>
      %310 = math.exp %309 : vector<8x128xf32>
      %cst_160 = arith.constant 1.000000e+00 : f32
      %311 = vector.broadcast %cst_160 : f32 to vector<8x128xf32>
      %312 = arith.addf %311, %310 : vector<8x128xf32>
      %313 = arith.divf %311, %312 : vector<8x128xf32>
      %314 = vector.extract_strided_slice %307 {offsets = [0, 128], sizes = [8, 128], strides = [1, 1]} : vector<8x512xf32> to vector<8x128xf32>
      %315 = arith.negf %314 : vector<8x128xf32>
      %316 = math.exp %315 : vector<8x128xf32>
      %cst_161 = arith.constant 1.000000e+00 : f32
      %317 = vector.broadcast %cst_161 : f32 to vector<8x128xf32>
      %318 = arith.addf %317, %316 : vector<8x128xf32>
      %319 = arith.divf %317, %318 : vector<8x128xf32>
      %320 = vector.extract_strided_slice %307 {offsets = [0, 256], sizes = [8, 128], strides = [1, 1]} : vector<8x512xf32> to vector<8x128xf32>
      %321 = math.tanh %320 : vector<8x128xf32>
      %322 = vector.extract_strided_slice %307 {offsets = [0, 384], sizes = [8, 128], strides = [1, 1]} : vector<8x512xf32> to vector<8x128xf32>
      %323 = arith.negf %322 : vector<8x128xf32>
      %324 = math.exp %323 : vector<8x128xf32>
      %cst_162 = arith.constant 1.000000e+00 : f32
      %325 = vector.broadcast %cst_162 : f32 to vector<8x128xf32>
      %326 = arith.addf %325, %324 : vector<8x128xf32>
      %327 = arith.divf %325, %326 : vector<8x128xf32>
      %328 = arith.mulf %319, %265 : vector<8x128xf32>
      %329 = arith.mulf %313, %321 : vector<8x128xf32>
      %330 = arith.addf %328, %329 : vector<8x128xf32>
      %331 = math.tanh %330 : vector<8x128xf32>
      %332 = arith.mulf %327, %331 : vector<8x128xf32>
      %c4_i32_163 = arith.constant 4 : i32
      %333 = arith.muli %arg17, %c4_i32_163 : i32
      %c2_i32 = arith.constant 2 : i32
      %334 = arith.addi %333, %c2_i32 : i32
      %c8_i32_164 = arith.constant 8 : i32
      %335 = arith.muli %334, %c8_i32_164 : i32
      %336 = tpu.assume_multiple %335, 8 : i32
      %337 = arith.index_cast %336 : i32 to index
      %c0_165 = arith.constant 0 : index
      %338 = vector.load %arg16[%337, %c0_165] : memref<256x512xf32, #tpu.memory_space<vmem>>, vector<8x512xf32>
      %c0_166 = arith.constant 0 : index
      %c0_167 = arith.constant 0 : index
      %339 = vector.load %arg8[%c0_166, %c0_167] : memref<128x512xf32, #tpu.memory_space<vmem>>, vector<128x512xf32>
      %cst_168 = arith.constant dense<0.000000e+00> : vector<8x512xf32>
      %340 = tpu.matmul %301, %339, %cst_168 {dimension_numbers = #tpu.dot_dimension_numbers<[1], [0], [0], [1], [0, 0, 1, 1], [], []>} : vector<8x128xf32>, vector<128x512xf32>, vector<8x512xf32> -> vector<8x512xf32>
      %341 = arith.addf %338, %340 : vector<8x512xf32>
      %342 = vector.extract_strided_slice %341 {offsets = [0, 0], sizes = [8, 128], strides = [1, 1]} : vector<8x512xf32> to vector<8x128xf32>
      %343 = arith.negf %342 : vector<8x128xf32>
      %344 = math.exp %343 : vector<8x128xf32>
      %cst_169 = arith.constant 1.000000e+00 : f32
      %345 = vector.broadcast %cst_169 : f32 to vector<8x128xf32>
      %346 = arith.addf %345, %344 : vector<8x128xf32>
      %347 = arith.divf %345, %346 : vector<8x128xf32>
      %348 = vector.extract_strided_slice %341 {offsets = [0, 128], sizes = [8, 128], strides = [1, 1]} : vector<8x512xf32> to vector<8x128xf32>
      %349 = arith.negf %348 : vector<8x128xf32>
      %350 = math.exp %349 : vector<8x128xf32>
      %cst_170 = arith.constant 1.000000e+00 : f32
      %351 = vector.broadcast %cst_170 : f32 to vector<8x128xf32>
      %352 = arith.addf %351, %350 : vector<8x128xf32>
      %353 = arith.divf %351, %352 : vector<8x128xf32>
      %354 = vector.extract_strided_slice %341 {offsets = [0, 256], sizes = [8, 128], strides = [1, 1]} : vector<8x512xf32> to vector<8x128xf32>
      %355 = math.tanh %354 : vector<8x128xf32>
      %356 = vector.extract_strided_slice %341 {offsets = [0, 384], sizes = [8, 128], strides = [1, 1]} : vector<8x512xf32> to vector<8x128xf32>
      %357 = arith.negf %356 : vector<8x128xf32>
      %358 = math.exp %357 : vector<8x128xf32>
      %cst_171 = arith.constant 1.000000e+00 : f32
      %359 = vector.broadcast %cst_171 : f32 to vector<8x128xf32>
      %360 = arith.addf %359, %358 : vector<8x128xf32>
      %361 = arith.divf %359, %360 : vector<8x128xf32>
      %362 = arith.mulf %353, %299 : vector<8x128xf32>
      %363 = arith.mulf %347, %355 : vector<8x128xf32>
      %364 = arith.addf %362, %363 : vector<8x128xf32>
      %365 = math.tanh %364 : vector<8x128xf32>
      %366 = arith.mulf %361, %365 : vector<8x128xf32>
      %367 = tpu.concatenate %366, %332 in 1 : vector<8x128xf32>, vector<8x128xf32> -> vector<8x256xf32>
      %c0_172 = arith.constant 0 : index
      %c0_173 = arith.constant 0 : index
      %368 = vector.load %arg9[%c0_172, %c0_173] : memref<256x512xf32, #tpu.memory_space<vmem>>, vector<256x512xf32>
      %cst_174 = arith.constant dense<0.000000e+00> : vector<8x512xf32>
      %369 = tpu.matmul %367, %368, %cst_174 {dimension_numbers = #tpu.dot_dimension_numbers<[1], [0], [0], [1], [0, 0, 1, 1], [], []>} : vector<8x256xf32>, vector<256x512xf32>, vector<8x512xf32> -> vector<8x512xf32>
      %c0_175 = arith.constant 0 : index
      %c0_176 = arith.constant 0 : index
      %370 = vector.load %arg10[%c0_175, %c0_176] : memref<1x512xf32, #tpu.memory_space<vmem>>, vector<1x512xf32>
      %371 = vector.broadcast %370 : vector<1x512xf32> to vector<8x512xf32>
      %372 = arith.addf %369, %371 : vector<8x512xf32>
      %373 = vector.extract_strided_slice %372 {offsets = [0, 0], sizes = [8, 128], strides = [1, 1]} : vector<8x512xf32> to vector<8x128xf32>
      %374 = arith.negf %373 : vector<8x128xf32>
      %375 = math.exp %374 : vector<8x128xf32>
      %cst_177 = arith.constant 1.000000e+00 : f32
      %376 = vector.broadcast %cst_177 : f32 to vector<8x128xf32>
      %377 = arith.addf %376, %375 : vector<8x128xf32>
      %378 = arith.divf %376, %377 : vector<8x128xf32>
      %379 = vector.extract_strided_slice %372 {offsets = [0, 128], sizes = [8, 128], strides = [1, 1]} : vector<8x512xf32> to vector<8x128xf32>
      %380 = arith.negf %379 : vector<8x128xf32>
      %381 = math.exp %380 : vector<8x128xf32>
      %cst_178 = arith.constant 1.000000e+00 : f32
      %382 = vector.broadcast %cst_178 : f32 to vector<8x128xf32>
      %383 = arith.addf %382, %381 : vector<8x128xf32>
      %384 = arith.divf %382, %383 : vector<8x128xf32>
      %385 = vector.extract_strided_slice %372 {offsets = [0, 256], sizes = [8, 128], strides = [1, 1]} : vector<8x512xf32> to vector<8x128xf32>
      %386 = math.tanh %385 : vector<8x128xf32>
      %387 = vector.extract_strided_slice %372 {offsets = [0, 384], sizes = [8, 128], strides = [1, 1]} : vector<8x512xf32> to vector<8x128xf32>
      %388 = arith.negf %387 : vector<8x128xf32>
      %389 = math.exp %388 : vector<8x128xf32>
      %cst_179 = arith.constant 1.000000e+00 : f32
      %390 = vector.broadcast %cst_179 : f32 to vector<8x128xf32>
      %391 = arith.addf %390, %389 : vector<8x128xf32>
      %392 = arith.divf %390, %391 : vector<8x128xf32>
      %393 = arith.mulf %384, %330 : vector<8x128xf32>
      %394 = arith.mulf %378, %386 : vector<8x128xf32>
      %395 = arith.addf %393, %394 : vector<8x128xf32>
      %396 = math.tanh %395 : vector<8x128xf32>
      %397 = arith.mulf %392, %396 : vector<8x128xf32>
      %c4_i32_180 = arith.constant 4 : i32
      %398 = arith.muli %arg17, %c4_i32_180 : i32
      %c3_i32 = arith.constant 3 : i32
      %399 = arith.addi %398, %c3_i32 : i32
      %c8_i32_181 = arith.constant 8 : i32
      %400 = arith.muli %399, %c8_i32_181 : i32
      %401 = tpu.assume_multiple %400, 8 : i32
      %402 = arith.index_cast %401 : i32 to index
      %c0_182 = arith.constant 0 : index
      %403 = vector.load %arg16[%402, %c0_182] : memref<256x512xf32, #tpu.memory_space<vmem>>, vector<8x512xf32>
      %c0_183 = arith.constant 0 : index
      %c0_184 = arith.constant 0 : index
      %404 = vector.load %arg8[%c0_183, %c0_184] : memref<128x512xf32, #tpu.memory_space<vmem>>, vector<128x512xf32>
      %cst_185 = arith.constant dense<0.000000e+00> : vector<8x512xf32>
      %405 = tpu.matmul %366, %404, %cst_185 {dimension_numbers = #tpu.dot_dimension_numbers<[1], [0], [0], [1], [0, 0, 1, 1], [], []>} : vector<8x128xf32>, vector<128x512xf32>, vector<8x512xf32> -> vector<8x512xf32>
      %406 = arith.addf %403, %405 : vector<8x512xf32>
      %407 = vector.extract_strided_slice %406 {offsets = [0, 0], sizes = [8, 128], strides = [1, 1]} : vector<8x512xf32> to vector<8x128xf32>
      %408 = arith.negf %407 : vector<8x128xf32>
      %409 = math.exp %408 : vector<8x128xf32>
      %cst_186 = arith.constant 1.000000e+00 : f32
      %410 = vector.broadcast %cst_186 : f32 to vector<8x128xf32>
      %411 = arith.addf %410, %409 : vector<8x128xf32>
      %412 = arith.divf %410, %411 : vector<8x128xf32>
      %413 = vector.extract_strided_slice %406 {offsets = [0, 128], sizes = [8, 128], strides = [1, 1]} : vector<8x512xf32> to vector<8x128xf32>
      %414 = arith.negf %413 : vector<8x128xf32>
      %415 = math.exp %414 : vector<8x128xf32>
      %cst_187 = arith.constant 1.000000e+00 : f32
      %416 = vector.broadcast %cst_187 : f32 to vector<8x128xf32>
      %417 = arith.addf %416, %415 : vector<8x128xf32>
      %418 = arith.divf %416, %417 : vector<8x128xf32>
      %419 = vector.extract_strided_slice %406 {offsets = [0, 256], sizes = [8, 128], strides = [1, 1]} : vector<8x512xf32> to vector<8x128xf32>
      %420 = math.tanh %419 : vector<8x128xf32>
      %421 = vector.extract_strided_slice %406 {offsets = [0, 384], sizes = [8, 128], strides = [1, 1]} : vector<8x512xf32> to vector<8x128xf32>
      %422 = arith.negf %421 : vector<8x128xf32>
      %423 = math.exp %422 : vector<8x128xf32>
      %cst_188 = arith.constant 1.000000e+00 : f32
      %424 = vector.broadcast %cst_188 : f32 to vector<8x128xf32>
      %425 = arith.addf %424, %423 : vector<8x128xf32>
      %426 = arith.divf %424, %425 : vector<8x128xf32>
      %427 = arith.mulf %418, %364 : vector<8x128xf32>
      %428 = arith.mulf %412, %420 : vector<8x128xf32>
      %429 = arith.addf %427, %428 : vector<8x128xf32>
      %430 = math.tanh %429 : vector<8x128xf32>
      %431 = arith.mulf %426, %430 : vector<8x128xf32>
      %432 = tpu.concatenate %431, %397 in 1 : vector<8x128xf32>, vector<8x128xf32> -> vector<8x256xf32>
      %c0_189 = arith.constant 0 : index
      %c0_190 = arith.constant 0 : index
      %433 = vector.load %arg9[%c0_189, %c0_190] : memref<256x512xf32, #tpu.memory_space<vmem>>, vector<256x512xf32>
      %cst_191 = arith.constant dense<0.000000e+00> : vector<8x512xf32>
      %434 = tpu.matmul %432, %433, %cst_191 {dimension_numbers = #tpu.dot_dimension_numbers<[1], [0], [0], [1], [0, 0, 1, 1], [], []>} : vector<8x256xf32>, vector<256x512xf32>, vector<8x512xf32> -> vector<8x512xf32>
      %c0_192 = arith.constant 0 : index
      %c0_193 = arith.constant 0 : index
      %435 = vector.load %arg10[%c0_192, %c0_193] : memref<1x512xf32, #tpu.memory_space<vmem>>, vector<1x512xf32>
      %436 = vector.broadcast %435 : vector<1x512xf32> to vector<8x512xf32>
      %437 = arith.addf %434, %436 : vector<8x512xf32>
      %438 = vector.extract_strided_slice %437 {offsets = [0, 0], sizes = [8, 128], strides = [1, 1]} : vector<8x512xf32> to vector<8x128xf32>
      %439 = arith.negf %438 : vector<8x128xf32>
      %440 = math.exp %439 : vector<8x128xf32>
      %cst_194 = arith.constant 1.000000e+00 : f32
      %441 = vector.broadcast %cst_194 : f32 to vector<8x128xf32>
      %442 = arith.addf %441, %440 : vector<8x128xf32>
      %443 = arith.divf %441, %442 : vector<8x128xf32>
      %444 = vector.extract_strided_slice %437 {offsets = [0, 128], sizes = [8, 128], strides = [1, 1]} : vector<8x512xf32> to vector<8x128xf32>
      %445 = arith.negf %444 : vector<8x128xf32>
      %446 = math.exp %445 : vector<8x128xf32>
      %cst_195 = arith.constant 1.000000e+00 : f32
      %447 = vector.broadcast %cst_195 : f32 to vector<8x128xf32>
      %448 = arith.addf %447, %446 : vector<8x128xf32>
      %449 = arith.divf %447, %448 : vector<8x128xf32>
      %450 = vector.extract_strided_slice %437 {offsets = [0, 256], sizes = [8, 128], strides = [1, 1]} : vector<8x512xf32> to vector<8x128xf32>
      %451 = math.tanh %450 : vector<8x128xf32>
      %452 = vector.extract_strided_slice %437 {offsets = [0, 384], sizes = [8, 128], strides = [1, 1]} : vector<8x512xf32> to vector<8x128xf32>
      %453 = arith.negf %452 : vector<8x128xf32>
      %454 = math.exp %453 : vector<8x128xf32>
      %cst_196 = arith.constant 1.000000e+00 : f32
      %455 = vector.broadcast %cst_196 : f32 to vector<8x128xf32>
      %456 = arith.addf %455, %454 : vector<8x128xf32>
      %457 = arith.divf %455, %456 : vector<8x128xf32>
      %458 = arith.mulf %449, %395 : vector<8x128xf32>
      %459 = arith.mulf %443, %451 : vector<8x128xf32>
      %460 = arith.addf %458, %459 : vector<8x128xf32>
      %461 = math.tanh %460 : vector<8x128xf32>
      %462 = arith.mulf %457, %461 : vector<8x128xf32>
      scf.yield %431, %429, %462, %460 : vector<8x128xf32>, vector<8x128xf32>, vector<8x128xf32>, vector<8x128xf32>
    }
    %c4_i32_114 = arith.constant 4 : i32
    %c0_115 = arith.constant 0 : index
    %c0_116 = arith.constant 0 : index
    %190 = vector.load %arg11[%c0_115, %c0_116] : memref<128x6xf32, #tpu.memory_space<vmem>>, vector<128x6xf32>
    %cst_117 = arith.constant dense<0.000000e+00> : vector<8x6xf32>
    %191 = tpu.matmul %189#2, %190, %cst_117 {dimension_numbers = #tpu.dot_dimension_numbers<[1], [0], [0], [1], [0, 0, 1, 1], [], []>} : vector<8x128xf32>, vector<128x6xf32>, vector<8x6xf32> -> vector<8x6xf32>
    %c0_118 = arith.constant 0 : index
    %c0_119 = arith.constant 0 : index
    %192 = vector.load %arg12[%c0_118, %c0_119] : memref<1x6xf32, #tpu.memory_space<vmem>>, vector<1x6xf32>
    %193 = vector.broadcast %192 : vector<1x6xf32> to vector<8x6xf32>
    %194 = arith.addf %191, %193 : vector<8x6xf32>
    %cst_120 = arith.constant 0.000000e+00 : f32
    %195 = vector.broadcast %cst_120 : f32 to vector<8x6xf32>
    %196 = arith.maximumf %194, %195 : vector<8x6xf32>
    %c0_121 = arith.constant 0 : index
    %c0_122 = arith.constant 0 : index
    %197 = vector.load %arg13[%c0_121, %c0_122] : memref<6x6xf32, #tpu.memory_space<vmem>>, vector<6x6xf32>
    %cst_123 = arith.constant dense<0.000000e+00> : vector<8x6xf32>
    %198 = tpu.matmul %196, %197, %cst_123 {dimension_numbers = #tpu.dot_dimension_numbers<[1], [0], [0], [1], [0, 0, 1, 1], [], []>} : vector<8x6xf32>, vector<6x6xf32>, vector<8x6xf32> -> vector<8x6xf32>
    %c0_124 = arith.constant 0 : index
    %c0_125 = arith.constant 0 : index
    %199 = vector.load %arg14[%c0_124, %c0_125] : memref<1x6xf32, #tpu.memory_space<vmem>>, vector<1x6xf32>
    %200 = vector.broadcast %199 : vector<1x6xf32> to vector<8x6xf32>
    %201 = arith.addf %198, %200 : vector<8x6xf32>
    %c0_126 = arith.constant 0 : index
    %c0_127 = arith.constant 0 : index
    %202 = vector.load %arg15[%c0_126, %c0_127] : memref<8x6xf32, #tpu.memory_space<vmem>>, vector<8x6xf32>
    tpu.vector_store %arg15[%c0_126, %c0_127], %201 {strides = array<i32>} : memref<8x6xf32, #tpu.memory_space<vmem>>, vector<8x6xf32>,
    return
  }
}

</mosaic_0001>

<llo_original>
// kernel: forward.1
$region0: #{forward.1}
  #allocation0 [shape = 'u32[]', space=smem, size = 0x4, offset = 0x4, fixed_abs, tag = 'smem constant byte address 0x4 - core index']
  #allocation1 [shape = 'u32[144,128]{1,0:T(1,128)}', space=vmem, size = 0x12000, scoped, tag = 'internal scratch']
  #allocation2 [shape = 'f32[256,512]{1,0:T(8,128)}', space=vmem, size = 0x80000, scoped, tag = 'scratch operand']
  %s0 = inlined_call_operand.vmem [shape: f32[256,16], index: 0, kind: input, shape index: {}]
  %s1 = inlined_call_operand.vmem [shape: f32[5,16,128], index: 1, kind: input, shape index: {}]
  %s2 = inlined_call_operand.hbm [shape: f32[15,128,128], index: 2, kind: input, shape index: {}]
  %s3 = inlined_call_operand.vmem [shape: f32[4,1,128], index: 3, kind: input, shape index: {}]
  %s4 = inlined_call_operand.vmem [shape: f32[4,1,128], index: 4, kind: input, shape index: {}]
  %s5 = inlined_call_operand.vmem [shape: f32[4,1,128], index: 5, kind: input, shape index: {}]
  %s6 = inlined_call_operand.vmem [shape: f32[128,512], index: 6, kind: input, shape index: {}]
  %s7 = inlined_call_operand.vmem [shape: f32[1,512], index: 7, kind: input, shape index: {}]
  %s8 = inlined_call_operand.hbm [shape: f32[128,512], index: 8, kind: input, shape index: {}]
  %s9 = inlined_call_operand.hbm [shape: f32[256,512], index: 9, kind: input, shape index: {}]
  %s10 = inlined_call_operand.vmem [shape: f32[1,512], index: 10, kind: input, shape index: {}]
  %s11 = inlined_call_operand.vmem [shape: f32[128,6], index: 11, kind: input, shape index: {}]
  %s12 = inlined_call_operand.vmem [shape: f32[1,6], index: 12, kind: input, shape index: {}]
  %s13 = inlined_call_operand.vmem [shape: f32[6,6], index: 13, kind: input, shape index: {}]
  %s14 = inlined_call_operand.vmem [shape: f32[1,6], index: 14, kind: input, shape index: {}]
  %s15 = inlined_call_operand.vmem [shape: f32[8,6], index: 15, kind: output, shape index: {}]
  %s16 = sld [smem:[#allocation0]]
  $region89: #{forward.1} parent=0
    _
  %s18 = ssub.s32 1, %s16
  %s19 = scalar_select 0, %s18, %s16
  $region1: #{forward.1} parent=0
    #allocation3 [shape = 'u8[983040]{0}', space=vmem, size = 0xf0000, scoped, tag = 'input window, operand 2, single buffered']
    #allocation4 [shape = 's32[1]{0}', space=sflag, size = 0x4, scoped, tag = 'scoped memory for forward.1']
    #allocation5 [shape = 'u8[262144]{0}', space=vmem, size = 0x40000, scoped, tag = 'input window, operand 8, single buffered']
    #allocation6 [shape = 's32[1]{0}', space=sflag, size = 0x4, scoped, tag = 'scoped memory for forward.1']
    #allocation7 [shape = 'u8[524288]{0}', space=vmem, size = 0x80000, scoped, tag = 'input window, operand 9, single buffered']
    %20 = vsyncpa [#allocation4], 0
    %21 = vsyncpa [#allocation6], 0
    // Predicated region
    $region2: #{forward.1} parent=1 // pred_check
      _
    $region3: #{forward.1} parent=1 // pred_check_branch
      %23 = sbr.rel (0) target = $region5
    $region4: #{forward.1} parent=1 // pred_region
      _
    $region5: #{forward.1} parent=1 // pred_fallthru
      _
    // Predicated region
    $region6: #{forward.1} parent=1 // pred_check
      _
    $region7: #{forward.1} parent=1 // pred_check_branch
      %25 = sbr.rel (0) target = $region9
    $region8: #{forward.1} parent=1 // pred_region
      _
    $region9: #{forward.1} parent=1 // pred_fallthru
      _
    // Predicated region
    $region10: #{forward.1} parent=1 // pred_check
      _
    $region11: #{forward.1} parent=1 // pred_check_branch
      %27 = sbr.rel (0) target = $region13
    $region12: #{forward.1} parent=1 // pred_region
      %s29 = ssub.s32 30720, 30720
      %30 = vsyncadd [#allocation4], %s29
      %s31 = sshll.u32 [#allocation3], 4
      %s32 = int_to_ptr.vmem [resolvable:$true] %s31
      %37 = dma.hbm_to_vmem [thread:$0]  %s2, 30720, %s32, [#allocation4], 128, 128, 8
    $region13: #{forward.1} parent=1 // pred_fallthru
      _
    // Predicated region
    $region14: #{forward.1} parent=1 // pred_check
      _
    $region15: #{forward.1} parent=1 // pred_check_branch
      %39 = sbr.rel (0) target = $region17
    $region16: #{forward.1} parent=1 // pred_region
      _
    $region17: #{forward.1} parent=1 // pred_fallthru
      _
    // Predicated region
    $region18: #{forward.1} parent=1 // pred_check
      _
    $region19: #{forward.1} parent=1 // pred_check_branch
      %41 = sbr.rel (0) target = $region21
    $region20: #{forward.1} parent=1 // pred_region
      _
    $region21: #{forward.1} parent=1 // pred_fallthru
      _
    // Predicated region
    $region22: #{forward.1} parent=1 // pred_check
      _
    $region23: #{forward.1} parent=1 // pred_check_branch
      %43 = sbr.rel (0) target = $region25
    $region24: #{forward.1} parent=1 // pred_region
      _
    $region25: #{forward.1} parent=1 // pred_fallthru
      _
    // Predicated region
    $region26: #{forward.1} parent=1 // pred_check
      _
    $region27: #{forward.1} parent=1 // pred_check_branch
      %45 = sbr.rel (0) target = $region29
    $region28: #{forward.1} parent=1 // pred_region
      _
    $region29: #{forward.1} parent=1 // pred_fallthru
      _
    // Predicated region
    $region30: #{forward.1} parent=1 // pred_check
      _
    $region31: #{forward.1} parent=1 // pred_check_branch
      %47 = sbr.rel (0) target = $region33
    $region32: #{forward.1} parent=1 // pred_region
      _
    $region33: #{forward.1} parent=1 // pred_fallthru
      _
    // Predicated region
    $region34: #{forward.1} parent=1 // pred_check
      _
    $region35: #{forward.1} parent=1 // pred_check_branch
      %49 = sbr.rel (0) target = $region37
    $region36: #{forward.1} parent=1 // pred_region
      %s51 = ssub.s32 8192, 8192
      %52 = vsyncadd [#allocation6], %s51
      %s53 = sshll.u32 [#allocation5], 4
      %s54 = int_to_ptr.vmem [resolvable:$true] %s53
      %59 = dma.hbm_to_vmem [thread:$0]  %s8, 8192, %s54, [#allocation6], 512, 512, 32
    $region37: #{forward.1} parent=1 // pred_fallthru
      _
    // Predicated region
    $region38: #{forward.1} parent=1 // pred_check
      _
    $region39: #{forward.1} parent=1 // pred_check_branch
      %61 = sbr.rel (0) target = $region41
    $region40: #{forward.1} parent=1 // pred_region
      %s63 = ssub.s32 16384, 16384
      %64 = vsyncadd [#allocation6], %s63
      %s65 = sshll.u32 [#allocation7], 4
      %s66 = int_to_ptr.vmem [resolvable:$true] %s65
      %71 = dma.hbm_to_vmem [thread:$0]  %s9, 16384, %s66, [#allocation6], 512, 512, 32
    $region41: #{forward.1} parent=1 // pred_fallthru
      _
    // Predicated region
    $region42: #{forward.1} parent=1 // pred_check
      _
    $region43: #{forward.1} parent=1 // pred_check_branch
      %73 = sbr.rel (0) target = $region45
    $region44: #{forward.1} parent=1 // pred_region
      _
    $region45: #{forward.1} parent=1 // pred_fallthru
      _
    // Predicated region
    $region46: #{forward.1} parent=1 // pred_check
      _
    $region47: #{forward.1} parent=1 // pred_check_branch
      %75 = sbr.rel (0) target = $region49
    $region48: #{forward.1} parent=1 // pred_region
      _
    $region49: #{forward.1} parent=1 // pred_fallthru
      _
    // Predicated region
    $region50: #{forward.1} parent=1 // pred_check
      _
    $region51: #{forward.1} parent=1 // pred_check_branch
      %77 = sbr.rel (0) target = $region53
    $region52: #{forward.1} parent=1 // pred_region
      _
    $region53: #{forward.1} parent=1 // pred_fallthru
      _
    // Predicated region
    $region54: #{forward.1} parent=1 // pred_check
      _
    $region55: #{forward.1} parent=1 // pred_check_branch
      %79 = sbr.rel (0) target = $region57
    $region56: #{forward.1} parent=1 // pred_region
      _
    $region57: #{forward.1} parent=1 // pred_fallthru
      _
    // Predicated region
    $region58: #{forward.1} parent=1 // pred_check
      _
    $region59: #{forward.1} parent=1 // pred_check_branch
      %81 = sbr.rel (0) target = $region61
    $region60: #{forward.1} parent=1 // pred_region
      _
    $region61: #{forward.1} parent=1 // pred_fallthru
      _
    // Predicated region
    $region62: #{forward.1} parent=1 // pred_check
      _
    $region63: #{forward.1} parent=1 // pred_check_branch
      %83 = sbr.rel (0) target = $region65
    $region64: #{forward.1} parent=1 // pred_region
      %84 = dma.done [#allocation4], 30720
    $region65: #{forward.1} parent=1 // pred_fallthru
      _
    // Predicated region
    $region66: #{forward.1} parent=1 // pred_check
      _
    $region67: #{forward.1} parent=1 // pred_check_branch
      %86 = sbr.rel (0) target = $region69
    $region68: #{forward.1} parent=1 // pred_region
      %87 = dma.done [#allocation6], 8192
    $region69: #{forward.1} parent=1 // pred_fallthru
      _
    // Predicated region
    $region70: #{forward.1} parent=1 // pred_check
      _
    $region71: #{forward.1} parent=1 // pred_check_branch
      %89 = sbr.rel (0) target = $region73
    $region72: #{forward.1} parent=1 // pred_region
      %90 = dma.done [#allocation6], 16384
    $region73: #{forward.1} parent=1 // pred_fallthru
      _
    %v91 = vld [vmem:[%s0] sm:$0xff]
    %v92 = vld [vmem:[%s0 + $0x8] sm:$0xff]
    %v93 = vld [vmem:[%s0 + $0x10] sm:$0xff]
    %v94 = vld [vmem:[%s0 + $0x18] sm:$0xff]
    %v95 = vld [vmem:[%s0 + $0x20] sm:$0xff]
    %v96 = vld [vmem:[%s0 + $0x28] sm:$0xff]
    %v97 = vld [vmem:[%s0 + $0x30] sm:$0xff]
    %v98 = vld [vmem:[%s0 + $0x38] sm:$0xff]
    %v99 = vld [vmem:[%s0 + $0x40] sm:$0xff]
    %v100 = vld [vmem:[%s0 + $0x48] sm:$0xff]
    %v101 = vld [vmem:[%s0 + $0x50] sm:$0xff]
    %v102 = vld [vmem:[%s0 + $0x58] sm:$0xff]
    %v103 = vld [vmem:[%s0 + $0x60] sm:$0xff]
    %v104 = vld [vmem:[%s0 + $0x68] sm:$0xff]
    %v105 = vld [vmem:[%s0 + $0x70] sm:$0xff]
    %v106 = vld [vmem:[%s0 + $0x78] sm:$0xff]
    %v107 = vld [vmem:[%s0 + $0x80] sm:$0xff]
    %v108 = vld [vmem:[%s0 + $0x88] sm:$0xff]
    %v109 = vld [vmem:[%s0 + $0x90] sm:$0xff]
    %v110 = vld [vmem:[%s0 + $0x98] sm:$0xff]
    %v111 = vld [vmem:[%s0 + $0xa0] sm:$0xff]
    %v112 = vld [vmem:[%s0 + $0xa8] sm:$0xff]
    %v113 = vld [vmem:[%s0 + $0xb0] sm:$0xff]
    %v114 = vld [vmem:[%s0 + $0xb8] sm:$0xff]
    %v115 = vld [vmem:[%s0 + $0xc0] sm:$0xff]
    %v116 = vld [vmem:[%s0 + $0xc8] sm:$0xff]
    %v117 = vld [vmem:[%s0 + $0xd0] sm:$0xff]
    %v118 = vld [vmem:[%s0 + $0xd8] sm:$0xff]
    %v119 = vld [vmem:[%s0 + $0xe0] sm:$0xff]
    %v120 = vld [vmem:[%s0 + $0xe8] sm:$0xff]
    %v121 = vld [vmem:[%s0 + $0xf0] sm:$0xff]
    %v122 = vld [vmem:[%s0 + $0xf8] sm:$0xff]
    %v123 = vld [vmem:[%s1] sm:$0xff]
    %v124 = vld [vmem:[%s1 + $0x8] sm:$0xff]
    %s125 = scalar_lea.vmem %s1, 16
    %v126 = vld [vmem:[%s125] sm:$0xff]
    %v127 = vld [vmem:[%s125 + $0x8] sm:$0xff]
    %s128 = scalar_lea.vmem %s1, 32
    %v129 = vld [vmem:[%s128] sm:$0xff]
    %v130 = vld [vmem:[%s128 + $0x8] sm:$0xff]
    %s131 = scalar_lea.vmem %s1, 48
    %v132 = vld [vmem:[%s131] sm:$0xff]
    %v133 = vld [vmem:[%s131 + $0x8] sm:$0xff]
    %s134 = scalar_lea.vmem %s1, 64
    %v135 = vld [vmem:[%s134] sm:$0xff]
    %v136 = vld [vmem:[%s134 + $0x8] sm:$0xff]
    %v137 = vld [vmem:[%s3] sm:$0x1]
    %v138 = vld [vmem:[%s4] sm:$0x1]
    %v139 = vld [vmem:[%s5] sm:$0x1]
    %vm140 = vcmask 130048
    %v142 = vsel %vm140, %v92, 0
    %v145 = vsel %vm140, %v93, 0
    %v148 = vsel %vm140, %v94, 0
    %v151 = vsel %vm140, %v95, 0
    %v154 = vsel %vm140, %v96, 0
    %v157 = vsel %vm140, %v97, 0
    %v160 = vsel %vm140, %v98, 0
    %v163 = vsel %vm140, %v99, 0
    %v166 = vsel %vm140, %v100, 0
    %v169 = vsel %vm140, %v101, 0
    %v172 = vsel %vm140, %v102, 0
    %v175 = vsel %vm140, %v103, 0
    %v178 = vsel %vm140, %v104, 0
    %v181 = vsel %vm140, %v105, 0
    %v184 = vsel %vm140, %v106, 0
    %v187 = vsel %vm140, %v107, 0
    %v190 = vsel %vm140, %v108, 0
    %v193 = vsel %vm140, %v109, 0
    %v196 = vsel %vm140, %v110, 0
    %v199 = vsel %vm140, %v111, 0
    %v202 = vsel %vm140, %v112, 0
    %v205 = vsel %vm140, %v113, 0
    %v208 = vsel %vm140, %v114, 0
    %v211 = vsel %vm140, %v115, 0
    %v214 = vsel %vm140, %v116, 0
    %v217 = vsel %vm140, %v117, 0
    %v220 = vsel %vm140, %v118, 0
    %v223 = vsel %vm140, %v119, 0
    %v226 = vsel %vm140, %v120, 0
    %v229 = vsel %vm140, %v121, 0
    %v232 = vsel %vm140, %v122, 0
    %v235 = vsel %vm140, %v91, 0
    %237 = vmatprep.subr.mxu0 0.0
    %238 = vmatpush1.msra.mxu0 %v126
    %239 = vmatprep.subr.mxu0 0.0
    %240 = vmatpush1.msra.mxu0 %v127
    %241 = vmatprep.subr.mxu0 0.0
    %242 = vmatpush1.msra.mxu0 0.0
    %243 = vmatprep.subr.mxu0 0.0
    %244 = vmatpush1.msra.mxu0 0.0
    %245 = vmatprep.subr.mxu0 0.0
    %246 = vmatpush1.msra.mxu0 0.0
    %247 = vmatprep.subr.mxu0 0.0
    %248 = vmatpush1.msra.mxu0 0.0
    %249 = vmatprep.subr.mxu0 0.0
    %250 = vmatpush1.msra.mxu0 0.0
    %251 = vmatprep.subr.mxu0 0.0
    %252 = vmatpush1.msra.mxu0 0.0
    %253 = vmatprep.subr.mxu0 0.0
    %254 = vmatpush1.msra.mxu0 0.0
    %255 = vmatprep.subr.mxu0 0.0
    %256 = vmatpush1.msra.mxu0 0.0
    %257 = vmatprep.subr.mxu0 0.0
    %258 = vmatpush1.msra.mxu0 0.0
    %259 = vmatprep.subr.mxu0 0.0
    %260 = vmatpush1.msra.mxu0 0.0
    %261 = vmatprep.subr.mxu0 0.0
    %262 = vmatpush1.msra.mxu0 0.0
    %263 = vmatprep.subr.mxu0 0.0
    %264 = vmatpush1.msra.mxu0 0.0
    %265 = vmatprep.subr.mxu0 0.0
    %266 = vmatpush1.msra.mxu0 0.0
    %267 = vmatprep.subr.mxu0 0.0
    %268 = vmatpush1.msra.mxu0 0.0
    %269 = vmatprep.subr.mxu0 0.0
    %270 = vmatpush1.msra.mxu0 0.0
    %271 = vmatprep.subr.mxu0 0.0
    %272 = vmatpush1.msra.mxu0 0.0
    %273 = vmatprep.subr.mxu0 0.0
    %274 = vmatpush1.msra.mxu0 0.0
    %275 = vmatprep.subr.mxu0 0.0
    %276 = vmatpush1.msra.mxu0 0.0
    %277 = vmatprep.subr.mxu0 0.0
    %278 = vmatpush1.msra.mxu0 0.0
    %279 = vmatprep.subr.mxu0 0.0
    %280 = vmatpush1.msra.mxu0 0.0
    %281 = vmatprep.subr.mxu0 0.0
    %282 = vmatpush1.msra.mxu0 0.0
    %283 = vmatprep.subr.mxu0 0.0
    %284 = vmatpush1.msra.mxu0 0.0
    %285 = vmatprep.subr.mxu0 0.0
    %286 = vmatpush1.msra.mxu0 0.0
    %287 = vmatprep.subr.mxu0 0.0
    %288 = vmatpush1.msra.mxu0 0.0
    %289 = vmatprep.subr.mxu0 0.0
    %290 = vmatpush1.msra.mxu0 0.0
    %291 = vmatprep.subr.mxu0 0.0
    %292 = vmatpush1.msra.mxu0 0.0
    %293 = vmatprep.subr.mxu0 0.0
    %294 = vmatpush1.msra.mxu0 0.0
    %295 = vmatprep.subr.mxu0 0.0
    %296 = vmatpush1.msra.mxu0 0.0
    %297 = vmatprep.subr.mxu0 0.0
    %298 = vmatpush1.msra.mxu0 0.0
    %299 = vmatprep.subr.mxu0 0.0
    %300 = vmatpush1.msra.mxu0 0.0
    %301 = vmatprep.mubr.f32.mxu0 0.0
    %302 = vmatmul.mubr.f32.gmra.mrb[0].mxu0 %v142
    %v303 = vpop.f32.mrb[0].mxu0
    %v304 = vadd.f32 0.0, %v303
    %v305 = vpop.f32.mrb[0].mxu0
    %306 = vmatprep.mubr.f32.mxu0 0.0
    %307 = vmatmul.mubr.f32.gmra.mrb[0].mxu0 %v145
    %v308 = vpop.f32.mrb[0].mxu0
    %v309 = vadd.f32 0.0, %v308
    %v310 = vpop.f32.mrb[0].mxu0
    %311 = vmatprep.mubr.f32.mxu0 0.0
    %312 = vmatmul.mubr.f32.gmra.mrb[0].mxu0 %v148
    %v313 = vpop.f32.mrb[0].mxu0
    %v314 = vadd.f32 0.0, %v313
    %v315 = vpop.f32.mrb[0].mxu0
    %316 = vmatprep.mubr.f32.mxu0 0.0
    %317 = vmatmul.mubr.f32.gmra.mrb[0].mxu0 %v151
    %v318 = vpop.f32.mrb[0].mxu0
    %v319 = vadd.f32 0.0, %v318
    %v320 = vpop.f32.mrb[0].mxu0
    %321 = vmatprep.mubr.f32.mxu0 0.0
    %322 = vmatmul.mubr.f32.gmra.mrb[0].mxu0 %v154
    %v323 = vpop.f32.mrb[0].mxu0
    %v324 = vadd.f32 0.0, %v323
    %v325 = vpop.f32.mrb[0].mxu0
    %326 = vmatprep.mubr.f32.mxu0 0.0
    %327 = vmatmul.mubr.f32.gmra.mrb[0].mxu0 %v157
    %v328 = vpop.f32.mrb[0].mxu0
    %v329 = vadd.f32 0.0, %v328
    %v330 = vpop.f32.mrb[0].mxu0
    %331 = vmatprep.mubr.f32.mxu0 0.0
    %332 = vmatmul.mubr.f32.gmra.mrb[0].mxu0 %v160
    %v333 = vpop.f32.mrb[0].mxu0
    %v334 = vadd.f32 0.0, %v333
    %v335 = vpop.f32.mrb[0].mxu0
    %336 = vmatprep.mubr.f32.mxu0 0.0
    %337 = vmatmul.mubr.f32.gmra.mrb[0].mxu0 %v163
    %v338 = vpop.f32.mrb[0].mxu0
    %v339 = vadd.f32 0.0, %v338
    %v340 = vpop.f32.mrb[0].mxu0
    %341 = vmatprep.mubr.f32.mxu0 0.0
    %342 = vmatmul.mubr.f32.gmra.mrb[0].mxu0 %v166
    %v343 = vpop.f32.mrb[0].mxu0
    %v344 = vadd.f32 0.0, %v343
    %v345 = vpop.f32.mrb[0].mxu0
    %346 = vmatprep.mubr.f32.mxu0 0.0
    %347 = vmatmul.mubr.f32.gmra.mrb[0].mxu0 %v169
    %v348 = vpop.f32.mrb[0].mxu0
    %v349 = vadd.f32 0.0, %v348
    %v350 = vpop.f32.mrb[0].mxu0
    %351 = vmatprep.mubr.f32.mxu0 0.0
    %352 = vmatmul.mubr.f32.gmra.mrb[0].mxu0 %v172
    %v353 = vpop.f32.mrb[0].mxu0
    %v354 = vadd.f32 0.0, %v353
    %v355 = vpop.f32.mrb[0].mxu0
    %356 = vmatprep.mubr.f32.mxu0 0.0
    %357 = vmatmul.mubr.f32.gmra.mrb[0].mxu0 %v175
    %v358 = vpop.f32.mrb[0].mxu0
    %v359 = vadd.f32 0.0, %v358
    %v360 = vpop.f32.mrb[0].mxu0
    %361 = vmatprep.mubr.f32.mxu0 0.0
    %362 = vmatmul.mubr.f32.gmra.mrb[0].mxu0 %v178
    %v363 = vpop.f32.mrb[0].mxu0
    %v364 = vadd.f32 0.0, %v363
    %v365 = vpop.f32.mrb[0].mxu0
    %366 = vmatprep.mubr.f32.mxu0 0.0
    %367 = vmatmul.mubr.f32.gmra.mrb[0].mxu0 %v181
    %v368 = vpop.f32.mrb[0].mxu0
    %v369 = vadd.f32 0.0, %v368
    %v370 = vpop.f32.mrb[0].mxu0
    %371 = vmatprep.mubr.f32.mxu0 0.0
    %372 = vmatmul.mubr.f32.gmra.mrb[0].mxu0 %v184
    %v373 = vpop.f32.mrb[0].mxu0
    %v374 = vadd.f32 0.0, %v373
    %v375 = vpop.f32.mrb[0].mxu0
    %376 = vmatprep.mubr.f32.mxu0 0.0
    %377 = vmatmul.mubr.f32.gmra.mrb[0].mxu0 %v187
    %v378 = vpop.f32.mrb[0].mxu0
    %v379 = vadd.f32 0.0, %v378
    %v380 = vpop.f32.mrb[0].mxu0
    %381 = vmatprep.mubr.f32.mxu0 0.0
    %382 = vmatmul.mubr.f32.gmra.mrb[0].mxu0 %v190
    %v383 = vpop.f32.mrb[0].mxu0
    %v384 = vadd.f32 0.0, %v383
    %v385 = vpop.f32.mrb[0].mxu0
    %386 = vmatprep.mubr.f32.mxu0 0.0
    %387 = vmatmul.mubr.f32.gmra.mrb[0].mxu0 %v193
    %v388 = vpop.f32.mrb[0].mxu0
    %v389 = vadd.f32 0.0, %v388
    %v390 = vpop.f32.mrb[0].mxu0
    %391 = vmatprep.mubr.f32.mxu0 0.0
    %392 = vmatmul.mubr.f32.gmra.mrb[0].mxu0 %v196
    %v393 = vpop.f32.mrb[0].mxu0
    %v394 = vadd.f32 0.0, %v393
    %v395 = vpop.f32.mrb[0].mxu0
    %396 = vmatprep.mubr.f32.mxu0 0.0
    %397 = vmatmul.mubr.f32.gmra.mrb[0].mxu0 %v199
    %v398 = vpop.f32.mrb[0].mxu0
    %v399 = vadd.f32 0.0, %v398
    %v400 = vpop.f32.mrb[0].mxu0
    %401 = vmatprep.mubr.f32.mxu0 0.0
    %402 = vmatmul.mubr.f32.gmra.mrb[0].mxu0 %v202
    %v403 = vpop.f32.mrb[0].mxu0
    %v404 = vadd.f32 0.0, %v403
    %v405 = vpop.f32.mrb[0].mxu0
    %406 = vmatprep.mubr.f32.mxu0 0.0
    %407 = vmatmul.mubr.f32.gmra.mrb[0].mxu0 %v205
    %v408 = vpop.f32.mrb[0].mxu0
    %v409 = vadd.f32 0.0, %v408
    %v410 = vpop.f32.mrb[0].mxu0
    %411 = vmatprep.mubr.f32.mxu0 0.0
    %412 = vmatmul.mubr.f32.gmra.mrb[0].mxu0 %v208
    %v413 = vpop.f32.mrb[0].mxu0
    %v414 = vadd.f32 0.0, %v413
    %v415 = vpop.f32.mrb[0].mxu0
    %416 = vmatprep.mubr.f32.mxu0 0.0
    %417 = vmatmul.mubr.f32.gmra.mrb[0].mxu0 %v211
    %v418 = vpop.f32.mrb[0].mxu0
    %v419 = vadd.f32 0.0, %v418
    %v420 = vpop.f32.mrb[0].mxu0
    %421 = vmatprep.mubr.f32.mxu0 0.0
    %422 = vmatmul.mubr.f32.gmra.mrb[0].mxu0 %v214
    %v423 = vpop.f32.mrb[0].mxu0
    %v424 = vadd.f32 0.0, %v423
    %v425 = vpop.f32.mrb[0].mxu0
    %426 = vmatprep.mubr.f32.mxu0 0.0
    %427 = vmatmul.mubr.f32.gmra.mrb[0].mxu0 %v217
    %v428 = vpop.f32.mrb[0].mxu0
    %v429 = vadd.f32 0.0, %v428
    %v430 = vpop.f32.mrb[0].mxu0
    %431 = vmatprep.mubr.f32.mxu0 0.0
    %432 = vmatmul.mubr.f32.gmra.mrb[0].mxu0 %v220
    %v433 = vpop.f32.mrb[0].mxu0
    %v434 = vadd.f32 0.0, %v433
    %v435 = vpop.f32.mrb[0].mxu0
    %436 = vmatprep.mubr.f32.mxu0 0.0
    %437 = vmatmul.mubr.f32.gmra.mrb[0].mxu0 %v223
    %v438 = vpop.f32.mrb[0].mxu0
    %v439 = vadd.f32 0.0, %v438
    %v440 = vpop.f32.mrb[0].mxu0
    %441 = vmatprep.mubr.f32.mxu0 0.0
    %442 = vmatmul.mubr.f32.gmra.mrb[0].mxu0 %v226
    %v443 = vpop.f32.mrb[0].mxu0
    %v444 = vadd.f32 0.0, %v443
    %v445 = vpop.f32.mrb[0].mxu0
    %446 = vmatprep.mubr.f32.mxu0 0.0
    %447 = vmatmul.mubr.f32.gmra.mrb[0].mxu0 %v229
    %v448 = vpop.f32.mrb[0].mxu0
    %v449 = vadd.f32 0.0, %v448
    %v450 = vpop.f32.mrb[0].mxu0
    %451 = vmatprep.mubr.f32.mxu0 0.0
    %452 = vmatmul.mubr.f32.gmra.mrb[0].mxu0 %v232
    %v453 = vpop.f32.mrb[0].mxu0
    %v454 = vadd.f32 0.0, %v453
    %v455 = vpop.f32.mrb[0].mxu0
    %456 = vmatprep.mubr.f32.mxu0 0.0
    %457 = vmatmul.mubr.f32.gmra.mrb[0].mxu0 %v235
    %v458 = vpop.f32.mrb[0].mxu0
    %v459 = vadd.f32 0.0, %v458
    %v460 = vpop.f32.mrb[0].mxu0
    %461 = vdwg.mxu0
    %462 = vmatprep.subr.mxu0 0.0
    %463 = vmatpush1.msra.mxu0 %v123
    %464 = vmatprep.subr.mxu0 0.0
    %465 = vmatpush1.msra.mxu0 %v124
    %466 = vmatprep.subr.mxu0 0.0
    %467 = vmatpush1.msra.mxu0 0.0
    %468 = vmatprep.subr.mxu0 0.0
    %469 = vmatpush1.msra.mxu0 0.0
    %470 = vmatprep.subr.mxu0 0.0
    %471 = vmatpush1.msra.mxu0 0.0
    %472 = vmatprep.subr.mxu0 0.0
    %473 = vmatpush1.msra.mxu0 0.0
    %474 = vmatprep.subr.mxu0 0.0
    %475 = vmatpush1.msra.mxu0 0.0
    %476 = vmatprep.subr.mxu0 0.0
    %477 = vmatpush1.msra.mxu0 0.0
    %478 = vmatprep.subr.mxu0 0.0
    %479 = vmatpush1.msra.mxu0 0.0
    %480 = vmatprep.subr.mxu0 0.0
    %481 = vmatpush1.msra.mxu0 0.0
    %482 = vmatprep.subr.mxu0 0.0
    %483 = vmatpush1.msra.mxu0 0.0
    %484 = vmatprep.subr.mxu0 0.0
    %485 = vmatpush1.msra.mxu0 0.0
    %486 = vmatprep.subr.mxu0 0.0
    %487 = vmatpush1.msra.mxu0 0.0
    %488 = vmatprep.subr.mxu0 0.0
    %489 = vmatpush1.msra.mxu0 0.0
    %490 = vmatprep.subr.mxu0 0.0
    %491 = vmatpush1.msra.mxu0 0.0
    %492 = vmatprep.subr.mxu0 0.0
    %493 = vmatpush1.msra.mxu0 0.0
    %494 = vmatprep.subr.mxu0 0.0
    %495 = vmatpush1.msra.mxu0 0.0
    %496 = vmatprep.subr.mxu0 0.0
    %497 = vmatpush1.msra.mxu0 0.0
    %498 = vmatprep.subr.mxu0 0.0
    %499 = vmatpush1.msra.mxu0 0.0
    %500 = vmatprep.subr.mxu0 0.0
    %501 = vmatpush1.msra.mxu0 0.0
    %502 = vmatprep.subr.mxu0 0.0
    %503 = vmatpush1.msra.mxu0 0.0
    %504 = vmatprep.subr.mxu0 0.0
    %505 = vmatpush1.msra.mxu0 0.0
    %506 = vmatprep.subr.mxu0 0.0
    %507 = vmatpush1.msra.mxu0 0.0
    %508 = vmatprep.subr.mxu0 0.0
    %509 = vmatpush1.msra.mxu0 0.0
    %510 = vmatprep.subr.mxu0 0.0
    %511 = vmatpush1.msra.mxu0 0.0
    %512 = vmatprep.subr.mxu0 0.0
    %513 = vmatpush1.msra.mxu0 0.0
    %514 = vmatprep.subr.mxu0 0.0
    %515 = vmatpush1.msra.mxu0 0.0
    %516 = vmatprep.subr.mxu0 0.0
    %517 = vmatpush1.msra.mxu0 0.0
    %518 = vmatprep.subr.mxu0 0.0
    %519 = vmatpush1.msra.mxu0 0.0
    %520 = vmatprep.subr.mxu0 0.0
    %521 = vmatpush1.msra.mxu0 0.0
    %522 = vmatprep.subr.mxu0 0.0
    %523 = vmatpush1.msra.mxu0 0.0
    %524 = vmatprep.subr.mxu0 0.0
    %525 = vmatpush1.msra.mxu0 0.0
    %526 = vmatprep.mubr.f32.mxu0 0.0
    %527 = vmatmul.mubr.f32.gmra.mrb[0].mxu0 %v235
    %v528 = vpop.f32.mrb[0].mxu0
    %v529 = vadd.f32 %v304, %v528
    %v530 = vpop.f32.mrb[0].mxu0
    %531 = vmatprep.mubr.f32.mxu0 0.0
    %532 = vmatmul.mubr.f32.gmra.mrb[0].mxu0 %v142
    %v533 = vpop.f32.mrb[0].mxu0
    %v534 = vadd.f32 %v309, %v533
    %v535 = vpop.f32.mrb[0].mxu0
    %536 = vmatprep.mubr.f32.mxu0 0.0
    %537 = vmatmul.mubr.f32.gmra.mrb[0].mxu0 %v145
    %v538 = vpop.f32.mrb[0].mxu0
    %v539 = vadd.f32 %v314, %v538
    %v540 = vpop.f32.mrb[0].mxu0
    %541 = vmatprep.mubr.f32.mxu0 0.0
    %542 = vmatmul.mubr.f32.gmra.mrb[0].mxu0 %v148
    %v543 = vpop.f32.mrb[0].mxu0
    %v544 = vadd.f32 %v319, %v543
    %v545 = vpop.f32.mrb[0].mxu0
    %546 = vmatprep.mubr.f32.mxu0 0.0
    %547 = vmatmul.mubr.f32.gmra.mrb[0].mxu0 %v151
    %v548 = vpop.f32.mrb[0].mxu0
    %v549 = vadd.f32 %v324, %v548
    %v550 = vpop.f32.mrb[0].mxu0
    %551 = vmatprep.mubr.f32.mxu0 0.0
    %552 = vmatmul.mubr.f32.gmra.mrb[0].mxu0 %v154
    %v553 = vpop.f32.mrb[0].mxu0
    %v554 = vadd.f32 %v329, %v553
    %v555 = vpop.f32.mrb[0].mxu0
    %556 = vmatprep.mubr.f32.mxu0 0.0
    %557 = vmatmul.mubr.f32.gmra.mrb[0].mxu0 %v157
    %v558 = vpop.f32.mrb[0].mxu0
    %v559 = vadd.f32 %v334, %v558
    %v560 = vpop.f32.mrb[0].mxu0
    %561 = vmatprep.mubr.f32.mxu0 0.0
    %562 = vmatmul.mubr.f32.gmra.mrb[0].mxu0 %v160
    %v563 = vpop.f32.mrb[0].mxu0
    %v564 = vadd.f32 %v339, %v563
    %v565 = vpop.f32.mrb[0].mxu0
    %566 = vmatprep.mubr.f32.mxu0 0.0
    %567 = vmatmul.mubr.f32.gmra.mrb[0].mxu0 %v163
    %v568 = vpop.f32.mrb[0].mxu0
    %v569 = vadd.f32 %v344, %v568
    %v570 = vpop.f32.mrb[0].mxu0
    %571 = vmatprep.mubr.f32.mxu0 0.0
    %572 = vmatmul.mubr.f32.gmra.mrb[0].mxu0 %v166
    %v573 = vpop.f32.mrb[0].mxu0
    %v574 = vadd.f32 %v349, %v573
    %v575 = vpop.f32.mrb[0].mxu0
    %576 = vmatprep.mubr.f32.mxu0 0.0
    %577 = vmatmul.mubr.f32.gmra.mrb[0].mxu0 %v169
    %v578 = vpop.f32.mrb[0].mxu0
    %v579 = vadd.f32 %v354, %v578
    %v580 = vpop.f32.mrb[0].mxu0
    %581 = vmatprep.mubr.f32.mxu0 0.0
    %582 = vmatmul.mubr.f32.gmra.mrb[0].mxu0 %v172
    %v583 = vpop.f32.mrb[0].mxu0
    %v584 = vadd.f32 %v359, %v583
    %v585 = vpop.f32.mrb[0].mxu0
    %586 = vmatprep.mubr.f32.mxu0 0.0
    %587 = vmatmul.mubr.f32.gmra.mrb[0].mxu0 %v175
    %v588 = vpop.f32.mrb[0].mxu0
    %v589 = vadd.f32 %v364, %v588
    %v590 = vpop.f32.mrb[0].mxu0
    %591 = vmatprep.mubr.f32.mxu0 0.0
    %592 = vmatmul.mubr.f32.gmra.mrb[0].mxu0 %v178
    %v593 = vpop.f32.mrb[0].mxu0
    %v594 = vadd.f32 %v369, %v593
    %v595 = vpop.f32.mrb[0].mxu0
    %596 = vmatprep.mubr.f32.mxu0 0.0
    %597 = vmatmul.mubr.f32.gmra.mrb[0].mxu0 %v181
    %v598 = vpop.f32.mrb[0].mxu0
    %v599 = vadd.f32 %v374, %v598
    %v600 = vpop.f32.mrb[0].mxu0
    %601 = vmatprep.mubr.f32.mxu0 0.0
    %602 = vmatmul.mubr.f32.gmra.mrb[0].mxu0 %v184
    %v603 = vpop.f32.mrb[0].mxu0
    %v604 = vadd.f32 %v379, %v603
    %v605 = vpop.f32.mrb[0].mxu0
    %606 = vmatprep.mubr.f32.mxu0 0.0
    %607 = vmatmul.mubr.f32.gmra.mrb[0].mxu0 %v187
    %v608 = vpop.f32.mrb[0].mxu0
    %v609 = vadd.f32 %v384, %v608
    %v610 = vpop.f32.mrb[0].mxu0
    %611 = vmatprep.mubr.f32.mxu0 0.0
    %612 = vmatmul.mubr.f32.gmra.mrb[0].mxu0 %v190
    %v613 = vpop.f32.mrb[0].mxu0
    %v614 = vadd.f32 %v389, %v613
    %v615 = vpop.f32.mrb[0].mxu0
    %616 = vmatprep.mubr.f32.mxu0 0.0
    %617 = vmatmul.mubr.f32.gmra.mrb[0].mxu0 %v193
    %v618 = vpop.f32.mrb[0].mxu0
    %v619 = vadd.f32 %v394, %v618
    %v620 = vpop.f32.mrb[0].mxu0
    %621 = vmatprep.mubr.f32.mxu0 0.0
    %622 = vmatmul.mubr.f32.gmra.mrb[0].mxu0 %v196
    %v623 = vpop.f32.mrb[0].mxu0
    %v624 = vadd.f32 %v399, %v623
    %v625 = vpop.f32.mrb[0].mxu0
    %626 = vmatprep.mubr.f32.mxu0 0.0
    %627 = vmatmul.mubr.f32.gmra.mrb[0].mxu0 %v199
    %v628 = vpop.f32.mrb[0].mxu0
    %v629 = vadd.f32 %v404, %v628
    %v630 = vpop.f32.mrb[0].mxu0
    %631 = vmatprep.mubr.f32.mxu0 0.0
    %632 = vmatmul.mubr.f32.gmra.mrb[0].mxu0 %v202
    %v633 = vpop.f32.mrb[0].mxu0
    %v634 = vadd.f32 %v409, %v633
    %v635 = vpop.f32.mrb[0].mxu0
    %636 = vmatprep.mubr.f32.mxu0 0.0
    %637 = vmatmul.mubr.f32.gmra.mrb[0].mxu0 %v205
    %v638 = vpop.f32.mrb[0].mxu0
    %v639 = vadd.f32 %v414, %v638
    %v640 = vpop.f32.mrb[0].mxu0
    %641 = vmatprep.mubr.f32.mxu0 0.0
    %642 = vmatmul.mubr.f32.gmra.mrb[0].mxu0 %v208
    %v643 = vpop.f32.mrb[0].mxu0
    %v644 = vadd.f32 %v419, %v643
    %v645 = vpop.f32.mrb[0].mxu0
    %646 = vmatprep.mubr.f32.mxu0 0.0
    %647 = vmatmul.mubr.f32.gmra.mrb[0].mxu0 %v211
    %v648 = vpop.f32.mrb[0].mxu0
    %v649 = vadd.f32 %v424, %v648
    %v650 = vpop.f32.mrb[0].mxu0
    %651 = vmatprep.mubr.f32.mxu0 0.0
    %652 = vmatmul.mubr.f32.gmra.mrb[0].mxu0 %v214
    %v653 = vpop.f32.mrb[0].mxu0
    %v654 = vadd.f32 %v429, %v653
    %v655 = vpop.f32.mrb[0].mxu0
    %656 = vmatprep.mubr.f32.mxu0 0.0
    %657 = vmatmul.mubr.f32.gmra.mrb[0].mxu0 %v217
    %v658 = vpop.f32.mrb[0].mxu0
    %v659 = vadd.f32 %v434, %v658
    %v660 = vpop.f32.mrb[0].mxu0
    %661 = vmatprep.mubr.f32.mxu0 0.0
    %662 = vmatmul.mubr.f32.gmra.mrb[0].mxu0 %v220
    %v663 = vpop.f32.mrb[0].mxu0
    %v664 = vadd.f32 %v439, %v663
    %v665 = vpop.f32.mrb[0].mxu0
    %666 = vmatprep.mubr.f32.mxu0 0.0
    %667 = vmatmul.mubr.f32.gmra.mrb[0].mxu0 %v223
    %v668 = vpop.f32.mrb[0].mxu0
    %v669 = vadd.f32 %v444, %v668
    %v670 = vpop.f32.mrb[0].mxu0
    %671 = vmatprep.mubr.f32.mxu0 0.0
    %672 = vmatmul.mubr.f32.gmra.mrb[0].mxu0 %v226
    %v673 = vpop.f32.mrb[0].mxu0
    %v674 = vadd.f32 %v449, %v673
    %v675 = vpop.f32.mrb[0].mxu0
    %676 = vmatprep.mubr.f32.mxu0 0.0
    %677 = vmatmul.mubr.f32.gmra.mrb[0].mxu0 %v229
    %v678 = vpop.f32.mrb[0].mxu0
    %v679 = vadd.f32 %v454, %v678
    %v680 = vpop.f32.mrb[0].mxu0
    %681 = vmatprep.mubr.f32.mxu0 0.0
    %682 = vmatmul.mubr.f32.gmra.mrb[0].mxu0 %v232
    %v683 = vpop.f32.mrb[0].mxu0
    %v684 = vadd.f32 %v459, %v683
    %v685 = vpop.f32.mrb[0].mxu0
    %686 = vdwg.mxu0
    %687 = vmatprep.subr.mxu0 0.0
    %688 = vmatpush1.msra.mxu0 %v129
    %689 = vmatprep.subr.mxu0 0.0
    %690 = vmatpush1.msra.mxu0 %v130
    %691 = vmatprep.subr.mxu0 0.0
    %692 = vmatpush1.msra.mxu0 0.0
    %693 = vmatprep.subr.mxu0 0.0
    %694 = vmatpush1.msra.mxu0 0.0
    %695 = vmatprep.subr.mxu0 0.0
    %696 = vmatpush1.msra.mxu0 0.0
    %697 = vmatprep.subr.mxu0 0.0
    %698 = vmatpush1.msra.mxu0 0.0
    %699 = vmatprep.subr.mxu0 0.0
    %700 = vmatpush1.msra.mxu0 0.0
    %701 = vmatprep.subr.mxu0 0.0
    %702 = vmatpush1.msra.mxu0 0.0
    %703 = vmatprep.subr.mxu0 0.0
    %704 = vmatpush1.msra.mxu0 0.0
    %705 = vmatprep.subr.mxu0 0.0
    %706 = vmatpush1.msra.mxu0 0.0
    %707 = vmatprep.subr.mxu0 0.0
    %708 = vmatpush1.msra.mxu0 0.0
    %709 = vmatprep.subr.mxu0 0.0
    %710 = vmatpush1.msra.mxu0 0.0
    %711 = vmatprep.subr.mxu0 0.0
    %712 = vmatpush1.msra.mxu0 0.0
    %713 = vmatprep.subr.mxu0 0.0
    %714 = vmatpush1.msra.mxu0 0.0
    %715 = vmatprep.subr.mxu0 0.0
    %716 = vmatpush1.msra.mxu0 0.0
    %717 = vmatprep.subr.mxu0 0.0
    %718 = vmatpush1.msra.mxu0 0.0
    %719 = vmatprep.subr.mxu0 0.0
    %720 = vmatpush1.msra.mxu0 0.0
    %721 = vmatprep.subr.mxu0 0.0
    %722 = vmatpush1.msra.mxu0 0.0
    %723 = vmatprep.subr.mxu0 0.0
    %724 = vmatpush1.msra.mxu0 0.0
    %725 = vmatprep.subr.mxu0 0.0
    %726 = vmatpush1.msra.mxu0 0.0
    %727 = vmatprep.subr.mxu0 0.0
    %728 = vmatpush1.msra.mxu0 0.0
    %729 = vmatprep.subr.mxu0 0.0
    %730 = vmatpush1.msra.mxu0 0.0
    %731 = vmatprep.subr.mxu0 0.0
    %732 = vmatpush1.msra.mxu0 0.0
    %733 = vmatprep.subr.mxu0 0.0
    %734 = vmatpush1.msra.mxu0 0.0
    %735 = vmatprep.subr.mxu0 0.0
    %736 = vmatpush1.msra.mxu0 0.0
    %737 = vmatprep.subr.mxu0 0.0
    %738 = vmatpush1.msra.mxu0 0.0
    %739 = vmatprep.subr.mxu0 0.0
    %740 = vmatpush1.msra.mxu0 0.0
    %741 = vmatprep.subr.mxu0 0.0
    %742 = vmatpush1.msra.mxu0 0.0
    %743 = vmatprep.subr.mxu0 0.0
    %744 = vmatpush1.msra.mxu0 0.0
    %745 = vmatprep.subr.mxu0 0.0
    %746 = vmatpush1.msra.mxu0 0.0
    %747 = vmatprep.subr.mxu0 0.0
    %748 = vmatpush1.msra.mxu0 0.0
    %749 = vmatprep.subr.mxu0 0.0
    %750 = vmatpush1.msra.mxu0 0.0
    %751 = vmatprep.mubr.f32.mxu0 0.0
    %752 = vmatmul.mubr.f32.gmra.mrb[0].mxu0 %v145
    %v753 = vpop.f32.mrb[0].mxu0
    %v754 = vadd.f32 0.0, %v753
    %v755 = vpop.f32.mrb[0].mxu0
    %756 = vmatprep.mubr.f32.mxu0 0.0
    %757 = vmatmul.mubr.f32.gmra.mrb[0].mxu0 %v148
    %v758 = vpop.f32.mrb[0].mxu0
    %v759 = vadd.f32 0.0, %v758
    %v760 = vpop.f32.mrb[0].mxu0
    %761 = vmatprep.mubr.f32.mxu0 0.0
    %762 = vmatmul.mubr.f32.gmra.mrb[0].mxu0 %v151
    %v763 = vpop.f32.mrb[0].mxu0
    %v764 = vadd.f32 0.0, %v763
    %v765 = vpop.f32.mrb[0].mxu0
    %766 = vmatprep.mubr.f32.mxu0 0.0
    %767 = vmatmul.mubr.f32.gmra.mrb[0].mxu0 %v154
    %v768 = vpop.f32.mrb[0].mxu0
    %v769 = vadd.f32 0.0, %v768
    %v770 = vpop.f32.mrb[0].mxu0
    %771 = vmatprep.mubr.f32.mxu0 0.0
    %772 = vmatmul.mubr.f32.gmra.mrb[0].mxu0 %v157
    %v773 = vpop.f32.mrb[0].mxu0
    %v774 = vadd.f32 0.0, %v773
    %v775 = vpop.f32.mrb[0].mxu0
    %776 = vmatprep.mubr.f32.mxu0 0.0
    %777 = vmatmul.mubr.f32.gmra.mrb[0].mxu0 %v160
    %v778 = vpop.f32.mrb[0].mxu0
    %v779 = vadd.f32 0.0, %v778
    %v780 = vpop.f32.mrb[0].mxu0
    %781 = vmatprep.mubr.f32.mxu0 0.0
    %782 = vmatmul.mubr.f32.gmra.mrb[0].mxu0 %v163
    %v783 = vpop.f32.mrb[0].mxu0
    %v784 = vadd.f32 0.0, %v783
    %v785 = vpop.f32.mrb[0].mxu0
    %786 = vmatprep.mubr.f32.mxu0 0.0
    %787 = vmatmul.mubr.f32.gmra.mrb[0].mxu0 %v166
    %v788 = vpop.f32.mrb[0].mxu0
    %v789 = vadd.f32 0.0, %v788
    %v790 = vpop.f32.mrb[0].mxu0
    %791 = vmatprep.mubr.f32.mxu0 0.0
    %792 = vmatmul.mubr.f32.gmra.mrb[0].mxu0 %v169
    %v793 = vpop.f32.mrb[0].mxu0
    %v794 = vadd.f32 0.0, %v793
    %v795 = vpop.f32.mrb[0].mxu0
    %796 = vmatprep.mubr.f32.mxu0 0.0
    %797 = vmatmul.mubr.f32.gmra.mrb[0].mxu0 %v172
    %v798 = vpop.f32.mrb[0].mxu0
    %v799 = vadd.f32 0.0, %v798
    %v800 = vpop.f32.mrb[0].mxu0
    %801 = vmatprep.mubr.f32.mxu0 0.0
    %802 = vmatmul.mubr.f32.gmra.mrb[0].mxu0 %v175
    %v803 = vpop.f32.mrb[0].mxu0
    %v804 = vadd.f32 0.0, %v803
    %v805 = vpop.f32.mrb[0].mxu0
    %806 = vmatprep.mubr.f32.mxu0 0.0
    %807 = vmatmul.mubr.f32.gmra.mrb[0].mxu0 %v178
    %v808 = vpop.f32.mrb[0].mxu0
    %v809 = vadd.f32 0.0, %v808
    %v810 = vpop.f32.mrb[0].mxu0
    %811 = vmatprep.mubr.f32.mxu0 0.0
    %812 = vmatmul.mubr.f32.gmra.mrb[0].mxu0 %v181
    %v813 = vpop.f32.mrb[0].mxu0
    %v814 = vadd.f32 0.0, %v813
    %v815 = vpop.f32.mrb[0].mxu0
    %816 = vmatprep.mubr.f32.mxu0 0.0
    %817 = vmatmul.mubr.f32.gmra.mrb[0].mxu0 %v184
    %v818 = vpop.f32.mrb[0].mxu0
    %v819 = vadd.f32 0.0, %v818
    %v820 = vpop.f32.mrb[0].mxu0
    %821 = vmatprep.mubr.f32.mxu0 0.0
    %822 = vmatmul.mubr.f32.gmra.mrb[0].mxu0 %v187
    %v823 = vpop.f32.mrb[0].mxu0
    %v824 = vadd.f32 0.0, %v823
    %v825 = vpop.f32.mrb[0].mxu0
    %826 = vmatprep.mubr.f32.mxu0 0.0
    %827 = vmatmul.mubr.f32.gmra.mrb[0].mxu0 %v190
    %v828 = vpop.f32.mrb[0].mxu0
    %v829 = vadd.f32 0.0, %v828
    %v830 = vpop.f32.mrb[0].mxu0
    %831 = vmatprep.mubr.f32.mxu0 0.0
    %832 = vmatmul.mubr.f32.gmra.mrb[0].mxu0 %v193
    %v833 = vpop.f32.mrb[0].mxu0
    %v834 = vadd.f32 0.0, %v833
    %v835 = vpop.f32.mrb[0].mxu0
    %836 = vmatprep.mubr.f32.mxu0 0.0
    %837 = vmatmul.mubr.f32.gmra.mrb[0].mxu0 %v196
    %v838 = vpop.f32.mrb[0].mxu0
    %v839 = vadd.f32 0.0, %v838
    %v840 = vpop.f32.mrb[0].mxu0
    %841 = vmatprep.mubr.f32.mxu0 0.0
    %842 = vmatmul.mubr.f32.gmra.mrb[0].mxu0 %v199
    %v843 = vpop.f32.mrb[0].mxu0
    %v844 = vadd.f32 0.0, %v843
    %v845 = vpop.f32.mrb[0].mxu0
    %846 = vmatprep.mubr.f32.mxu0 0.0
    %847 = vmatmul.mubr.f32.gmra.mrb[0].mxu0 %v202
    %v848 = vpop.f32.mrb[0].mxu0
    %v849 = vadd.f32 0.0, %v848
    %v850 = vpop.f32.mrb[0].mxu0
    %851 = vmatprep.mubr.f32.mxu0 0.0
    %852 = vmatmul.mubr.f32.gmra.mrb[0].mxu0 %v205
    %v853 = vpop.f32.mrb[0].mxu0
    %v854 = vadd.f32 0.0, %v853
    %v855 = vpop.f32.mrb[0].mxu0
    %856 = vmatprep.mubr.f32.mxu0 0.0
    %857 = vmatmul.mubr.f32.gmra.mrb[0].mxu0 %v208
    %v858 = vpop.f32.mrb[0].mxu0
    %v859 = vadd.f32 0.0, %v858
    %v860 = vpop.f32.mrb[0].mxu0
    %861 = vmatprep.mubr.f32.mxu0 0.0
    %862 = vmatmul.mubr.f32.gmra.mrb[0].mxu0 %v211
    %v863 = vpop.f32.mrb[0].mxu0
    %v864 = vadd.f32 0.0, %v863
    %v865 = vpop.f32.mrb[0].mxu0
    %866 = vmatprep.mubr.f32.mxu0 0.0
    %867 = vmatmul.mubr.f32.gmra.mrb[0].mxu0 %v214
    %v868 = vpop.f32.mrb[0].mxu0
    %v869 = vadd.f32 0.0, %v868
    %v870 = vpop.f32.mrb[0].mxu0
    %871 = vmatprep.mubr.f32.mxu0 0.0
    %872 = vmatmul.mubr.f32.gmra.mrb[0].mxu0 %v217
    %v873 = vpop.f32.mrb[0].mxu0
    %v874 = vadd.f32 0.0, %v873
    %v875 = vpop.f32.mrb[0].mxu0
    %876 = vmatprep.mubr.f32.mxu0 0.0
    %877 = vmatmul.mubr.f32.gmra.mrb[0].mxu0 %v220
    %v878 = vpop.f32.mrb[0].mxu0
    %v879 = vadd.f32 0.0, %v878
    %v880 = vpop.f32.mrb[0].mxu0
    %881 = vmatprep.mubr.f32.mxu0 0.0
    %882 = vmatmul.mubr.f32.gmra.mrb[0].mxu0 %v223
    %v883 = vpop.f32.mrb[0].mxu0
    %v884 = vadd.f32 0.0, %v883
    %v885 = vpop.f32.mrb[0].mxu0
    %886 = vmatprep.mubr.f32.mxu0 0.0
    %887 = vmatmul.mubr.f32.gmra.mrb[0].mxu0 %v226
    %v888 = vpop.f32.mrb[0].mxu0
    %v889 = vadd.f32 0.0, %v888
    %v890 = vpop.f32.mrb[0].mxu0
    %891 = vmatprep.mubr.f32.mxu0 0.0
    %892 = vmatmul.mubr.f32.gmra.mrb[0].mxu0 %v229
    %v893 = vpop.f32.mrb[0].mxu0
    %v894 = vadd.f32 0.0, %v893
    %v895 = vpop.f32.mrb[0].mxu0
    %896 = vmatprep.mubr.f32.mxu0 0.0
    %897 = vmatmul.mubr.f32.gmra.mrb[0].mxu0 %v232
    %v898 = vpop.f32.mrb[0].mxu0
    %v899 = vadd.f32 0.0, %v898
    %v900 = vpop.f32.mrb[0].mxu0
    %901 = vmatprep.mubr.f32.mxu0 0.0
    %902 = vmatmul.mubr.f32.gmra.mrb[0].mxu0 %v235
    %v903 = vpop.f32.mrb[0].mxu0
    %v904 = vadd.f32 0.0, %v903
    %v905 = vpop.f32.mrb[0].mxu0
    %906 = vmatprep.mubr.f32.mxu0 0.0
    %907 = vmatmul.mubr.f32.gmra.mrb[0].mxu0 %v142
    %v908 = vpop.f32.mrb[0].mxu0
    %v909 = vadd.f32 0.0, %v908
    %v910 = vpop.f32.mrb[0].mxu0
    %911 = vdwg.mxu0
    %v912 = vadd.f32 %v529, %v754
    %v913 = vadd.f32 %v534, %v759
    %v914 = vadd.f32 %v539, %v764
    %v915 = vadd.f32 %v544, %v769
    %v916 = vadd.f32 %v549, %v774
    %v917 = vadd.f32 %v554, %v779
    %v918 = vadd.f32 %v559, %v784
    %v919 = vadd.f32 %v564, %v789
    %v920 = vadd.f32 %v569, %v794
    %v921 = vadd.f32 %v574, %v799
    %v922 = vadd.f32 %v579, %v804
    %v923 = vadd.f32 %v584, %v809
    %v924 = vadd.f32 %v589, %v814
    %v925 = vadd.f32 %v594, %v819
    %v926 = vadd.f32 %v599, %v824
    %v927 = vadd.f32 %v604, %v829
    %v928 = vadd.f32 %v609, %v834
    %v929 = vadd.f32 %v614, %v839
    %v930 = vadd.f32 %v619, %v844
    %v931 = vadd.f32 %v624, %v849
    %v932 = vadd.f32 %v629, %v854
    %v933 = vadd.f32 %v634, %v859
    %v934 = vadd.f32 %v639, %v864
    %v935 = vadd.f32 %v644, %v869
    %v936 = vadd.f32 %v649, %v874
    %v937 = vadd.f32 %v654, %v879
    %v938 = vadd.f32 %v659, %v884
    %v939 = vadd.f32 %v664, %v889
    %v940 = vadd.f32 %v669, %v894
    %v941 = vadd.f32 %v674, %v899
    %v942 = vadd.f32 %v679, %v904
    %v943 = vadd.f32 %v684, %v909
    %944 = vmatprep.subr.mxu0 0.0
    %945 = vmatpush1.msra.mxu0 %v132
    %946 = vmatprep.subr.mxu0 0.0
    %947 = vmatpush1.msra.mxu0 %v133
    %948 = vmatprep.subr.mxu0 0.0
    %949 = vmatpush1.msra.mxu0 0.0
    %950 = vmatprep.subr.mxu0 0.0
    %951 = vmatpush1.msra.mxu0 0.0
    %952 = vmatprep.subr.mxu0 0.0
    %953 = vmatpush1.msra.mxu0 0.0
    %954 = vmatprep.subr.mxu0 0.0
    %955 = vmatpush1.msra.mxu0 0.0
    %956 = vmatprep.subr.mxu0 0.0
    %957 = vmatpush1.msra.mxu0 0.0
    %958 = vmatprep.subr.mxu0 0.0
    %959 = vmatpush1.msra.mxu0 0.0
    %960 = vmatprep.subr.mxu0 0.0
    %961 = vmatpush1.msra.mxu0 0.0
    %962 = vmatprep.subr.mxu0 0.0
    %963 = vmatpush1.msra.mxu0 0.0
    %964 = vmatprep.subr.mxu0 0.0
    %965 = vmatpush1.msra.mxu0 0.0
    %966 = vmatprep.subr.mxu0 0.0
    %967 = vmatpush1.msra.mxu0 0.0
    %968 = vmatprep.subr.mxu0 0.0
    %969 = vmatpush1.msra.mxu0 0.0
    %970 = vmatprep.subr.mxu0 0.0
    %971 = vmatpush1.msra.mxu0 0.0
    %972 = vmatprep.subr.mxu0 0.0
    %973 = vmatpush1.msra.mxu0 0.0
    %974 = vmatprep.subr.mxu0 0.0
    %975 = vmatpush1.msra.mxu0 0.0
    %976 = vmatprep.subr.mxu0 0.0
    %977 = vmatpush1.msra.mxu0 0.0
    %978 = vmatprep.subr.mxu0 0.0
    %979 = vmatpush1.msra.mxu0 0.0
    %980 = vmatprep.subr.mxu0 0.0
    %981 = vmatpush1.msra.mxu0 0.0
    %982 = vmatprep.subr.mxu0 0.0
    %983 = vmatpush1.msra.mxu0 0.0
    %984 = vmatprep.subr.mxu0 0.0
    %985 = vmatpush1.msra.mxu0 0.0
    %986 = vmatprep.subr.mxu0 0.0
    %987 = vmatpush1.msra.mxu0 0.0
    %988 = vmatprep.subr.mxu0 0.0
    %989 = vmatpush1.msra.mxu0 0.0
    %990 = vmatprep.subr.mxu0 0.0
    %991 = vmatpush1.msra.mxu0 0.0
    %992 = vmatprep.subr.mxu0 0.0
    %993 = vmatpush1.msra.mxu0 0.0
    %994 = vmatprep.subr.mxu0 0.0
    %995 = vmatpush1.msra.mxu0 0.0
    %996 = vmatprep.subr.mxu0 0.0
    %997 = vmatpush1.msra.mxu0 0.0
    %998 = vmatprep.subr.mxu0 0.0
    %999 = vmatpush1.msra.mxu0 0.0
    %1000 = vmatprep.subr.mxu0 0.0
    %1001 = vmatpush1.msra.mxu0 0.0
    %1002 = vmatprep.subr.mxu0 0.0
    %1003 = vmatpush1.msra.mxu0 0.0
    %1004 = vmatprep.subr.mxu0 0.0
    %1005 = vmatpush1.msra.mxu0 0.0
    %1006 = vmatprep.subr.mxu0 0.0
    %1007 = vmatpush1.msra.mxu0 0.0
    %1008 = vmatprep.mubr.f32.mxu0 0.0
    %1009 = vmatmul.mubr.f32.gmra.mrb[0].mxu0 %v148
    %v1010 = vpop.f32.mrb[0].mxu0
    %v1011 = vadd.f32 0.0, %v1010
    %v1012 = vpop.f32.mrb[0].mxu0
    %1013 = vmatprep.mubr.f32.mxu0 0.0
    %1014 = vmatmul.mubr.f32.gmra.mrb[0].mxu0 %v151
    %v1015 = vpop.f32.mrb[0].mxu0
    %v1016 = vadd.f32 0.0, %v1015
    %v1017 = vpop.f32.mrb[0].mxu0
    %1018 = vmatprep.mubr.f32.mxu0 0.0
    %1019 = vmatmul.mubr.f32.gmra.mrb[0].mxu0 %v154
    %v1020 = vpop.f32.mrb[0].mxu0
    %v1021 = vadd.f32 0.0, %v1020
    %v1022 = vpop.f32.mrb[0].mxu0
    %1023 = vmatprep.mubr.f32.mxu0 0.0
    %1024 = vmatmul.mubr.f32.gmra.mrb[0].mxu0 %v157
    %v1025 = vpop.f32.mrb[0].mxu0
    %v1026 = vadd.f32 0.0, %v1025
    %v1027 = vpop.f32.mrb[0].mxu0
    %1028 = vmatprep.mubr.f32.mxu0 0.0
    %1029 = vmatmul.mubr.f32.gmra.mrb[0].mxu0 %v160
    %v1030 = vpop.f32.mrb[0].mxu0
    %v1031 = vadd.f32 0.0, %v1030
    %v1032 = vpop.f32.mrb[0].mxu0
    %1033 = vmatprep.mubr.f32.mxu0 0.0
    %1034 = vmatmul.mubr.f32.gmra.mrb[0].mxu0 %v163
    %v1035 = vpop.f32.mrb[0].mxu0
    %v1036 = vadd.f32 0.0, %v1035
    %v1037 = vpop.f32.mrb[0].mxu0
    %1038 = vmatprep.mubr.f32.mxu0 0.0
    %1039 = vmatmul.mubr.f32.gmra.mrb[0].mxu0 %v166
    %v1040 = vpop.f32.mrb[0].mxu0
    %v1041 = vadd.f32 0.0, %v1040
    %v1042 = vpop.f32.mrb[0].mxu0
    %1043 = vmatprep.mubr.f32.mxu0 0.0
    %1044 = vmatmul.mubr.f32.gmra.mrb[0].mxu0 %v169
    %v1045 = vpop.f32.mrb[0].mxu0
    %v1046 = vadd.f32 0.0, %v1045
    %v1047 = vpop.f32.mrb[0].mxu0
    %1048 = vmatprep.mubr.f32.mxu0 0.0
    %1049 = vmatmul.mubr.f32.gmra.mrb[0].mxu0 %v172
    %v1050 = vpop.f32.mrb[0].mxu0
    %v1051 = vadd.f32 0.0, %v1050
    %v1052 = vpop.f32.mrb[0].mxu0
    %1053 = vmatprep.mubr.f32.mxu0 0.0
    %1054 = vmatmul.mubr.f32.gmra.mrb[0].mxu0 %v175
    %v1055 = vpop.f32.mrb[0].mxu0
    %v1056 = vadd.f32 0.0, %v1055
    %v1057 = vpop.f32.mrb[0].mxu0
    %1058 = vmatprep.mubr.f32.mxu0 0.0
    %1059 = vmatmul.mubr.f32.gmra.mrb[0].mxu0 %v178
    %v1060 = vpop.f32.mrb[0].mxu0
    %v1061 = vadd.f32 0.0, %v1060
    %v1062 = vpop.f32.mrb[0].mxu0
    %1063 = vmatprep.mubr.f32.mxu0 0.0
    %1064 = vmatmul.mubr.f32.gmra.mrb[0].mxu0 %v181
    %v1065 = vpop.f32.mrb[0].mxu0
    %v1066 = vadd.f32 0.0, %v1065
    %v1067 = vpop.f32.mrb[0].mxu0
    %1068 = vmatprep.mubr.f32.mxu0 0.0
    %1069 = vmatmul.mubr.f32.gmra.mrb[0].mxu0 %v184
    %v1070 = vpop.f32.mrb[0].mxu0
    %v1071 = vadd.f32 0.0, %v1070
    %v1072 = vpop.f32.mrb[0].mxu0
    %1073 = vmatprep.mubr.f32.mxu0 0.0
    %1074 = vmatmul.mubr.f32.gmra.mrb[0].mxu0 %v187
    %v1075 = vpop.f32.mrb[0].mxu0
    %v1076 = vadd.f32 0.0, %v1075
    %v1077 = vpop.f32.mrb[0].mxu0
    %1078 = vmatprep.mubr.f32.mxu0 0.0
    %1079 = vmatmul.mubr.f32.gmra.mrb[0].mxu0 %v190
    %v1080 = vpop.f32.mrb[0].mxu0
    %v1081 = vadd.f32 0.0, %v1080
    %v1082 = vpop.f32.mrb[0].mxu0
    %1083 = vmatprep.mubr.f32.mxu0 0.0
    %1084 = vmatmul.mubr.f32.gmra.mrb[0].mxu0 %v193
    %v1085 = vpop.f32.mrb[0].mxu0
    %v1086 = vadd.f32 0.0, %v1085
    %v1087 = vpop.f32.mrb[0].mxu0
    %1088 = vmatprep.mubr.f32.mxu0 0.0
    %1089 = vmatmul.mubr.f32.gmra.mrb[0].mxu0 %v196
    %v1090 = vpop.f32.mrb[0].mxu0
    %v1091 = vadd.f32 0.0, %v1090
    %v1092 = vpop.f32.mrb[0].mxu0
    %1093 = vmatprep.mubr.f32.mxu0 0.0
    %1094 = vmatmul.mubr.f32.gmra.mrb[0].mxu0 %v199
    %v1095 = vpop.f32.mrb[0].mxu0
    %v1096 = vadd.f32 0.0, %v1095
    %v1097 = vpop.f32.mrb[0].mxu0
    %1098 = vmatprep.mubr.f32.mxu0 0.0
    %1099 = vmatmul.mubr.f32.gmra.mrb[0].mxu0 %v202
    %v1100 = vpop.f32.mrb[0].mxu0
    %v1101 = vadd.f32 0.0, %v1100
    %v1102 = vpop.f32.mrb[0].mxu0
    %1103 = vmatprep.mubr.f32.mxu0 0.0
    %1104 = vmatmul.mubr.f32.gmra.mrb[0].mxu0 %v205
    %v1105 = vpop.f32.mrb[0].mxu0
    %v1106 = vadd.f32 0.0, %v1105
    %v1107 = vpop.f32.mrb[0].mxu0
    %1108 = vmatprep.mubr.f32.mxu0 0.0
    %1109 = vmatmul.mubr.f32.gmra.mrb[0].mxu0 %v208
    %v1110 = vpop.f32.mrb[0].mxu0
    %v1111 = vadd.f32 0.0, %v1110
    %v1112 = vpop.f32.mrb[0].mxu0
    %1113 = vmatprep.mubr.f32.mxu0 0.0
    %1114 = vmatmul.mubr.f32.gmra.mrb[0].mxu0 %v211
    %v1115 = vpop.f32.mrb[0].mxu0
    %v1116 = vadd.f32 0.0, %v1115
    %v1117 = vpop.f32.mrb[0].mxu0
    %1118 = vmatprep.mubr.f32.mxu0 0.0
    %1119 = vmatmul.mubr.f32.gmra.mrb[0].mxu0 %v214
    %v1120 = vpop.f32.mrb[0].mxu0
    %v1121 = vadd.f32 0.0, %v1120
    %v1122 = vpop.f32.mrb[0].mxu0
    %1123 = vmatprep.mubr.f32.mxu0 0.0
    %1124 = vmatmul.mubr.f32.gmra.mrb[0].mxu0 %v217
    %v1125 = vpop.f32.mrb[0].mxu0
    %v1126 = vadd.f32 0.0, %v1125
    %v1127 = vpop.f32.mrb[0].mxu0
    %1128 = vmatprep.mubr.f32.mxu0 0.0
    %1129 = vmatmul.mubr.f32.gmra.mrb[0].mxu0 %v220
    %v1130 = vpop.f32.mrb[0].mxu0
    %v1131 = vadd.f32 0.0, %v1130
    %v1132 = vpop.f32.mrb[0].mxu0
    %1133 = vmatprep.mubr.f32.mxu0 0.0
    %1134 = vmatmul.mubr.f32.gmra.mrb[0].mxu0 %v223
    %v1135 = vpop.f32.mrb[0].mxu0
    %v1136 = vadd.f32 0.0, %v1135
    %v1137 = vpop.f32.mrb[0].mxu0
    %1138 = vmatprep.mubr.f32.mxu0 0.0
    %1139 = vmatmul.mubr.f32.gmra.mrb[0].mxu0 %v226
    %v1140 = vpop.f32.mrb[0].mxu0
    %v1141 = vadd.f32 0.0, %v1140
    %v1142 = vpop.f32.mrb[0].mxu0
    %1143 = vmatprep.mubr.f32.mxu0 0.0
    %1144 = vmatmul.mubr.f32.gmra.mrb[0].mxu0 %v229
    %v1145 = vpop.f32.mrb[0].mxu0
    %v1146 = vadd.f32 0.0, %v1145
    %v1147 = vpop.f32.mrb[0].mxu0
    %1148 = vmatprep.mubr.f32.mxu0 0.0
    %1149 = vmatmul.mubr.f32.gmra.mrb[0].mxu0 %v232
    %v1150 = vpop.f32.mrb[0].mxu0
    %v1151 = vadd.f32 0.0, %v1150
    %v1152 = vpop.f32.mrb[0].mxu0
    %1153 = vmatprep.mubr.f32.mxu0 0.0
    %1154 = vmatmul.mubr.f32.gmra.mrb[0].mxu0 %v235
    %v1155 = vpop.f32.mrb[0].mxu0
    %v1156 = vadd.f32 0.0, %v1155
    %v1157 = vpop.f32.mrb[0].mxu0
    %1158 = vmatprep.mubr.f32.mxu0 0.0
    %1159 = vmatmul.mubr.f32.gmra.mrb[0].mxu0 %v142
    %v1160 = vpop.f32.mrb[0].mxu0
    %v1161 = vadd.f32 0.0, %v1160
    %v1162 = vpop.f32.mrb[0].mxu0
    %1163 = vmatprep.mubr.f32.mxu0 0.0
    %1164 = vmatmul.mubr.f32.gmra.mrb[0].mxu0 %v145
    %v1165 = vpop.f32.mrb[0].mxu0
    %v1166 = vadd.f32 0.0, %v1165
    %v1167 = vpop.f32.mrb[0].mxu0
    %1168 = vdwg.mxu0
    %v1169 = vadd.f32 %v912, %v1011
    %v1170 = vadd.f32 %v913, %v1016
    %v1171 = vadd.f32 %v914, %v1021
    %v1172 = vadd.f32 %v915, %v1026
    %v1173 = vadd.f32 %v916, %v1031
    %v1174 = vadd.f32 %v917, %v1036
    %v1175 = vadd.f32 %v918, %v1041
    %v1176 = vadd.f32 %v919, %v1046
    %v1177 = vadd.f32 %v920, %v1051
    %v1178 = vadd.f32 %v921, %v1056
    %v1179 = vadd.f32 %v922, %v1061
    %v1180 = vadd.f32 %v923, %v1066
    %v1181 = vadd.f32 %v924, %v1071
    %v1182 = vadd.f32 %v925, %v1076
    %v1183 = vadd.f32 %v926, %v1081
    %v1184 = vadd.f32 %v927, %v1086
    %v1185 = vadd.f32 %v928, %v1091
    %v1186 = vadd.f32 %v929, %v1096
    %v1187 = vadd.f32 %v930, %v1101
    %v1188 = vadd.f32 %v931, %v1106
    %v1189 = vadd.f32 %v932, %v1111
    %v1190 = vadd.f32 %v933, %v1116
    %v1191 = vadd.f32 %v934, %v1121
    %v1192 = vadd.f32 %v935, %v1126
    %v1193 = vadd.f32 %v936, %v1131
    %v1194 = vadd.f32 %v937, %v1136
    %v1195 = vadd.f32 %v938, %v1141
    %v1196 = vadd.f32 %v939, %v1146
    %v1197 = vadd.f32 %v940, %v1151
    %v1198 = vadd.f32 %v941, %v1156
    %v1199 = vadd.f32 %v942, %v1161
    %v1200 = vadd.f32 %v943, %v1166
    %1201 = vmatprep.subr.mxu0 0.0
    %1202 = vmatpush1.msra.mxu0 %v135
    %1203 = vmatprep.subr.mxu0 0.0
    %1204 = vmatpush1.msra.mxu0 %v136
    %1205 = vmatprep.subr.mxu0 0.0
    %1206 = vmatpush1.msra.mxu0 0.0
    %1207 = vmatprep.subr.mxu0 0.0
    %1208 = vmatpush1.msra.mxu0 0.0
    %1209 = vmatprep.subr.mxu0 0.0
    %1210 = vmatpush1.msra.mxu0 0.0
    %1211 = vmatprep.subr.mxu0 0.0
    %1212 = vmatpush1.msra.mxu0 0.0
    %1213 = vmatprep.subr.mxu0 0.0
    %1214 = vmatpush1.msra.mxu0 0.0
    %1215 = vmatprep.subr.mxu0 0.0
    %1216 = vmatpush1.msra.mxu0 0.0
    %1217 = vmatprep.subr.mxu0 0.0
    %1218 = vmatpush1.msra.mxu0 0.0
    %1219 = vmatprep.subr.mxu0 0.0
    %1220 = vmatpush1.msra.mxu0 0.0
    %1221 = vmatprep.subr.mxu0 0.0
    %1222 = vmatpush1.msra.mxu0 0.0
    %1223 = vmatprep.subr.mxu0 0.0
    %1224 = vmatpush1.msra.mxu0 0.0
    %1225 = vmatprep.subr.mxu0 0.0
    %1226 = vmatpush1.msra.mxu0 0.0
    %1227 = vmatprep.subr.mxu0 0.0
    %1228 = vmatpush1.msra.mxu0 0.0
    %1229 = vmatprep.subr.mxu0 0.0
    %1230 = vmatpush1.msra.mxu0 0.0
    %1231 = vmatprep.subr.mxu0 0.0
    %1232 = vmatpush1.msra.mxu0 0.0
    %1233 = vmatprep.subr.mxu0 0.0
    %1234 = vmatpush1.msra.mxu0 0.0
    %1235 = vmatprep.subr.mxu0 0.0
    %1236 = vmatpush1.msra.mxu0 0.0
    %1237 = vmatprep.subr.mxu0 0.0
    %1238 = vmatpush1.msra.mxu0 0.0
    %1239 = vmatprep.subr.mxu0 0.0
    %1240 = vmatpush1.msra.mxu0 0.0
    %1241 = vmatprep.subr.mxu0 0.0
    %1242 = vmatpush1.msra.mxu0 0.0
    %1243 = vmatprep.subr.mxu0 0.0
    %1244 = vmatpush1.msra.mxu0 0.0
    %1245 = vmatprep.subr.mxu0 0.0
    %1246 = vmatpush1.msra.mxu0 0.0
    %1247 = vmatprep.subr.mxu0 0.0
    %1248 = vmatpush1.msra.mxu0 0.0
    %1249 = vmatprep.subr.mxu0 0.0
    %1250 = vmatpush1.msra.mxu0 0.0
    %1251 = vmatprep.subr.mxu0 0.0
    %1252 = vmatpush1.msra.mxu0 0.0
    %1253 = vmatprep.subr.mxu0 0.0
    %1254 = vmatpush1.msra.mxu0 0.0
    %1255 = vmatprep.subr.mxu0 0.0
    %1256 = vmatpush1.msra.mxu0 0.0
    %1257 = vmatprep.subr.mxu0 0.0
    %1258 = vmatpush1.msra.mxu0 0.0
    %1259 = vmatprep.subr.mxu0 0.0
    %1260 = vmatpush1.msra.mxu0 0.0
    %1261 = vmatprep.subr.mxu0 0.0
    %1262 = vmatpush1.msra.mxu0 0.0
    %1263 = vmatprep.subr.mxu0 0.0
    %1264 = vmatpush1.msra.mxu0 0.0
    %1265 = vmatprep.mubr.f32.mxu0 0.0
    %1266 = vmatmul.mubr.f32.gmra.mrb[0].mxu0 %v151
    %v1267 = vpop.f32.mrb[0].mxu0
    %v1268 = vadd.f32 0.0, %v1267
    %v1269 = vpop.f32.mrb[0].mxu0
    %1270 = vmatprep.mubr.f32.mxu0 0.0
    %1271 = vmatmul.mubr.f32.gmra.mrb[0].mxu0 %v154
    %v1272 = vpop.f32.mrb[0].mxu0
    %v1273 = vadd.f32 0.0, %v1272
    %v1274 = vpop.f32.mrb[0].mxu0
    %1275 = vmatprep.mubr.f32.mxu0 0.0
    %1276 = vmatmul.mubr.f32.gmra.mrb[0].mxu0 %v157
    %v1277 = vpop.f32.mrb[0].mxu0
    %v1278 = vadd.f32 0.0, %v1277
    %v1279 = vpop.f32.mrb[0].mxu0
    %1280 = vmatprep.mubr.f32.mxu0 0.0
    %1281 = vmatmul.mubr.f32.gmra.mrb[0].mxu0 %v160
    %v1282 = vpop.f32.mrb[0].mxu0
    %v1283 = vadd.f32 0.0, %v1282
    %v1284 = vpop.f32.mrb[0].mxu0
    %1285 = vmatprep.mubr.f32.mxu0 0.0
    %1286 = vmatmul.mubr.f32.gmra.mrb[0].mxu0 %v163
    %v1287 = vpop.f32.mrb[0].mxu0
    %v1288 = vadd.f32 0.0, %v1287
    %v1289 = vpop.f32.mrb[0].mxu0
    %1290 = vmatprep.mubr.f32.mxu0 0.0
    %1291 = vmatmul.mubr.f32.gmra.mrb[0].mxu0 %v166
    %v1292 = vpop.f32.mrb[0].mxu0
    %v1293 = vadd.f32 0.0, %v1292
    %v1294 = vpop.f32.mrb[0].mxu0
    %1295 = vmatprep.mubr.f32.mxu0 0.0
    %1296 = vmatmul.mubr.f32.gmra.mrb[0].mxu0 %v169
    %v1297 = vpop.f32.mrb[0].mxu0
    %v1298 = vadd.f32 0.0, %v1297
    %v1299 = vpop.f32.mrb[0].mxu0
    %1300 = vmatprep.mubr.f32.mxu0 0.0
    %1301 = vmatmul.mubr.f32.gmra.mrb[0].mxu0 %v172
    %v1302 = vpop.f32.mrb[0].mxu0
    %v1303 = vadd.f32 0.0, %v1302
    %v1304 = vpop.f32.mrb[0].mxu0
    %1305 = vmatprep.mubr.f32.mxu0 0.0
    %1306 = vmatmul.mubr.f32.gmra.mrb[0].mxu0 %v175
    %v1307 = vpop.f32.mrb[0].mxu0
    %v1308 = vadd.f32 0.0, %v1307
    %v1309 = vpop.f32.mrb[0].mxu0
    %1310 = vmatprep.mubr.f32.mxu0 0.0
    %1311 = vmatmul.mubr.f32.gmra.mrb[0].mxu0 %v178
    %v1312 = vpop.f32.mrb[0].mxu0
    %v1313 = vadd.f32 0.0, %v1312
    %v1314 = vpop.f32.mrb[0].mxu0
    %1315 = vmatprep.mubr.f32.mxu0 0.0
    %1316 = vmatmul.mubr.f32.gmra.mrb[0].mxu0 %v181
    %v1317 = vpop.f32.mrb[0].mxu0
    %v1318 = vadd.f32 0.0, %v1317
    %v1319 = vpop.f32.mrb[0].mxu0
    %1320 = vmatprep.mubr.f32.mxu0 0.0
    %1321 = vmatmul.mubr.f32.gmra.mrb[0].mxu0 %v184
    %v1322 = vpop.f32.mrb[0].mxu0
    %v1323 = vadd.f32 0.0, %v1322
    %v1324 = vpop.f32.mrb[0].mxu0
    %1325 = vmatprep.mubr.f32.mxu0 0.0
    %1326 = vmatmul.mubr.f32.gmra.mrb[0].mxu0 %v187
    %v1327 = vpop.f32.mrb[0].mxu0
    %v1328 = vadd.f32 0.0, %v1327
    %v1329 = vpop.f32.mrb[0].mxu0
    %1330 = vmatprep.mubr.f32.mxu0 0.0
    %1331 = vmatmul.mubr.f32.gmra.mrb[0].mxu0 %v190
    %v1332 = vpop.f32.mrb[0].mxu0
    %v1333 = vadd.f32 0.0, %v1332
    %v1334 = vpop.f32.mrb[0].mxu0
    %1335 = vmatprep.mubr.f32.mxu0 0.0
    %1336 = vmatmul.mubr.f32.gmra.mrb[0].mxu0 %v193
    %v1337 = vpop.f32.mrb[0].mxu0
    %v1338 = vadd.f32 0.0, %v1337
    %v1339 = vpop.f32.mrb[0].mxu0
    %1340 = vmatprep.mubr.f32.mxu0 0.0
    %1341 = vmatmul.mubr.f32.gmra.mrb[0].mxu0 %v196
    %v1342 = vpop.f32.mrb[0].mxu0
    %v1343 = vadd.f32 0.0, %v1342
    %v1344 = vpop.f32.mrb[0].mxu0
    %1345 = vmatprep.mubr.f32.mxu0 0.0
    %1346 = vmatmul.mubr.f32.gmra.mrb[0].mxu0 %v199
    %v1347 = vpop.f32.mrb[0].mxu0
    %v1348 = vadd.f32 0.0, %v1347
    %v1349 = vpop.f32.mrb[0].mxu0
    %1350 = vmatprep.mubr.f32.mxu0 0.0
    %1351 = vmatmul.mubr.f32.gmra.mrb[0].mxu0 %v202
    %v1352 = vpop.f32.mrb[0].mxu0
    %v1353 = vadd.f32 0.0, %v1352
    %v1354 = vpop.f32.mrb[0].mxu0
    %1355 = vmatprep.mubr.f32.mxu0 0.0
    %1356 = vmatmul.mubr.f32.gmra.mrb[0].mxu0 %v205
    %v1357 = vpop.f32.mrb[0].mxu0
    %v1358 = vadd.f32 0.0, %v1357
    %v1359 = vpop.f32.mrb[0].mxu0
    %1360 = vmatprep.mubr.f32.mxu0 0.0
    %1361 = vmatmul.mubr.f32.gmra.mrb[0].mxu0 %v208
    %v1362 = vpop.f32.mrb[0].mxu0
    %v1363 = vadd.f32 0.0, %v1362
    %v1364 = vpop.f32.mrb[0].mxu0
    %1365 = vmatprep.mubr.f32.mxu0 0.0
    %1366 = vmatmul.mubr.f32.gmra.mrb[0].mxu0 %v211
    %v1367 = vpop.f32.mrb[0].mxu0
    %v1368 = vadd.f32 0.0, %v1367
    %v1369 = vpop.f32.mrb[0].mxu0
    %1370 = vmatprep.mubr.f32.mxu0 0.0
    %1371 = vmatmul.mubr.f32.gmra.mrb[0].mxu0 %v214
    %v1372 = vpop.f32.mrb[0].mxu0
    %v1373 = vadd.f32 0.0, %v1372
    %v1374 = vpop.f32.mrb[0].mxu0
    %1375 = vmatprep.mubr.f32.mxu0 0.0
    %1376 = vmatmul.mubr.f32.gmra.mrb[0].mxu0 %v217
    %v1377 = vpop.f32.mrb[0].mxu0
    %v1378 = vadd.f32 0.0, %v1377
    %v1379 = vpop.f32.mrb[0].mxu0
    %1380 = vmatprep.mubr.f32.mxu0 0.0
    %1381 = vmatmul.mubr.f32.gmra.mrb[0].mxu0 %v220
    %v1382 = vpop.f32.mrb[0].mxu0
    %v1383 = vadd.f32 0.0, %v1382
    %v1384 = vpop.f32.mrb[0].mxu0
    %1385 = vmatprep.mubr.f32.mxu0 0.0
    %1386 = vmatmul.mubr.f32.gmra.mrb[0].mxu0 %v223
    %v1387 = vpop.f32.mrb[0].mxu0
    %v1388 = vadd.f32 0.0, %v1387
    %v1389 = vpop.f32.mrb[0].mxu0
    %1390 = vmatprep.mubr.f32.mxu0 0.0
    %1391 = vmatmul.mubr.f32.gmra.mrb[0].mxu0 %v226
    %v1392 = vpop.f32.mrb[0].mxu0
    %v1393 = vadd.f32 0.0, %v1392
    %v1394 = vpop.f32.mrb[0].mxu0
    %1395 = vmatprep.mubr.f32.mxu0 0.0
    %1396 = vmatmul.mubr.f32.gmra.mrb[0].mxu0 %v229
    %v1397 = vpop.f32.mrb[0].mxu0
    %v1398 = vadd.f32 0.0, %v1397
    %v1399 = vpop.f32.mrb[0].mxu0
    %1400 = vmatprep.mubr.f32.mxu0 0.0
    %1401 = vmatmul.mubr.f32.gmra.mrb[0].mxu0 %v232
    %v1402 = vpop.f32.mrb[0].mxu0
    %v1403 = vadd.f32 0.0, %v1402
    %v1404 = vpop.f32.mrb[0].mxu0
    %1405 = vmatprep.mubr.f32.mxu0 0.0
    %1406 = vmatmul.mubr.f32.gmra.mrb[0].mxu0 %v235
    %v1407 = vpop.f32.mrb[0].mxu0
    %v1408 = vadd.f32 0.0, %v1407
    %v1409 = vpop.f32.mrb[0].mxu0
    %1410 = vmatprep.mubr.f32.mxu0 0.0
    %1411 = vmatmul.mubr.f32.gmra.mrb[0].mxu0 %v142
    %v1412 = vpop.f32.mrb[0].mxu0
    %v1413 = vadd.f32 0.0, %v1412
    %v1414 = vpop.f32.mrb[0].mxu0
    %1415 = vmatprep.mubr.f32.mxu0 0.0
    %1416 = vmatmul.mubr.f32.gmra.mrb[0].mxu0 %v145
    %v1417 = vpop.f32.mrb[0].mxu0
    %v1418 = vadd.f32 0.0, %v1417
    %v1419 = vpop.f32.mrb[0].mxu0
    %1420 = vmatprep.mubr.f32.mxu0 0.0
    %1421 = vmatmul.mubr.f32.gmra.mrb[0].mxu0 %v148
    %v1422 = vpop.f32.mrb[0].mxu0
    %v1423 = vadd.f32 0.0, %v1422
    %v1424 = vpop.f32.mrb[0].mxu0
    %1425 = vdwg.mxu0
    %v1426 = vadd.f32 %v1169, %v1268
    %v1427 = vadd.f32 %v1170, %v1273
    %v1428 = vadd.f32 %v1171, %v1278
    %v1429 = vadd.f32 %v1172, %v1283
    %v1430 = vadd.f32 %v1173, %v1288
    %v1431 = vadd.f32 %v1174, %v1293
    %v1432 = vadd.f32 %v1175, %v1298
    %v1433 = vadd.f32 %v1176, %v1303
    %v1434 = vadd.f32 %v1177, %v1308
    %v1435 = vadd.f32 %v1178, %v1313
    %v1436 = vadd.f32 %v1179, %v1318
    %v1437 = vadd.f32 %v1180, %v1323
    %v1438 = vadd.f32 %v1181, %v1328
    %v1439 = vadd.f32 %v1182, %v1333
    %v1440 = vadd.f32 %v1183, %v1338
    %v1441 = vadd.f32 %v1184, %v1343
    %v1442 = vadd.f32 %v1185, %v1348
    %v1443 = vadd.f32 %v1186, %v1353
    %v1444 = vadd.f32 %v1187, %v1358
    %v1445 = vadd.f32 %v1188, %v1363
    %v1446 = vadd.f32 %v1189, %v1368
    %v1447 = vadd.f32 %v1190, %v1373
    %v1448 = vadd.f32 %v1191, %v1378
    %v1449 = vadd.f32 %v1192, %v1383
    %v1450 = vadd.f32 %v1193, %v1388
    %v1451 = vadd.f32 %v1194, %v1393
    %v1452 = vadd.f32 %v1195, %v1398
    %v1453 = vadd.f32 %v1196, %v1403
    %v1454 = vadd.f32 %v1197, %v1408
    %v1455 = vadd.f32 %v1198, %v1413
    %v1456 = vadd.f32 %v1199, %v1418
    %v1457 = vadd.f32 %v1200, %v1423
    %v1459 = vlaneseq
    %v1460 = vshrl.u32 %v1459, 7
    %v1461 = vsub.s32 0, %v1460
    %v1462 = vrot.slane %v137, %v1461
    %v1464 = vadd.f32 %v1426, %v1462
    %v1465 = vadd.f32 %v1427, %v1462
    %v1466 = vadd.f32 %v1428, %v1462
    %v1467 = vadd.f32 %v1429, %v1462
    %v1468 = vadd.f32 %v1430, %v1462
    %v1469 = vadd.f32 %v1431, %v1462
    %v1470 = vadd.f32 %v1432, %v1462
    %v1471 = vadd.f32 %v1433, %v1462
    %v1472 = vadd.f32 %v1434, %v1462
    %v1473 = vadd.f32 %v1435, %v1462
    %v1474 = vadd.f32 %v1436, %v1462
    %v1475 = vadd.f32 %v1437, %v1462
    %v1476 = vadd.f32 %v1438, %v1462
    %v1477 = vadd.f32 %v1439, %v1462
    %v1478 = vadd.f32 %v1440, %v1462
    %v1479 = vadd.f32 %v1441, %v1462
    %v1480 = vadd.f32 %v1442, %v1462
    %v1481 = vadd.f32 %v1443, %v1462
    %v1482 = vadd.f32 %v1444, %v1462
    %v1483 = vadd.f32 %v1445, %v1462
    %v1484 = vadd.f32 %v1446, %v1462
    %v1485 = vadd.f32 %v1447, %v1462
    %v1486 = vadd.f32 %v1448, %v1462
    %v1487 = vadd.f32 %v1449, %v1462
    %v1488 = vadd.f32 %v1450, %v1462
    %v1489 = vadd.f32 %v1451, %v1462
    %v1490 = vadd.f32 %v1452, %v1462
    %v1491 = vadd.f32 %v1453, %v1462
    %v1492 = vadd.f32 %v1454, %v1462
    %v1493 = vadd.f32 %v1455, %v1462
    %v1494 = vadd.f32 %v1456, %v1462
    %v1495 = vadd.f32 %v1457, %v1462
    %v1496 = vmax.f32 %v1464, 0.0
    %v1497 = vmax.f32 %v1465, 0.0
    %v1498 = vmax.f32 %v1466, 0.0
    %v1499 = vmax.f32 %v1467, 0.0
    %v1500 = vmax.f32 %v1468, 0.0
    %v1501 = vmax.f32 %v1469, 0.0
    %v1502 = vmax.f32 %v1470, 0.0
    %v1503 = vmax.f32 %v1471, 0.0
    %v1504 = vmax.f32 %v1472, 0.0
    %v1505 = vmax.f32 %v1473, 0.0
    %v1506 = vmax.f32 %v1474, 0.0
    %v1507 = vmax.f32 %v1475, 0.0
    %v1508 = vmax.f32 %v1476, 0.0
    %v1509 = vmax.f32 %v1477, 0.0
    %v1510 = vmax.f32 %v1478, 0.0
    %v1511 = vmax.f32 %v1479, 0.0
    %v1512 = vmax.f32 %v1480, 0.0
    %v1513 = vmax.f32 %v1481, 0.0
    %v1514 = vmax.f32 %v1482, 0.0
    %v1515 = vmax.f32 %v1483, 0.0
    %v1516 = vmax.f32 %v1484, 0.0
    %v1517 = vmax.f32 %v1485, 0.0
    %v1518 = vmax.f32 %v1486, 0.0
    %v1519 = vmax.f32 %v1487, 0.0
    %v1520 = vmax.f32 %v1488, 0.0
    %v1521 = vmax.f32 %v1489, 0.0
    %v1522 = vmax.f32 %v1490, 0.0
    %v1523 = vmax.f32 %v1491, 0.0
    %v1524 = vmax.f32 %v1492, 0.0
    %v1525 = vmax.f32 %v1493, 0.0
    %v1526 = vmax.f32 %v1494, 0.0
    %v1527 = vmax.f32 %v1495, 0.0
    %v1529 = vlaneseq
    %v1530 = vshrl.u32 %v1529, 7
    %v1531 = vsub.s32 0, %v1530
    %v1532 = vrot.slane %v138, %v1531
    %v1534 = vmul.f32 %v1496, %v1532
    %v1535 = vmul.f32 %v1497, %v1532
    %v1536 = vmul.f32 %v1498, %v1532
    %v1537 = vmul.f32 %v1499, %v1532
    %v1538 = vmul.f32 %v1500, %v1532
    %v1539 = vmul.f32 %v1501, %v1532
    %v1540 = vmul.f32 %v1502, %v1532
    %v1541 = vmul.f32 %v1503, %v1532
    %v1542 = vmul.f32 %v1504, %v1532
    %v1543 = vmul.f32 %v1505, %v1532
    %v1544 = vmul.f32 %v1506, %v1532
    %v1545 = vmul.f32 %v1507, %v1532
    %v1546 = vmul.f32 %v1508, %v1532
    %v1547 = vmul.f32 %v1509, %v1532
    %v1548 = vmul.f32 %v1510, %v1532
    %v1549 = vmul.f32 %v1511, %v1532
    %v1550 = vmul.f32 %v1512, %v1532
    %v1551 = vmul.f32 %v1513, %v1532
    %v1552 = vmul.f32 %v1514, %v1532
    %v1553 = vmul.f32 %v1515, %v1532
    %v1554 = vmul.f32 %v1516, %v1532
    %v1555 = vmul.f32 %v1517, %v1532
    %v1556 = vmul.f32 %v1518, %v1532
    %v1557 = vmul.f32 %v1519, %v1532
    %v1558 = vmul.f32 %v1520, %v1532
    %v1559 = vmul.f32 %v1521, %v1532
    %v1560 = vmul.f32 %v1522, %v1532
    %v1561 = vmul.f32 %v1523, %v1532
    %v1562 = vmul.f32 %v1524, %v1532
    %v1563 = vmul.f32 %v1525, %v1532
    %v1564 = vmul.f32 %v1526, %v1532
    %v1565 = vmul.f32 %v1527, %v1532
    %v1567 = vlaneseq
    %v1568 = vshrl.u32 %v1567, 7
    %v1569 = vsub.s32 0, %v1568
    %v1570 = vrot.slane %v139, %v1569
    %v1572 = vadd.f32 %v1534, %v1570
    %v1573 = vadd.f32 %v1535, %v1570
    %v1574 = vadd.f32 %v1536, %v1570
    %v1575 = vadd.f32 %v1537, %v1570
    %v1576 = vadd.f32 %v1538, %v1570
    %v1577 = vadd.f32 %v1539, %v1570
    %v1578 = vadd.f32 %v1540, %v1570
    %v1579 = vadd.f32 %v1541, %v1570
    %v1580 = vadd.f32 %v1542, %v1570
    %v1581 = vadd.f32 %v1543, %v1570
    %v1582 = vadd.f32 %v1544, %v1570
    %v1583 = vadd.f32 %v1545, %v1570
    %v1584 = vadd.f32 %v1546, %v1570
    %v1585 = vadd.f32 %v1547, %v1570
    %v1586 = vadd.f32 %v1548, %v1570
    %v1587 = vadd.f32 %v1549, %v1570
    %v1588 = vadd.f32 %v1550, %v1570
    %v1589 = vadd.f32 %v1551, %v1570
    %v1590 = vadd.f32 %v1552, %v1570
    %v1591 = vadd.f32 %v1553, %v1570
    %v1592 = vadd.f32 %v1554, %v1570
    %v1593 = vadd.f32 %v1555, %v1570
    %v1594 = vadd.f32 %v1556, %v1570
    %v1595 = vadd.f32 %v1557, %v1570
    %v1596 = vadd.f32 %v1558, %v1570
    %v1597 = vadd.f32 %v1559, %v1570
    %v1598 = vadd.f32 %v1560, %v1570
    %v1599 = vadd.f32 %v1561, %v1570
    %v1600 = vadd.f32 %v1562, %v1570
    %v1601 = vadd.f32 %v1563, %v1570
    %v1602 = vadd.f32 %v1564, %v1570
    %v1603 = vadd.f32 %v1565, %v1570
    %v1604 = vld [vmem:[#allocation3] sm:$0xff]
    %v1605 = vld [vmem:[#allocation3 + $0x8] sm:$0xff]
    %v1606 = vld [vmem:[#allocation3 + $0x10] sm:$0xff]
    %v1607 = vld [vmem:[#allocation3 + $0x18] sm:$0xff]
    %v1608 = vld [vmem:[#allocation3 + $0x20] sm:$0xff]
    %v1609 = vld [vmem:[#allocation3 + $0x28] sm:$0xff]
    %v1610 = vld [vmem:[#allocation3 + $0x30] sm:$0xff]
    %v1611 = vld [vmem:[#allocation3 + $0x38] sm:$0xff]
    %v1612 = vld [vmem:[#allocation3 + $0x40] sm:$0xff]
    %v1613 = vld [vmem:[#allocation3 + $0x48] sm:$0xff]
    %v1614 = vld [vmem:[#allocation3 + $0x50] sm:$0xff]
    %v1615 = vld [vmem:[#allocation3 + $0x58] sm:$0xff]
    %v1616 = vld [vmem:[#allocation3 + $0x60] sm:$0xff]
    %v1617 = vld [vmem:[#allocation3 + $0x68] sm:$0xff]
    %v1618 = vld [vmem:[#allocation3 + $0x70] sm:$0xff]
    %v1619 = vld [vmem:[#allocation3 + $0x78] sm:$0xff]
    %s1620 = scalar_lea.vmem [#allocation3], 128
    %v1621 = vld [vmem:[%s1620] sm:$0xff]
    %v1622 = vld [vmem:[%s1620 + $0x8] sm:$0xff]
    %v1623 = vld [vmem:[%s1620 + $0x10] sm:$0xff]
    %v1624 = vld [vmem:[%s1620 + $0x18] sm:$0xff]
    %v1625 = vld [vmem:[%s1620 + $0x20] sm:$0xff]
    %v1626 = vld [vmem:[%s1620 + $0x28] sm:$0xff]
    %v1627 = vld [vmem:[%s1620 + $0x30] sm:$0xff]
    %v1628 = vld [vmem:[%s1620 + $0x38] sm:$0xff]
    %v1629 = vld [vmem:[%s1620 + $0x40] sm:$0xff]
    %v1630 = vld [vmem:[%s1620 + $0x48] sm:$0xff]
    %v1631 = vld [vmem:[%s1620 + $0x50] sm:$0xff]
    %v1632 = vld [vmem:[%s1620 + $0x58] sm:$0xff]
    %v1633 = vld [vmem:[%s1620 + $0x60] sm:$0xff]
    %v1634 = vld [vmem:[%s1620 + $0x68] sm:$0xff]
    %v1635 = vld [vmem:[%s1620 + $0x70] sm:$0xff]
    %v1636 = vld [vmem:[%s1620 + $0x78] sm:$0xff]
    %s1637 = scalar_lea.vmem [#allocation3], 256
    %v1638 = vld [vmem:[%s1637] sm:$0xff]
    %v1639 = vld [vmem:[%s1637 + $0x8] sm:$0xff]
    %v1640 = vld [vmem:[%s1637 + $0x10] sm:$0xff]
    %v1641 = vld [vmem:[%s1637 + $0x18] sm:$0xff]
    %v1642 = vld [vmem:[%s1637 + $0x20] sm:$0xff]
    %v1643 = vld [vmem:[%s1637 + $0x28] sm:$0xff]
    %v1644 = vld [vmem:[%s1637 + $0x30] sm:$0xff]
    %v1645 = vld [vmem:[%s1637 + $0x38] sm:$0xff]
    %v1646 = vld [vmem:[%s1637 + $0x40] sm:$0xff]
    %v1647 = vld [vmem:[%s1637 + $0x48] sm:$0xff]
    %v1648 = vld [vmem:[%s1637 + $0x50] sm:$0xff]
    %v1649 = vld [vmem:[%s1637 + $0x58] sm:$0xff]
    %v1650 = vld [vmem:[%s1637 + $0x60] sm:$0xff]
    %v1651 = vld [vmem:[%s1637 + $0x68] sm:$0xff]
    %v1652 = vld [vmem:[%s1637 + $0x70] sm:$0xff]
    %v1653 = vld [vmem:[%s1637 + $0x78] sm:$0xff]
    %s1654 = scalar_lea.vmem [#allocation3], 384
    %v1655 = vld [vmem:[%s1654] sm:$0xff]
    %v1656 = vld [vmem:[%s1654 + $0x8] sm:$0xff]
    %v1657 = vld [vmem:[%s1654 + $0x10] sm:$0xff]
    %v1658 = vld [vmem:[%s1654 + $0x18] sm:$0xff]
    %v1659 = vld [vmem:[%s1654 + $0x20] sm:$0xff]
    %v1660 = vld [vmem:[%s1654 + $0x28] sm:$0xff]
    %v1661 = vld [vmem:[%s1654 + $0x30] sm:$0xff]
    %v1662 = vld [vmem:[%s1654 + $0x38] sm:$0xff]
    %v1663 = vld [vmem:[%s1654 + $0x40] sm:$0xff]
    %v1664 = vld [vmem:[%s1654 + $0x48] sm:$0xff]
    %v1665 = vld [vmem:[%s1654 + $0x50] sm:$0xff]
    %v1666 = vld [vmem:[%s1654 + $0x58] sm:$0xff]
    %v1667 = vld [vmem:[%s1654 + $0x60] sm:$0xff]
    %v1668 = vld [vmem:[%s1654 + $0x68] sm:$0xff]
    %v1669 = vld [vmem:[%s1654 + $0x70] sm:$0xff]
    %v1670 = vld [vmem:[%s1654 + $0x78] sm:$0xff]
    %s1671 = scalar_lea.vmem [#allocation3], 512
    %v1672 = vld [vmem:[%s1671] sm:$0xff]
    %v1673 = vld [vmem:[%s1671 + $0x8] sm:$0xff]
    %v1674 = vld [vmem:[%s1671 + $0x10] sm:$0xff]
    %v1675 = vld [vmem:[%s1671 + $0x18] sm:$0xff]
    %v1676 = vld [vmem:[%s1671 + $0x20] sm:$0xff]
    %v1677 = vld [vmem:[%s1671 + $0x28] sm:$0xff]
    %v1678 = vld [vmem:[%s1671 + $0x30] sm:$0xff]
    %v1679 = vld [vmem:[%s1671 + $0x38] sm:$0xff]
    %v1680 = vld [vmem:[%s1671 + $0x40] sm:$0xff]
    %v1681 = vld [vmem:[%s1671 + $0x48] sm:$0xff]
    %v1682 = vld [vmem:[%s1671 + $0x50] sm:$0xff]
    %v1683 = vld [vmem:[%s1671 + $0x58] sm:$0xff]
    %v1684 = vld [vmem:[%s1671 + $0x60] sm:$0xff]
    %v1685 = vld [vmem:[%s1671 + $0x68] sm:$0xff]
    %v1686 = vld [vmem:[%s1671 + $0x70] sm:$0xff]
    %v1687 = vld [vmem:[%s1671 + $0x78] sm:$0xff]
    %s1688 = scalar_lea.vmem %s3, 1
    %v1689 = vld [vmem:[%s1688] sm:$0x1]
    %s1690 = scalar_lea.vmem %s4, 1
    %v1691 = vld [vmem:[%s1690] sm:$0x1]
    %s1692 = scalar_lea.vmem %s5, 1
    %v1693 = vld [vmem:[%s1692] sm:$0x1]
    %1694 = vmatprep.subr.mxu0 0.0
    %1695 = vmatpush1.msra.mxu0 %v1621
    %1696 = vmatprep.subr.mxu0 0.0
    %1697 = vmatpush1.msra.mxu0 %v1622
    %1698 = vmatprep.subr.mxu0 0.0
    %1699 = vmatpush1.msra.mxu0 %v1623
    %1700 = vmatprep.subr.mxu0 0.0
    %1701 = vmatpush1.msra.mxu0 %v1624
    %1702 = vmatprep.subr.mxu0 0.0
    %1703 = vmatpush1.msra.mxu0 %v1625
    %1704 = vmatprep.subr.mxu0 0.0
    %1705 = vmatpush1.msra.mxu0 %v1626
    %1706 = vmatprep.subr.mxu0 0.0
    %1707 = vmatpush1.msra.mxu0 %v1627
    %1708 = vmatprep.subr.mxu0 0.0
    %1709 = vmatpush1.msra.mxu0 %v1628
    %1710 = vmatprep.subr.mxu0 0.0
    %1711 = vmatpush1.msra.mxu0 %v1629
    %1712 = vmatprep.subr.mxu0 0.0
    %1713 = vmatpush1.msra.mxu0 %v1630
    %1714 = vmatprep.subr.mxu0 0.0
    %1715 = vmatpush1.msra.mxu0 %v1631
    %1716 = vmatprep.subr.mxu0 0.0
    %1717 = vmatpush1.msra.mxu0 %v1632
    %1718 = vmatprep.subr.mxu0 0.0
    %1719 = vmatpush1.msra.mxu0 %v1633
    %1720 = vmatprep.subr.mxu0 0.0
    %1721 = vmatpush1.msra.mxu0 %v1634
    %1722 = vmatprep.subr.mxu0 0.0
    %1723 = vmatpush1.msra.mxu0 %v1635
    %1724 = vmatprep.subr.mxu0 0.0
    %1725 = vmatpush1.msra.mxu0 %v1636
    %1726 = vmatprep.subr.mxu0 0.0
    %1727 = vmatpush1.msra.mxu0 0.0
    %1728 = vmatprep.subr.mxu0 0.0
    %1729 = vmatpush1.msra.mxu0 0.0
    %1730 = vmatprep.subr.mxu0 0.0
    %1731 = vmatpush1.msra.mxu0 0.0
    %1732 = vmatprep.subr.mxu0 0.0
    %1733 = vmatpush1.msra.mxu0 0.0
    %1734 = vmatprep.subr.mxu0 0.0
    %1735 = vmatpush1.msra.mxu0 0.0
    %1736 = vmatprep.subr.mxu0 0.0
    %1737 = vmatpush1.msra.mxu0 0.0
    %1738 = vmatprep.subr.mxu0 0.0
    %1739 = vmatpush1.msra.mxu0 0.0
    %1740 = vmatprep.subr.mxu0 0.0
    %1741 = vmatpush1.msra.mxu0 0.0
    %1742 = vmatprep.subr.mxu0 0.0
    %1743 = vmatpush1.msra.mxu0 0.0
    %1744 = vmatprep.subr.mxu0 0.0
    %1745 = vmatpush1.msra.mxu0 0.0
    %1746 = vmatprep.subr.mxu0 0.0
    %1747 = vmatpush1.msra.mxu0 0.0
    %1748 = vmatprep.subr.mxu0 0.0
    %1749 = vmatpush1.msra.mxu0 0.0
    %1750 = vmatprep.subr.mxu0 0.0
    %1751 = vmatpush1.msra.mxu0 0.0
    %1752 = vmatprep.subr.mxu0 0.0
    %1753 = vmatpush1.msra.mxu0 0.0
    %1754 = vmatprep.subr.mxu0 0.0
    %1755 = vmatpush1.msra.mxu0 0.0
    %1756 = vmatprep.subr.mxu0 0.0
    %1757 = vmatpush1.msra.mxu0 0.0
    %1758 = vmatprep.mubr.f32.mxu0 0.0
    %1759 = vmatmul.mubr.f32.gmra.mrb[0].mxu0 %v1573
    %v1760 = vpop.f32.mrb[0].mxu0
    %v1761 = vadd.f32 0.0, %v1760
    %v1762 = vpop.f32.mrb[0].mxu0
    %1763 = vmatprep.mubr.f32.mxu0 0.0
    %1764 = vmatmul.mubr.f32.gmra.mrb[0].mxu0 %v1574
    %v1765 = vpop.f32.mrb[0].mxu0
    %v1766 = vadd.f32 0.0, %v1765
    %v1767 = vpop.f32.mrb[0].mxu0
    %1768 = vmatprep.mubr.f32.mxu0 0.0
    %1769 = vmatmul.mubr.f32.gmra.mrb[0].mxu0 %v1575
    %v1770 = vpop.f32.mrb[0].mxu0
    %v1771 = vadd.f32 0.0, %v1770
    %v1772 = vpop.f32.mrb[0].mxu0
    %1773 = vmatprep.mubr.f32.mxu0 0.0
    %1774 = vmatmul.mubr.f32.gmra.mrb[0].mxu0 %v1576
    %v1775 = vpop.f32.mrb[0].mxu0
    %v1776 = vadd.f32 0.0, %v1775
    %v1777 = vpop.f32.mrb[0].mxu0
    %1778 = vmatprep.mubr.f32.mxu0 0.0
    %1779 = vmatmul.mubr.f32.gmra.mrb[0].mxu0 %v1577
    %v1780 = vpop.f32.mrb[0].mxu0
    %v1781 = vadd.f32 0.0, %v1780
    %v1782 = vpop.f32.mrb[0].mxu0
    %1783 = vmatprep.mubr.f32.mxu0 0.0
    %1784 = vmatmul.mubr.f32.gmra.mrb[0].mxu0 %v1578
    %v1785 = vpop.f32.mrb[0].mxu0
    %v1786 = vadd.f32 0.0, %v1785
    %v1787 = vpop.f32.mrb[0].mxu0
    %1788 = vmatprep.mubr.f32.mxu0 0.0
    %1789 = vmatmul.mubr.f32.gmra.mrb[0].mxu0 %v1579
    %v1790 = vpop.f32.mrb[0].mxu0
    %v1791 = vadd.f32 0.0, %v1790
    %v1792 = vpop.f32.mrb[0].mxu0
    %1793 = vmatprep.mubr.f32.mxu0 0.0
    %1794 = vmatmul.mubr.f32.gmra.mrb[0].mxu0 %v1580
    %v1795 = vpop.f32.mrb[0].mxu0
    %v1796 = vadd.f32 0.0, %v1795
    %v1797 = vpop.f32.mrb[0].mxu0
    %1798 = vmatprep.mubr.f32.mxu0 0.0
    %1799 = vmatmul.mubr.f32.gmra.mrb[0].mxu0 %v1581
    %v1800 = vpop.f32.mrb[0].mxu0
    %v1801 = vadd.f32 0.0, %v1800
    %v1802 = vpop.f32.mrb[0].mxu0
    %1803 = vmatprep.mubr.f32.mxu0 0.0
    %1804 = vmatmul.mubr.f32.gmra.mrb[0].mxu0 %v1582
    %v1805 = vpop.f32.mrb[0].mxu0
    %v1806 = vadd.f32 0.0, %v1805
    %v1807 = vpop.f32.mrb[0].mxu0
    %1808 = vmatprep.mubr.f32.mxu0 0.0
    %1809 = vmatmul.mubr.f32.gmra.mrb[0].mxu0 %v1583
    %v1810 = vpop.f32.mrb[0].mxu0
    %v1811 = vadd.f32 0.0, %v1810
    %v1812 = vpop.f32.mrb[0].mxu0
    %1813 = vmatprep.mubr.f32.mxu0 0.0
    %1814 = vmatmul.mubr.f32.gmra.mrb[0].mxu0 %v1584
    %v1815 = vpop.f32.mrb[0].mxu0
    %v1816 = vadd.f32 0.0, %v1815
    %v1817 = vpop.f32.mrb[0].mxu0
    %1818 = vmatprep.mubr.f32.mxu0 0.0
    %1819 = vmatmul.mubr.f32.gmra.mrb[0].mxu0 %v1585
    %v1820 = vpop.f32.mrb[0].mxu0
    %v1821 = vadd.f32 0.0, %v1820
    %v1822 = vpop.f32.mrb[0].mxu0
    %1823 = vmatprep.mubr.f32.mxu0 0.0
    %1824 = vmatmul.mubr.f32.gmra.mrb[0].mxu0 %v1586
    %v1825 = vpop.f32.mrb[0].mxu0
    %v1826 = vadd.f32 0.0, %v1825
    %v1827 = vpop.f32.mrb[0].mxu0
    %1828 = vmatprep.mubr.f32.mxu0 0.0
    %1829 = vmatmul.mubr.f32.gmra.mrb[0].mxu0 %v1587
    %v1830 = vpop.f32.mrb[0].mxu0
    %v1831 = vadd.f32 0.0, %v1830
    %v1832 = vpop.f32.mrb[0].mxu0
    %1833 = vmatprep.mubr.f32.mxu0 0.0
    %1834 = vmatmul.mubr.f32.gmra.mrb[0].mxu0 %v1588
    %v1835 = vpop.f32.mrb[0].mxu0
    %v1836 = vadd.f32 0.0, %v1835
    %v1837 = vpop.f32.mrb[0].mxu0
    %1838 = vmatprep.mubr.f32.mxu0 0.0
    %1839 = vmatmul.mubr.f32.gmra.mrb[0].mxu0 %v1589
    %v1840 = vpop.f32.mrb[0].mxu0
    %v1841 = vadd.f32 0.0, %v1840
    %v1842 = vpop.f32.mrb[0].mxu0
    %1843 = vmatprep.mubr.f32.mxu0 0.0
    %1844 = vmatmul.mubr.f32.gmra.mrb[0].mxu0 %v1590
    %v1845 = vpop.f32.mrb[0].mxu0
    %v1846 = vadd.f32 0.0, %v1845
    %v1847 = vpop.f32.mrb[0].mxu0
    %1848 = vmatprep.mubr.f32.mxu0 0.0
    %1849 = vmatmul.mubr.f32.gmra.mrb[0].mxu0 %v1591
    %v1850 = vpop.f32.mrb[0].mxu0
    %v1851 = vadd.f32 0.0, %v1850
    %v1852 = vpop.f32.mrb[0].mxu0
    %1853 = vmatprep.mubr.f32.mxu0 0.0
    %1854 = vmatmul.mubr.f32.gmra.mrb[0].mxu0 %v1592
    %v1855 = vpop.f32.mrb[0].mxu0
    %v1856 = vadd.f32 0.0, %v1855
    %v1857 = vpop.f32.mrb[0].mxu0
    %1858 = vmatprep.mubr.f32.mxu0 0.0
    %1859 = vmatmul.mubr.f32.gmra.mrb[0].mxu0 %v1593
    %v1860 = vpop.f32.mrb[0].mxu0
    %v1861 = vadd.f32 0.0, %v1860
    %v1862 = vpop.f32.mrb[0].mxu0
    %1863 = vmatprep.mubr.f32.mxu0 0.0
    %1864 = vmatmul.mubr.f32.gmra.mrb[0].mxu0 %v1594
    %v1865 = vpop.f32.mrb[0].mxu0
    %v1866 = vadd.f32 0.0, %v1865
    %v1867 = vpop.f32.mrb[0].mxu0
    %1868 = vmatprep.mubr.f32.mxu0 0.0
    %1869 = vmatmul.mubr.f32.gmra.mrb[0].mxu0 %v1595
    %v1870 = vpop.f32.mrb[0].mxu0
    %v1871 = vadd.f32 0.0, %v1870
    %v1872 = vpop.f32.mrb[0].mxu0
    %1873 = vmatprep.mubr.f32.mxu0 0.0
    %1874 = vmatmul.mubr.f32.gmra.mrb[0].mxu0 %v1596
    %v1875 = vpop.f32.mrb[0].mxu0
    %v1876 = vadd.f32 0.0, %v1875
    %v1877 = vpop.f32.mrb[0].mxu0
    %1878 = vmatprep.mubr.f32.mxu0 0.0
    %1879 = vmatmul.mubr.f32.gmra.mrb[0].mxu0 %v1597
    %v1880 = vpop.f32.mrb[0].mxu0
    %v1881 = vadd.f32 0.0, %v1880
    %v1882 = vpop.f32.mrb[0].mxu0
    %1883 = vmatprep.mubr.f32.mxu0 0.0
    %1884 = vmatmul.mubr.f32.gmra.mrb[0].mxu0 %v1598
    %v1885 = vpop.f32.mrb[0].mxu0
    %v1886 = vadd.f32 0.0, %v1885
    %v1887 = vpop.f32.mrb[0].mxu0
    %1888 = vmatprep.mubr.f32.mxu0 0.0
    %1889 = vmatmul.mubr.f32.gmra.mrb[0].mxu0 %v1599
    %v1890 = vpop.f32.mrb[0].mxu0
    %v1891 = vadd.f32 0.0, %v1890
    %v1892 = vpop.f32.mrb[0].mxu0
    %1893 = vmatprep.mubr.f32.mxu0 0.0
    %1894 = vmatmul.mubr.f32.gmra.mrb[0].mxu0 %v1600
    %v1895 = vpop.f32.mrb[0].mxu0
    %v1896 = vadd.f32 0.0, %v1895
    %v1897 = vpop.f32.mrb[0].mxu0
    %1898 = vmatprep.mubr.f32.mxu0 0.0
    %1899 = vmatmul.mubr.f32.gmra.mrb[0].mxu0 %v1601
    %v1900 = vpop.f32.mrb[0].mxu0
    %v1901 = vadd.f32 0.0, %v1900
    %v1902 = vpop.f32.mrb[0].mxu0
    %1903 = vmatprep.mubr.f32.mxu0 0.0
    %1904 = vmatmul.mubr.f32.gmra.mrb[0].mxu0 %v1602
    %v1905 = vpop.f32.mrb[0].mxu0
    %v1906 = vadd.f32 0.0, %v1905
    %v1907 = vpop.f32.mrb[0].mxu0
    %1908 = vmatprep.mubr.f32.mxu0 0.0
    %1909 = vmatmul.mubr.f32.gmra.mrb[0].mxu0 %v1603
    %v1910 = vpop.f32.mrb[0].mxu0
    %v1911 = vadd.f32 0.0, %v1910
    %v1912 = vpop.f32.mrb[0].mxu0
    %1913 = vmatprep.mubr.f32.mxu0 0.0
    %1914 = vmatmul.mubr.f32.gmra.mrb[0].mxu0 %v1572
    %v1915 = vpop.f32.mrb[0].mxu0
    %v1916 = vadd.f32 0.0, %v1915
    %v1917 = vpop.f32.mrb[0].mxu0
    %1918 = vdwg.mxu0
    %1919 = vmatprep.subr.mxu0 0.0
    %1920 = vmatpush1.msra.mxu0 %v1604
    %1921 = vmatprep.subr.mxu0 0.0
    %1922 = vmatpush1.msra.mxu0 %v1605
    %1923 = vmatprep.subr.mxu0 0.0
    %1924 = vmatpush1.msra.mxu0 %v1606
    %1925 = vmatprep.subr.mxu0 0.0
    %1926 = vmatpush1.msra.mxu0 %v1607
    %1927 = vmatprep.subr.mxu0 0.0
    %1928 = vmatpush1.msra.mxu0 %v1608
    %1929 = vmatprep.subr.mxu0 0.0
    %1930 = vmatpush1.msra.mxu0 %v1609
    %1931 = vmatprep.subr.mxu0 0.0
    %1932 = vmatpush1.msra.mxu0 %v1610
    %1933 = vmatprep.subr.mxu0 0.0
    %1934 = vmatpush1.msra.mxu0 %v1611
    %1935 = vmatprep.subr.mxu0 0.0
    %1936 = vmatpush1.msra.mxu0 %v1612
    %1937 = vmatprep.subr.mxu0 0.0
    %1938 = vmatpush1.msra.mxu0 %v1613
    %1939 = vmatprep.subr.mxu0 0.0
    %1940 = vmatpush1.msra.mxu0 %v1614
    %1941 = vmatprep.subr.mxu0 0.0
    %1942 = vmatpush1.msra.mxu0 %v1615
    %1943 = vmatprep.subr.mxu0 0.0
    %1944 = vmatpush1.msra.mxu0 %v1616
    %1945 = vmatprep.subr.mxu0 0.0
    %1946 = vmatpush1.msra.mxu0 %v1617
    %1947 = vmatprep.subr.mxu0 0.0
    %1948 = vmatpush1.msra.mxu0 %v1618
    %1949 = vmatprep.subr.mxu0 0.0
    %1950 = vmatpush1.msra.mxu0 %v1619
    %1951 = vmatprep.subr.mxu0 0.0
    %1952 = vmatpush1.msra.mxu0 0.0
    %1953 = vmatprep.subr.mxu0 0.0
    %1954 = vmatpush1.msra.mxu0 0.0
    %1955 = vmatprep.subr.mxu0 0.0
    %1956 = vmatpush1.msra.mxu0 0.0
    %1957 = vmatprep.subr.mxu0 0.0
    %1958 = vmatpush1.msra.mxu0 0.0
    %1959 = vmatprep.subr.mxu0 0.0
    %1960 = vmatpush1.msra.mxu0 0.0
    %1961 = vmatprep.subr.mxu0 0.0
    %1962 = vmatpush1.msra.mxu0 0.0
    %1963 = vmatprep.subr.mxu0 0.0
    %1964 = vmatpush1.msra.mxu0 0.0
    %1965 = vmatprep.subr.mxu0 0.0
    %1966 = vmatpush1.msra.mxu0 0.0
    %1967 = vmatprep.subr.mxu0 0.0
    %1968 = vmatpush1.msra.mxu0 0.0
    %1969 = vmatprep.subr.mxu0 0.0
    %1970 = vmatpush1.msra.mxu0 0.0
    %1971 = vmatprep.subr.mxu0 0.0
    %1972 = vmatpush1.msra.mxu0 0.0
    %1973 = vmatprep.subr.mxu0 0.0
    %1974 = vmatpush1.msra.mxu0 0.0
    %1975 = vmatprep.subr.mxu0 0.0
    %1976 = vmatpush1.msra.mxu0 0.0
    %1977 = vmatprep.subr.mxu0 0.0
    %1978 = vmatpush1.msra.mxu0 0.0
    %1979 = vmatprep.subr.mxu0 0.0
    %1980 = vmatpush1.msra.mxu0 0.0
    %1981 = vmatprep.subr.mxu0 0.0
    %1982 = vmatpush1.msra.mxu0 0.0
    %1983 = vmatprep.mubr.f32.mxu0 0.0
    %1984 = vmatmul.mubr.f32.gmra.mrb[0].mxu0 %v1572
    %v1985 = vpop.f32.mrb[0].mxu0
    %v1986 = vadd.f32 %v1761, %v1985
    %v1987 = vpop.f32.mrb[0].mxu0
    %1988 = vmatprep.mubr.f32.mxu0 0.0
    %1989 = vmatmul.mubr.f32.gmra.mrb[0].mxu0 %v1573
    %v1990 = vpop.f32.mrb[0].mxu0
    %v1991 = vadd.f32 %v1766, %v1990
    %v1992 = vpop.f32.mrb[0].mxu0
    %1993 = vmatprep.mubr.f32.mxu0 0.0
    %1994 = vmatmul.mubr.f32.gmra.mrb[0].mxu0 %v1574
    %v1995 = vpop.f32.mrb[0].mxu0
    %v1996 = vadd.f32 %v1771, %v1995
    %v1997 = vpop.f32.mrb[0].mxu0
    %1998 = vmatprep.mubr.f32.mxu0 0.0
    %1999 = vmatmul.mubr.f32.gmra.mrb[0].mxu0 %v1575
    %v2000 = vpop.f32.mrb[0].mxu0
    %v2001 = vadd.f32 %v1776, %v2000
    %v2002 = vpop.f32.mrb[0].mxu0
    %2003 = vmatprep.mubr.f32.mxu0 0.0
    %2004 = vmatmul.mubr.f32.gmra.mrb[0].mxu0 %v1576
    %v2005 = vpop.f32.mrb[0].mxu0
    %v2006 = vadd.f32 %v1781, %v2005
    %v2007 = vpop.f32.mrb[0].mxu0
    %2008 = vmatprep.mubr.f32.mxu0 0.0
    %2009 = vmatmul.mubr.f32.gmra.mrb[0].mxu0 %v1577
    %v2010 = vpop.f32.mrb[0].mxu0
    %v2011 = vadd.f32 %v1786, %v2010
    %v2012 = vpop.f32.mrb[0].mxu0
    %2013 = vmatprep.mubr.f32.mxu0 0.0
    %2014 = vmatmul.mubr.f32.gmra.mrb[0].mxu0 %v1578
    %v2015 = vpop.f32.mrb[0].mxu0
    %v2016 = vadd.f32 %v1791, %v2015
    %v2017 = vpop.f32.mrb[0].mxu0
    %2018 = vmatprep.mubr.f32.mxu0 0.0
    %2019 = vmatmul.mubr.f32.gmra.mrb[0].mxu0 %v1579
    %v2020 = vpop.f32.mrb[0].mxu0
    %v2021 = vadd.f32 %v1796, %v2020
    %v2022 = vpop.f32.mrb[0].mxu0
    %2023 = vmatprep.mubr.f32.mxu0 0.0
    %2024 = vmatmul.mubr.f32.gmra.mrb[0].mxu0 %v1580
    %v2025 = vpop.f32.mrb[0].mxu0
    %v2026 = vadd.f32 %v1801, %v2025
    %v2027 = vpop.f32.mrb[0].mxu0
    %2028 = vmatprep.mubr.f32.mxu0 0.0
    %2029 = vmatmul.mubr.f32.gmra.mrb[0].mxu0 %v1581
    %v2030 = vpop.f32.mrb[0].mxu0
    %v2031 = vadd.f32 %v1806, %v2030
    %v2032 = vpop.f32.mrb[0].mxu0
    %2033 = vmatprep.mubr.f32.mxu0 0.0
    %2034 = vmatmul.mubr.f32.gmra.mrb[0].mxu0 %v1582
    %v2035 = vpop.f32.mrb[0].mxu0
    %v2036 = vadd.f32 %v1811, %v2035
    %v2037 = vpop.f32.mrb[0].mxu0
    %2038 = vmatprep.mubr.f32.mxu0 0.0
    %2039 = vmatmul.mubr.f32.gmra.mrb[0].mxu0 %v1583
    %v2040 = vpop.f32.mrb[0].mxu0
    %v2041 = vadd.f32 %v1816, %v2040
    %v2042 = vpop.f32.mrb[0].mxu0
    %2043 = vmatprep.mubr.f32.mxu0 0.0
    %2044 = vmatmul.mubr.f32.gmra.mrb[0].mxu0 %v1584
    %v2045 = vpop.f32.mrb[0].mxu0
    %v2046 = vadd.f32 %v1821, %v2045
    %v2047 = vpop.f32.mrb[0].mxu0
    %2048 = vmatprep.mubr.f32.mxu0 0.0
    %2049 = vmatmul.mubr.f32.gmra.mrb[0].mxu0 %v1585
    %v2050 = vpop.f32.mrb[0].mxu0
    %v2051 = vadd.f32 %v1826, %v2050
    %v2052 = vpop.f32.mrb[0].mxu0
    %2053 = vmatprep.mubr.f32.mxu0 0.0
    %2054 = vmatmul.mubr.f32.gmra.mrb[0].mxu0 %v1586
    %v2055 = vpop.f32.mrb[0].mxu0
    %v2056 = vadd.f32 %v1831, %v2055
    %v2057 = vpop.f32.mrb[0].mxu0
    %2058 = vmatprep.mubr.f32.mxu0 0.0
    %2059 = vmatmul.mubr.f32.gmra.mrb[0].mxu0 %v1587
    %v2060 = vpop.f32.mrb[0].mxu0
    %v2061 = vadd.f32 %v1836, %v2060
    %v2062 = vpop.f32.mrb[0].mxu0
    %2063 = vmatprep.mubr.f32.mxu0 0.0
    %2064 = vmatmul.mubr.f32.gmra.mrb[0].mxu0 %v1588
    %v2065 = vpop.f32.mrb[0].mxu0
    %v2066 = vadd.f32 %v1841, %v2065
    %v2067 = vpop.f32.mrb[0].mxu0
    %2068 = vmatprep.mubr.f32.mxu0 0.0
    %2069 = vmatmul.mubr.f32.gmra.mrb[0].mxu0 %v1589
    %v2070 = vpop.f32.mrb[0].mxu0
    %v2071 = vadd.f32 %v1846, %v2070
    %v2072 = vpop.f32.mrb[0].mxu0
    %2073 = vmatprep.mubr.f32.mxu0 0.0
    %2074 = vmatmul.mubr.f32.gmra.mrb[0].mxu0 %v1590
    %v2075 = vpop.f32.mrb[0].mxu0
    %v2076 = vadd.f32 %v1851, %v2075
    %v2077 = vpop.f32.mrb[0].mxu0
    %2078 = vmatprep.mubr.f32.mxu0 0.0
    %2079 = vmatmul.mubr.f32.gmra.mrb[0].mxu0 %v1591
    %v2080 = vpop.f32.mrb[0].mxu0
    %v2081 = vadd.f32 %v1856, %v2080
    %v2082 = vpop.f32.mrb[0].mxu0
    %2083 = vmatprep.mubr.f32.mxu0 0.0
    %2084 = vmatmul.mubr.f32.gmra.mrb[0].mxu0 %v1592
    %v2085 = vpop.f32.mrb[0].mxu0
    %v2086 = vadd.f32 %v1861, %v2085
    %v2087 = vpop.f32.mrb[0].mxu0
    %2088 = vmatprep.mubr.f32.mxu0 0.0
    %2089 = vmatmul.mubr.f32.gmra.mrb[0].mxu0 %v1593
    %v2090 = vpop.f32.mrb[0].mxu0
    %v2091 = vadd.f32 %v1866, %v2090
    %v2092 = vpop.f32.mrb[0].mxu0
    %2093 = vmatprep.mubr.f32.mxu0 0.0
    %2094 = vmatmul.mubr.f32.gmra.mrb[0].mxu0 %v1594
    %v2095 = vpop.f32.mrb[0].mxu0
    %v2096 = vadd.f32 %v1871, %v2095
    %v2097 = vpop.f32.mrb[0].mxu0
    %2098 = vmatprep.mubr.f32.mxu0 0.0
    %2099 = vmatmul.mubr.f32.gmra.mrb[0].mxu0 %v1595
    %v2100 = vpop.f32.mrb[0].mxu0
    %v2101 = vadd.f32 %v1876, %v2100
    %v2102 = vpop.f32.mrb[0].mxu0
    %2103 = vmatprep.mubr.f32.mxu0 0.0
    %2104 = vmatmul.mubr.f32.gmra.mrb[0].mxu0 %v1596
    %v2105 = vpop.f32.mrb[0].mxu0
    %v2106 = vadd.f32 %v1881, %v2105
    %v2107 = vpop.f32.mrb[0].mxu0
    %2108 = vmatprep.mubr.f32.mxu0 0.0
    %2109 = vmatmul.mubr.f32.gmra.mrb[0].mxu0 %v1597
    %v2110 = vpop.f32.mrb[0].mxu0
    %v2111 = vadd.f32 %v1886, %v2110
    %v2112 = vpop.f32.mrb[0].mxu0
    %2113 = vmatprep.mubr.f32.mxu0 0.0
    %2114 = vmatmul.mubr.f32.gmra.mrb[0].mxu0 %v1598
    %v2115 = vpop.f32.mrb[0].mxu0
    %v2116 = vadd.f32 %v1891, %v2115
    %v2117 = vpop.f32.mrb[0].mxu0
    %2118 = vmatprep.mubr.f32.mxu0 0.0
    %2119 = vmatmul.mubr.f32.gmra.mrb[0].mxu0 %v1599
    %v2120 = vpop.f32.mrb[0].mxu0
    %v2121 = vadd.f32 %v1896, %v2120
    %v2122 = vpop.f32.mrb[0].mxu0
    %2123 = vmatprep.mubr.f32.mxu0 0.0
    %2124 = vmatmul.mubr.f32.gmra.mrb[0].mxu0 %v1600
    %v2125 = vpop.f32.mrb[0].mxu0
    %v2126 = vadd.f32 %v1901, %v2125
    %v2127 = vpop.f32.mrb[0].mxu0
    %2128 = vmatprep.mubr.f32.mxu0 0.0
    %2129 = vmatmul.mubr.f32.gmra.mrb[0].mxu0 %v1601
    %v2130 = vpop.f32.mrb[0].mxu0
    %v2131 = vadd.f32 %v1906, %v2130
    %v2132 = vpop.f32.mrb[0].mxu0
    %2133 = vmatprep.mubr.f32.mxu0 0.0
    %2134 = vmatmul.mubr.f32.gmra.mrb[0].mxu0 %v1602
    %v2135 = vpop.f32.mrb[0].mxu0
    %v2136 = vadd.f32 %v1911, %v2135
    %v2137 = vpop.f32.mrb[0].mxu0
    %2138 = vmatprep.mubr.f32.mxu0 0.0
    %2139 = vmatmul.mubr.f32.gmra.mrb[0].mxu0 %v1603
    %v2140 = vpop.f32.mrb[0].mxu0
    %v2141 = vadd.f32 %v1916, %v2140
    %v2142 = vpop.f32.mrb[0].mxu0
    %2143 = vdwg.mxu0
    %2144 = vmatprep.subr.mxu0 0.0
    %2145 = vmatpush1.msra.mxu0 %v1638
    %2146 = vmatprep.subr.mxu0 0.0
    %2147 = vmatpush1.msra.mxu0 %v1639
    %2148 = vmatprep.subr.mxu0 0.0
    %2149 = vmatpush1.msra.mxu0 %v1640
    %2150 = vmatprep.subr.mxu0 0.0
    %2151 = vmatpush1.msra.mxu0 %v1641
    %2152 = vmatprep.subr.mxu0 0.0
    %2153 = vmatpush1.msra.mxu0 %v1642
    %2154 = vmatprep.subr.mxu0 0.0
    %2155 = vmatpush1.msra.mxu0 %v1643
    %2156 = vmatprep.subr.mxu0 0.0
    %2157 = vmatpush1.msra.mxu0 %v1644
    %2158 = vmatprep.subr.mxu0 0.0
    %2159 = vmatpush1.msra.mxu0 %v1645
    %2160 = vmatprep.subr.mxu0 0.0
    %2161 = vmatpush1.msra.mxu0 %v1646
    %2162 = vmatprep.subr.mxu0 0.0
    %2163 = vmatpush1.msra.mxu0 %v1647
    %2164 = vmatprep.subr.mxu0 0.0
    %2165 = vmatpush1.msra.mxu0 %v1648
    %2166 = vmatprep.subr.mxu0 0.0
    %2167 = vmatpush1.msra.mxu0 %v1649
    %2168 = vmatprep.subr.mxu0 0.0
    %2169 = vmatpush1.msra.mxu0 %v1650
    %2170 = vmatprep.subr.mxu0 0.0
    %2171 = vmatpush1.msra.mxu0 %v1651
    %2172 = vmatprep.subr.mxu0 0.0
    %2173 = vmatpush1.msra.mxu0 %v1652
    %2174 = vmatprep.subr.mxu0 0.0
    %2175 = vmatpush1.msra.mxu0 %v1653
    %2176 = vmatprep.subr.mxu0 0.0
    %2177 = vmatpush1.msra.mxu0 0.0
    %2178 = vmatprep.subr.mxu0 0.0
    %2179 = vmatpush1.msra.mxu0 0.0
    %2180 = vmatprep.subr.mxu0 0.0
    %2181 = vmatpush1.msra.mxu0 0.0
    %2182 = vmatprep.subr.mxu0 0.0
    %2183 = vmatpush1.msra.mxu0 0.0
    %2184 = vmatprep.subr.mxu0 0.0
    %2185 = vmatpush1.msra.mxu0 0.0
    %2186 = vmatprep.subr.mxu0 0.0
    %2187 = vmatpush1.msra.mxu0 0.0
    %2188 = vmatprep.subr.mxu0 0.0
    %2189 = vmatpush1.msra.mxu0 0.0
    %2190 = vmatprep.subr.mxu0 0.0
    %2191 = vmatpush1.msra.mxu0 0.0
    %2192 = vmatprep.subr.mxu0 0.0
    %2193 = vmatpush1.msra.mxu0 0.0
    %2194 = vmatprep.subr.mxu0 0.0
    %2195 = vmatpush1.msra.mxu0 0.0
    %2196 = vmatprep.subr.mxu0 0.0
    %2197 = vmatpush1.msra.mxu0 0.0
    %2198 = vmatprep.subr.mxu0 0.0
    %2199 = vmatpush1.msra.mxu0 0.0
    %2200 = vmatprep.subr.mxu0 0.0
    %2201 = vmatpush1.msra.mxu0 0.0
    %2202 = vmatprep.subr.mxu0 0.0
    %2203 = vmatpush1.msra.mxu0 0.0
    %2204 = vmatprep.subr.mxu0 0.0
    %2205 = vmatpush1.msra.mxu0 0.0
    %2206 = vmatprep.subr.mxu0 0.0
    %2207 = vmatpush1.msra.mxu0 0.0
    %2208 = vmatprep.mubr.f32.mxu0 0.0
    %2209 = vmatmul.mubr.f32.gmra.mrb[0].mxu0 %v1574
    %v2210 = vpop.f32.mrb[0].mxu0
    %v2211 = vadd.f32 0.0, %v2210
    %v2212 = vpop.f32.mrb[0].mxu0
    %2213 = vmatprep.mubr.f32.mxu0 0.0
    %2214 = vmatmul.mubr.f32.gmra.mrb[0].mxu0 %v1575
    %v2215 = vpop.f32.mrb[0].mxu0
    %v2216 = vadd.f32 0.0, %v2215
    %v2217 = vpop.f32.mrb[0].mxu0
    %2218 = vmatprep.mubr.f32.mxu0 0.0
    %2219 = vmatmul.mubr.f32.gmra.mrb[0].mxu0 %v1576
    %v2220 = vpop.f32.mrb[0].mxu0
    %v2221 = vadd.f32 0.0, %v2220
    %v2222 = vpop.f32.mrb[0].mxu0
    %2223 = vmatprep.mubr.f32.mxu0 0.0
    %2224 = vmatmul.mubr.f32.gmra.mrb[0].mxu0 %v1577
    %v2225 = vpop.f32.mrb[0].mxu0
    %v2226 = vadd.f32 0.0, %v2225
    %v2227 = vpop.f32.mrb[0].mxu0
    %2228 = vmatprep.mubr.f32.mxu0 0.0
    %2229 = vmatmul.mubr.f32.gmra.mrb[0].mxu0 %v1578
    %v2230 = vpop.f32.mrb[0].mxu0
    %v2231 = vadd.f32 0.0, %v2230
    %v2232 = vpop.f32.mrb[0].mxu0
    %2233 = vmatprep.mubr.f32.mxu0 0.0
    %2234 = vmatmul.mubr.f32.gmra.mrb[0].mxu0 %v1579
    %v2235 = vpop.f32.mrb[0].mxu0
    %v2236 = vadd.f32 0.0, %v2235
    %v2237 = vpop.f32.mrb[0].mxu0
    %2238 = vmatprep.mubr.f32.mxu0 0.0
    %2239 = vmatmul.mubr.f32.gmra.mrb[0].mxu0 %v1580
    %v2240 = vpop.f32.mrb[0].mxu0
    %v2241 = vadd.f32 0.0, %v2240
    %v2242 = vpop.f32.mrb[0].mxu0
    %2243 = vmatprep.mubr.f32.mxu0 0.0
    %2244 = vmatmul.mubr.f32.gmra.mrb[0].mxu0 %v1581
    %v2245 = vpop.f32.mrb[0].mxu0
    %v2246 = vadd.f32 0.0, %v2245
    %v2247 = vpop.f32.mrb[0].mxu0
    %2248 = vmatprep.mubr.f32.mxu0 0.0
    %2249 = vmatmul.mubr.f32.gmra.mrb[0].mxu0 %v1582
    %v2250 = vpop.f32.mrb[0].mxu0
    %v2251 = vadd.f32 0.0, %v2250
    %v2252 = vpop.f32.mrb[0].mxu0
    %2253 = vmatprep.mubr.f32.mxu0 0.0
    %2254 = vmatmul.mubr.f32.gmra.mrb[0].mxu0 %v1583
    %v2255 = vpop.f32.mrb[0].mxu0
    %v2256 = vadd.f32 0.0, %v2255
    %v2257 = vpop.f32.mrb[0].mxu0
    %2258 = vmatprep.mubr.f32.mxu0 0.0
    %2259 = vmatmul.mubr.f32.gmra.mrb[0].mxu0 %v1584
    %v2260 = vpop.f32.mrb[0].mxu0
    %v2261 = vadd.f32 0.0, %v2260
    %v2262 = vpop.f32.mrb[0].mxu0
    %2263 = vmatprep.mubr.f32.mxu0 0.0
    %2264 = vmatmul.mubr.f32.gmra.mrb[0].mxu0 %v1585
    %v2265 = vpop.f32.mrb[0].mxu0
    %v2266 = vadd.f32 0.0, %v2265
    %v2267 = vpop.f32.mrb[0].mxu0
    %2268 = vmatprep.mubr.f32.mxu0 0.0
    %2269 = vmatmul.mubr.f32.gmra.mrb[0].mxu0 %v1586
    %v2270 = vpop.f32.mrb[0].mxu0
    %v2271 = vadd.f32 0.0, %v2270
    %v2272 = vpop.f32.mrb[0].mxu0
    %2273 = vmatprep.mubr.f32.mxu0 0.0
    %2274 = vmatmul.mubr.f32.gmra.mrb[0].mxu0 %v1587
    %v2275 = vpop.f32.mrb[0].mxu0
    %v2276 = vadd.f32 0.0, %v2275
    %v2277 = vpop.f32.mrb[0].mxu0
    %2278 = vmatprep.mubr.f32.mxu0 0.0
    %2279 = vmatmul.mubr.f32.gmra.mrb[0].mxu0 %v1588
    %v2280 = vpop.f32.mrb[0].mxu0
    %v2281 = vadd.f32 0.0, %v2280
    %v2282 = vpop.f32.mrb[0].mxu0
    %2283 = vmatprep.mubr.f32.mxu0 0.0
    %2284 = vmatmul.mubr.f32.gmra.mrb[0].mxu0 %v1589
    %v2285 = vpop.f32.mrb[0].mxu0
    %v2286 = vadd.f32 0.0, %v2285
    %v2287 = vpop.f32.mrb[0].mxu0
    %2288 = vmatprep.mubr.f32.mxu0 0.0
    %2289 = vmatmul.mubr.f32.gmra.mrb[0].mxu0 %v1590
    %v2290 = vpop.f32.mrb[0].mxu0
    %v2291 = vadd.f32 0.0, %v2290
    %v2292 = vpop.f32.mrb[0].mxu0
    %2293 = vmatprep.mubr.f32.mxu0 0.0
    %2294 = vmatmul.mubr.f32.gmra.mrb[0].mxu0 %v1591
    %v2295 = vpop.f32.mrb[0].mxu0
    %v2296 = vadd.f32 0.0, %v2295
    %v2297 = vpop.f32.mrb[0].mxu0
    %2298 = vmatprep.mubr.f32.mxu0 0.0
    %2299 = vmatmul.mubr.f32.gmra.mrb[0].mxu0 %v1592
    %v2300 = vpop.f32.mrb[0].mxu0
    %v2301 = vadd.f32 0.0, %v2300
    %v2302 = vpop.f32.mrb[0].mxu0
    %2303 = vmatprep.mubr.f32.mxu0 0.0
    %2304 = vmatmul.mubr.f32.gmra.mrb[0].mxu0 %v1593
    %v2305 = vpop.f32.mrb[0].mxu0
    %v2306 = vadd.f32 0.0, %v2305
    %v2307 = vpop.f32.mrb[0].mxu0
    %2308 = vmatprep.mubr.f32.mxu0 0.0
    %2309 = vmatmul.mubr.f32.gmra.mrb[0].mxu0 %v1594
    %v2310 = vpop.f32.mrb[0].mxu0
    %v2311 = vadd.f32 0.0, %v2310
    %v2312 = vpop.f32.mrb[0].mxu0
    %2313 = vmatprep.mubr.f32.mxu0 0.0
    %2314 = vmatmul.mubr.f32.gmra.mrb[0].mxu0 %v1595
    %v2315 = vpop.f32.mrb[0].mxu0
    %v2316 = vadd.f32 0.0, %v2315
    %v2317 = vpop.f32.mrb[0].mxu0
    %2318 = vmatprep.mubr.f32.mxu0 0.0
    %2319 = vmatmul.mubr.f32.gmra.mrb[0].mxu0 %v1596
    %v2320 = vpop.f32.mrb[0].mxu0
    %v2321 = vadd.f32 0.0, %v2320
    %v2322 = vpop.f32.mrb[0].mxu0
    %2323 = vmatprep.mubr.f32.mxu0 0.0
    %2324 = vmatmul.mubr.f32.gmra.mrb[0].mxu0 %v1597
    %v2325 = vpop.f32.mrb[0].mxu0
    %v2326 = vadd.f32 0.0, %v2325
    %v2327 = vpop.f32.mrb[0].mxu0
    %2328 = vmatprep.mubr.f32.mxu0 0.0
    %2329 = vmatmul.mubr.f32.gmra.mrb[0].mxu0 %v1598
    %v2330 = vpop.f32.mrb[0].mxu0
    %v2331 = vadd.f32 0.0, %v2330
    %v2332 = vpop.f32.mrb[0].mxu0
    %2333 = vmatprep.mubr.f32.mxu0 0.0
    %2334 = vmatmul.mubr.f32.gmra.mrb[0].mxu0 %v1599
    %v2335 = vpop.f32.mrb[0].mxu0
    %v2336 = vadd.f32 0.0, %v2335
    %v2337 = vpop.f32.mrb[0].mxu0
    %2338 = vmatprep.mubr.f32.mxu0 0.0
    %2339 = vmatmul.mubr.f32.gmra.mrb[0].mxu0 %v1600
    %v2340 = vpop.f32.mrb[0].mxu0
    %v2341 = vadd.f32 0.0, %v2340
    %v2342 = vpop.f32.mrb[0].mxu0
    %2343 = vmatprep.mubr.f32.mxu0 0.0
    %2344 = vmatmul.mubr.f32.gmra.mrb[0].mxu0 %v1601
    %v2345 = vpop.f32.mrb[0].mxu0
    %v2346 = vadd.f32 0.0, %v2345
    %v2347 = vpop.f32.mrb[0].mxu0
    %2348 = vmatprep.mubr.f32.mxu0 0.0
    %2349 = vmatmul.mubr.f32.gmra.mrb[0].mxu0 %v1602
    %v2350 = vpop.f32.mrb[0].mxu0
    %v2351 = vadd.f32 0.0, %v2350
    %v2352 = vpop.f32.mrb[0].mxu0
    %2353 = vmatprep.mubr.f32.mxu0 0.0
    %2354 = vmatmul.mubr.f32.gmra.mrb[0].mxu0 %v1603
    %v2355 = vpop.f32.mrb[0].mxu0
    %v2356 = vadd.f32 0.0, %v2355
    %v2357 = vpop.f32.mrb[0].mxu0
    %2358 = vmatprep.mubr.f32.mxu0 0.0
    %2359 = vmatmul.mubr.f32.gmra.mrb[0].mxu0 %v1572
    %v2360 = vpop.f32.mrb[0].mxu0
    %v2361 = vadd.f32 0.0, %v2360
    %v2362 = vpop.f32.mrb[0].mxu0
    %2363 = vmatprep.mubr.f32.mxu0 0.0
    %2364 = vmatmul.mubr.f32.gmra.mrb[0].mxu0 %v1573
    %v2365 = vpop.f32.mrb[0].mxu0
    %v2366 = vadd.f32 0.0, %v2365
    %v2367 = vpop.f32.mrb[0].mxu0
    %2368 = vdwg.mxu0
    %v2369 = vadd.f32 %v1986, %v2211
    %v2370 = vadd.f32 %v1991, %v2216
    %v2371 = vadd.f32 %v1996, %v2221
    %v2372 = vadd.f32 %v2001, %v2226
    %v2373 = vadd.f32 %v2006, %v2231
    %v2374 = vadd.f32 %v2011, %v2236
    %v2375 = vadd.f32 %v2016, %v2241
    %v2376 = vadd.f32 %v2021, %v2246
    %v2377 = vadd.f32 %v2026, %v2251
    %v2378 = vadd.f32 %v2031, %v2256
    %v2379 = vadd.f32 %v2036, %v2261
    %v2380 = vadd.f32 %v2041, %v2266
    %v2381 = vadd.f32 %v2046, %v2271
    %v2382 = vadd.f32 %v2051, %v2276
    %v2383 = vadd.f32 %v2056, %v2281
    %v2384 = vadd.f32 %v2061, %v2286
    %v2385 = vadd.f32 %v2066, %v2291
    %v2386 = vadd.f32 %v2071, %v2296
    %v2387 = vadd.f32 %v2076, %v2301
    %v2388 = vadd.f32 %v2081, %v2306
    %v2389 = vadd.f32 %v2086, %v2311
    %v2390 = vadd.f32 %v2091, %v2316
    %v2391 = vadd.f32 %v2096, %v2321
    %v2392 = vadd.f32 %v2101, %v2326
    %v2393 = vadd.f32 %v2106, %v2331
    %v2394 = vadd.f32 %v2111, %v2336
    %v2395 = vadd.f32 %v2116, %v2341
    %v2396 = vadd.f32 %v2121, %v2346
    %v2397 = vadd.f32 %v2126, %v2351
    %v2398 = vadd.f32 %v2131, %v2356
    %v2399 = vadd.f32 %v2136, %v2361
    %v2400 = vadd.f32 %v2141, %v2366
    %2401 = vmatprep.subr.mxu0 0.0
    %2402 = vmatpush1.msra.mxu0 %v1655
    %2403 = vmatprep.subr.mxu0 0.0
    %2404 = vmatpush1.msra.mxu0 %v1656
    %2405 = vmatprep.subr.mxu0 0.0
    %2406 = vmatpush1.msra.mxu0 %v1657
    %2407 = vmatprep.subr.mxu0 0.0
    %2408 = vmatpush1.msra.mxu0 %v1658
    %2409 = vmatprep.subr.mxu0 0.0
    %2410 = vmatpush1.msra.mxu0 %v1659
    %2411 = vmatprep.subr.mxu0 0.0
    %2412 = vmatpush1.msra.mxu0 %v1660
    %2413 = vmatprep.subr.mxu0 0.0
    %2414 = vmatpush1.msra.mxu0 %v1661
    %2415 = vmatprep.subr.mxu0 0.0
    %2416 = vmatpush1.msra.mxu0 %v1662
    %2417 = vmatprep.subr.mxu0 0.0
    %2418 = vmatpush1.msra.mxu0 %v1663
    %2419 = vmatprep.subr.mxu0 0.0
    %2420 = vmatpush1.msra.mxu0 %v1664
    %2421 = vmatprep.subr.mxu0 0.0
    %2422 = vmatpush1.msra.mxu0 %v1665
    %2423 = vmatprep.subr.mxu0 0.0
    %2424 = vmatpush1.msra.mxu0 %v1666
    %2425 = vmatprep.subr.mxu0 0.0
    %2426 = vmatpush1.msra.mxu0 %v1667
    %2427 = vmatprep.subr.mxu0 0.0
    %2428 = vmatpush1.msra.mxu0 %v1668
    %2429 = vmatprep.subr.mxu0 0.0
    %2430 = vmatpush1.msra.mxu0 %v1669
    %2431 = vmatprep.subr.mxu0 0.0
    %2432 = vmatpush1.msra.mxu0 %v1670
    %2433 = vmatprep.subr.mxu0 0.0
    %2434 = vmatpush1.msra.mxu0 0.0
    %2435 = vmatprep.subr.mxu0 0.0
    %2436 = vmatpush1.msra.mxu0 0.0
    %2437 = vmatprep.subr.mxu0 0.0
    %2438 = vmatpush1.msra.mxu0 0.0
    %2439 = vmatprep.subr.mxu0 0.0
    %2440 = vmatpush1.msra.mxu0 0.0
    %2441 = vmatprep.subr.mxu0 0.0
    %2442 = vmatpush1.msra.mxu0 0.0
    %2443 = vmatprep.subr.mxu0 0.0
    %2444 = vmatpush1.msra.mxu0 0.0
    %2445 = vmatprep.subr.mxu0 0.0
    %2446 = vmatpush1.msra.mxu0 0.0
    %2447 = vmatprep.subr.mxu0 0.0
    %2448 = vmatpush1.msra.mxu0 0.0
    %2449 = vmatprep.subr.mxu0 0.0
    %2450 = vmatpush1.msra.mxu0 0.0
    %2451 = vmatprep.subr.mxu0 0.0
    %2452 = vmatpush1.msra.mxu0 0.0
    %2453 = vmatprep.subr.mxu0 0.0
    %2454 = vmatpush1.msra.mxu0 0.0
    %2455 = vmatprep.subr.mxu0 0.0
    %2456 = vmatpush1.msra.mxu0 0.0
    %2457 = vmatprep.subr.mxu0 0.0
    %2458 = vmatpush1.msra.mxu0 0.0
    %2459 = vmatprep.subr.mxu0 0.0
    %2460 = vmatpush1.msra.mxu0 0.0
    %2461 = vmatprep.subr.mxu0 0.0
    %2462 = vmatpush1.msra.mxu0 0.0
    %2463 = vmatprep.subr.mxu0 0.0
    %2464 = vmatpush1.msra.mxu0 0.0
    %2465 = vmatprep.mubr.f32.mxu0 0.0
    %2466 = vmatmul.mubr.f32.gmra.mrb[0].mxu0 %v1575
    %v2467 = vpop.f32.mrb[0].mxu0
    %v2468 = vadd.f32 0.0, %v2467
    %v2469 = vpop.f32.mrb[0].mxu0
    %2470 = vmatprep.mubr.f32.mxu0 0.0
    %2471 = vmatmul.mubr.f32.gmra.mrb[0].mxu0 %v1576
    %v2472 = vpop.f32.mrb[0].mxu0
    %v2473 = vadd.f32 0.0, %v2472
    %v2474 = vpop.f32.mrb[0].mxu0
    %2475 = vmatprep.mubr.f32.mxu0 0.0
    %2476 = vmatmul.mubr.f32.gmra.mrb[0].mxu0 %v1577
    %v2477 = vpop.f32.mrb[0].mxu0
    %v2478 = vadd.f32 0.0, %v2477
    %v2479 = vpop.f32.mrb[0].mxu0
    %2480 = vmatprep.mubr.f32.mxu0 0.0
    %2481 = vmatmul.mubr.f32.gmra.mrb[0].mxu0 %v1578
    %v2482 = vpop.f32.mrb[0].mxu0
    %v2483 = vadd.f32 0.0, %v2482
    %v2484 = vpop.f32.mrb[0].mxu0
    %2485 = vmatprep.mubr.f32.mxu0 0.0
    %2486 = vmatmul.mubr.f32.gmra.mrb[0].mxu0 %v1579
    %v2487 = vpop.f32.mrb[0].mxu0
    %v2488 = vadd.f32 0.0, %v2487
    %v2489 = vpop.f32.mrb[0].mxu0
    %2490 = vmatprep.mubr.f32.mxu0 0.0
    %2491 = vmatmul.mubr.f32.gmra.mrb[0].mxu0 %v1580
    %v2492 = vpop.f32.mrb[0].mxu0
    %v2493 = vadd.f32 0.0, %v2492
    %v2494 = vpop.f32.mrb[0].mxu0
    %2495 = vmatprep.mubr.f32.mxu0 0.0
    %2496 = vmatmul.mubr.f32.gmra.mrb[0].mxu0 %v1581
    %v2497 = vpop.f32.mrb[0].mxu0
    %v2498 = vadd.f32 0.0, %v2497
    %v2499 = vpop.f32.mrb[0].mxu0
    %2500 = vmatprep.mubr.f32.mxu0 0.0
    %2501 = vmatmul.mubr.f32.gmra.mrb[0].mxu0 %v1582
    %v2502 = vpop.f32.mrb[0].mxu0
    %v2503 = vadd.f32 0.0, %v2502
    %v2504 = vpop.f32.mrb[0].mxu0
    %2505 = vmatprep.mubr.f32.mxu0 0.0
    %2506 = vmatmul.mubr.f32.gmra.mrb[0].mxu0 %v1583
    %v2507 = vpop.f32.mrb[0].mxu0
    %v2508 = vadd.f32 0.0, %v2507
    %v2509 = vpop.f32.mrb[0].mxu0
    %2510 = vmatprep.mubr.f32.mxu0 0.0
    %2511 = vmatmul.mubr.f32.gmra.mrb[0].mxu0 %v1584
    %v2512 = vpop.f32.mrb[0].mxu0
    %v2513 = vadd.f32 0.0, %v2512
    %v2514 = vpop.f32.mrb[0].mxu0
    %2515 = vmatprep.mubr.f32.mxu0 0.0
    %2516 = vmatmul.mubr.f32.gmra.mrb[0].mxu0 %v1585
    %v2517 = vpop.f32.mrb[0].mxu0
    %v2518 = vadd.f32 0.0, %v2517
    %v2519 = vpop.f32.mrb[0].mxu0
    %2520 = vmatprep.mubr.f32.mxu0 0.0
    %2521 = vmatmul.mubr.f32.gmra.mrb[0].mxu0 %v1586
    %v2522 = vpop.f32.mrb[0].mxu0
    %v2523 = vadd.f32 0.0, %v2522
    %v2524 = vpop.f32.mrb[0].mxu0
    %2525 = vmatprep.mubr.f32.mxu0 0.0
    %2526 = vmatmul.mubr.f32.gmra.mrb[0].mxu0 %v1587
    %v2527 = vpop.f32.mrb[0].mxu0
    %v2528 = vadd.f32 0.0, %v2527
    %v2529 = vpop.f32.mrb[0].mxu0
    %2530 = vmatprep.mubr.f32.mxu0 0.0
    %2531 = vmatmul.mubr.f32.gmra.mrb[0].mxu0 %v1588
    %v2532 = vpop.f32.mrb[0].mxu0
    %v2533 = vadd.f32 0.0, %v2532
    %v2534 = vpop.f32.mrb[0].mxu0
    %2535 = vmatprep.mubr.f32.mxu0 0.0
    %2536 = vmatmul.mubr.f32.gmra.mrb[0].mxu0 %v1589
    %v2537 = vpop.f32.mrb[0].mxu0
    %v2538 = vadd.f32 0.0, %v2537
    %v2539 = vpop.f32.mrb[0].mxu0
    %2540 = vmatprep.mubr.f32.mxu0 0.0
    %2541 = vmatmul.mubr.f32.gmra.mrb[0].mxu0 %v1590
    %v2542 = vpop.f32.mrb[0].mxu0
    %v2543 = vadd.f32 0.0, %v2542
    %v2544 = vpop.f32.mrb[0].mxu0
    %2545 = vmatprep.mubr.f32.mxu0 0.0
    %2546 = vmatmul.mubr.f32.gmra.mrb[0].mxu0 %v1591
    %v2547 = vpop.f32.mrb[0].mxu0
    %v2548 = vadd.f32 0.0, %v2547
    %v2549 = vpop.f32.mrb[0].mxu0
    %2550 = vmatprep.mubr.f32.mxu0 0.0
    %2551 = vmatmul.mubr.f32.gmra.mrb[0].mxu0 %v1592
    %v2552 = vpop.f32.mrb[0].mxu0
    %v2553 = vadd.f32 0.0, %v2552
    %v2554 = vpop.f32.mrb[0].mxu0
    %2555 = vmatprep.mubr.f32.mxu0 0.0
    %2556 = vmatmul.mubr.f32.gmra.mrb[0].mxu0 %v1593
    %v2557 = vpop.f32.mrb[0].mxu0
    %v2558 = vadd.f32 0.0, %v2557
    %v2559 = vpop.f32.mrb[0].mxu0
    %2560 = vmatprep.mubr.f32.mxu0 0.0
    %2561 = vmatmul.mubr.f32.gmra.mrb[0].mxu0 %v1594
    %v2562 = vpop.f32.mrb[0].mxu0
    %v2563 = vadd.f32 0.0, %v2562
    %v2564 = vpop.f32.mrb[0].mxu0
    %2565 = vmatprep.mubr.f32.mxu0 0.0
    %2566 = vmatmul.mubr.f32.gmra.mrb[0].mxu0 %v1595
    %v2567 = vpop.f32.mrb[0].mxu0
    %v2568 = vadd.f32 0.0, %v2567
    %v2569 = vpop.f32.mrb[0].mxu0
    %2570 = vmatprep.mubr.f32.mxu0 0.0
    %2571 = vmatmul.mubr.f32.gmra.mrb[0].mxu0 %v1596
    %v2572 = vpop.f32.mrb[0].mxu0
    %v2573 = vadd.f32 0.0, %v2572
    %v2574 = vpop.f32.mrb[0].mxu0
    %2575 = vmatprep.mubr.f32.mxu0 0.0
    %2576 = vmatmul.mubr.f32.gmra.mrb[0].mxu0 %v1597
    %v2577 = vpop.f32.mrb[0].mxu0
    %v2578 = vadd.f32 0.0, %v2577
    %v2579 = vpop.f32.mrb[0].mxu0
    %2580 = vmatprep.mubr.f32.mxu0 0.0
    %2581 = vmatmul.mubr.f32.gmra.mrb[0].mxu0 %v1598
    %v2582 = vpop.f32.mrb[0].mxu0
    %v2583 = vadd.f32 0.0, %v2582
    %v2584 = vpop.f32.mrb[0].mxu0
    %2585 = vmatprep.mubr.f32.mxu0 0.0
    %2586 = vmatmul.mubr.f32.gmra.mrb[0].mxu0 %v1599
    %v2587 = vpop.f32.mrb[0].mxu0
    %v2588 = vadd.f32 0.0, %v2587
    %v2589 = vpop.f32.mrb[0].mxu0
    %2590 = vmatprep.mubr.f32.mxu0 0.0
    %2591 = vmatmul.mubr.f32.gmra.mrb[0].mxu0 %v1600
    %v2592 = vpop.f32.mrb[0].mxu0
    %v2593 = vadd.f32 0.0, %v2592
    %v2594 = vpop.f32.mrb[0].mxu0
    %2595 = vmatprep.mubr.f32.mxu0 0.0
    %2596 = vmatmul.mubr.f32.gmra.mrb[0].mxu0 %v1601
    %v2597 = vpop.f32.mrb[0].mxu0
    %v2598 = vadd.f32 0.0, %v2597
    %v2599 = vpop.f32.mrb[0].mxu0
    %2600 = vmatprep.mubr.f32.mxu0 0.0
    %2601 = vmatmul.mubr.f32.gmra.mrb[0].mxu0 %v1602
    %v2602 = vpop.f32.mrb[0].mxu0
    %v2603 = vadd.f32 0.0, %v2602
    %v2604 = vpop.f32.mrb[0].mxu0
    %2605 = vmatprep.mubr.f32.mxu0 0.0
    %2606 = vmatmul.mubr.f32.gmra.mrb[0].mxu0 %v1603
    %v2607 = vpop.f32.mrb[0].mxu0
    %v2608 = vadd.f32 0.0, %v2607
    %v2609 = vpop.f32.mrb[0].mxu0
    %2610 = vmatprep.mubr.f32.mxu0 0.0
    %2611 = vmatmul.mubr.f32.gmra.mrb[0].mxu0 %v1572
    %v2612 = vpop.f32.mrb[0].mxu0
    %v2613 = vadd.f32 0.0, %v2612
    %v2614 = vpop.f32.mrb[0].mxu0
    %2615 = vmatprep.mubr.f32.mxu0 0.0
    %2616 = vmatmul.mubr.f32.gmra.mrb[0].mxu0 %v1573
    %v2617 = vpop.f32.mrb[0].mxu0
    %v2618 = vadd.f32 0.0, %v2617
    %v2619 = vpop.f32.mrb[0].mxu0
    %2620 = vmatprep.mubr.f32.mxu0 0.0
    %2621 = vmatmul.mubr.f32.gmra.mrb[0].mxu0 %v1574
    %v2622 = vpop.f32.mrb[0].mxu0
    %v2623 = vadd.f32 0.0, %v2622
    %v2624 = vpop.f32.mrb[0].mxu0
    %2625 = vdwg.mxu0
    %v2626 = vadd.f32 %v2369, %v2468
    %v2627 = vadd.f32 %v2370, %v2473
    %v2628 = vadd.f32 %v2371, %v2478
    %v2629 = vadd.f32 %v2372, %v2483
    %v2630 = vadd.f32 %v2373, %v2488
    %v2631 = vadd.f32 %v2374, %v2493
    %v2632 = vadd.f32 %v2375, %v2498
    %v2633 = vadd.f32 %v2376, %v2503
    %v2634 = vadd.f32 %v2377, %v2508
    %v2635 = vadd.f32 %v2378, %v2513
    %v2636 = vadd.f32 %v2379, %v2518
    %v2637 = vadd.f32 %v2380, %v2523
    %v2638 = vadd.f32 %v2381, %v2528
    %v2639 = vadd.f32 %v2382, %v2533
    %v2640 = vadd.f32 %v2383, %v2538
    %v2641 = vadd.f32 %v2384, %v2543
    %v2642 = vadd.f32 %v2385, %v2548
    %v2643 = vadd.f32 %v2386, %v2553
    %v2644 = vadd.f32 %v2387, %v2558
    %v2645 = vadd.f32 %v2388, %v2563
    %v2646 = vadd.f32 %v2389, %v2568
    %v2647 = vadd.f32 %v2390, %v2573
    %v2648 = vadd.f32 %v2391, %v2578
    %v2649 = vadd.f32 %v2392, %v2583
    %v2650 = vadd.f32 %v2393, %v2588
    %v2651 = vadd.f32 %v2394, %v2593
    %v2652 = vadd.f32 %v2395, %v2598
    %v2653 = vadd.f32 %v2396, %v2603
    %v2654 = vadd.f32 %v2397, %v2608
    %v2655 = vadd.f32 %v2398, %v2613
    %v2656 = vadd.f32 %v2399, %v2618
    %v2657 = vadd.f32 %v2400, %v2623
    %2658 = vmatprep.subr.mxu0 0.0
    %2659 = vmatpush1.msra.mxu0 %v1672
    %2660 = vmatprep.subr.mxu0 0.0
    %2661 = vmatpush1.msra.mxu0 %v1673
    %2662 = vmatprep.subr.mxu0 0.0
    %2663 = vmatpush1.msra.mxu0 %v1674
    %2664 = vmatprep.subr.mxu0 0.0
    %2665 = vmatpush1.msra.mxu0 %v1675
    %2666 = vmatprep.subr.mxu0 0.0
    %2667 = vmatpush1.msra.mxu0 %v1676
    %2668 = vmatprep.subr.mxu0 0.0
    %2669 = vmatpush1.msra.mxu0 %v1677
    %2670 = vmatprep.subr.mxu0 0.0
    %2671 = vmatpush1.msra.mxu0 %v1678
    %2672 = vmatprep.subr.mxu0 0.0
    %2673 = vmatpush1.msra.mxu0 %v1679
    %2674 = vmatprep.subr.mxu0 0.0
    %2675 = vmatpush1.msra.mxu0 %v1680
    %2676 = vmatprep.subr.mxu0 0.0
    %2677 = vmatpush1.msra.mxu0 %v1681
    %2678 = vmatprep.subr.mxu0 0.0
    %2679 = vmatpush1.msra.mxu0 %v1682
    %2680 = vmatprep.subr.mxu0 0.0
    %2681 = vmatpush1.msra.mxu0 %v1683
    %2682 = vmatprep.subr.mxu0 0.0
    %2683 = vmatpush1.msra.mxu0 %v1684
    %2684 = vmatprep.subr.mxu0 0.0
    %2685 = vmatpush1.msra.mxu0 %v1685
    %2686 = vmatprep.subr.mxu0 0.0
    %2687 = vmatpush1.msra.mxu0 %v1686
    %2688 = vmatprep.subr.mxu0 0.0
    %2689 = vmatpush1.msra.mxu0 %v1687
    %2690 = vmatprep.subr.mxu0 0.0
    %2691 = vmatpush1.msra.mxu0 0.0
    %2692 = vmatprep.subr.mxu0 0.0
    %2693 = vmatpush1.msra.mxu0 0.0
    %2694 = vmatprep.subr.mxu0 0.0
    %2695 = vmatpush1.msra.mxu0 0.0
    %2696 = vmatprep.subr.mxu0 0.0
    %2697 = vmatpush1.msra.mxu0 0.0
    %2698 = vmatprep.subr.mxu0 0.0
    %2699 = vmatpush1.msra.mxu0 0.0
    %2700 = vmatprep.subr.mxu0 0.0
    %2701 = vmatpush1.msra.mxu0 0.0
    %2702 = vmatprep.subr.mxu0 0.0
    %2703 = vmatpush1.msra.mxu0 0.0
    %2704 = vmatprep.subr.mxu0 0.0
    %2705 = vmatpush1.msra.mxu0 0.0
    %2706 = vmatprep.subr.mxu0 0.0
    %2707 = vmatpush1.msra.mxu0 0.0
    %2708 = vmatprep.subr.mxu0 0.0
    %2709 = vmatpush1.msra.mxu0 0.0
    %2710 = vmatprep.subr.mxu0 0.0
    %2711 = vmatpush1.msra.mxu0 0.0
    %2712 = vmatprep.subr.mxu0 0.0
    %2713 = vmatpush1.msra.mxu0 0.0
    %2714 = vmatprep.subr.mxu0 0.0
    %2715 = vmatpush1.msra.mxu0 0.0
    %2716 = vmatprep.subr.mxu0 0.0
    %2717 = vmatpush1.msra.mxu0 0.0
    %2718 = vmatprep.subr.mxu0 0.0
    %2719 = vmatpush1.msra.mxu0 0.0
    %2720 = vmatprep.subr.mxu0 0.0
    %2721 = vmatpush1.msra.mxu0 0.0
    %2722 = vmatprep.mubr.f32.mxu0 0.0
    %2723 = vmatmul.mubr.f32.gmra.mrb[0].mxu0 %v1576
    %v2724 = vpop.f32.mrb[0].mxu0
    %v2725 = vadd.f32 0.0, %v2724
    %v2726 = vpop.f32.mrb[0].mxu0
    %2727 = vmatprep.mubr.f32.mxu0 0.0
    %2728 = vmatmul.mubr.f32.gmra.mrb[0].mxu0 %v1577
    %v2729 = vpop.f32.mrb[0].mxu0
    %v2730 = vadd.f32 0.0, %v2729
    %v2731 = vpop.f32.mrb[0].mxu0
    %2732 = vmatprep.mubr.f32.mxu0 0.0
    %2733 = vmatmul.mubr.f32.gmra.mrb[0].mxu0 %v1578
    %v2734 = vpop.f32.mrb[0].mxu0
    %v2735 = vadd.f32 0.0, %v2734
    %v2736 = vpop.f32.mrb[0].mxu0
    %2737 = vmatprep.mubr.f32.mxu0 0.0
    %2738 = vmatmul.mubr.f32.gmra.mrb[0].mxu0 %v1579
    %v2739 = vpop.f32.mrb[0].mxu0
    %v2740 = vadd.f32 0.0, %v2739
    %v2741 = vpop.f32.mrb[0].mxu0
    %2742 = vmatprep.mubr.f32.mxu0 0.0
    %2743 = vmatmul.mubr.f32.gmra.mrb[0].mxu0 %v1580
    %v2744 = vpop.f32.mrb[0].mxu0
    %v2745 = vadd.f32 0.0, %v2744
    %v2746 = vpop.f32.mrb[0].mxu0
    %2747 = vmatprep.mubr.f32.mxu0 0.0
    %2748 = vmatmul.mubr.f32.gmra.mrb[0].mxu0 %v1581
    %v2749 = vpop.f32.mrb[0].mxu0
    %v2750 = vadd.f32 0.0, %v2749
    %v2751 = vpop.f32.mrb[0].mxu0
    %2752 = vmatprep.mubr.f32.mxu0 0.0
    %2753 = vmatmul.mubr.f32.gmra.mrb[0].mxu0 %v1582
    %v2754 = vpop.f32.mrb[0].mxu0
    %v2755 = vadd.f32 0.0, %v2754
    %v2756 = vpop.f32.mrb[0].mxu0
    %2757 = vmatprep.mubr.f32.mxu0 0.0
    %2758 = vmatmul.mubr.f32.gmra.mrb[0].mxu0 %v1583
    %v2759 = vpop.f32.mrb[0].mxu0
    %v2760 = vadd.f32 0.0, %v2759
    %v2761 = vpop.f32.mrb[0].mxu0
    %2762 = vmatprep.mubr.f32.mxu0 0.0
    %2763 = vmatmul.mubr.f32.gmra.mrb[0].mxu0 %v1584
    %v2764 = vpop.f32.mrb[0].mxu0
    %v2765 = vadd.f32 0.0, %v2764
    %v2766 = vpop.f32.mrb[0].mxu0
    %2767 = vmatprep.mubr.f32.mxu0 0.0
    %2768 = vmatmul.mubr.f32.gmra.mrb[0].mxu0 %v1585
    %v2769 = vpop.f32.mrb[0].mxu0
    %v2770 = vadd.f32 0.0, %v2769
    %v2771 = vpop.f32.mrb[0].mxu0
    %2772 = vmatprep.mubr.f32.mxu0 0.0
    %2773 = vmatmul.mubr.f32.gmra.mrb[0].mxu0 %v1586
    %v2774 = vpop.f32.mrb[0].mxu0
    %v2775 = vadd.f32 0.0, %v2774
    %v2776 = vpop.f32.mrb[0].mxu0
    %2777 = vmatprep.mubr.f32.mxu0 0.0
    %2778 = vmatmul.mubr.f32.gmra.mrb[0].mxu0 %v1587
    %v2779 = vpop.f32.mrb[0].mxu0
    %v2780 = vadd.f32 0.0, %v2779
    %v2781 = vpop.f32.mrb[0].mxu0
    %2782 = vmatprep.mubr.f32.mxu0 0.0
    %2783 = vmatmul.mubr.f32.gmra.mrb[0].mxu0 %v1588
    %v2784 = vpop.f32.mrb[0].mxu0
    %v2785 = vadd.f32 0.0, %v2784
    %v2786 = vpop.f32.mrb[0].mxu0
    %2787 = vmatprep.mubr.f32.mxu0 0.0
    %2788 = vmatmul.mubr.f32.gmra.mrb[0].mxu0 %v1589
    %v2789 = vpop.f32.mrb[0].mxu0
    %v2790 = vadd.f32 0.0, %v2789
    %v2791 = vpop.f32.mrb[0].mxu0
    %2792 = vmatprep.mubr.f32.mxu0 0.0
    %2793 = vmatmul.mubr.f32.gmra.mrb[0].mxu0 %v1590
    %v2794 = vpop.f32.mrb[0].mxu0
    %v2795 = vadd.f32 0.0, %v2794
    %v2796 = vpop.f32.mrb[0].mxu0
    %2797 = vmatprep.mubr.f32.mxu0 0.0
    %2798 = vmatmul.mubr.f32.gmra.mrb[0].mxu0 %v1591
    %v2799 = vpop.f32.mrb[0].mxu0
    %v2800 = vadd.f32 0.0, %v2799
    %v2801 = vpop.f32.mrb[0].mxu0
    %2802 = vmatprep.mubr.f32.mxu0 0.0
    %2803 = vmatmul.mubr.f32.gmra.mrb[0].mxu0 %v1592
    %v2804 = vpop.f32.mrb[0].mxu0
    %v2805 = vadd.f32 0.0, %v2804
    %v2806 = vpop.f32.mrb[0].mxu0
    %2807 = vmatprep.mubr.f32.mxu0 0.0
    %2808 = vmatmul.mubr.f32.gmra.mrb[0].mxu0 %v1593
    %v2809 = vpop.f32.mrb[0].mxu0
    %v2810 = vadd.f32 0.0, %v2809
    %v2811 = vpop.f32.mrb[0].mxu0
    %2812 = vmatprep.mubr.f32.mxu0 0.0
    %2813 = vmatmul.mubr.f32.gmra.mrb[0].mxu0 %v1594
    %v2814 = vpop.f32.mrb[0].mxu0
    %v2815 = vadd.f32 0.0, %v2814
    %v2816 = vpop.f32.mrb[0].mxu0
    %2817 = vmatprep.mubr.f32.mxu0 0.0
    %2818 = vmatmul.mubr.f32.gmra.mrb[0].mxu0 %v1595
    %v2819 = vpop.f32.mrb[0].mxu0
    %v2820 = vadd.f32 0.0, %v2819
    %v2821 = vpop.f32.mrb[0].mxu0
    %2822 = vmatprep.mubr.f32.mxu0 0.0
    %2823 = vmatmul.mubr.f32.gmra.mrb[0].mxu0 %v1596
    %v2824 = vpop.f32.mrb[0].mxu0
    %v2825 = vadd.f32 0.0, %v2824
    %v2826 = vpop.f32.mrb[0].mxu0
    %2827 = vmatprep.mubr.f32.mxu0 0.0
    %2828 = vmatmul.mubr.f32.gmra.mrb[0].mxu0 %v1597
    %v2829 = vpop.f32.mrb[0].mxu0
    %v2830 = vadd.f32 0.0, %v2829
    %v2831 = vpop.f32.mrb[0].mxu0
    %2832 = vmatprep.mubr.f32.mxu0 0.0
    %2833 = vmatmul.mubr.f32.gmra.mrb[0].mxu0 %v1598
    %v2834 = vpop.f32.mrb[0].mxu0
    %v2835 = vadd.f32 0.0, %v2834
    %v2836 = vpop.f32.mrb[0].mxu0
    %2837 = vmatprep.mubr.f32.mxu0 0.0
    %2838 = vmatmul.mubr.f32.gmra.mrb[0].mxu0 %v1599
    %v2839 = vpop.f32.mrb[0].mxu0
    %v2840 = vadd.f32 0.0, %v2839
    %v2841 = vpop.f32.mrb[0].mxu0
    %2842 = vmatprep.mubr.f32.mxu0 0.0
    %2843 = vmatmul.mubr.f32.gmra.mrb[0].mxu0 %v1600
    %v2844 = vpop.f32.mrb[0].mxu0
    %v2845 = vadd.f32 0.0, %v2844
    %v2846 = vpop.f32.mrb[0].mxu0
    %2847 = vmatprep.mubr.f32.mxu0 0.0
    %2848 = vmatmul.mubr.f32.gmra.mrb[0].mxu0 %v1601
    %v2849 = vpop.f32.mrb[0].mxu0
    %v2850 = vadd.f32 0.0, %v2849
    %v2851 = vpop.f32.mrb[0].mxu0
    %2852 = vmatprep.mubr.f32.mxu0 0.0
    %2853 = vmatmul.mubr.f32.gmra.mrb[0].mxu0 %v1602
    %v2854 = vpop.f32.mrb[0].mxu0
    %v2855 = vadd.f32 0.0, %v2854
    %v2856 = vpop.f32.mrb[0].mxu0
    %2857 = vmatprep.mubr.f32.mxu0 0.0
    %2858 = vmatmul.mubr.f32.gmra.mrb[0].mxu0 %v1603
    %v2859 = vpop.f32.mrb[0].mxu0
    %v2860 = vadd.f32 0.0, %v2859
    %v2861 = vpop.f32.mrb[0].mxu0
    %2862 = vmatprep.mubr.f32.mxu0 0.0
    %2863 = vmatmul.mubr.f32.gmra.mrb[0].mxu0 %v1572
    %v2864 = vpop.f32.mrb[0].mxu0
    %v2865 = vadd.f32 0.0, %v2864
    %v2866 = vpop.f32.mrb[0].mxu0
    %2867 = vmatprep.mubr.f32.mxu0 0.0
    %2868 = vmatmul.mubr.f32.gmra.mrb[0].mxu0 %v1573
    %v2869 = vpop.f32.mrb[0].mxu0
    %v2870 = vadd.f32 0.0, %v2869
    %v2871 = vpop.f32.mrb[0].mxu0
    %2872 = vmatprep.mubr.f32.mxu0 0.0
    %2873 = vmatmul.mubr.f32.gmra.mrb[0].mxu0 %v1574
    %v2874 = vpop.f32.mrb[0].mxu0
    %v2875 = vadd.f32 0.0, %v2874
    %v2876 = vpop.f32.mrb[0].mxu0
    %2877 = vmatprep.mubr.f32.mxu0 0.0
    %2878 = vmatmul.mubr.f32.gmra.mrb[0].mxu0 %v1575
    %v2879 = vpop.f32.mrb[0].mxu0
    %v2880 = vadd.f32 0.0, %v2879
    %v2881 = vpop.f32.mrb[0].mxu0
    %2882 = vdwg.mxu0
    %v2883 = vadd.f32 %v2626, %v2725
    %v2884 = vadd.f32 %v2627, %v2730
    %v2885 = vadd.f32 %v2628, %v2735
    %v2886 = vadd.f32 %v2629, %v2740
    %v2887 = vadd.f32 %v2630, %v2745
    %v2888 = vadd.f32 %v2631, %v2750
    %v2889 = vadd.f32 %v2632, %v2755
    %v2890 = vadd.f32 %v2633, %v2760
    %v2891 = vadd.f32 %v2634, %v2765
    %v2892 = vadd.f32 %v2635, %v2770
    %v2893 = vadd.f32 %v2636, %v2775
    %v2894 = vadd.f32 %v2637, %v2780
    %v2895 = vadd.f32 %v2638, %v2785
    %v2896 = vadd.f32 %v2639, %v2790
    %v2897 = vadd.f32 %v2640, %v2795
    %v2898 = vadd.f32 %v2641, %v2800
    %v2899 = vadd.f32 %v2642, %v2805
    %v2900 = vadd.f32 %v2643, %v2810
    %v2901 = vadd.f32 %v2644, %v2815
    %v2902 = vadd.f32 %v2645, %v2820
    %v2903 = vadd.f32 %v2646, %v2825
    %v2904 = vadd.f32 %v2647, %v2830
    %v2905 = vadd.f32 %v2648, %v2835
    %v2906 = vadd.f32 %v2649, %v2840
    %v2907 = vadd.f32 %v2650, %v2845
    %v2908 = vadd.f32 %v2651, %v2850
    %v2909 = vadd.f32 %v2652, %v2855
    %v2910 = vadd.f32 %v2653, %v2860
    %v2911 = vadd.f32 %v2654, %v2865
    %v2912 = vadd.f32 %v2655, %v2870
    %v2913 = vadd.f32 %v2656, %v2875
    %v2914 = vadd.f32 %v2657, %v2880
    %v2916 = vlaneseq
    %v2917 = vshrl.u32 %v2916, 7
    %v2918 = vsub.s32 0, %v2917
    %v2919 = vrot.slane %v1689, %v2918
    %v2921 = vadd.f32 %v2883, %v2919
    %v2922 = vadd.f32 %v2884, %v2919
    %v2923 = vadd.f32 %v2885, %v2919
    %v2924 = vadd.f32 %v2886, %v2919
    %v2925 = vadd.f32 %v2887, %v2919
    %v2926 = vadd.f32 %v2888, %v2919
    %v2927 = vadd.f32 %v2889, %v2919
    %v2928 = vadd.f32 %v2890, %v2919
    %v2929 = vadd.f32 %v2891, %v2919
    %v2930 = vadd.f32 %v2892, %v2919
    %v2931 = vadd.f32 %v2893, %v2919
    %v2932 = vadd.f32 %v2894, %v2919
    %v2933 = vadd.f32 %v2895, %v2919
    %v2934 = vadd.f32 %v2896, %v2919
    %v2935 = vadd.f32 %v2897, %v2919
    %v2936 = vadd.f32 %v2898, %v2919
    %v2937 = vadd.f32 %v2899, %v2919
    %v2938 = vadd.f32 %v2900, %v2919
    %v2939 = vadd.f32 %v2901, %v2919
    %v2940 = vadd.f32 %v2902, %v2919
    %v2941 = vadd.f32 %v2903, %v2919
    %v2942 = vadd.f32 %v2904, %v2919
    %v2943 = vadd.f32 %v2905, %v2919
    %v2944 = vadd.f32 %v2906, %v2919
    %v2945 = vadd.f32 %v2907, %v2919
    %v2946 = vadd.f32 %v2908, %v2919
    %v2947 = vadd.f32 %v2909, %v2919
    %v2948 = vadd.f32 %v2910, %v2919
    %v2949 = vadd.f32 %v2911, %v2919
    %v2950 = vadd.f32 %v2912, %v2919
    %v2951 = vadd.f32 %v2913, %v2919
    %v2952 = vadd.f32 %v2914, %v2919
    %v2953 = vmax.f32 %v2921, 0.0
    %v2954 = vmax.f32 %v2922, 0.0
    %v2955 = vmax.f32 %v2923, 0.0
    %v2956 = vmax.f32 %v2924, 0.0
    %v2957 = vmax.f32 %v2925, 0.0
    %v2958 = vmax.f32 %v2926, 0.0
    %v2959 = vmax.f32 %v2927, 0.0
    %v2960 = vmax.f32 %v2928, 0.0
    %v2961 = vmax.f32 %v2929, 0.0
    %v2962 = vmax.f32 %v2930, 0.0
    %v2963 = vmax.f32 %v2931, 0.0
    %v2964 = vmax.f32 %v2932, 0.0
    %v2965 = vmax.f32 %v2933, 0.0
    %v2966 = vmax.f32 %v2934, 0.0
    %v2967 = vmax.f32 %v2935, 0.0
    %v2968 = vmax.f32 %v2936, 0.0
    %v2969 = vmax.f32 %v2937, 0.0
    %v2970 = vmax.f32 %v2938, 0.0
    %v2971 = vmax.f32 %v2939, 0.0
    %v2972 = vmax.f32 %v2940, 0.0
    %v2973 = vmax.f32 %v2941, 0.0
    %v2974 = vmax.f32 %v2942, 0.0
    %v2975 = vmax.f32 %v2943, 0.0
    %v2976 = vmax.f32 %v2944, 0.0
    %v2977 = vmax.f32 %v2945, 0.0
    %v2978 = vmax.f32 %v2946, 0.0
    %v2979 = vmax.f32 %v2947, 0.0
    %v2980 = vmax.f32 %v2948, 0.0
    %v2981 = vmax.f32 %v2949, 0.0
    %v2982 = vmax.f32 %v2950, 0.0
    %v2983 = vmax.f32 %v2951, 0.0
    %v2984 = vmax.f32 %v2952, 0.0
    %v2986 = vlaneseq
    %v2987 = vshrl.u32 %v2986, 7
    %v2988 = vsub.s32 0, %v2987
    %v2989 = vrot.slane %v1691, %v2988
    %v2991 = vmul.f32 %v2953, %v2989
    %v2992 = vmul.f32 %v2954, %v2989
    %v2993 = vmul.f32 %v2955, %v2989
    %v2994 = vmul.f32 %v2956, %v2989
    %v2995 = vmul.f32 %v2957, %v2989
    %v2996 = vmul.f32 %v2958, %v2989
    %v2997 = vmul.f32 %v2959, %v2989
    %v2998 = vmul.f32 %v2960, %v2989
    %v2999 = vmul.f32 %v2961, %v2989
    %v3000 = vmul.f32 %v2962, %v2989
    %v3001 = vmul.f32 %v2963, %v2989
    %v3002 = vmul.f32 %v2964, %v2989
    %v3003 = vmul.f32 %v2965, %v2989
    %v3004 = vmul.f32 %v2966, %v2989
    %v3005 = vmul.f32 %v2967, %v2989
    %v3006 = vmul.f32 %v2968, %v2989
    %v3007 = vmul.f32 %v2969, %v2989
    %v3008 = vmul.f32 %v2970, %v2989
    %v3009 = vmul.f32 %v2971, %v2989
    %v3010 = vmul.f32 %v2972, %v2989
    %v3011 = vmul.f32 %v2973, %v2989
    %v3012 = vmul.f32 %v2974, %v2989
    %v3013 = vmul.f32 %v2975, %v2989
    %v3014 = vmul.f32 %v2976, %v2989
    %v3015 = vmul.f32 %v2977, %v2989
    %v3016 = vmul.f32 %v2978, %v2989
    %v3017 = vmul.f32 %v2979, %v2989
    %v3018 = vmul.f32 %v2980, %v2989
    %v3019 = vmul.f32 %v2981, %v2989
    %v3020 = vmul.f32 %v2982, %v2989
    %v3021 = vmul.f32 %v2983, %v2989
    %v3022 = vmul.f32 %v2984, %v2989
    %v3024 = vlaneseq
    %v3025 = vshrl.u32 %v3024, 7
    %v3026 = vsub.s32 0, %v3025
    %v3027 = vrot.slane %v1693, %v3026
    %v3029 = vadd.f32 %v2991, %v3027
    %v3030 = vadd.f32 %v2992, %v3027
    %v3031 = vadd.f32 %v2993, %v3027
    %v3032 = vadd.f32 %v2994, %v3027
    %v3033 = vadd.f32 %v2995, %v3027
    %v3034 = vadd.f32 %v2996, %v3027
    %v3035 = vadd.f32 %v2997, %v3027
    %v3036 = vadd.f32 %v2998, %v3027
    %v3037 = vadd.f32 %v2999, %v3027
    %v3038 = vadd.f32 %v3000, %v3027
    %v3039 = vadd.f32 %v3001, %v3027
    %v3040 = vadd.f32 %v3002, %v3027
    %v3041 = vadd.f32 %v3003, %v3027
    %v3042 = vadd.f32 %v3004, %v3027
    %v3043 = vadd.f32 %v3005, %v3027
    %v3044 = vadd.f32 %v3006, %v3027
    %v3045 = vadd.f32 %v3007, %v3027
    %v3046 = vadd.f32 %v3008, %v3027
    %v3047 = vadd.f32 %v3009, %v3027
    %v3048 = vadd.f32 %v3010, %v3027
    %v3049 = vadd.f32 %v3011, %v3027
    %v3050 = vadd.f32 %v3012, %v3027
    %v3051 = vadd.f32 %v3013, %v3027
    %v3052 = vadd.f32 %v3014, %v3027
    %v3053 = vadd.f32 %v3015, %v3027
    %v3054 = vadd.f32 %v3016, %v3027
    %v3055 = vadd.f32 %v3017, %v3027
    %v3056 = vadd.f32 %v3018, %v3027
    %v3057 = vadd.f32 %v3019, %v3027
    %v3058 = vadd.f32 %v3020, %v3027
    %v3059 = vadd.f32 %v3021, %v3027
    %v3060 = vadd.f32 %v3022, %v3027
    %s3061 = scalar_lea.vmem [#allocation3], 640
    %v3062 = vld [vmem:[%s3061] sm:$0xff]
    %v3063 = vld [vmem:[%s3061 + $0x8] sm:$0xff]
    %v3064 = vld [vmem:[%s3061 + $0x10] sm:$0xff]
    %v3065 = vld [vmem:[%s3061 + $0x18] sm:$0xff]
    %v3066 = vld [vmem:[%s3061 + $0x20] sm:$0xff]
    %v3067 = vld [vmem:[%s3061 + $0x28] sm:$0xff]
    %v3068 = vld [vmem:[%s3061 + $0x30] sm:$0xff]
    %v3069 = vld [vmem:[%s3061 + $0x38] sm:$0xff]
    %v3070 = vld [vmem:[%s3061 + $0x40] sm:$0xff]
    %v3071 = vld [vmem:[%s3061 + $0x48] sm:$0xff]
    %v3072 = vld [vmem:[%s3061 + $0x50] sm:$0xff]
    %v3073 = vld [vmem:[%s3061 + $0x58] sm:$0xff]
    %v3074 = vld [vmem:[%s3061 + $0x60] sm:$0xff]
    %v3075 = vld [vmem:[%s3061 + $0x68] sm:$0xff]
    %v3076 = vld [vmem:[%s3061 + $0x70] sm:$0xff]
    %v3077 = vld [vmem:[%s3061 + $0x78] sm:$0xff]
    %s3078 = scalar_lea.vmem [#allocation3], 768
    %v3079 = vld [vmem:[%s3078] sm:$0xff]
    %v3080 = vld [vmem:[%s3078 + $0x8] sm:$0xff]
    %v3081 = vld [vmem:[%s3078 + $0x10] sm:$0xff]
    %v3082 = vld [vmem:[%s3078 + $0x18] sm:$0xff]
    %v3083 = vld [vmem:[%s3078 + $0x20] sm:$0xff]
    %v3084 = vld [vmem:[%s3078 + $0x28] sm:$0xff]
    %v3085 = vld [vmem:[%s3078 + $0x30] sm:$0xff]
    %v3086 = vld [vmem:[%s3078 + $0x38] sm:$0xff]
    %v3087 = vld [vmem:[%s3078 + $0x40] sm:$0xff]
    %v3088 = vld [vmem:[%s3078 + $0x48] sm:$0xff]
    %v3089 = vld [vmem:[%s3078 + $0x50] sm:$0xff]
    %v3090 = vld [vmem:[%s3078 + $0x58] sm:$0xff]
    %v3091 = vld [vmem:[%s3078 + $0x60] sm:$0xff]
    %v3092 = vld [vmem:[%s3078 + $0x68] sm:$0xff]
    %v3093 = vld [vmem:[%s3078 + $0x70] sm:$0xff]
    %v3094 = vld [vmem:[%s3078 + $0x78] sm:$0xff]
    %s3095 = scalar_lea.vmem [#allocation3], 896
    %v3096 = vld [vmem:[%s3095] sm:$0xff]
    %v3097 = vld [vmem:[%s3095 + $0x8] sm:$0xff]
    %v3098 = vld [vmem:[%s3095 + $0x10] sm:$0xff]
    %v3099 = vld [vmem:[%s3095 + $0x18] sm:$0xff]
    %v3100 = vld [vmem:[%s3095 + $0x20] sm:$0xff]
    %v3101 = vld [vmem:[%s3095 + $0x28] sm:$0xff]
    %v3102 = vld [vmem:[%s3095 + $0x30] sm:$0xff]
    %v3103 = vld [vmem:[%s3095 + $0x38] sm:$0xff]
    %v3104 = vld [vmem:[%s3095 + $0x40] sm:$0xff]
    %v3105 = vld [vmem:[%s3095 + $0x48] sm:$0xff]
    %v3106 = vld [vmem:[%s3095 + $0x50] sm:$0xff]
    %v3107 = vld [vmem:[%s3095 + $0x58] sm:$0xff]
    %v3108 = vld [vmem:[%s3095 + $0x60] sm:$0xff]
    %v3109 = vld [vmem:[%s3095 + $0x68] sm:$0xff]
    %v3110 = vld [vmem:[%s3095 + $0x70] sm:$0xff]
    %v3111 = vld [vmem:[%s3095 + $0x78] sm:$0xff]
    %s3112 = scalar_lea.vmem [#allocation3], 1024
    %v3113 = vld [vmem:[%s3112] sm:$0xff]
    %v3114 = vld [vmem:[%s3112 + $0x8] sm:$0xff]
    %v3115 = vld [vmem:[%s3112 + $0x10] sm:$0xff]
    %v3116 = vld [vmem:[%s3112 + $0x18] sm:$0xff]
    %v3117 = vld [vmem:[%s3112 + $0x20] sm:$0xff]
    %v3118 = vld [vmem:[%s3112 + $0x28] sm:$0xff]
    %v3119 = vld [vmem:[%s3112 + $0x30] sm:$0xff]
    %v3120 = vld [vmem:[%s3112 + $0x38] sm:$0xff]
    %v3121 = vld [vmem:[%s3112 + $0x40] sm:$0xff]
    %v3122 = vld [vmem:[%s3112 + $0x48] sm:$0xff]
    %v3123 = vld [vmem:[%s3112 + $0x50] sm:$0xff]
    %v3124 = vld [vmem:[%s3112 + $0x58] sm:$0xff]
    %v3125 = vld [vmem:[%s3112 + $0x60] sm:$0xff]
    %v3126 = vld [vmem:[%s3112 + $0x68] sm:$0xff]
    %v3127 = vld [vmem:[%s3112 + $0x70] sm:$0xff]
    %v3128 = vld [vmem:[%s3112 + $0x78] sm:$0xff]
    %s3129 = scalar_lea.vmem [#allocation3], 1152
    %v3130 = vld [vmem:[%s3129] sm:$0xff]
    %v3131 = vld [vmem:[%s3129 + $0x8] sm:$0xff]
    %v3132 = vld [vmem:[%s3129 + $0x10] sm:$0xff]
    %v3133 = vld [vmem:[%s3129 + $0x18] sm:$0xff]
    %v3134 = vld [vmem:[%s3129 + $0x20] sm:$0xff]
    %v3135 = vld [vmem:[%s3129 + $0x28] sm:$0xff]
    %v3136 = vld [vmem:[%s3129 + $0x30] sm:$0xff]
    %v3137 = vld [vmem:[%s3129 + $0x38] sm:$0xff]
    %v3138 = vld [vmem:[%s3129 + $0x40] sm:$0xff]
    %v3139 = vld [vmem:[%s3129 + $0x48] sm:$0xff]
    %v3140 = vld [vmem:[%s3129 + $0x50] sm:$0xff]
    %v3141 = vld [vmem:[%s3129 + $0x58] sm:$0xff]
    %v3142 = vld [vmem:[%s3129 + $0x60] sm:$0xff]
    %v3143 = vld [vmem:[%s3129 + $0x68] sm:$0xff]
    %v3144 = vld [vmem:[%s3129 + $0x70] sm:$0xff]
    %v3145 = vld [vmem:[%s3129 + $0x78] sm:$0xff]
    %s3146 = scalar_lea.vmem %s3, 2
    %v3147 = vld [vmem:[%s3146] sm:$0x1]
    %s3148 = scalar_lea.vmem %s4, 2
    %v3149 = vld [vmem:[%s3148] sm:$0x1]
    %s3150 = scalar_lea.vmem %s5, 2
    %v3151 = vld [vmem:[%s3150] sm:$0x1]
    %3152 = vmatprep.subr.mxu0 0.0
    %3153 = vmatpush1.msra.mxu0 %v3079
    %3154 = vmatprep.subr.mxu0 0.0
    %3155 = vmatpush1.msra.mxu0 %v3080
    %3156 = vmatprep.subr.mxu0 0.0
    %3157 = vmatpush1.msra.mxu0 %v3081
    %3158 = vmatprep.subr.mxu0 0.0
    %3159 = vmatpush1.msra.mxu0 %v3082
    %3160 = vmatprep.subr.mxu0 0.0
    %3161 = vmatpush1.msra.mxu0 %v3083
    %3162 = vmatprep.subr.mxu0 0.0
    %3163 = vmatpush1.msra.mxu0 %v3084
    %3164 = vmatprep.subr.mxu0 0.0
    %3165 = vmatpush1.msra.mxu0 %v3085
    %3166 = vmatprep.subr.mxu0 0.0
    %3167 = vmatpush1.msra.mxu0 %v3086
    %3168 = vmatprep.subr.mxu0 0.0
    %3169 = vmatpush1.msra.mxu0 %v3087
    %3170 = vmatprep.subr.mxu0 0.0
    %3171 = vmatpush1.msra.mxu0 %v3088
    %3172 = vmatprep.subr.mxu0 0.0
    %3173 = vmatpush1.msra.mxu0 %v3089
    %3174 = vmatprep.subr.mxu0 0.0
    %3175 = vmatpush1.msra.mxu0 %v3090
    %3176 = vmatprep.subr.mxu0 0.0
    %3177 = vmatpush1.msra.mxu0 %v3091
    %3178 = vmatprep.subr.mxu0 0.0
    %3179 = vmatpush1.msra.mxu0 %v3092
    %3180 = vmatprep.subr.mxu0 0.0
    %3181 = vmatpush1.msra.mxu0 %v3093
    %3182 = vmatprep.subr.mxu0 0.0
    %3183 = vmatpush1.msra.mxu0 %v3094
    %3184 = vmatprep.subr.mxu0 0.0
    %3185 = vmatpush1.msra.mxu0 0.0
    %3186 = vmatprep.subr.mxu0 0.0
    %3187 = vmatpush1.msra.mxu0 0.0
    %3188 = vmatprep.subr.mxu0 0.0
    %3189 = vmatpush1.msra.mxu0 0.0
    %3190 = vmatprep.subr.mxu0 0.0
    %3191 = vmatpush1.msra.mxu0 0.0
    %3192 = vmatprep.subr.mxu0 0.0
    %3193 = vmatpush1.msra.mxu0 0.0
    %3194 = vmatprep.subr.mxu0 0.0
    %3195 = vmatpush1.msra.mxu0 0.0
    %3196 = vmatprep.subr.mxu0 0.0
    %3197 = vmatpush1.msra.mxu0 0.0
    %3198 = vmatprep.subr.mxu0 0.0
    %3199 = vmatpush1.msra.mxu0 0.0
    %3200 = vmatprep.subr.mxu0 0.0
    %3201 = vmatpush1.msra.mxu0 0.0
    %3202 = vmatprep.subr.mxu0 0.0
    %3203 = vmatpush1.msra.mxu0 0.0
    %3204 = vmatprep.subr.mxu0 0.0
    %3205 = vmatpush1.msra.mxu0 0.0
    %3206 = vmatprep.subr.mxu0 0.0
    %3207 = vmatpush1.msra.mxu0 0.0
    %3208 = vmatprep.subr.mxu0 0.0
    %3209 = vmatpush1.msra.mxu0 0.0
    %3210 = vmatprep.subr.mxu0 0.0
    %3211 = vmatpush1.msra.mxu0 0.0
    %3212 = vmatprep.subr.mxu0 0.0
    %3213 = vmatpush1.msra.mxu0 0.0
    %3214 = vmatprep.subr.mxu0 0.0
    %3215 = vmatpush1.msra.mxu0 0.0
    %3216 = vmatprep.mubr.f32.mxu0 0.0
    %3217 = vmatmul.mubr.f32.gmra.mrb[0].mxu0 %v3030
    %v3218 = vpop.f32.mrb[0].mxu0
    %v3219 = vadd.f32 0.0, %v3218
    %v3220 = vpop.f32.mrb[0].mxu0
    %3221 = vmatprep.mubr.f32.mxu0 0.0
    %3222 = vmatmul.mubr.f32.gmra.mrb[0].mxu0 %v3031
    %v3223 = vpop.f32.mrb[0].mxu0
    %v3224 = vadd.f32 0.0, %v3223
    %v3225 = vpop.f32.mrb[0].mxu0
    %3226 = vmatprep.mubr.f32.mxu0 0.0
    %3227 = vmatmul.mubr.f32.gmra.mrb[0].mxu0 %v3032
    %v3228 = vpop.f32.mrb[0].mxu0
    %v3229 = vadd.f32 0.0, %v3228
    %v3230 = vpop.f32.mrb[0].mxu0
    %3231 = vmatprep.mubr.f32.mxu0 0.0
    %3232 = vmatmul.mubr.f32.gmra.mrb[0].mxu0 %v3033
    %v3233 = vpop.f32.mrb[0].mxu0
    %v3234 = vadd.f32 0.0, %v3233
    %v3235 = vpop.f32.mrb[0].mxu0
    %3236 = vmatprep.mubr.f32.mxu0 0.0
    %3237 = vmatmul.mubr.f32.gmra.mrb[0].mxu0 %v3034
    %v3238 = vpop.f32.mrb[0].mxu0
    %v3239 = vadd.f32 0.0, %v3238
    %v3240 = vpop.f32.mrb[0].mxu0
    %3241 = vmatprep.mubr.f32.mxu0 0.0
    %3242 = vmatmul.mubr.f32.gmra.mrb[0].mxu0 %v3035
    %v3243 = vpop.f32.mrb[0].mxu0
    %v3244 = vadd.f32 0.0, %v3243
    %v3245 = vpop.f32.mrb[0].mxu0
    %3246 = vmatprep.mubr.f32.mxu0 0.0
    %3247 = vmatmul.mubr.f32.gmra.mrb[0].mxu0 %v3036
    %v3248 = vpop.f32.mrb[0].mxu0
    %v3249 = vadd.f32 0.0, %v3248
    %v3250 = vpop.f32.mrb[0].mxu0
    %3251 = vmatprep.mubr.f32.mxu0 0.0
    %3252 = vmatmul.mubr.f32.gmra.mrb[0].mxu0 %v3037
    %v3253 = vpop.f32.mrb[0].mxu0
    %v3254 = vadd.f32 0.0, %v3253
    %v3255 = vpop.f32.mrb[0].mxu0
    %3256 = vmatprep.mubr.f32.mxu0 0.0
    %3257 = vmatmul.mubr.f32.gmra.mrb[0].mxu0 %v3038
    %v3258 = vpop.f32.mrb[0].mxu0
    %v3259 = vadd.f32 0.0, %v3258
    %v3260 = vpop.f32.mrb[0].mxu0
    %3261 = vmatprep.mubr.f32.mxu0 0.0
    %3262 = vmatmul.mubr.f32.gmra.mrb[0].mxu0 %v3039
    %v3263 = vpop.f32.mrb[0].mxu0
    %v3264 = vadd.f32 0.0, %v3263
    %v3265 = vpop.f32.mrb[0].mxu0
    %3266 = vmatprep.mubr.f32.mxu0 0.0
    %3267 = vmatmul.mubr.f32.gmra.mrb[0].mxu0 %v3040
    %v3268 = vpop.f32.mrb[0].mxu0
    %v3269 = vadd.f32 0.0, %v3268
    %v3270 = vpop.f32.mrb[0].mxu0
    %3271 = vmatprep.mubr.f32.mxu0 0.0
    %3272 = vmatmul.mubr.f32.gmra.mrb[0].mxu0 %v3041
    %v3273 = vpop.f32.mrb[0].mxu0
    %v3274 = vadd.f32 0.0, %v3273
    %v3275 = vpop.f32.mrb[0].mxu0
    %3276 = vmatprep.mubr.f32.mxu0 0.0
    %3277 = vmatmul.mubr.f32.gmra.mrb[0].mxu0 %v3042
    %v3278 = vpop.f32.mrb[0].mxu0
    %v3279 = vadd.f32 0.0, %v3278
    %v3280 = vpop.f32.mrb[0].mxu0
    %3281 = vmatprep.mubr.f32.mxu0 0.0
    %3282 = vmatmul.mubr.f32.gmra.mrb[0].mxu0 %v3043
    %v3283 = vpop.f32.mrb[0].mxu0
    %v3284 = vadd.f32 0.0, %v3283
    %v3285 = vpop.f32.mrb[0].mxu0
    %3286 = vmatprep.mubr.f32.mxu0 0.0
    %3287 = vmatmul.mubr.f32.gmra.mrb[0].mxu0 %v3044
    %v3288 = vpop.f32.mrb[0].mxu0
    %v3289 = vadd.f32 0.0, %v3288
    %v3290 = vpop.f32.mrb[0].mxu0
    %3291 = vmatprep.mubr.f32.mxu0 0.0
    %3292 = vmatmul.mubr.f32.gmra.mrb[0].mxu0 %v3045
    %v3293 = vpop.f32.mrb[0].mxu0
    %v3294 = vadd.f32 0.0, %v3293
    %v3295 = vpop.f32.mrb[0].mxu0
    %3296 = vmatprep.mubr.f32.mxu0 0.0
    %3297 = vmatmul.mubr.f32.gmra.mrb[0].mxu0 %v3046
    %v3298 = vpop.f32.mrb[0].mxu0
    %v3299 = vadd.f32 0.0, %v3298
    %v3300 = vpop.f32.mrb[0].mxu0
    %3301 = vmatprep.mubr.f32.mxu0 0.0
    %3302 = vmatmul.mubr.f32.gmra.mrb[0].mxu0 %v3047
    %v3303 = vpop.f32.mrb[0].mxu0
    %v3304 = vadd.f32 0.0, %v3303
    %v3305 = vpop.f32.mrb[0].mxu0
    %3306 = vmatprep.mubr.f32.mxu0 0.0
    %3307 = vmatmul.mubr.f32.gmra.mrb[0].mxu0 %v3048
    %v3308 = vpop.f32.mrb[0].mxu0
    %v3309 = vadd.f32 0.0, %v3308
    %v3310 = vpop.f32.mrb[0].mxu0
    %3311 = vmatprep.mubr.f32.mxu0 0.0
    %3312 = vmatmul.mubr.f32.gmra.mrb[0].mxu0 %v3049
    %v3313 = vpop.f32.mrb[0].mxu0
    %v3314 = vadd.f32 0.0, %v3313
    %v3315 = vpop.f32.mrb[0].mxu0
    %3316 = vmatprep.mubr.f32.mxu0 0.0
    %3317 = vmatmul.mubr.f32.gmra.mrb[0].mxu0 %v3050
    %v3318 = vpop.f32.mrb[0].mxu0
    %v3319 = vadd.f32 0.0, %v3318
    %v3320 = vpop.f32.mrb[0].mxu0
    %3321 = vmatprep.mubr.f32.mxu0 0.0
    %3322 = vmatmul.mubr.f32.gmra.mrb[0].mxu0 %v3051
    %v3323 = vpop.f32.mrb[0].mxu0
    %v3324 = vadd.f32 0.0, %v3323
    %v3325 = vpop.f32.mrb[0].mxu0
    %3326 = vmatprep.mubr.f32.mxu0 0.0
    %3327 = vmatmul.mubr.f32.gmra.mrb[0].mxu0 %v3052
    %v3328 = vpop.f32.mrb[0].mxu0
    %v3329 = vadd.f32 0.0, %v3328
    %v3330 = vpop.f32.mrb[0].mxu0
    %3331 = vmatprep.mubr.f32.mxu0 0.0
    %3332 = vmatmul.mubr.f32.gmra.mrb[0].mxu0 %v3053
    %v3333 = vpop.f32.mrb[0].mxu0
    %v3334 = vadd.f32 0.0, %v3333
    %v3335 = vpop.f32.mrb[0].mxu0
    %3336 = vmatprep.mubr.f32.mxu0 0.0
    %3337 = vmatmul.mubr.f32.gmra.mrb[0].mxu0 %v3054
    %v3338 = vpop.f32.mrb[0].mxu0
    %v3339 = vadd.f32 0.0, %v3338
    %v3340 = vpop.f32.mrb[0].mxu0
    %3341 = vmatprep.mubr.f32.mxu0 0.0
    %3342 = vmatmul.mubr.f32.gmra.mrb[0].mxu0 %v3055
    %v3343 = vpop.f32.mrb[0].mxu0
    %v3344 = vadd.f32 0.0, %v3343
    %v3345 = vpop.f32.mrb[0].mxu0
    %3346 = vmatprep.mubr.f32.mxu0 0.0
    %3347 = vmatmul.mubr.f32.gmra.mrb[0].mxu0 %v3056
    %v3348 = vpop.f32.mrb[0].mxu0
    %v3349 = vadd.f32 0.0, %v3348
    %v3350 = vpop.f32.mrb[0].mxu0
    %3351 = vmatprep.mubr.f32.mxu0 0.0
    %3352 = vmatmul.mubr.f32.gmra.mrb[0].mxu0 %v3057
    %v3353 = vpop.f32.mrb[0].mxu0
    %v3354 = vadd.f32 0.0, %v3353
    %v3355 = vpop.f32.mrb[0].mxu0
    %3356 = vmatprep.mubr.f32.mxu0 0.0
    %3357 = vmatmul.mubr.f32.gmra.mrb[0].mxu0 %v3058
    %v3358 = vpop.f32.mrb[0].mxu0
    %v3359 = vadd.f32 0.0, %v3358
    %v3360 = vpop.f32.mrb[0].mxu0
    %3361 = vmatprep.mubr.f32.mxu0 0.0
    %3362 = vmatmul.mubr.f32.gmra.mrb[0].mxu0 %v3059
    %v3363 = vpop.f32.mrb[0].mxu0
    %v3364 = vadd.f32 0.0, %v3363
    %v3365 = vpop.f32.mrb[0].mxu0
    %3366 = vmatprep.mubr.f32.mxu0 0.0
    %3367 = vmatmul.mubr.f32.gmra.mrb[0].mxu0 %v3060
    %v3368 = vpop.f32.mrb[0].mxu0
    %v3369 = vadd.f32 0.0, %v3368
    %v3370 = vpop.f32.mrb[0].mxu0
    %3371 = vmatprep.mubr.f32.mxu0 0.0
    %3372 = vmatmul.mubr.f32.gmra.mrb[0].mxu0 %v3029
    %v3373 = vpop.f32.mrb[0].mxu0
    %v3374 = vadd.f32 0.0, %v3373
    %v3375 = vpop.f32.mrb[0].mxu0
    %3376 = vdwg.mxu0
    %3377 = vmatprep.subr.mxu0 0.0
    %3378 = vmatpush1.msra.mxu0 %v3062
    %3379 = vmatprep.subr.mxu0 0.0
    %3380 = vmatpush1.msra.mxu0 %v3063
    %3381 = vmatprep.subr.mxu0 0.0
    %3382 = vmatpush1.msra.mxu0 %v3064
    %3383 = vmatprep.subr.mxu0 0.0
    %3384 = vmatpush1.msra.mxu0 %v3065
    %3385 = vmatprep.subr.mxu0 0.0
    %3386 = vmatpush1.msra.mxu0 %v3066
    %3387 = vmatprep.subr.mxu0 0.0
    %3388 = vmatpush1.msra.mxu0 %v3067
    %3389 = vmatprep.subr.mxu0 0.0
    %3390 = vmatpush1.msra.mxu0 %v3068
    %3391 = vmatprep.subr.mxu0 0.0
    %3392 = vmatpush1.msra.mxu0 %v3069
    %3393 = vmatprep.subr.mxu0 0.0
    %3394 = vmatpush1.msra.mxu0 %v3070
    %3395 = vmatprep.subr.mxu0 0.0
    %3396 = vmatpush1.msra.mxu0 %v3071
    %3397 = vmatprep.subr.mxu0 0.0
    %3398 = vmatpush1.msra.mxu0 %v3072
    %3399 = vmatprep.subr.mxu0 0.0
    %3400 = vmatpush1.msra.mxu0 %v3073
    %3401 = vmatprep.subr.mxu0 0.0
    %3402 = vmatpush1.msra.mxu0 %v3074
    %3403 = vmatprep.subr.mxu0 0.0
    %3404 = vmatpush1.msra.mxu0 %v3075
    %3405 = vmatprep.subr.mxu0 0.0
    %3406 = vmatpush1.msra.mxu0 %v3076
    %3407 = vmatprep.subr.mxu0 0.0
    %3408 = vmatpush1.msra.mxu0 %v3077
    %3409 = vmatprep.subr.mxu0 0.0
    %3410 = vmatpush1.msra.mxu0 0.0
    %3411 = vmatprep.subr.mxu0 0.0
    %3412 = vmatpush1.msra.mxu0 0.0
    %3413 = vmatprep.subr.mxu0 0.0
    %3414 = vmatpush1.msra.mxu0 0.0
    %3415 = vmatprep.subr.mxu0 0.0
    %3416 = vmatpush1.msra.mxu0 0.0
    %3417 = vmatprep.subr.mxu0 0.0
    %3418 = vmatpush1.msra.mxu0 0.0
    %3419 = vmatprep.subr.mxu0 0.0
    %3420 = vmatpush1.msra.mxu0 0.0
    %3421 = vmatprep.subr.mxu0 0.0
    %3422 = vmatpush1.msra.mxu0 0.0
    %3423 = vmatprep.subr.mxu0 0.0
    %3424 = vmatpush1.msra.mxu0 0.0
    %3425 = vmatprep.subr.mxu0 0.0
    %3426 = vmatpush1.msra.mxu0 0.0
    %3427 = vmatprep.subr.mxu0 0.0
    %3428 = vmatpush1.msra.mxu0 0.0
    %3429 = vmatprep.subr.mxu0 0.0
    %3430 = vmatpush1.msra.mxu0 0.0
    %3431 = vmatprep.subr.mxu0 0.0
    %3432 = vmatpush1.msra.mxu0 0.0
    %3433 = vmatprep.subr.mxu0 0.0
    %3434 = vmatpush1.msra.mxu0 0.0
    %3435 = vmatprep.subr.mxu0 0.0
    %3436 = vmatpush1.msra.mxu0 0.0
    %3437 = vmatprep.subr.mxu0 0.0
    %3438 = vmatpush1.msra.mxu0 0.0
    %3439 = vmatprep.subr.mxu0 0.0
    %3440 = vmatpush1.msra.mxu0 0.0
    %3441 = vmatprep.mubr.f32.mxu0 0.0
    %3442 = vmatmul.mubr.f32.gmra.mrb[0].mxu0 %v3029
    %v3443 = vpop.f32.mrb[0].mxu0
    %v3444 = vadd.f32 %v3219, %v3443
    %v3445 = vpop.f32.mrb[0].mxu0
    %3446 = vmatprep.mubr.f32.mxu0 0.0
    %3447 = vmatmul.mubr.f32.gmra.mrb[0].mxu0 %v3030
    %v3448 = vpop.f32.mrb[0].mxu0
    %v3449 = vadd.f32 %v3224, %v3448
    %v3450 = vpop.f32.mrb[0].mxu0
    %3451 = vmatprep.mubr.f32.mxu0 0.0
    %3452 = vmatmul.mubr.f32.gmra.mrb[0].mxu0 %v3031
    %v3453 = vpop.f32.mrb[0].mxu0
    %v3454 = vadd.f32 %v3229, %v3453
    %v3455 = vpop.f32.mrb[0].mxu0
    %3456 = vmatprep.mubr.f32.mxu0 0.0
    %3457 = vmatmul.mubr.f32.gmra.mrb[0].mxu0 %v3032
    %v3458 = vpop.f32.mrb[0].mxu0
    %v3459 = vadd.f32 %v3234, %v3458
    %v3460 = vpop.f32.mrb[0].mxu0
    %3461 = vmatprep.mubr.f32.mxu0 0.0
    %3462 = vmatmul.mubr.f32.gmra.mrb[0].mxu0 %v3033
    %v3463 = vpop.f32.mrb[0].mxu0
    %v3464 = vadd.f32 %v3239, %v3463
    %v3465 = vpop.f32.mrb[0].mxu0
    %3466 = vmatprep.mubr.f32.mxu0 0.0
    %3467 = vmatmul.mubr.f32.gmra.mrb[0].mxu0 %v3034
    %v3468 = vpop.f32.mrb[0].mxu0
    %v3469 = vadd.f32 %v3244, %v3468
    %v3470 = vpop.f32.mrb[0].mxu0
    %3471 = vmatprep.mubr.f32.mxu0 0.0
    %3472 = vmatmul.mubr.f32.gmra.mrb[0].mxu0 %v3035
    %v3473 = vpop.f32.mrb[0].mxu0
    %v3474 = vadd.f32 %v3249, %v3473
    %v3475 = vpop.f32.mrb[0].mxu0
    %3476 = vmatprep.mubr.f32.mxu0 0.0
    %3477 = vmatmul.mubr.f32.gmra.mrb[0].mxu0 %v3036
    %v3478 = vpop.f32.mrb[0].mxu0
    %v3479 = vadd.f32 %v3254, %v3478
    %v3480 = vpop.f32.mrb[0].mxu0
    %3481 = vmatprep.mubr.f32.mxu0 0.0
    %3482 = vmatmul.mubr.f32.gmra.mrb[0].mxu0 %v3037
    %v3483 = vpop.f32.mrb[0].mxu0
    %v3484 = vadd.f32 %v3259, %v3483
    %v3485 = vpop.f32.mrb[0].mxu0
    %3486 = vmatprep.mubr.f32.mxu0 0.0
    %3487 = vmatmul.mubr.f32.gmra.mrb[0].mxu0 %v3038
    %v3488 = vpop.f32.mrb[0].mxu0
    %v3489 = vadd.f32 %v3264, %v3488
    %v3490 = vpop.f32.mrb[0].mxu0
    %3491 = vmatprep.mubr.f32.mxu0 0.0
    %3492 = vmatmul.mubr.f32.gmra.mrb[0].mxu0 %v3039
    %v3493 = vpop.f32.mrb[0].mxu0
    %v3494 = vadd.f32 %v3269, %v3493
    %v3495 = vpop.f32.mrb[0].mxu0
    %3496 = vmatprep.mubr.f32.mxu0 0.0
    %3497 = vmatmul.mubr.f32.gmra.mrb[0].mxu0 %v3040
    %v3498 = vpop.f32.mrb[0].mxu0
    %v3499 = vadd.f32 %v3274, %v3498
    %v3500 = vpop.f32.mrb[0].mxu0
    %3501 = vmatprep.mubr.f32.mxu0 0.0
    %3502 = vmatmul.mubr.f32.gmra.mrb[0].mxu0 %v3041
    %v3503 = vpop.f32.mrb[0].mxu0
    %v3504 = vadd.f32 %v3279, %v3503
    %v3505 = vpop.f32.mrb[0].mxu0
    %3506 = vmatprep.mubr.f32.mxu0 0.0
    %3507 = vmatmul.mubr.f32.gmra.mrb[0].mxu0 %v3042
    %v3508 = vpop.f32.mrb[0].mxu0
    %v3509 = vadd.f32 %v3284, %v3508
    %v3510 = vpop.f32.mrb[0].mxu0
    %3511 = vmatprep.mubr.f32.mxu0 0.0
    %3512 = vmatmul.mubr.f32.gmra.mrb[0].mxu0 %v3043
    %v3513 = vpop.f32.mrb[0].mxu0
    %v3514 = vadd.f32 %v3289, %v3513
    %v3515 = vpop.f32.mrb[0].mxu0
    %3516 = vmatprep.mubr.f32.mxu0 0.0
    %3517 = vmatmul.mubr.f32.gmra.mrb[0].mxu0 %v3044
    %v3518 = vpop.f32.mrb[0].mxu0
    %v3519 = vadd.f32 %v3294, %v3518
    %v3520 = vpop.f32.mrb[0].mxu0
    %3521 = vmatprep.mubr.f32.mxu0 0.0
    %3522 = vmatmul.mubr.f32.gmra.mrb[0].mxu0 %v3045
    %v3523 = vpop.f32.mrb[0].mxu0
    %v3524 = vadd.f32 %v3299, %v3523
    %v3525 = vpop.f32.mrb[0].mxu0
    %3526 = vmatprep.mubr.f32.mxu0 0.0
    %3527 = vmatmul.mubr.f32.gmra.mrb[0].mxu0 %v3046
    %v3528 = vpop.f32.mrb[0].mxu0
    %v3529 = vadd.f32 %v3304, %v3528
    %v3530 = vpop.f32.mrb[0].mxu0
    %3531 = vmatprep.mubr.f32.mxu0 0.0
    %3532 = vmatmul.mubr.f32.gmra.mrb[0].mxu0 %v3047
    %v3533 = vpop.f32.mrb[0].mxu0
    %v3534 = vadd.f32 %v3309, %v3533
    %v3535 = vpop.f32.mrb[0].mxu0
    %3536 = vmatprep.mubr.f32.mxu0 0.0
    %3537 = vmatmul.mubr.f32.gmra.mrb[0].mxu0 %v3048
    %v3538 = vpop.f32.mrb[0].mxu0
    %v3539 = vadd.f32 %v3314, %v3538
    %v3540 = vpop.f32.mrb[0].mxu0
    %3541 = vmatprep.mubr.f32.mxu0 0.0
    %3542 = vmatmul.mubr.f32.gmra.mrb[0].mxu0 %v3049
    %v3543 = vpop.f32.mrb[0].mxu0
    %v3544 = vadd.f32 %v3319, %v3543
    %v3545 = vpop.f32.mrb[0].mxu0
    %3546 = vmatprep.mubr.f32.mxu0 0.0
    %3547 = vmatmul.mubr.f32.gmra.mrb[0].mxu0 %v3050
    %v3548 = vpop.f32.mrb[0].mxu0
    %v3549 = vadd.f32 %v3324, %v3548
    %v3550 = vpop.f32.mrb[0].mxu0
    %3551 = vmatprep.mubr.f32.mxu0 0.0
    %3552 = vmatmul.mubr.f32.gmra.mrb[0].mxu0 %v3051
    %v3553 = vpop.f32.mrb[0].mxu0
    %v3554 = vadd.f32 %v3329, %v3553
    %v3555 = vpop.f32.mrb[0].mxu0
    %3556 = vmatprep.mubr.f32.mxu0 0.0
    %3557 = vmatmul.mubr.f32.gmra.mrb[0].mxu0 %v3052
    %v3558 = vpop.f32.mrb[0].mxu0
    %v3559 = vadd.f32 %v3334, %v3558
    %v3560 = vpop.f32.mrb[0].mxu0
    %3561 = vmatprep.mubr.f32.mxu0 0.0
    %3562 = vmatmul.mubr.f32.gmra.mrb[0].mxu0 %v3053
    %v3563 = vpop.f32.mrb[0].mxu0
    %v3564 = vadd.f32 %v3339, %v3563
    %v3565 = vpop.f32.mrb[0].mxu0
    %3566 = vmatprep.mubr.f32.mxu0 0.0
    %3567 = vmatmul.mubr.f32.gmra.mrb[0].mxu0 %v3054
    %v3568 = vpop.f32.mrb[0].mxu0
    %v3569 = vadd.f32 %v3344, %v3568
    %v3570 = vpop.f32.mrb[0].mxu0
    %3571 = vmatprep.mubr.f32.mxu0 0.0
    %3572 = vmatmul.mubr.f32.gmra.mrb[0].mxu0 %v3055
    %v3573 = vpop.f32.mrb[0].mxu0
    %v3574 = vadd.f32 %v3349, %v3573
    %v3575 = vpop.f32.mrb[0].mxu0
    %3576 = vmatprep.mubr.f32.mxu0 0.0
    %3577 = vmatmul.mubr.f32.gmra.mrb[0].mxu0 %v3056
    %v3578 = vpop.f32.mrb[0].mxu0
    %v3579 = vadd.f32 %v3354, %v3578
    %v3580 = vpop.f32.mrb[0].mxu0
    %3581 = vmatprep.mubr.f32.mxu0 0.0
    %3582 = vmatmul.mubr.f32.gmra.mrb[0].mxu0 %v3057
    %v3583 = vpop.f32.mrb[0].mxu0
    %v3584 = vadd.f32 %v3359, %v3583
    %v3585 = vpop.f32.mrb[0].mxu0
    %3586 = vmatprep.mubr.f32.mxu0 0.0
    %3587 = vmatmul.mubr.f32.gmra.mrb[0].mxu0 %v3058
    %v3588 = vpop.f32.mrb[0].mxu0
    %v3589 = vadd.f32 %v3364, %v3588
    %v3590 = vpop.f32.mrb[0].mxu0
    %3591 = vmatprep.mubr.f32.mxu0 0.0
    %3592 = vmatmul.mubr.f32.gmra.mrb[0].mxu0 %v3059
    %v3593 = vpop.f32.mrb[0].mxu0
    %v3594 = vadd.f32 %v3369, %v3593
    %v3595 = vpop.f32.mrb[0].mxu0
    %3596 = vmatprep.mubr.f32.mxu0 0.0
    %3597 = vmatmul.mubr.f32.gmra.mrb[0].mxu0 %v3060
    %v3598 = vpop.f32.mrb[0].mxu0
    %v3599 = vadd.f32 %v3374, %v3598
    %v3600 = vpop.f32.mrb[0].mxu0
    %3601 = vdwg.mxu0
    %3602 = vmatprep.subr.mxu0 0.0
    %3603 = vmatpush1.msra.mxu0 %v3096
    %3604 = vmatprep.subr.mxu0 0.0
    %3605 = vmatpush1.msra.mxu0 %v3097
    %3606 = vmatprep.subr.mxu0 0.0
    %3607 = vmatpush1.msra.mxu0 %v3098
    %3608 = vmatprep.subr.mxu0 0.0
    %3609 = vmatpush1.msra.mxu0 %v3099
    %3610 = vmatprep.subr.mxu0 0.0
    %3611 = vmatpush1.msra.mxu0 %v3100
    %3612 = vmatprep.subr.mxu0 0.0
    %3613 = vmatpush1.msra.mxu0 %v3101
    %3614 = vmatprep.subr.mxu0 0.0
    %3615 = vmatpush1.msra.mxu0 %v3102
    %3616 = vmatprep.subr.mxu0 0.0
    %3617 = vmatpush1.msra.mxu0 %v3103
    %3618 = vmatprep.subr.mxu0 0.0
    %3619 = vmatpush1.msra.mxu0 %v3104
    %3620 = vmatprep.subr.mxu0 0.0
    %3621 = vmatpush1.msra.mxu0 %v3105
    %3622 = vmatprep.subr.mxu0 0.0
    %3623 = vmatpush1.msra.mxu0 %v3106
    %3624 = vmatprep.subr.mxu0 0.0
    %3625 = vmatpush1.msra.mxu0 %v3107
    %3626 = vmatprep.subr.mxu0 0.0
    %3627 = vmatpush1.msra.mxu0 %v3108
    %3628 = vmatprep.subr.mxu0 0.0
    %3629 = vmatpush1.msra.mxu0 %v3109
    %3630 = vmatprep.subr.mxu0 0.0
    %3631 = vmatpush1.msra.mxu0 %v3110
    %3632 = vmatprep.subr.mxu0 0.0
    %3633 = vmatpush1.msra.mxu0 %v3111
    %3634 = vmatprep.subr.mxu0 0.0
    %3635 = vmatpush1.msra.mxu0 0.0
    %3636 = vmatprep.subr.mxu0 0.0
    %3637 = vmatpush1.msra.mxu0 0.0
    %3638 = vmatprep.subr.mxu0 0.0
    %3639 = vmatpush1.msra.mxu0 0.0
    %3640 = vmatprep.subr.mxu0 0.0
    %3641 = vmatpush1.msra.mxu0 0.0
    %3642 = vmatprep.subr.mxu0 0.0
    %3643 = vmatpush1.msra.mxu0 0.0
    %3644 = vmatprep.subr.mxu0 0.0
    %3645 = vmatpush1.msra.mxu0 0.0
    %3646 = vmatprep.subr.mxu0 0.0
    %3647 = vmatpush1.msra.mxu0 0.0
    %3648 = vmatprep.subr.mxu0 0.0
    %3649 = vmatpush1.msra.mxu0 0.0
    %3650 = vmatprep.subr.mxu0 0.0
    %3651 = vmatpush1.msra.mxu0 0.0
    %3652 = vmatprep.subr.mxu0 0.0
    %3653 = vmatpush1.msra.mxu0 0.0
    %3654 = vmatprep.subr.mxu0 0.0
    %3655 = vmatpush1.msra.mxu0 0.0
    %3656 = vmatprep.subr.mxu0 0.0
    %3657 = vmatpush1.msra.mxu0 0.0
    %3658 = vmatprep.subr.mxu0 0.0
    %3659 = vmatpush1.msra.mxu0 0.0
    %3660 = vmatprep.subr.mxu0 0.0
    %3661 = vmatpush1.msra.mxu0 0.0
    %3662 = vmatprep.subr.mxu0 0.0
    %3663 = vmatpush1.msra.mxu0 0.0
    %3664 = vmatprep.subr.mxu0 0.0
    %3665 = vmatpush1.msra.mxu0 0.0
    %3666 = vmatprep.mubr.f32.mxu0 0.0
    %3667 = vmatmul.mubr.f32.gmra.mrb[0].mxu0 %v3031
    %v3668 = vpop.f32.mrb[0].mxu0
    %v3669 = vadd.f32 0.0, %v3668
    %v3670 = vpop.f32.mrb[0].mxu0
    %3671 = vmatprep.mubr.f32.mxu0 0.0
    %3672 = vmatmul.mubr.f32.gmra.mrb[0].mxu0 %v3032
    %v3673 = vpop.f32.mrb[0].mxu0
    %v3674 = vadd.f32 0.0, %v3673
    %v3675 = vpop.f32.mrb[0].mxu0
    %3676 = vmatprep.mubr.f32.mxu0 0.0
    %3677 = vmatmul.mubr.f32.gmra.mrb[0].mxu0 %v3033
    %v3678 = vpop.f32.mrb[0].mxu0
    %v3679 = vadd.f32 0.0, %v3678
    %v3680 = vpop.f32.mrb[0].mxu0
    %3681 = vmatprep.mubr.f32.mxu0 0.0
    %3682 = vmatmul.mubr.f32.gmra.mrb[0].mxu0 %v3034
    %v3683 = vpop.f32.mrb[0].mxu0
    %v3684 = vadd.f32 0.0, %v3683
    %v3685 = vpop.f32.mrb[0].mxu0
    %3686 = vmatprep.mubr.f32.mxu0 0.0
    %3687 = vmatmul.mubr.f32.gmra.mrb[0].mxu0 %v3035
    %v3688 = vpop.f32.mrb[0].mxu0
    %v3689 = vadd.f32 0.0, %v3688
    %v3690 = vpop.f32.mrb[0].mxu0
    %3691 = vmatprep.mubr.f32.mxu0 0.0
    %3692 = vmatmul.mubr.f32.gmra.mrb[0].mxu0 %v3036
    %v3693 = vpop.f32.mrb[0].mxu0
    %v3694 = vadd.f32 0.0, %v3693
    %v3695 = vpop.f32.mrb[0].mxu0
    %3696 = vmatprep.mubr.f32.mxu0 0.0
    %3697 = vmatmul.mubr.f32.gmra.mrb[0].mxu0 %v3037
    %v3698 = vpop.f32.mrb[0].mxu0
    %v3699 = vadd.f32 0.0, %v3698
    %v3700 = vpop.f32.mrb[0].mxu0
    %3701 = vmatprep.mubr.f32.mxu0 0.0
    %3702 = vmatmul.mubr.f32.gmra.mrb[0].mxu0 %v3038
    %v3703 = vpop.f32.mrb[0].mxu0
    %v3704 = vadd.f32 0.0, %v3703
    %v3705 = vpop.f32.mrb[0].mxu0
    %3706 = vmatprep.mubr.f32.mxu0 0.0
    %3707 = vmatmul.mubr.f32.gmra.mrb[0].mxu0 %v3039
    %v3708 = vpop.f32.mrb[0].mxu0
    %v3709 = vadd.f32 0.0, %v3708
    %v3710 = vpop.f32.mrb[0].mxu0
    %3711 = vmatprep.mubr.f32.mxu0 0.0
    %3712 = vmatmul.mubr.f32.gmra.mrb[0].mxu0 %v3040
    %v3713 = vpop.f32.mrb[0].mxu0
    %v3714 = vadd.f32 0.0, %v3713
    %v3715 = vpop.f32.mrb[0].mxu0
    %3716 = vmatprep.mubr.f32.mxu0 0.0
    %3717 = vmatmul.mubr.f32.gmra.mrb[0].mxu0 %v3041
    %v3718 = vpop.f32.mrb[0].mxu0
    %v3719 = vadd.f32 0.0, %v3718
    %v3720 = vpop.f32.mrb[0].mxu0
    %3721 = vmatprep.mubr.f32.mxu0 0.0
    %3722 = vmatmul.mubr.f32.gmra.mrb[0].mxu0 %v3042
    %v3723 = vpop.f32.mrb[0].mxu0
    %v3724 = vadd.f32 0.0, %v3723
    %v3725 = vpop.f32.mrb[0].mxu0
    %3726 = vmatprep.mubr.f32.mxu0 0.0
    %3727 = vmatmul.mubr.f32.gmra.mrb[0].mxu0 %v3043
    %v3728 = vpop.f32.mrb[0].mxu0
    %v3729 = vadd.f32 0.0, %v3728
    %v3730 = vpop.f32.mrb[0].mxu0
    %3731 = vmatprep.mubr.f32.mxu0 0.0
    %3732 = vmatmul.mubr.f32.gmra.mrb[0].mxu0 %v3044
    %v3733 = vpop.f32.mrb[0].mxu0
    %v3734 = vadd.f32 0.0, %v3733
    %v3735 = vpop.f32.mrb[0].mxu0
    %3736 = vmatprep.mubr.f32.mxu0 0.0
    %3737 = vmatmul.mubr.f32.gmra.mrb[0].mxu0 %v3045
    %v3738 = vpop.f32.mrb[0].mxu0
    %v3739 = vadd.f32 0.0, %v3738
    %v3740 = vpop.f32.mrb[0].mxu0
    %3741 = vmatprep.mubr.f32.mxu0 0.0
    %3742 = vmatmul.mubr.f32.gmra.mrb[0].mxu0 %v3046
    %v3743 = vpop.f32.mrb[0].mxu0
    %v3744 = vadd.f32 0.0, %v3743
    %v3745 = vpop.f32.mrb[0].mxu0
    %3746 = vmatprep.mubr.f32.mxu0 0.0
    %3747 = vmatmul.mubr.f32.gmra.mrb[0].mxu0 %v3047
    %v3748 = vpop.f32.mrb[0].mxu0
    %v3749 = vadd.f32 0.0, %v3748
    %v3750 = vpop.f32.mrb[0].mxu0
    %3751 = vmatprep.mubr.f32.mxu0 0.0
    %3752 = vmatmul.mubr.f32.gmra.mrb[0].mxu0 %v3048
    %v3753 = vpop.f32.mrb[0].mxu0
    %v3754 = vadd.f32 0.0, %v3753
    %v3755 = vpop.f32.mrb[0].mxu0
    %3756 = vmatprep.mubr.f32.mxu0 0.0
    %3757 = vmatmul.mubr.f32.gmra.mrb[0].mxu0 %v3049
    %v3758 = vpop.f32.mrb[0].mxu0
    %v3759 = vadd.f32 0.0, %v3758
    %v3760 = vpop.f32.mrb[0].mxu0
    %3761 = vmatprep.mubr.f32.mxu0 0.0
    %3762 = vmatmul.mubr.f32.gmra.mrb[0].mxu0 %v3050
    %v3763 = vpop.f32.mrb[0].mxu0
    %v3764 = vadd.f32 0.0, %v3763
    %v3765 = vpop.f32.mrb[0].mxu0
    %3766 = vmatprep.mubr.f32.mxu0 0.0
    %3767 = vmatmul.mubr.f32.gmra.mrb[0].mxu0 %v3051
    %v3768 = vpop.f32.mrb[0].mxu0
    %v3769 = vadd.f32 0.0, %v3768
    %v3770 = vpop.f32.mrb[0].mxu0
    %3771 = vmatprep.mubr.f32.mxu0 0.0
    %3772 = vmatmul.mubr.f32.gmra.mrb[0].mxu0 %v3052
    %v3773 = vpop.f32.mrb[0].mxu0
    %v3774 = vadd.f32 0.0, %v3773
    %v3775 = vpop.f32.mrb[0].mxu0
    %3776 = vmatprep.mubr.f32.mxu0 0.0
    %3777 = vmatmul.mubr.f32.gmra.mrb[0].mxu0 %v3053
    %v3778 = vpop.f32.mrb[0].mxu0
    %v3779 = vadd.f32 0.0, %v3778
    %v3780 = vpop.f32.mrb[0].mxu0
    %3781 = vmatprep.mubr.f32.mxu0 0.0
    %3782 = vmatmul.mubr.f32.gmra.mrb[0].mxu0 %v3054
    %v3783 = vpop.f32.mrb[0].mxu0
    %v3784 = vadd.f32 0.0, %v3783
    %v3785 = vpop.f32.mrb[0].mxu0
    %3786 = vmatprep.mubr.f32.mxu0 0.0
    %3787 = vmatmul.mubr.f32.gmra.mrb[0].mxu0 %v3055
    %v3788 = vpop.f32.mrb[0].mxu0
    %v3789 = vadd.f32 0.0, %v3788
    %v3790 = vpop.f32.mrb[0].mxu0
    %3791 = vmatprep.mubr.f32.mxu0 0.0
    %3792 = vmatmul.mubr.f32.gmra.mrb[0].mxu0 %v3056
    %v3793 = vpop.f32.mrb[0].mxu0
    %v3794 = vadd.f32 0.0, %v3793
    %v3795 = vpop.f32.mrb[0].mxu0
    %3796 = vmatprep.mubr.f32.mxu0 0.0
    %3797 = vmatmul.mubr.f32.gmra.mrb[0].mxu0 %v3057
    %v3798 = vpop.f32.mrb[0].mxu0
    %v3799 = vadd.f32 0.0, %v3798
    %v3800 = vpop.f32.mrb[0].mxu0
    %3801 = vmatprep.mubr.f32.mxu0 0.0
    %3802 = vmatmul.mubr.f32.gmra.mrb[0].mxu0 %v3058
    %v3803 = vpop.f32.mrb[0].mxu0
    %v3804 = vadd.f32 0.0, %v3803
    %v3805 = vpop.f32.mrb[0].mxu0
    %3806 = vmatprep.mubr.f32.mxu0 0.0
    %3807 = vmatmul.mubr.f32.gmra.mrb[0].mxu0 %v3059
    %v3808 = vpop.f32.mrb[0].mxu0
    %v3809 = vadd.f32 0.0, %v3808
    %v3810 = vpop.f32.mrb[0].mxu0
    %3811 = vmatprep.mubr.f32.mxu0 0.0
    %3812 = vmatmul.mubr.f32.gmra.mrb[0].mxu0 %v3060
    %v3813 = vpop.f32.mrb[0].mxu0
    %v3814 = vadd.f32 0.0, %v3813
    %v3815 = vpop.f32.mrb[0].mxu0
    %3816 = vmatprep.mubr.f32.mxu0 0.0
    %3817 = vmatmul.mubr.f32.gmra.mrb[0].mxu0 %v3029
    %v3818 = vpop.f32.mrb[0].mxu0
    %v3819 = vadd.f32 0.0, %v3818
    %v3820 = vpop.f32.mrb[0].mxu0
    %3821 = vmatprep.mubr.f32.mxu0 0.0
    %3822 = vmatmul.mubr.f32.gmra.mrb[0].mxu0 %v3030
    %v3823 = vpop.f32.mrb[0].mxu0
    %v3824 = vadd.f32 0.0, %v3823
    %v3825 = vpop.f32.mrb[0].mxu0
    %3826 = vdwg.mxu0
    %v3827 = vadd.f32 %v3444, %v3669
    %v3828 = vadd.f32 %v3449, %v3674
    %v3829 = vadd.f32 %v3454, %v3679
    %v3830 = vadd.f32 %v3459, %v3684
    %v3831 = vadd.f32 %v3464, %v3689
    %v3832 = vadd.f32 %v3469, %v3694
    %v3833 = vadd.f32 %v3474, %v3699
    %v3834 = vadd.f32 %v3479, %v3704
    %v3835 = vadd.f32 %v3484, %v3709
    %v3836 = vadd.f32 %v3489, %v3714
    %v3837 = vadd.f32 %v3494, %v3719
    %v3838 = vadd.f32 %v3499, %v3724
    %v3839 = vadd.f32 %v3504, %v3729
    %v3840 = vadd.f32 %v3509, %v3734
    %v3841 = vadd.f32 %v3514, %v3739
    %v3842 = vadd.f32 %v3519, %v3744
    %v3843 = vadd.f32 %v3524, %v3749
    %v3844 = vadd.f32 %v3529, %v3754
    %v3845 = vadd.f32 %v3534, %v3759
    %v3846 = vadd.f32 %v3539, %v3764
    %v3847 = vadd.f32 %v3544, %v3769
    %v3848 = vadd.f32 %v3549, %v3774
    %v3849 = vadd.f32 %v3554, %v3779
    %v3850 = vadd.f32 %v3559, %v3784
    %v3851 = vadd.f32 %v3564, %v3789
    %v3852 = vadd.f32 %v3569, %v3794
    %v3853 = vadd.f32 %v3574, %v3799
    %v3854 = vadd.f32 %v3579, %v3804
    %v3855 = vadd.f32 %v3584, %v3809
    %v3856 = vadd.f32 %v3589, %v3814
    %v3857 = vadd.f32 %v3594, %v3819
    %v3858 = vadd.f32 %v3599, %v3824
    %3859 = vmatprep.subr.mxu0 0.0
    %3860 = vmatpush1.msra.mxu0 %v3113
    %3861 = vmatprep.subr.mxu0 0.0
    %3862 = vmatpush1.msra.mxu0 %v3114
    %3863 = vmatprep.subr.mxu0 0.0
    %3864 = vmatpush1.msra.mxu0 %v3115
    %3865 = vmatprep.subr.mxu0 0.0
    %3866 = vmatpush1.msra.mxu0 %v3116
    %3867 = vmatprep.subr.mxu0 0.0
    %3868 = vmatpush1.msra.mxu0 %v3117
    %3869 = vmatprep.subr.mxu0 0.0
    %3870 = vmatpush1.msra.mxu0 %v3118
    %3871 = vmatprep.subr.mxu0 0.0
    %3872 = vmatpush1.msra.mxu0 %v3119
    %3873 = vmatprep.subr.mxu0 0.0
    %3874 = vmatpush1.msra.mxu0 %v3120
    %3875 = vmatprep.subr.mxu0 0.0
    %3876 = vmatpush1.msra.mxu0 %v3121
    %3877 = vmatprep.subr.mxu0 0.0
    %3878 = vmatpush1.msra.mxu0 %v3122
    %3879 = vmatprep.subr.mxu0 0.0
    %3880 = vmatpush1.msra.mxu0 %v3123
    %3881 = vmatprep.subr.mxu0 0.0
    %3882 = vmatpush1.msra.mxu0 %v3124
    %3883 = vmatprep.subr.mxu0 0.0
    %3884 = vmatpush1.msra.mxu0 %v3125
    %3885 = vmatprep.subr.mxu0 0.0
    %3886 = vmatpush1.msra.mxu0 %v3126
    %3887 = vmatprep.subr.mxu0 0.0
    %3888 = vmatpush1.msra.mxu0 %v3127
    %3889 = vmatprep.subr.mxu0 0.0
    %3890 = vmatpush1.msra.mxu0 %v3128
    %3891 = vmatprep.subr.mxu0 0.0
    %3892 = vmatpush1.msra.mxu0 0.0
    %3893 = vmatprep.subr.mxu0 0.0
    %3894 = vmatpush1.msra.mxu0 0.0
    %3895 = vmatprep.subr.mxu0 0.0
    %3896 = vmatpush1.msra.mxu0 0.0
    %3897 = vmatprep.subr.mxu0 0.0
    %3898 = vmatpush1.msra.mxu0 0.0
    %3899 = vmatprep.subr.mxu0 0.0
    %3900 = vmatpush1.msra.mxu0 0.0
    %3901 = vmatprep.subr.mxu0 0.0
    %3902 = vmatpush1.msra.mxu0 0.0
    %3903 = vmatprep.subr.mxu0 0.0
    %3904 = vmatpush1.msra.mxu0 0.0
    %3905 = vmatprep.subr.mxu0 0.0
    %3906 = vmatpush1.msra.mxu0 0.0
    %3907 = vmatprep.subr.mxu0 0.0
    %3908 = vmatpush1.msra.mxu0 0.0
    %3909 = vmatprep.subr.mxu0 0.0
    %3910 = vmatpush1.msra.mxu0 0.0
    %3911 = vmatprep.subr.mxu0 0.0
    %3912 = vmatpush1.msra.mxu0 0.0
    %3913 = vmatprep.subr.mxu0 0.0
    %3914 = vmatpush1.msra.mxu0 0.0
    %3915 = vmatprep.subr.mxu0 0.0
    %3916 = vmatpush1.msra.mxu0 0.0
    %3917 = vmatprep.subr.mxu0 0.0
    %3918 = vmatpush1.msra.mxu0 0.0
    %3919 = vmatprep.subr.mxu0 0.0
    %3920 = vmatpush1.msra.mxu0 0.0
    %3921 = vmatprep.subr.mxu0 0.0
    %3922 = vmatpush1.msra.mxu0 0.0
    %3923 = vmatprep.mubr.f32.mxu0 0.0
    %3924 = vmatmul.mubr.f32.gmra.mrb[0].mxu0 %v3032
    %v3925 = vpop.f32.mrb[0].mxu0
    %v3926 = vadd.f32 0.0, %v3925
    %v3927 = vpop.f32.mrb[0].mxu0
    %3928 = vmatprep.mubr.f32.mxu0 0.0
    %3929 = vmatmul.mubr.f32.gmra.mrb[0].mxu0 %v3033
    %v3930 = vpop.f32.mrb[0].mxu0
    %v3931 = vadd.f32 0.0, %v3930
    %v3932 = vpop.f32.mrb[0].mxu0
    %3933 = vmatprep.mubr.f32.mxu0 0.0
    %3934 = vmatmul.mubr.f32.gmra.mrb[0].mxu0 %v3034
    %v3935 = vpop.f32.mrb[0].mxu0
    %v3936 = vadd.f32 0.0, %v3935
    %v3937 = vpop.f32.mrb[0].mxu0
    %3938 = vmatprep.mubr.f32.mxu0 0.0
    %3939 = vmatmul.mubr.f32.gmra.mrb[0].mxu0 %v3035
    %v3940 = vpop.f32.mrb[0].mxu0
    %v3941 = vadd.f32 0.0, %v3940
    %v3942 = vpop.f32.mrb[0].mxu0
    %3943 = vmatprep.mubr.f32.mxu0 0.0
    %3944 = vmatmul.mubr.f32.gmra.mrb[0].mxu0 %v3036
    %v3945 = vpop.f32.mrb[0].mxu0
    %v3946 = vadd.f32 0.0, %v3945
    %v3947 = vpop.f32.mrb[0].mxu0
    %3948 = vmatprep.mubr.f32.mxu0 0.0
    %3949 = vmatmul.mubr.f32.gmra.mrb[0].mxu0 %v3037
    %v3950 = vpop.f32.mrb[0].mxu0
    %v3951 = vadd.f32 0.0, %v3950
    %v3952 = vpop.f32.mrb[0].mxu0
    %3953 = vmatprep.mubr.f32.mxu0 0.0
    %3954 = vmatmul.mubr.f32.gmra.mrb[0].mxu0 %v3038
    %v3955 = vpop.f32.mrb[0].mxu0
    %v3956 = vadd.f32 0.0, %v3955
    %v3957 = vpop.f32.mrb[0].mxu0
    %3958 = vmatprep.mubr.f32.mxu0 0.0
    %3959 = vmatmul.mubr.f32.gmra.mrb[0].mxu0 %v3039
    %v3960 = vpop.f32.mrb[0].mxu0
    %v3961 = vadd.f32 0.0, %v3960
    %v3962 = vpop.f32.mrb[0].mxu0
    %3963 = vmatprep.mubr.f32.mxu0 0.0
    %3964 = vmatmul.mubr.f32.gmra.mrb[0].mxu0 %v3040
    %v3965 = vpop.f32.mrb[0].mxu0
    %v3966 = vadd.f32 0.0, %v3965
    %v3967 = vpop.f32.mrb[0].mxu0
    %3968 = vmatprep.mubr.f32.mxu0 0.0
    %3969 = vmatmul.mubr.f32.gmra.mrb[0].mxu0 %v3041
    %v3970 = vpop.f32.mrb[0].mxu0
    %v3971 = vadd.f32 0.0, %v3970
    %v3972 = vpop.f32.mrb[0].mxu0
    %3973 = vmatprep.mubr.f32.mxu0 0.0
    %3974 = vmatmul.mubr.f32.gmra.mrb[0].mxu0 %v3042
    %v3975 = vpop.f32.mrb[0].mxu0
    %v3976 = vadd.f32 0.0, %v3975
    %v3977 = vpop.f32.mrb[0].mxu0
    %3978 = vmatprep.mubr.f32.mxu0 0.0
    %3979 = vmatmul.mubr.f32.gmra.mrb[0].mxu0 %v3043
    %v3980 = vpop.f32.mrb[0].mxu0
    %v3981 = vadd.f32 0.0, %v3980
    %v3982 = vpop.f32.mrb[0].mxu0
    %3983 = vmatprep.mubr.f32.mxu0 0.0
    %3984 = vmatmul.mubr.f32.gmra.mrb[0].mxu0 %v3044
    %v3985 = vpop.f32.mrb[0].mxu0
    %v3986 = vadd.f32 0.0, %v3985
    %v3987 = vpop.f32.mrb[0].mxu0
    %3988 = vmatprep.mubr.f32.mxu0 0.0
    %3989 = vmatmul.mubr.f32.gmra.mrb[0].mxu0 %v3045
    %v3990 = vpop.f32.mrb[0].mxu0
    %v3991 = vadd.f32 0.0, %v3990
    %v3992 = vpop.f32.mrb[0].mxu0
    %3993 = vmatprep.mubr.f32.mxu0 0.0
    %3994 = vmatmul.mubr.f32.gmra.mrb[0].mxu0 %v3046
    %v3995 = vpop.f32.mrb[0].mxu0
    %v3996 = vadd.f32 0.0, %v3995
    %v3997 = vpop.f32.mrb[0].mxu0
    %3998 = vmatprep.mubr.f32.mxu0 0.0
    %3999 = vmatmul.mubr.f32.gmra.mrb[0].mxu0 %v3047
    %v4000 = vpop.f32.mrb[0].mxu0
    %v4001 = vadd.f32 0.0, %v4000
    %v4002 = vpop.f32.mrb[0].mxu0
    %4003 = vmatprep.mubr.f32.mxu0 0.0
    %4004 = vmatmul.mubr.f32.gmra.mrb[0].mxu0 %v3048
    %v4005 = vpop.f32.mrb[0].mxu0
    %v4006 = vadd.f32 0.0, %v4005
    %v4007 = vpop.f32.mrb[0].mxu0
    %4008 = vmatprep.mubr.f32.mxu0 0.0
    %4009 = vmatmul.mubr.f32.gmra.mrb[0].mxu0 %v3049
    %v4010 = vpop.f32.mrb[0].mxu0
    %v4011 = vadd.f32 0.0, %v4010
    %v4012 = vpop.f32.mrb[0].mxu0
    %4013 = vmatprep.mubr.f32.mxu0 0.0
    %4014 = vmatmul.mubr.f32.gmra.mrb[0].mxu0 %v3050
    %v4015 = vpop.f32.mrb[0].mxu0
    %v4016 = vadd.f32 0.0, %v4015
    %v4017 = vpop.f32.mrb[0].mxu0
    %4018 = vmatprep.mubr.f32.mxu0 0.0
    %4019 = vmatmul.mubr.f32.gmra.mrb[0].mxu0 %v3051
    %v4020 = vpop.f32.mrb[0].mxu0
    %v4021 = vadd.f32 0.0, %v4020
    %v4022 = vpop.f32.mrb[0].mxu0
    %4023 = vmatprep.mubr.f32.mxu0 0.0
    %4024 = vmatmul.mubr.f32.gmra.mrb[0].mxu0 %v3052
    %v4025 = vpop.f32.mrb[0].mxu0
    %v4026 = vadd.f32 0.0, %v4025
    %v4027 = vpop.f32.mrb[0].mxu0
    %4028 = vmatprep.mubr.f32.mxu0 0.0
    %4029 = vmatmul.mubr.f32.gmra.mrb[0].mxu0 %v3053
    %v4030 = vpop.f32.mrb[0].mxu0
    %v4031 = vadd.f32 0.0, %v4030
    %v4032 = vpop.f32.mrb[0].mxu0
    %4033 = vmatprep.mubr.f32.mxu0 0.0
    %4034 = vmatmul.mubr.f32.gmra.mrb[0].mxu0 %v3054
    %v4035 = vpop.f32.mrb[0].mxu0
    %v4036 = vadd.f32 0.0, %v4035
    %v4037 = vpop.f32.mrb[0].mxu0
    %4038 = vmatprep.mubr.f32.mxu0 0.0
    %4039 = vmatmul.mubr.f32.gmra.mrb[0].mxu0 %v3055
    %v4040 = vpop.f32.mrb[0].mxu0
    %v4041 = vadd.f32 0.0, %v4040
    %v4042 = vpop.f32.mrb[0].mxu0
    %4043 = vmatprep.mubr.f32.mxu0 0.0
    %4044 = vmatmul.mubr.f32.gmra.mrb[0].mxu0 %v3056
    %v4045 = vpop.f32.mrb[0].mxu0
    %v4046 = vadd.f32 0.0, %v4045
    %v4047 = vpop.f32.mrb[0].mxu0
    %4048 = vmatprep.mubr.f32.mxu0 0.0
    %4049 = vmatmul.mubr.f32.gmra.mrb[0].mxu0 %v3057
    %v4050 = vpop.f32.mrb[0].mxu0
    %v4051 = vadd.f32 0.0, %v4050
    %v4052 = vpop.f32.mrb[0].mxu0
    %4053 = vmatprep.mubr.f32.mxu0 0.0
    %4054 = vmatmul.mubr.f32.gmra.mrb[0].mxu0 %v3058
    %v4055 = vpop.f32.mrb[0].mxu0
    %v4056 = vadd.f32 0.0, %v4055
    %v4057 = vpop.f32.mrb[0].mxu0
    %4058 = vmatprep.mubr.f32.mxu0 0.0
    %4059 = vmatmul.mubr.f32.gmra.mrb[0].mxu0 %v3059
    %v4060 = vpop.f32.mrb[0].mxu0
    %v4061 = vadd.f32 0.0, %v4060
    %v4062 = vpop.f32.mrb[0].mxu0
    %4063 = vmatprep.mubr.f32.mxu0 0.0
    %4064 = vmatmul.mubr.f32.gmra.mrb[0].mxu0 %v3060
    %v4065 = vpop.f32.mrb[0].mxu0
    %v4066 = vadd.f32 0.0, %v4065
    %v4067 = vpop.f32.mrb[0].mxu0
    %4068 = vmatprep.mubr.f32.mxu0 0.0
    %4069 = vmatmul.mubr.f32.gmra.mrb[0].mxu0 %v3029
    %v4070 = vpop.f32.mrb[0].mxu0
    %v4071 = vadd.f32 0.0, %v4070
    %v4072 = vpop.f32.mrb[0].mxu0
    %4073 = vmatprep.mubr.f32.mxu0 0.0
    %4074 = vmatmul.mubr.f32.gmra.mrb[0].mxu0 %v3030
    %v4075 = vpop.f32.mrb[0].mxu0
    %v4076 = vadd.f32 0.0, %v4075
    %v4077 = vpop.f32.mrb[0].mxu0
    %4078 = vmatprep.mubr.f32.mxu0 0.0
    %4079 = vmatmul.mubr.f32.gmra.mrb[0].mxu0 %v3031
    %v4080 = vpop.f32.mrb[0].mxu0
    %v4081 = vadd.f32 0.0, %v4080
    %v4082 = vpop.f32.mrb[0].mxu0
    %4083 = vdwg.mxu0
    %v4084 = vadd.f32 %v3827, %v3926
    %v4085 = vadd.f32 %v3828, %v3931
    %v4086 = vadd.f32 %v3829, %v3936
    %v4087 = vadd.f32 %v3830, %v3941
    %v4088 = vadd.f32 %v3831, %v3946
    %v4089 = vadd.f32 %v3832, %v3951
    %v4090 = vadd.f32 %v3833, %v3956
    %v4091 = vadd.f32 %v3834, %v3961
    %v4092 = vadd.f32 %v3835, %v3966
    %v4093 = vadd.f32 %v3836, %v3971
    %v4094 = vadd.f32 %v3837, %v3976
    %v4095 = vadd.f32 %v3838, %v3981
    %v4096 = vadd.f32 %v3839, %v3986
    %v4097 = vadd.f32 %v3840, %v3991
    %v4098 = vadd.f32 %v3841, %v3996
    %v4099 = vadd.f32 %v3842, %v4001
    %v4100 = vadd.f32 %v3843, %v4006
    %v4101 = vadd.f32 %v3844, %v4011
    %v4102 = vadd.f32 %v3845, %v4016
    %v4103 = vadd.f32 %v3846, %v4021
    %v4104 = vadd.f32 %v3847, %v4026
    %v4105 = vadd.f32 %v3848, %v4031
    %v4106 = vadd.f32 %v3849, %v4036
    %v4107 = vadd.f32 %v3850, %v4041
    %v4108 = vadd.f32 %v3851, %v4046
    %v4109 = vadd.f32 %v3852, %v4051
    %v4110 = vadd.f32 %v3853, %v4056
    %v4111 = vadd.f32 %v3854, %v4061
    %v4112 = vadd.f32 %v3855, %v4066
    %v4113 = vadd.f32 %v3856, %v4071
    %v4114 = vadd.f32 %v3857, %v4076
    %v4115 = vadd.f32 %v3858, %v4081
    %4116 = vmatprep.subr.mxu0 0.0
    %4117 = vmatpush1.msra.mxu0 %v3130
    %4118 = vmatprep.subr.mxu0 0.0
    %4119 = vmatpush1.msra.mxu0 %v3131
    %4120 = vmatprep.subr.mxu0 0.0
    %4121 = vmatpush1.msra.mxu0 %v3132
    %4122 = vmatprep.subr.mxu0 0.0
    %4123 = vmatpush1.msra.mxu0 %v3133
    %4124 = vmatprep.subr.mxu0 0.0
    %4125 = vmatpush1.msra.mxu0 %v3134
    %4126 = vmatprep.subr.mxu0 0.0
    %4127 = vmatpush1.msra.mxu0 %v3135
    %4128 = vmatprep.subr.mxu0 0.0
    %4129 = vmatpush1.msra.mxu0 %v3136
    %4130 = vmatprep.subr.mxu0 0.0
    %4131 = vmatpush1.msra.mxu0 %v3137
    %4132 = vmatprep.subr.mxu0 0.0
    %4133 = vmatpush1.msra.mxu0 %v3138
    %4134 = vmatprep.subr.mxu0 0.0
    %4135 = vmatpush1.msra.mxu0 %v3139
    %4136 = vmatprep.subr.mxu0 0.0
    %4137 = vmatpush1.msra.mxu0 %v3140
    %4138 = vmatprep.subr.mxu0 0.0
    %4139 = vmatpush1.msra.mxu0 %v3141
    %4140 = vmatprep.subr.mxu0 0.0
    %4141 = vmatpush1.msra.mxu0 %v3142
    %4142 = vmatprep.subr.mxu0 0.0
    %4143 = vmatpush1.msra.mxu0 %v3143
    %4144 = vmatprep.subr.mxu0 0.0
    %4145 = vmatpush1.msra.mxu0 %v3144
    %4146 = vmatprep.subr.mxu0 0.0
    %4147 = vmatpush1.msra.mxu0 %v3145
    %4148 = vmatprep.subr.mxu0 0.0
    %4149 = vmatpush1.msra.mxu0 0.0
    %4150 = vmatprep.subr.mxu0 0.0
    %4151 = vmatpush1.msra.mxu0 0.0
    %4152 = vmatprep.subr.mxu0 0.0
    %4153 = vmatpush1.msra.mxu0 0.0
    %4154 = vmatprep.subr.mxu0 0.0
    %4155 = vmatpush1.msra.mxu0 0.0
    %4156 = vmatprep.subr.mxu0 0.0
    %4157 = vmatpush1.msra.mxu0 0.0
    %4158 = vmatprep.subr.mxu0 0.0
    %4159 = vmatpush1.msra.mxu0 0.0
    %4160 = vmatprep.subr.mxu0 0.0
    %4161 = vmatpush1.msra.mxu0 0.0
    %4162 = vmatprep.subr.mxu0 0.0
    %4163 = vmatpush1.msra.mxu0 0.0
    %4164 = vmatprep.subr.mxu0 0.0
    %4165 = vmatpush1.msra.mxu0 0.0
    %4166 = vmatprep.subr.mxu0 0.0
    %4167 = vmatpush1.msra.mxu0 0.0
    %4168 = vmatprep.subr.mxu0 0.0
    %4169 = vmatpush1.msra.mxu0 0.0
    %4170 = vmatprep.subr.mxu0 0.0
    %4171 = vmatpush1.msra.mxu0 0.0
    %4172 = vmatprep.subr.mxu0 0.0
    %4173 = vmatpush1.msra.mxu0 0.0
    %4174 = vmatprep.subr.mxu0 0.0
    %4175 = vmatpush1.msra.mxu0 0.0
    %4176 = vmatprep.subr.mxu0 0.0
    %4177 = vmatpush1.msra.mxu0 0.0
    %4178 = vmatprep.subr.mxu0 0.0
    %4179 = vmatpush1.msra.mxu0 0.0
    %4180 = vmatprep.mubr.f32.mxu0 0.0
    %4181 = vmatmul.mubr.f32.gmra.mrb[0].mxu0 %v3033
    %v4182 = vpop.f32.mrb[0].mxu0
    %v4183 = vadd.f32 0.0, %v4182
    %v4184 = vpop.f32.mrb[0].mxu0
    %4185 = vmatprep.mubr.f32.mxu0 0.0
    %4186 = vmatmul.mubr.f32.gmra.mrb[0].mxu0 %v3034
    %v4187 = vpop.f32.mrb[0].mxu0
    %v4188 = vadd.f32 0.0, %v4187
    %v4189 = vpop.f32.mrb[0].mxu0
    %4190 = vmatprep.mubr.f32.mxu0 0.0
    %4191 = vmatmul.mubr.f32.gmra.mrb[0].mxu0 %v3035
    %v4192 = vpop.f32.mrb[0].mxu0
    %v4193 = vadd.f32 0.0, %v4192
    %v4194 = vpop.f32.mrb[0].mxu0
    %4195 = vmatprep.mubr.f32.mxu0 0.0
    %4196 = vmatmul.mubr.f32.gmra.mrb[0].mxu0 %v3036
    %v4197 = vpop.f32.mrb[0].mxu0
    %v4198 = vadd.f32 0.0, %v4197
    %v4199 = vpop.f32.mrb[0].mxu0
    %4200 = vmatprep.mubr.f32.mxu0 0.0
    %4201 = vmatmul.mubr.f32.gmra.mrb[0].mxu0 %v3037
    %v4202 = vpop.f32.mrb[0].mxu0
    %v4203 = vadd.f32 0.0, %v4202
    %v4204 = vpop.f32.mrb[0].mxu0
    %4205 = vmatprep.mubr.f32.mxu0 0.0
    %4206 = vmatmul.mubr.f32.gmra.mrb[0].mxu0 %v3038
    %v4207 = vpop.f32.mrb[0].mxu0
    %v4208 = vadd.f32 0.0, %v4207
    %v4209 = vpop.f32.mrb[0].mxu0
    %4210 = vmatprep.mubr.f32.mxu0 0.0
    %4211 = vmatmul.mubr.f32.gmra.mrb[0].mxu0 %v3039
    %v4212 = vpop.f32.mrb[0].mxu0
    %v4213 = vadd.f32 0.0, %v4212
    %v4214 = vpop.f32.mrb[0].mxu0
    %4215 = vmatprep.mubr.f32.mxu0 0.0
    %4216 = vmatmul.mubr.f32.gmra.mrb[0].mxu0 %v3040
    %v4217 = vpop.f32.mrb[0].mxu0
    %v4218 = vadd.f32 0.0, %v4217
    %v4219 = vpop.f32.mrb[0].mxu0
    %4220 = vmatprep.mubr.f32.mxu0 0.0
    %4221 = vmatmul.mubr.f32.gmra.mrb[0].mxu0 %v3041
    %v4222 = vpop.f32.mrb[0].mxu0
    %v4223 = vadd.f32 0.0, %v4222
    %v4224 = vpop.f32.mrb[0].mxu0
    %4225 = vmatprep.mubr.f32.mxu0 0.0
    %4226 = vmatmul.mubr.f32.gmra.mrb[0].mxu0 %v3042
    %v4227 = vpop.f32.mrb[0].mxu0
    %v4228 = vadd.f32 0.0, %v4227
    %v4229 = vpop.f32.mrb[0].mxu0
    %4230 = vmatprep.mubr.f32.mxu0 0.0
    %4231 = vmatmul.mubr.f32.gmra.mrb[0].mxu0 %v3043
    %v4232 = vpop.f32.mrb[0].mxu0
    %v4233 = vadd.f32 0.0, %v4232
    %v4234 = vpop.f32.mrb[0].mxu0
    %4235 = vmatprep.mubr.f32.mxu0 0.0
    %4236 = vmatmul.mubr.f32.gmra.mrb[0].mxu0 %v3044
    %v4237 = vpop.f32.mrb[0].mxu0
    %v4238 = vadd.f32 0.0, %v4237
    %v4239 = vpop.f32.mrb[0].mxu0
    %4240 = vmatprep.mubr.f32.mxu0 0.0
    %4241 = vmatmul.mubr.f32.gmra.mrb[0].mxu0 %v3045
    %v4242 = vpop.f32.mrb[0].mxu0
    %v4243 = vadd.f32 0.0, %v4242
    %v4244 = vpop.f32.mrb[0].mxu0
    %4245 = vmatprep.mubr.f32.mxu0 0.0
    %4246 = vmatmul.mubr.f32.gmra.mrb[0].mxu0 %v3046
    %v4247 = vpop.f32.mrb[0].mxu0
    %v4248 = vadd.f32 0.0, %v4247
    %v4249 = vpop.f32.mrb[0].mxu0
    %4250 = vmatprep.mubr.f32.mxu0 0.0
    %4251 = vmatmul.mubr.f32.gmra.mrb[0].mxu0 %v3047
    %v4252 = vpop.f32.mrb[0].mxu0
    %v4253 = vadd.f32 0.0, %v4252
    %v4254 = vpop.f32.mrb[0].mxu0
    %4255 = vmatprep.mubr.f32.mxu0 0.0
    %4256 = vmatmul.mubr.f32.gmra.mrb[0].mxu0 %v3048
    %v4257 = vpop.f32.mrb[0].mxu0
    %v4258 = vadd.f32 0.0, %v4257
    %v4259 = vpop.f32.mrb[0].mxu0
    %4260 = vmatprep.mubr.f32.mxu0 0.0
    %4261 = vmatmul.mubr.f32.gmra.mrb[0].mxu0 %v3049
    %v4262 = vpop.f32.mrb[0].mxu0
    %v4263 = vadd.f32 0.0, %v4262
    %v4264 = vpop.f32.mrb[0].mxu0
    %4265 = vmatprep.mubr.f32.mxu0 0.0
    %4266 = vmatmul.mubr.f32.gmra.mrb[0].mxu0 %v3050
    %v4267 = vpop.f32.mrb[0].mxu0
    %v4268 = vadd.f32 0.0, %v4267
    %v4269 = vpop.f32.mrb[0].mxu0
    %4270 = vmatprep.mubr.f32.mxu0 0.0
    %4271 = vmatmul.mubr.f32.gmra.mrb[0].mxu0 %v3051
    %v4272 = vpop.f32.mrb[0].mxu0
    %v4273 = vadd.f32 0.0, %v4272
    %v4274 = vpop.f32.mrb[0].mxu0
    %4275 = vmatprep.mubr.f32.mxu0 0.0
    %4276 = vmatmul.mubr.f32.gmra.mrb[0].mxu0 %v3052
    %v4277 = vpop.f32.mrb[0].mxu0
    %v4278 = vadd.f32 0.0, %v4277
    %v4279 = vpop.f32.mrb[0].mxu0
    %4280 = vmatprep.mubr.f32.mxu0 0.0
    %4281 = vmatmul.mubr.f32.gmra.mrb[0].mxu0 %v3053
    %v4282 = vpop.f32.mrb[0].mxu0
    %v4283 = vadd.f32 0.0, %v4282
    %v4284 = vpop.f32.mrb[0].mxu0
    %4285 = vmatprep.mubr.f32.mxu0 0.0
    %4286 = vmatmul.mubr.f32.gmra.mrb[0].mxu0 %v3054
    %v4287 = vpop.f32.mrb[0].mxu0
    %v4288 = vadd.f32 0.0, %v4287
    %v4289 = vpop.f32.mrb[0].mxu0
    %4290 = vmatprep.mubr.f32.mxu0 0.0
    %4291 = vmatmul.mubr.f32.gmra.mrb[0].mxu0 %v3055
    %v4292 = vpop.f32.mrb[0].mxu0
    %v4293 = vadd.f32 0.0, %v4292
    %v4294 = vpop.f32.mrb[0].mxu0
    %4295 = vmatprep.mubr.f32.mxu0 0.0
    %4296 = vmatmul.mubr.f32.gmra.mrb[0].mxu0 %v3056
    %v4297 = vpop.f32.mrb[0].mxu0
    %v4298 = vadd.f32 0.0, %v4297
    %v4299 = vpop.f32.mrb[0].mxu0
    %4300 = vmatprep.mubr.f32.mxu0 0.0
    %4301 = vmatmul.mubr.f32.gmra.mrb[0].mxu0 %v3057
    %v4302 = vpop.f32.mrb[0].mxu0
    %v4303 = vadd.f32 0.0, %v4302
    %v4304 = vpop.f32.mrb[0].mxu0
    %4305 = vmatprep.mubr.f32.mxu0 0.0
    %4306 = vmatmul.mubr.f32.gmra.mrb[0].mxu0 %v3058
    %v4307 = vpop.f32.mrb[0].mxu0
    %v4308 = vadd.f32 0.0, %v4307
    %v4309 = vpop.f32.mrb[0].mxu0
    %4310 = vmatprep.mubr.f32.mxu0 0.0
    %4311 = vmatmul.mubr.f32.gmra.mrb[0].mxu0 %v3059
    %v4312 = vpop.f32.mrb[0].mxu0
    %v4313 = vadd.f32 0.0, %v4312
    %v4314 = vpop.f32.mrb[0].mxu0
    %4315 = vmatprep.mubr.f32.mxu0 0.0
    %4316 = vmatmul.mubr.f32.gmra.mrb[0].mxu0 %v3060
    %v4317 = vpop.f32.mrb[0].mxu0
    %v4318 = vadd.f32 0.0, %v4317
    %v4319 = vpop.f32.mrb[0].mxu0
    %4320 = vmatprep.mubr.f32.mxu0 0.0
    %4321 = vmatmul.mubr.f32.gmra.mrb[0].mxu0 %v3029
    %v4322 = vpop.f32.mrb[0].mxu0
    %v4323 = vadd.f32 0.0, %v4322
    %v4324 = vpop.f32.mrb[0].mxu0
    %4325 = vmatprep.mubr.f32.mxu0 0.0
    %4326 = vmatmul.mubr.f32.gmra.mrb[0].mxu0 %v3030
    %v4327 = vpop.f32.mrb[0].mxu0
    %v4328 = vadd.f32 0.0, %v4327
    %v4329 = vpop.f32.mrb[0].mxu0
    %4330 = vmatprep.mubr.f32.mxu0 0.0
    %4331 = vmatmul.mubr.f32.gmra.mrb[0].mxu0 %v3031
    %v4332 = vpop.f32.mrb[0].mxu0
    %v4333 = vadd.f32 0.0, %v4332
    %v4334 = vpop.f32.mrb[0].mxu0
    %4335 = vmatprep.mubr.f32.mxu0 0.0
    %4336 = vmatmul.mubr.f32.gmra.mrb[0].mxu0 %v3032
    %v4337 = vpop.f32.mrb[0].mxu0
    %v4338 = vadd.f32 0.0, %v4337
    %v4339 = vpop.f32.mrb[0].mxu0
    %4340 = vdwg.mxu0
    %v4341 = vadd.f32 %v4084, %v4183
    %v4342 = vadd.f32 %v4085, %v4188
    %v4343 = vadd.f32 %v4086, %v4193
    %v4344 = vadd.f32 %v4087, %v4198
    %v4345 = vadd.f32 %v4088, %v4203
    %v4346 = vadd.f32 %v4089, %v4208
    %v4347 = vadd.f32 %v4090, %v4213
    %v4348 = vadd.f32 %v4091, %v4218
    %v4349 = vadd.f32 %v4092, %v4223
    %v4350 = vadd.f32 %v4093, %v4228
    %v4351 = vadd.f32 %v4094, %v4233
    %v4352 = vadd.f32 %v4095, %v4238
    %v4353 = vadd.f32 %v4096, %v4243
    %v4354 = vadd.f32 %v4097, %v4248
    %v4355 = vadd.f32 %v4098, %v4253
    %v4356 = vadd.f32 %v4099, %v4258
    %v4357 = vadd.f32 %v4100, %v4263
    %v4358 = vadd.f32 %v4101, %v4268
    %v4359 = vadd.f32 %v4102, %v4273
    %v4360 = vadd.f32 %v4103, %v4278
    %v4361 = vadd.f32 %v4104, %v4283
    %v4362 = vadd.f32 %v4105, %v4288
    %v4363 = vadd.f32 %v4106, %v4293
    %v4364 = vadd.f32 %v4107, %v4298
    %v4365 = vadd.f32 %v4108, %v4303
    %v4366 = vadd.f32 %v4109, %v4308
    %v4367 = vadd.f32 %v4110, %v4313
    %v4368 = vadd.f32 %v4111, %v4318
    %v4369 = vadd.f32 %v4112, %v4323
    %v4370 = vadd.f32 %v4113, %v4328
    %v4371 = vadd.f32 %v4114, %v4333
    %v4372 = vadd.f32 %v4115, %v4338
    %v4374 = vlaneseq
    %v4375 = vshrl.u32 %v4374, 7
    %v4376 = vsub.s32 0, %v4375
    %v4377 = vrot.slane %v3147, %v4376
    %v4379 = vadd.f32 %v4341, %v4377
    %v4380 = vadd.f32 %v4342, %v4377
    %v4381 = vadd.f32 %v4343, %v4377
    %v4382 = vadd.f32 %v4344, %v4377
    %v4383 = vadd.f32 %v4345, %v4377
    %v4384 = vadd.f32 %v4346, %v4377
    %v4385 = vadd.f32 %v4347, %v4377
    %v4386 = vadd.f32 %v4348, %v4377
    %v4387 = vadd.f32 %v4349, %v4377
    %v4388 = vadd.f32 %v4350, %v4377
    %v4389 = vadd.f32 %v4351, %v4377
    %v4390 = vadd.f32 %v4352, %v4377
    %v4391 = vadd.f32 %v4353, %v4377
    %v4392 = vadd.f32 %v4354, %v4377
    %v4393 = vadd.f32 %v4355, %v4377
    %v4394 = vadd.f32 %v4356, %v4377
    %v4395 = vadd.f32 %v4357, %v4377
    %v4396 = vadd.f32 %v4358, %v4377
    %v4397 = vadd.f32 %v4359, %v4377
    %v4398 = vadd.f32 %v4360, %v4377
    %v4399 = vadd.f32 %v4361, %v4377
    %v4400 = vadd.f32 %v4362, %v4377
    %v4401 = vadd.f32 %v4363, %v4377
    %v4402 = vadd.f32 %v4364, %v4377
    %v4403 = vadd.f32 %v4365, %v4377
    %v4404 = vadd.f32 %v4366, %v4377
    %v4405 = vadd.f32 %v4367, %v4377
    %v4406 = vadd.f32 %v4368, %v4377
    %v4407 = vadd.f32 %v4369, %v4377
    %v4408 = vadd.f32 %v4370, %v4377
    %v4409 = vadd.f32 %v4371, %v4377
    %v4410 = vadd.f32 %v4372, %v4377
    %v4411 = vmax.f32 %v4379, 0.0
    %v4412 = vmax.f32 %v4380, 0.0
    %v4413 = vmax.f32 %v4381, 0.0
    %v4414 = vmax.f32 %v4382, 0.0
    %v4415 = vmax.f32 %v4383, 0.0
    %v4416 = vmax.f32 %v4384, 0.0
    %v4417 = vmax.f32 %v4385, 0.0
    %v4418 = vmax.f32 %v4386, 0.0
    %v4419 = vmax.f32 %v4387, 0.0
    %v4420 = vmax.f32 %v4388, 0.0
    %v4421 = vmax.f32 %v4389, 0.0
    %v4422 = vmax.f32 %v4390, 0.0
    %v4423 = vmax.f32 %v4391, 0.0
    %v4424 = vmax.f32 %v4392, 0.0
    %v4425 = vmax.f32 %v4393, 0.0
    %v4426 = vmax.f32 %v4394, 0.0
    %v4427 = vmax.f32 %v4395, 0.0
    %v4428 = vmax.f32 %v4396, 0.0
    %v4429 = vmax.f32 %v4397, 0.0
    %v4430 = vmax.f32 %v4398, 0.0
    %v4431 = vmax.f32 %v4399, 0.0
    %v4432 = vmax.f32 %v4400, 0.0
    %v4433 = vmax.f32 %v4401, 0.0
    %v4434 = vmax.f32 %v4402, 0.0
    %v4435 = vmax.f32 %v4403, 0.0
    %v4436 = vmax.f32 %v4404, 0.0
    %v4437 = vmax.f32 %v4405, 0.0
    %v4438 = vmax.f32 %v4406, 0.0
    %v4439 = vmax.f32 %v4407, 0.0
    %v4440 = vmax.f32 %v4408, 0.0
    %v4441 = vmax.f32 %v4409, 0.0
    %v4442 = vmax.f32 %v4410, 0.0
    %v4444 = vlaneseq
    %v4445 = vshrl.u32 %v4444, 7
    %v4446 = vsub.s32 0, %v4445
    %v4447 = vrot.slane %v3149, %v4446
    %v4449 = vmul.f32 %v4411, %v4447
    %v4450 = vmul.f32 %v4412, %v4447
    %v4451 = vmul.f32 %v4413, %v4447
    %v4452 = vmul.f32 %v4414, %v4447
    %v4453 = vmul.f32 %v4415, %v4447
    %v4454 = vmul.f32 %v4416, %v4447
    %v4455 = vmul.f32 %v4417, %v4447
    %v4456 = vmul.f32 %v4418, %v4447
    %v4457 = vmul.f32 %v4419, %v4447
    %v4458 = vmul.f32 %v4420, %v4447
    %v4459 = vmul.f32 %v4421, %v4447
    %v4460 = vmul.f32 %v4422, %v4447
    %v4461 = vmul.f32 %v4423, %v4447
    %v4462 = vmul.f32 %v4424, %v4447
    %v4463 = vmul.f32 %v4425, %v4447
    %v4464 = vmul.f32 %v4426, %v4447
    %v4465 = vmul.f32 %v4427, %v4447
    %v4466 = vmul.f32 %v4428, %v4447
    %v4467 = vmul.f32 %v4429, %v4447
    %v4468 = vmul.f32 %v4430, %v4447
    %v4469 = vmul.f32 %v4431, %v4447
    %v4470 = vmul.f32 %v4432, %v4447
    %v4471 = vmul.f32 %v4433, %v4447
    %v4472 = vmul.f32 %v4434, %v4447
    %v4473 = vmul.f32 %v4435, %v4447
    %v4474 = vmul.f32 %v4436, %v4447
    %v4475 = vmul.f32 %v4437, %v4447
    %v4476 = vmul.f32 %v4438, %v4447
    %v4477 = vmul.f32 %v4439, %v4447
    %v4478 = vmul.f32 %v4440, %v4447
    %v4479 = vmul.f32 %v4441, %v4447
    %v4480 = vmul.f32 %v4442, %v4447
    %v4482 = vlaneseq
    %v4483 = vshrl.u32 %v4482, 7
    %v4484 = vsub.s32 0, %v4483
    %v4485 = vrot.slane %v3151, %v4484
    %v4487 = vadd.f32 %v4449, %v4485
    %v4488 = vadd.f32 %v4450, %v4485
    %v4489 = vadd.f32 %v4451, %v4485
    %v4490 = vadd.f32 %v4452, %v4485
    %v4491 = vadd.f32 %v4453, %v4485
    %v4492 = vadd.f32 %v4454, %v4485
    %v4493 = vadd.f32 %v4455, %v4485
    %v4494 = vadd.f32 %v4456, %v4485
    %v4495 = vadd.f32 %v4457, %v4485
    %v4496 = vadd.f32 %v4458, %v4485
    %v4497 = vadd.f32 %v4459, %v4485
    %v4498 = vadd.f32 %v4460, %v4485
    %v4499 = vadd.f32 %v4461, %v4485
    %v4500 = vadd.f32 %v4462, %v4485
    %v4501 = vadd.f32 %v4463, %v4485
    %v4502 = vadd.f32 %v4464, %v4485
    %v4503 = vadd.f32 %v4465, %v4485
    %v4504 = vadd.f32 %v4466, %v4485
    %v4505 = vadd.f32 %v4467, %v4485
    %v4506 = vadd.f32 %v4468, %v4485
    %v4507 = vadd.f32 %v4469, %v4485
    %v4508 = vadd.f32 %v4470, %v4485
    %v4509 = vadd.f32 %v4471, %v4485
    %v4510 = vadd.f32 %v4472, %v4485
    %v4511 = vadd.f32 %v4473, %v4485
    %v4512 = vadd.f32 %v4474, %v4485
    %v4513 = vadd.f32 %v4475, %v4485
    %v4514 = vadd.f32 %v4476, %v4485
    %v4515 = vadd.f32 %v4477, %v4485
    %v4516 = vadd.f32 %v4478, %v4485
    %v4517 = vadd.f32 %v4479, %v4485
    %v4518 = vadd.f32 %v4480, %v4485
    %s4519 = scalar_lea.vmem [#allocation3], 1280
    %v4520 = vld [vmem:[%s4519] sm:$0xff]
    %v4521 = vld [vmem:[%s4519 + $0x8] sm:$0xff]
    %v4522 = vld [vmem:[%s4519 + $0x10] sm:$0xff]
    %v4523 = vld [vmem:[%s4519 + $0x18] sm:$0xff]
    %v4524 = vld [vmem:[%s4519 + $0x20] sm:$0xff]
    %v4525 = vld [vmem:[%s4519 + $0x28] sm:$0xff]
    %v4526 = vld [vmem:[%s4519 + $0x30] sm:$0xff]
    %v4527 = vld [vmem:[%s4519 + $0x38] sm:$0xff]
    %v4528 = vld [vmem:[%s4519 + $0x40] sm:$0xff]
    %v4529 = vld [vmem:[%s4519 + $0x48] sm:$0xff]
    %v4530 = vld [vmem:[%s4519 + $0x50] sm:$0xff]
    %v4531 = vld [vmem:[%s4519 + $0x58] sm:$0xff]
    %v4532 = vld [vmem:[%s4519 + $0x60] sm:$0xff]
    %v4533 = vld [vmem:[%s4519 + $0x68] sm:$0xff]
    %v4534 = vld [vmem:[%s4519 + $0x70] sm:$0xff]
    %v4535 = vld [vmem:[%s4519 + $0x78] sm:$0xff]
    %s4536 = scalar_lea.vmem [#allocation3], 1408
    %v4537 = vld [vmem:[%s4536] sm:$0xff]
    %v4538 = vld [vmem:[%s4536 + $0x8] sm:$0xff]
    %v4539 = vld [vmem:[%s4536 + $0x10] sm:$0xff]
    %v4540 = vld [vmem:[%s4536 + $0x18] sm:$0xff]
    %v4541 = vld [vmem:[%s4536 + $0x20] sm:$0xff]
    %v4542 = vld [vmem:[%s4536 + $0x28] sm:$0xff]
    %v4543 = vld [vmem:[%s4536 + $0x30] sm:$0xff]
    %v4544 = vld [vmem:[%s4536 + $0x38] sm:$0xff]
    %v4545 = vld [vmem:[%s4536 + $0x40] sm:$0xff]
    %v4546 = vld [vmem:[%s4536 + $0x48] sm:$0xff]
    %v4547 = vld [vmem:[%s4536 + $0x50] sm:$0xff]
    %v4548 = vld [vmem:[%s4536 + $0x58] sm:$0xff]
    %v4549 = vld [vmem:[%s4536 + $0x60] sm:$0xff]
    %v4550 = vld [vmem:[%s4536 + $0x68] sm:$0xff]
    %v4551 = vld [vmem:[%s4536 + $0x70] sm:$0xff]
    %v4552 = vld [vmem:[%s4536 + $0x78] sm:$0xff]
    %s4553 = scalar_lea.vmem [#allocation3], 1536
    %v4554 = vld [vmem:[%s4553] sm:$0xff]
    %v4555 = vld [vmem:[%s4553 + $0x8] sm:$0xff]
    %v4556 = vld [vmem:[%s4553 + $0x10] sm:$0xff]
    %v4557 = vld [vmem:[%s4553 + $0x18] sm:$0xff]
    %v4558 = vld [vmem:[%s4553 + $0x20] sm:$0xff]
    %v4559 = vld [vmem:[%s4553 + $0x28] sm:$0xff]
    %v4560 = vld [vmem:[%s4553 + $0x30] sm:$0xff]
    %v4561 = vld [vmem:[%s4553 + $0x38] sm:$0xff]
    %v4562 = vld [vmem:[%s4553 + $0x40] sm:$0xff]
    %v4563 = vld [vmem:[%s4553 + $0x48] sm:$0xff]
    %v4564 = vld [vmem:[%s4553 + $0x50] sm:$0xff]
    %v4565 = vld [vmem:[%s4553 + $0x58] sm:$0xff]
    %v4566 = vld [vmem:[%s4553 + $0x60] sm:$0xff]
    %v4567 = vld [vmem:[%s4553 + $0x68] sm:$0xff]
    %v4568 = vld [vmem:[%s4553 + $0x70] sm:$0xff]
    %v4569 = vld [vmem:[%s4553 + $0x78] sm:$0xff]
    %s4570 = scalar_lea.vmem [#allocation3], 1664
    %v4571 = vld [vmem:[%s4570] sm:$0xff]
    %v4572 = vld [vmem:[%s4570 + $0x8] sm:$0xff]
    %v4573 = vld [vmem:[%s4570 + $0x10] sm:$0xff]
    %v4574 = vld [vmem:[%s4570 + $0x18] sm:$0xff]
    %v4575 = vld [vmem:[%s4570 + $0x20] sm:$0xff]
    %v4576 = vld [vmem:[%s4570 + $0x28] sm:$0xff]
    %v4577 = vld [vmem:[%s4570 + $0x30] sm:$0xff]
    %v4578 = vld [vmem:[%s4570 + $0x38] sm:$0xff]
    %v4579 = vld [vmem:[%s4570 + $0x40] sm:$0xff]
    %v4580 = vld [vmem:[%s4570 + $0x48] sm:$0xff]
    %v4581 = vld [vmem:[%s4570 + $0x50] sm:$0xff]
    %v4582 = vld [vmem:[%s4570 + $0x58] sm:$0xff]
    %v4583 = vld [vmem:[%s4570 + $0x60] sm:$0xff]
    %v4584 = vld [vmem:[%s4570 + $0x68] sm:$0xff]
    %v4585 = vld [vmem:[%s4570 + $0x70] sm:$0xff]
    %v4586 = vld [vmem:[%s4570 + $0x78] sm:$0xff]
    %s4587 = scalar_lea.vmem [#allocation3], 1792
    %v4588 = vld [vmem:[%s4587] sm:$0xff]
    %v4589 = vld [vmem:[%s4587 + $0x8] sm:$0xff]
    %v4590 = vld [vmem:[%s4587 + $0x10] sm:$0xff]
    %v4591 = vld [vmem:[%s4587 + $0x18] sm:$0xff]
    %v4592 = vld [vmem:[%s4587 + $0x20] sm:$0xff]
    %v4593 = vld [vmem:[%s4587 + $0x28] sm:$0xff]
    %v4594 = vld [vmem:[%s4587 + $0x30] sm:$0xff]
    %v4595 = vld [vmem:[%s4587 + $0x38] sm:$0xff]
    %v4596 = vld [vmem:[%s4587 + $0x40] sm:$0xff]
    %v4597 = vld [vmem:[%s4587 + $0x48] sm:$0xff]
    %v4598 = vld [vmem:[%s4587 + $0x50] sm:$0xff]
    %v4599 = vld [vmem:[%s4587 + $0x58] sm:$0xff]
    %v4600 = vld [vmem:[%s4587 + $0x60] sm:$0xff]
    %v4601 = vld [vmem:[%s4587 + $0x68] sm:$0xff]
    %v4602 = vld [vmem:[%s4587 + $0x70] sm:$0xff]
    %v4603 = vld [vmem:[%s4587 + $0x78] sm:$0xff]
    %s4604 = scalar_lea.vmem %s3, 3
    %v4605 = vld [vmem:[%s4604] sm:$0x1]
    %s4606 = scalar_lea.vmem %s4, 3
    %v4607 = vld [vmem:[%s4606] sm:$0x1]
    %s4608 = scalar_lea.vmem %s5, 3
    %v4609 = vld [vmem:[%s4608] sm:$0x1]
    %4610 = vmatprep.subr.mxu0 0.0
    %4611 = vmatpush1.msra.mxu0 %v4537
    %4612 = vmatprep.subr.mxu0 0.0
    %4613 = vmatpush1.msra.mxu0 %v4538
    %4614 = vmatprep.subr.mxu0 0.0
    %4615 = vmatpush1.msra.mxu0 %v4539
    %4616 = vmatprep.subr.mxu0 0.0
    %4617 = vmatpush1.msra.mxu0 %v4540
    %4618 = vmatprep.subr.mxu0 0.0
    %4619 = vmatpush1.msra.mxu0 %v4541
    %4620 = vmatprep.subr.mxu0 0.0
    %4621 = vmatpush1.msra.mxu0 %v4542
    %4622 = vmatprep.subr.mxu0 0.0
    %4623 = vmatpush1.msra.mxu0 %v4543
    %4624 = vmatprep.subr.mxu0 0.0
    %4625 = vmatpush1.msra.mxu0 %v4544
    %4626 = vmatprep.subr.mxu0 0.0
    %4627 = vmatpush1.msra.mxu0 %v4545
    %4628 = vmatprep.subr.mxu0 0.0
    %4629 = vmatpush1.msra.mxu0 %v4546
    %4630 = vmatprep.subr.mxu0 0.0
    %4631 = vmatpush1.msra.mxu0 %v4547
    %4632 = vmatprep.subr.mxu0 0.0
    %4633 = vmatpush1.msra.mxu0 %v4548
    %4634 = vmatprep.subr.mxu0 0.0
    %4635 = vmatpush1.msra.mxu0 %v4549
    %4636 = vmatprep.subr.mxu0 0.0
    %4637 = vmatpush1.msra.mxu0 %v4550
    %4638 = vmatprep.subr.mxu0 0.0
    %4639 = vmatpush1.msra.mxu0 %v4551
    %4640 = vmatprep.subr.mxu0 0.0
    %4641 = vmatpush1.msra.mxu0 %v4552
    %4642 = vmatprep.subr.mxu0 0.0
    %4643 = vmatpush1.msra.mxu0 0.0
    %4644 = vmatprep.subr.mxu0 0.0
    %4645 = vmatpush1.msra.mxu0 0.0
    %4646 = vmatprep.subr.mxu0 0.0
    %4647 = vmatpush1.msra.mxu0 0.0
    %4648 = vmatprep.subr.mxu0 0.0
    %4649 = vmatpush1.msra.mxu0 0.0
    %4650 = vmatprep.subr.mxu0 0.0
    %4651 = vmatpush1.msra.mxu0 0.0
    %4652 = vmatprep.subr.mxu0 0.0
    %4653 = vmatpush1.msra.mxu0 0.0
    %4654 = vmatprep.subr.mxu0 0.0
    %4655 = vmatpush1.msra.mxu0 0.0
    %4656 = vmatprep.subr.mxu0 0.0
    %4657 = vmatpush1.msra.mxu0 0.0
    %4658 = vmatprep.subr.mxu0 0.0
    %4659 = vmatpush1.msra.mxu0 0.0
    %4660 = vmatprep.subr.mxu0 0.0
    %4661 = vmatpush1.msra.mxu0 0.0
    %4662 = vmatprep.subr.mxu0 0.0
    %4663 = vmatpush1.msra.mxu0 0.0
    %4664 = vmatprep.subr.mxu0 0.0
    %4665 = vmatpush1.msra.mxu0 0.0
    %4666 = vmatprep.subr.mxu0 0.0
    %4667 = vmatpush1.msra.mxu0 0.0
    %4668 = vmatprep.subr.mxu0 0.0
    %4669 = vmatpush1.msra.mxu0 0.0
    %4670 = vmatprep.subr.mxu0 0.0
    %4671 = vmatpush1.msra.mxu0 0.0
    %4672 = vmatprep.subr.mxu0 0.0
    %4673 = vmatpush1.msra.mxu0 0.0
    %4674 = vmatprep.mubr.f32.mxu0 0.0
    %4675 = vmatmul.mubr.f32.gmra.mrb[0].mxu0 %v4488
    %v4676 = vpop.f32.mrb[0].mxu0
    %v4677 = vadd.f32 0.0, %v4676
    %v4678 = vpop.f32.mrb[0].mxu0
    %4679 = vmatprep.mubr.f32.mxu0 0.0
    %4680 = vmatmul.mubr.f32.gmra.mrb[0].mxu0 %v4489
    %v4681 = vpop.f32.mrb[0].mxu0
    %v4682 = vadd.f32 0.0, %v4681
    %v4683 = vpop.f32.mrb[0].mxu0
    %4684 = vmatprep.mubr.f32.mxu0 0.0
    %4685 = vmatmul.mubr.f32.gmra.mrb[0].mxu0 %v4490
    %v4686 = vpop.f32.mrb[0].mxu0
    %v4687 = vadd.f32 0.0, %v4686
    %v4688 = vpop.f32.mrb[0].mxu0
    %4689 = vmatprep.mubr.f32.mxu0 0.0
    %4690 = vmatmul.mubr.f32.gmra.mrb[0].mxu0 %v4491
    %v4691 = vpop.f32.mrb[0].mxu0
    %v4692 = vadd.f32 0.0, %v4691
    %v4693 = vpop.f32.mrb[0].mxu0
    %4694 = vmatprep.mubr.f32.mxu0 0.0
    %4695 = vmatmul.mubr.f32.gmra.mrb[0].mxu0 %v4492
    %v4696 = vpop.f32.mrb[0].mxu0
    %v4697 = vadd.f32 0.0, %v4696
    %v4698 = vpop.f32.mrb[0].mxu0
    %4699 = vmatprep.mubr.f32.mxu0 0.0
    %4700 = vmatmul.mubr.f32.gmra.mrb[0].mxu0 %v4493
    %v4701 = vpop.f32.mrb[0].mxu0
    %v4702 = vadd.f32 0.0, %v4701
    %v4703 = vpop.f32.mrb[0].mxu0
    %4704 = vmatprep.mubr.f32.mxu0 0.0
    %4705 = vmatmul.mubr.f32.gmra.mrb[0].mxu0 %v4494
    %v4706 = vpop.f32.mrb[0].mxu0
    %v4707 = vadd.f32 0.0, %v4706
    %v4708 = vpop.f32.mrb[0].mxu0
    %4709 = vmatprep.mubr.f32.mxu0 0.0
    %4710 = vmatmul.mubr.f32.gmra.mrb[0].mxu0 %v4495
    %v4711 = vpop.f32.mrb[0].mxu0
    %v4712 = vadd.f32 0.0, %v4711
    %v4713 = vpop.f32.mrb[0].mxu0
    %4714 = vmatprep.mubr.f32.mxu0 0.0
    %4715 = vmatmul.mubr.f32.gmra.mrb[0].mxu0 %v4496
    %v4716 = vpop.f32.mrb[0].mxu0
    %v4717 = vadd.f32 0.0, %v4716
    %v4718 = vpop.f32.mrb[0].mxu0
    %4719 = vmatprep.mubr.f32.mxu0 0.0
    %4720 = vmatmul.mubr.f32.gmra.mrb[0].mxu0 %v4497
    %v4721 = vpop.f32.mrb[0].mxu0
    %v4722 = vadd.f32 0.0, %v4721
    %v4723 = vpop.f32.mrb[0].mxu0
    %4724 = vmatprep.mubr.f32.mxu0 0.0
    %4725 = vmatmul.mubr.f32.gmra.mrb[0].mxu0 %v4498
    %v4726 = vpop.f32.mrb[0].mxu0
    %v4727 = vadd.f32 0.0, %v4726
    %v4728 = vpop.f32.mrb[0].mxu0
    %4729 = vmatprep.mubr.f32.mxu0 0.0
    %4730 = vmatmul.mubr.f32.gmra.mrb[0].mxu0 %v4499
    %v4731 = vpop.f32.mrb[0].mxu0
    %v4732 = vadd.f32 0.0, %v4731
    %v4733 = vpop.f32.mrb[0].mxu0
    %4734 = vmatprep.mubr.f32.mxu0 0.0
    %4735 = vmatmul.mubr.f32.gmra.mrb[0].mxu0 %v4500
    %v4736 = vpop.f32.mrb[0].mxu0
    %v4737 = vadd.f32 0.0, %v4736
    %v4738 = vpop.f32.mrb[0].mxu0
    %4739 = vmatprep.mubr.f32.mxu0 0.0
    %4740 = vmatmul.mubr.f32.gmra.mrb[0].mxu0 %v4501
    %v4741 = vpop.f32.mrb[0].mxu0
    %v4742 = vadd.f32 0.0, %v4741
    %v4743 = vpop.f32.mrb[0].mxu0
    %4744 = vmatprep.mubr.f32.mxu0 0.0
    %4745 = vmatmul.mubr.f32.gmra.mrb[0].mxu0 %v4502
    %v4746 = vpop.f32.mrb[0].mxu0
    %v4747 = vadd.f32 0.0, %v4746
    %v4748 = vpop.f32.mrb[0].mxu0
    %4749 = vmatprep.mubr.f32.mxu0 0.0
    %4750 = vmatmul.mubr.f32.gmra.mrb[0].mxu0 %v4503
    %v4751 = vpop.f32.mrb[0].mxu0
    %v4752 = vadd.f32 0.0, %v4751
    %v4753 = vpop.f32.mrb[0].mxu0
    %4754 = vmatprep.mubr.f32.mxu0 0.0
    %4755 = vmatmul.mubr.f32.gmra.mrb[0].mxu0 %v4504
    %v4756 = vpop.f32.mrb[0].mxu0
    %v4757 = vadd.f32 0.0, %v4756
    %v4758 = vpop.f32.mrb[0].mxu0
    %4759 = vmatprep.mubr.f32.mxu0 0.0
    %4760 = vmatmul.mubr.f32.gmra.mrb[0].mxu0 %v4505
    %v4761 = vpop.f32.mrb[0].mxu0
    %v4762 = vadd.f32 0.0, %v4761
    %v4763 = vpop.f32.mrb[0].mxu0
    %4764 = vmatprep.mubr.f32.mxu0 0.0
    %4765 = vmatmul.mubr.f32.gmra.mrb[0].mxu0 %v4506
    %v4766 = vpop.f32.mrb[0].mxu0
    %v4767 = vadd.f32 0.0, %v4766
    %v4768 = vpop.f32.mrb[0].mxu0
    %4769 = vmatprep.mubr.f32.mxu0 0.0
    %4770 = vmatmul.mubr.f32.gmra.mrb[0].mxu0 %v4507
    %v4771 = vpop.f32.mrb[0].mxu0
    %v4772 = vadd.f32 0.0, %v4771
    %v4773 = vpop.f32.mrb[0].mxu0
    %4774 = vmatprep.mubr.f32.mxu0 0.0
    %4775 = vmatmul.mubr.f32.gmra.mrb[0].mxu0 %v4508
    %v4776 = vpop.f32.mrb[0].mxu0
    %v4777 = vadd.f32 0.0, %v4776
    %v4778 = vpop.f32.mrb[0].mxu0
    %4779 = vmatprep.mubr.f32.mxu0 0.0
    %4780 = vmatmul.mubr.f32.gmra.mrb[0].mxu0 %v4509
    %v4781 = vpop.f32.mrb[0].mxu0
    %v4782 = vadd.f32 0.0, %v4781
    %v4783 = vpop.f32.mrb[0].mxu0
    %4784 = vmatprep.mubr.f32.mxu0 0.0
    %4785 = vmatmul.mubr.f32.gmra.mrb[0].mxu0 %v4510
    %v4786 = vpop.f32.mrb[0].mxu0
    %v4787 = vadd.f32 0.0, %v4786
    %v4788 = vpop.f32.mrb[0].mxu0
    %4789 = vmatprep.mubr.f32.mxu0 0.0
    %4790 = vmatmul.mubr.f32.gmra.mrb[0].mxu0 %v4511
    %v4791 = vpop.f32.mrb[0].mxu0
    %v4792 = vadd.f32 0.0, %v4791
    %v4793 = vpop.f32.mrb[0].mxu0
    %4794 = vmatprep.mubr.f32.mxu0 0.0
    %4795 = vmatmul.mubr.f32.gmra.mrb[0].mxu0 %v4512
    %v4796 = vpop.f32.mrb[0].mxu0
    %v4797 = vadd.f32 0.0, %v4796
    %v4798 = vpop.f32.mrb[0].mxu0
    %4799 = vmatprep.mubr.f32.mxu0 0.0
    %4800 = vmatmul.mubr.f32.gmra.mrb[0].mxu0 %v4513
    %v4801 = vpop.f32.mrb[0].mxu0
    %v4802 = vadd.f32 0.0, %v4801
    %v4803 = vpop.f32.mrb[0].mxu0
    %4804 = vmatprep.mubr.f32.mxu0 0.0
    %4805 = vmatmul.mubr.f32.gmra.mrb[0].mxu0 %v4514
    %v4806 = vpop.f32.mrb[0].mxu0
    %v4807 = vadd.f32 0.0, %v4806
    %v4808 = vpop.f32.mrb[0].mxu0
    %4809 = vmatprep.mubr.f32.mxu0 0.0
    %4810 = vmatmul.mubr.f32.gmra.mrb[0].mxu0 %v4515
    %v4811 = vpop.f32.mrb[0].mxu0
    %v4812 = vadd.f32 0.0, %v4811
    %v4813 = vpop.f32.mrb[0].mxu0
    %4814 = vmatprep.mubr.f32.mxu0 0.0
    %4815 = vmatmul.mubr.f32.gmra.mrb[0].mxu0 %v4516
    %v4816 = vpop.f32.mrb[0].mxu0
    %v4817 = vadd.f32 0.0, %v4816
    %v4818 = vpop.f32.mrb[0].mxu0
    %4819 = vmatprep.mubr.f32.mxu0 0.0
    %4820 = vmatmul.mubr.f32.gmra.mrb[0].mxu0 %v4517
    %v4821 = vpop.f32.mrb[0].mxu0
    %v4822 = vadd.f32 0.0, %v4821
    %v4823 = vpop.f32.mrb[0].mxu0
    %4824 = vmatprep.mubr.f32.mxu0 0.0
    %4825 = vmatmul.mubr.f32.gmra.mrb[0].mxu0 %v4518
    %v4826 = vpop.f32.mrb[0].mxu0
    %v4827 = vadd.f32 0.0, %v4826
    %v4828 = vpop.f32.mrb[0].mxu0
    %4829 = vmatprep.mubr.f32.mxu0 0.0
    %4830 = vmatmul.mubr.f32.gmra.mrb[0].mxu0 %v4487
    %v4831 = vpop.f32.mrb[0].mxu0
    %v4832 = vadd.f32 0.0, %v4831
    %v4833 = vpop.f32.mrb[0].mxu0
    %4834 = vdwg.mxu0
    %4835 = vmatprep.subr.mxu0 0.0
    %4836 = vmatpush1.msra.mxu0 %v4520
    %4837 = vmatprep.subr.mxu0 0.0
    %4838 = vmatpush1.msra.mxu0 %v4521
    %4839 = vmatprep.subr.mxu0 0.0
    %4840 = vmatpush1.msra.mxu0 %v4522
    %4841 = vmatprep.subr.mxu0 0.0
    %4842 = vmatpush1.msra.mxu0 %v4523
    %4843 = vmatprep.subr.mxu0 0.0
    %4844 = vmatpush1.msra.mxu0 %v4524
    %4845 = vmatprep.subr.mxu0 0.0
    %4846 = vmatpush1.msra.mxu0 %v4525
    %4847 = vmatprep.subr.mxu0 0.0
    %4848 = vmatpush1.msra.mxu0 %v4526
    %4849 = vmatprep.subr.mxu0 0.0
    %4850 = vmatpush1.msra.mxu0 %v4527
    %4851 = vmatprep.subr.mxu0 0.0
    %4852 = vmatpush1.msra.mxu0 %v4528
    %4853 = vmatprep.subr.mxu0 0.0
    %4854 = vmatpush1.msra.mxu0 %v4529
    %4855 = vmatprep.subr.mxu0 0.0
    %4856 = vmatpush1.msra.mxu0 %v4530
    %4857 = vmatprep.subr.mxu0 0.0
    %4858 = vmatpush1.msra.mxu0 %v4531
    %4859 = vmatprep.subr.mxu0 0.0
    %4860 = vmatpush1.msra.mxu0 %v4532
    %4861 = vmatprep.subr.mxu0 0.0
    %4862 = vmatpush1.msra.mxu0 %v4533
    %4863 = vmatprep.subr.mxu0 0.0
    %4864 = vmatpush1.msra.mxu0 %v4534
    %4865 = vmatprep.subr.mxu0 0.0
    %4866 = vmatpush1.msra.mxu0 %v4535
    %4867 = vmatprep.subr.mxu0 0.0
    %4868 = vmatpush1.msra.mxu0 0.0
    %4869 = vmatprep.subr.mxu0 0.0
    %4870 = vmatpush1.msra.mxu0 0.0
    %4871 = vmatprep.subr.mxu0 0.0
    %4872 = vmatpush1.msra.mxu0 0.0
    %4873 = vmatprep.subr.mxu0 0.0
    %4874 = vmatpush1.msra.mxu0 0.0
    %4875 = vmatprep.subr.mxu0 0.0
    %4876 = vmatpush1.msra.mxu0 0.0
    %4877 = vmatprep.subr.mxu0 0.0
    %4878 = vmatpush1.msra.mxu0 0.0
    %4879 = vmatprep.subr.mxu0 0.0
    %4880 = vmatpush1.msra.mxu0 0.0
    %4881 = vmatprep.subr.mxu0 0.0
    %4882 = vmatpush1.msra.mxu0 0.0
    %4883 = vmatprep.subr.mxu0 0.0
    %4884 = vmatpush1.msra.mxu0 0.0
    %4885 = vmatprep.subr.mxu0 0.0
    %4886 = vmatpush1.msra.mxu0 0.0
    %4887 = vmatprep.subr.mxu0 0.0
    %4888 = vmatpush1.msra.mxu0 0.0
    %4889 = vmatprep.subr.mxu0 0.0
    %4890 = vmatpush1.msra.mxu0 0.0
    %4891 = vmatprep.subr.mxu0 0.0
    %4892 = vmatpush1.msra.mxu0 0.0
    %4893 = vmatprep.subr.mxu0 0.0
    %4894 = vmatpush1.msra.mxu0 0.0
    %4895 = vmatprep.subr.mxu0 0.0
    %4896 = vmatpush1.msra.mxu0 0.0
    %4897 = vmatprep.subr.mxu0 0.0
    %4898 = vmatpush1.msra.mxu0 0.0
    %4899 = vmatprep.mubr.f32.mxu0 0.0
    %4900 = vmatmul.mubr.f32.gmra.mrb[0].mxu0 %v4487
    %v4901 = vpop.f32.mrb[0].mxu0
    %v4902 = vadd.f32 %v4677, %v4901
    %v4903 = vpop.f32.mrb[0].mxu0
    %4904 = vmatprep.mubr.f32.mxu0 0.0
    %4905 = vmatmul.mubr.f32.gmra.mrb[0].mxu0 %v4488
    %v4906 = vpop.f32.mrb[0].mxu0
    %v4907 = vadd.f32 %v4682, %v4906
    %v4908 = vpop.f32.mrb[0].mxu0
    %4909 = vmatprep.mubr.f32.mxu0 0.0
    %4910 = vmatmul.mubr.f32.gmra.mrb[0].mxu0 %v4489
    %v4911 = vpop.f32.mrb[0].mxu0
    %v4912 = vadd.f32 %v4687, %v4911
    %v4913 = vpop.f32.mrb[0].mxu0
    %4914 = vmatprep.mubr.f32.mxu0 0.0
    %4915 = vmatmul.mubr.f32.gmra.mrb[0].mxu0 %v4490
    %v4916 = vpop.f32.mrb[0].mxu0
    %v4917 = vadd.f32 %v4692, %v4916
    %v4918 = vpop.f32.mrb[0].mxu0
    %4919 = vmatprep.mubr.f32.mxu0 0.0
    %4920 = vmatmul.mubr.f32.gmra.mrb[0].mxu0 %v4491
    %v4921 = vpop.f32.mrb[0].mxu0
    %v4922 = vadd.f32 %v4697, %v4921
    %v4923 = vpop.f32.mrb[0].mxu0
    %4924 = vmatprep.mubr.f32.mxu0 0.0
    %4925 = vmatmul.mubr.f32.gmra.mrb[0].mxu0 %v4492
    %v4926 = vpop.f32.mrb[0].mxu0
    %v4927 = vadd.f32 %v4702, %v4926
    %v4928 = vpop.f32.mrb[0].mxu0
    %4929 = vmatprep.mubr.f32.mxu0 0.0
    %4930 = vmatmul.mubr.f32.gmra.mrb[0].mxu0 %v4493
    %v4931 = vpop.f32.mrb[0].mxu0
    %v4932 = vadd.f32 %v4707, %v4931
    %v4933 = vpop.f32.mrb[0].mxu0
    %4934 = vmatprep.mubr.f32.mxu0 0.0
    %4935 = vmatmul.mubr.f32.gmra.mrb[0].mxu0 %v4494
    %v4936 = vpop.f32.mrb[0].mxu0
    %v4937 = vadd.f32 %v4712, %v4936
    %v4938 = vpop.f32.mrb[0].mxu0
    %4939 = vmatprep.mubr.f32.mxu0 0.0
    %4940 = vmatmul.mubr.f32.gmra.mrb[0].mxu0 %v4495
    %v4941 = vpop.f32.mrb[0].mxu0
    %v4942 = vadd.f32 %v4717, %v4941
    %v4943 = vpop.f32.mrb[0].mxu0
    %4944 = vmatprep.mubr.f32.mxu0 0.0
    %4945 = vmatmul.mubr.f32.gmra.mrb[0].mxu0 %v4496
    %v4946 = vpop.f32.mrb[0].mxu0
    %v4947 = vadd.f32 %v4722, %v4946
    %v4948 = vpop.f32.mrb[0].mxu0
    %4949 = vmatprep.mubr.f32.mxu0 0.0
    %4950 = vmatmul.mubr.f32.gmra.mrb[0].mxu0 %v4497
    %v4951 = vpop.f32.mrb[0].mxu0
    %v4952 = vadd.f32 %v4727, %v4951
    %v4953 = vpop.f32.mrb[0].mxu0
    %4954 = vmatprep.mubr.f32.mxu0 0.0
    %4955 = vmatmul.mubr.f32.gmra.mrb[0].mxu0 %v4498
    %v4956 = vpop.f32.mrb[0].mxu0
    %v4957 = vadd.f32 %v4732, %v4956
    %v4958 = vpop.f32.mrb[0].mxu0
    %4959 = vmatprep.mubr.f32.mxu0 0.0
    %4960 = vmatmul.mubr.f32.gmra.mrb[0].mxu0 %v4499
    %v4961 = vpop.f32.mrb[0].mxu0
    %v4962 = vadd.f32 %v4737, %v4961
    %v4963 = vpop.f32.mrb[0].mxu0
    %4964 = vmatprep.mubr.f32.mxu0 0.0
    %4965 = vmatmul.mubr.f32.gmra.mrb[0].mxu0 %v4500
    %v4966 = vpop.f32.mrb[0].mxu0
    %v4967 = vadd.f32 %v4742, %v4966
    %v4968 = vpop.f32.mrb[0].mxu0
    %4969 = vmatprep.mubr.f32.mxu0 0.0
    %4970 = vmatmul.mubr.f32.gmra.mrb[0].mxu0 %v4501
    %v4971 = vpop.f32.mrb[0].mxu0
    %v4972 = vadd.f32 %v4747, %v4971
    %v4973 = vpop.f32.mrb[0].mxu0
    %4974 = vmatprep.mubr.f32.mxu0 0.0
    %4975 = vmatmul.mubr.f32.gmra.mrb[0].mxu0 %v4502
    %v4976 = vpop.f32.mrb[0].mxu0
    %v4977 = vadd.f32 %v4752, %v4976
    %v4978 = vpop.f32.mrb[0].mxu0
    %4979 = vmatprep.mubr.f32.mxu0 0.0
    %4980 = vmatmul.mubr.f32.gmra.mrb[0].mxu0 %v4503
    %v4981 = vpop.f32.mrb[0].mxu0
    %v4982 = vadd.f32 %v4757, %v4981
    %v4983 = vpop.f32.mrb[0].mxu0
    %4984 = vmatprep.mubr.f32.mxu0 0.0
    %4985 = vmatmul.mubr.f32.gmra.mrb[0].mxu0 %v4504
    %v4986 = vpop.f32.mrb[0].mxu0
    %v4987 = vadd.f32 %v4762, %v4986
    %v4988 = vpop.f32.mrb[0].mxu0
    %4989 = vmatprep.mubr.f32.mxu0 0.0
    %4990 = vmatmul.mubr.f32.gmra.mrb[0].mxu0 %v4505
    %v4991 = vpop.f32.mrb[0].mxu0
    %v4992 = vadd.f32 %v4767, %v4991
    %v4993 = vpop.f32.mrb[0].mxu0
    %4994 = vmatprep.mubr.f32.mxu0 0.0
    %4995 = vmatmul.mubr.f32.gmra.mrb[0].mxu0 %v4506
    %v4996 = vpop.f32.mrb[0].mxu0
    %v4997 = vadd.f32 %v4772, %v4996
    %v4998 = vpop.f32.mrb[0].mxu0
    %4999 = vmatprep.mubr.f32.mxu0 0.0
    %5000 = vmatmul.mubr.f32.gmra.mrb[0].mxu0 %v4507
    %v5001 = vpop.f32.mrb[0].mxu0
    %v5002 = vadd.f32 %v4777, %v5001
    %v5003 = vpop.f32.mrb[0].mxu0
    %5004 = vmatprep.mubr.f32.mxu0 0.0
    %5005 = vmatmul.mubr.f32.gmra.mrb[0].mxu0 %v4508
    %v5006 = vpop.f32.mrb[0].mxu0
    %v5007 = vadd.f32 %v4782, %v5006
    %v5008 = vpop.f32.mrb[0].mxu0
    %5009 = vmatprep.mubr.f32.mxu0 0.0
    %5010 = vmatmul.mubr.f32.gmra.mrb[0].mxu0 %v4509
    %v5011 = vpop.f32.mrb[0].mxu0
    %v5012 = vadd.f32 %v4787, %v5011
    %v5013 = vpop.f32.mrb[0].mxu0
    %5014 = vmatprep.mubr.f32.mxu0 0.0
    %5015 = vmatmul.mubr.f32.gmra.mrb[0].mxu0 %v4510
    %v5016 = vpop.f32.mrb[0].mxu0
    %v5017 = vadd.f32 %v4792, %v5016
    %v5018 = vpop.f32.mrb[0].mxu0
    %5019 = vmatprep.mubr.f32.mxu0 0.0
    %5020 = vmatmul.mubr.f32.gmra.mrb[0].mxu0 %v4511
    %v5021 = vpop.f32.mrb[0].mxu0
    %v5022 = vadd.f32 %v4797, %v5021
    %v5023 = vpop.f32.mrb[0].mxu0
    %5024 = vmatprep.mubr.f32.mxu0 0.0
    %5025 = vmatmul.mubr.f32.gmra.mrb[0].mxu0 %v4512
    %v5026 = vpop.f32.mrb[0].mxu0
    %v5027 = vadd.f32 %v4802, %v5026
    %v5028 = vpop.f32.mrb[0].mxu0
    %5029 = vmatprep.mubr.f32.mxu0 0.0
    %5030 = vmatmul.mubr.f32.gmra.mrb[0].mxu0 %v4513
    %v5031 = vpop.f32.mrb[0].mxu0
    %v5032 = vadd.f32 %v4807, %v5031
    %v5033 = vpop.f32.mrb[0].mxu0
    %5034 = vmatprep.mubr.f32.mxu0 0.0
    %5035 = vmatmul.mubr.f32.gmra.mrb[0].mxu0 %v4514
    %v5036 = vpop.f32.mrb[0].mxu0
    %v5037 = vadd.f32 %v4812, %v5036
    %v5038 = vpop.f32.mrb[0].mxu0
    %5039 = vmatprep.mubr.f32.mxu0 0.0
    %5040 = vmatmul.mubr.f32.gmra.mrb[0].mxu0 %v4515
    %v5041 = vpop.f32.mrb[0].mxu0
    %v5042 = vadd.f32 %v4817, %v5041
    %v5043 = vpop.f32.mrb[0].mxu0
    %5044 = vmatprep.mubr.f32.mxu0 0.0
    %5045 = vmatmul.mubr.f32.gmra.mrb[0].mxu0 %v4516
    %v5046 = vpop.f32.mrb[0].mxu0
    %v5047 = vadd.f32 %v4822, %v5046
    %v5048 = vpop.f32.mrb[0].mxu0
    %5049 = vmatprep.mubr.f32.mxu0 0.0
    %5050 = vmatmul.mubr.f32.gmra.mrb[0].mxu0 %v4517
    %v5051 = vpop.f32.mrb[0].mxu0
    %v5052 = vadd.f32 %v4827, %v5051
    %v5053 = vpop.f32.mrb[0].mxu0
    %5054 = vmatprep.mubr.f32.mxu0 0.0
    %5055 = vmatmul.mubr.f32.gmra.mrb[0].mxu0 %v4518
    %v5056 = vpop.f32.mrb[0].mxu0
    %v5057 = vadd.f32 %v4832, %v5056
    %v5058 = vpop.f32.mrb[0].mxu0
    %5059 = vdwg.mxu0
    %5060 = vmatprep.subr.mxu0 0.0
    %5061 = vmatpush1.msra.mxu0 %v4554
    %5062 = vmatprep.subr.mxu0 0.0
    %5063 = vmatpush1.msra.mxu0 %v4555
    %5064 = vmatprep.subr.mxu0 0.0
    %5065 = vmatpush1.msra.mxu0 %v4556
    %5066 = vmatprep.subr.mxu0 0.0
    %5067 = vmatpush1.msra.mxu0 %v4557
    %5068 = vmatprep.subr.mxu0 0.0
    %5069 = vmatpush1.msra.mxu0 %v4558
    %5070 = vmatprep.subr.mxu0 0.0
    %5071 = vmatpush1.msra.mxu0 %v4559
    %5072 = vmatprep.subr.mxu0 0.0
    %5073 = vmatpush1.msra.mxu0 %v4560
    %5074 = vmatprep.subr.mxu0 0.0
    %5075 = vmatpush1.msra.mxu0 %v4561
    %5076 = vmatprep.subr.mxu0 0.0
    %5077 = vmatpush1.msra.mxu0 %v4562
    %5078 = vmatprep.subr.mxu0 0.0
    %5079 = vmatpush1.msra.mxu0 %v4563
    %5080 = vmatprep.subr.mxu0 0.0
    %5081 = vmatpush1.msra.mxu0 %v4564
    %5082 = vmatprep.subr.mxu0 0.0
    %5083 = vmatpush1.msra.mxu0 %v4565
    %5084 = vmatprep.subr.mxu0 0.0
    %5085 = vmatpush1.msra.mxu0 %v4566
    %5086 = vmatprep.subr.mxu0 0.0
    %5087 = vmatpush1.msra.mxu0 %v4567
    %5088 = vmatprep.subr.mxu0 0.0
    %5089 = vmatpush1.msra.mxu0 %v4568
    %5090 = vmatprep.subr.mxu0 0.0
    %5091 = vmatpush1.msra.mxu0 %v4569
    %5092 = vmatprep.subr.mxu0 0.0
    %5093 = vmatpush1.msra.mxu0 0.0
    %5094 = vmatprep.subr.mxu0 0.0
    %5095 = vmatpush1.msra.mxu0 0.0
    %5096 = vmatprep.subr.mxu0 0.0
    %5097 = vmatpush1.msra.mxu0 0.0
    %5098 = vmatprep.subr.mxu0 0.0
    %5099 = vmatpush1.msra.mxu0 0.0
    %5100 = vmatprep.subr.mxu0 0.0
    %5101 = vmatpush1.msra.mxu0 0.0
    %5102 = vmatprep.subr.mxu0 0.0
    %5103 = vmatpush1.msra.mxu0 0.0
    %5104 = vmatprep.subr.mxu0 0.0
    %5105 = vmatpush1.msra.mxu0 0.0
    %5106 = vmatprep.subr.mxu0 0.0
    %5107 = vmatpush1.msra.mxu0 0.0
    %5108 = vmatprep.subr.mxu0 0.0
    %5109 = vmatpush1.msra.mxu0 0.0
    %5110 = vmatprep.subr.mxu0 0.0
    %5111 = vmatpush1.msra.mxu0 0.0
    %5112 = vmatprep.subr.mxu0 0.0
    %5113 = vmatpush1.msra.mxu0 0.0
    %5114 = vmatprep.subr.mxu0 0.0
    %5115 = vmatpush1.msra.mxu0 0.0
    %5116 = vmatprep.subr.mxu0 0.0
    %5117 = vmatpush1.msra.mxu0 0.0
    %5118 = vmatprep.subr.mxu0 0.0
    %5119 = vmatpush1.msra.mxu0 0.0
    %5120 = vmatprep.subr.mxu0 0.0
    %5121 = vmatpush1.msra.mxu0 0.0
    %5122 = vmatprep.subr.mxu0 0.0
    %5123 = vmatpush1.msra.mxu0 0.0
    %5124 = vmatprep.mubr.f32.mxu0 0.0
    %5125 = vmatmul.mubr.f32.gmra.mrb[0].mxu0 %v4489
    %v5126 = vpop.f32.mrb[0].mxu0
    %v5127 = vadd.f32 0.0, %v5126
    %v5128 = vpop.f32.mrb[0].mxu0
    %5129 = vmatprep.mubr.f32.mxu0 0.0
    %5130 = vmatmul.mubr.f32.gmra.mrb[0].mxu0 %v4490
    %v5131 = vpop.f32.mrb[0].mxu0
    %v5132 = vadd.f32 0.0, %v5131
    %v5133 = vpop.f32.mrb[0].mxu0
    %5134 = vmatprep.mubr.f32.mxu0 0.0
    %5135 = vmatmul.mubr.f32.gmra.mrb[0].mxu0 %v4491
    %v5136 = vpop.f32.mrb[0].mxu0
    %v5137 = vadd.f32 0.0, %v5136
    %v5138 = vpop.f32.mrb[0].mxu0
    %5139 = vmatprep.mubr.f32.mxu0 0.0
    %5140 = vmatmul.mubr.f32.gmra.mrb[0].mxu0 %v4492
    %v5141 = vpop.f32.mrb[0].mxu0
    %v5142 = vadd.f32 0.0, %v5141
    %v5143 = vpop.f32.mrb[0].mxu0
    %5144 = vmatprep.mubr.f32.mxu0 0.0
    %5145 = vmatmul.mubr.f32.gmra.mrb[0].mxu0 %v4493
    %v5146 = vpop.f32.mrb[0].mxu0
    %v5147 = vadd.f32 0.0, %v5146
    %v5148 = vpop.f32.mrb[0].mxu0
    %5149 = vmatprep.mubr.f32.mxu0 0.0
    %5150 = vmatmul.mubr.f32.gmra.mrb[0].mxu0 %v4494
    %v5151 = vpop.f32.mrb[0].mxu0
    %v5152 = vadd.f32 0.0, %v5151
    %v5153 = vpop.f32.mrb[0].mxu0
    %5154 = vmatprep.mubr.f32.mxu0 0.0
    %5155 = vmatmul.mubr.f32.gmra.mrb[0].mxu0 %v4495
    %v5156 = vpop.f32.mrb[0].mxu0
    %v5157 = vadd.f32 0.0, %v5156
    %v5158 = vpop.f32.mrb[0].mxu0
    %5159 = vmatprep.mubr.f32.mxu0 0.0
    %5160 = vmatmul.mubr.f32.gmra.mrb[0].mxu0 %v4496
    %v5161 = vpop.f32.mrb[0].mxu0
    %v5162 = vadd.f32 0.0, %v5161
    %v5163 = vpop.f32.mrb[0].mxu0
    %5164 = vmatprep.mubr.f32.mxu0 0.0
    %5165 = vmatmul.mubr.f32.gmra.mrb[0].mxu0 %v4497
    %v5166 = vpop.f32.mrb[0].mxu0
    %v5167 = vadd.f32 0.0, %v5166
    %v5168 = vpop.f32.mrb[0].mxu0
    %5169 = vmatprep.mubr.f32.mxu0 0.0
    %5170 = vmatmul.mubr.f32.gmra.mrb[0].mxu0 %v4498
    %v5171 = vpop.f32.mrb[0].mxu0
    %v5172 = vadd.f32 0.0, %v5171
    %v5173 = vpop.f32.mrb[0].mxu0
    %5174 = vmatprep.mubr.f32.mxu0 0.0
    %5175 = vmatmul.mubr.f32.gmra.mrb[0].mxu0 %v4499
    %v5176 = vpop.f32.mrb[0].mxu0
    %v5177 = vadd.f32 0.0, %v5176
    %v5178 = vpop.f32.mrb[0].mxu0
    %5179 = vmatprep.mubr.f32.mxu0 0.0
    %5180 = vmatmul.mubr.f32.gmra.mrb[0].mxu0 %v4500
    %v5181 = vpop.f32.mrb[0].mxu0
    %v5182 = vadd.f32 0.0, %v5181
    %v5183 = vpop.f32.mrb[0].mxu0
    %5184 = vmatprep.mubr.f32.mxu0 0.0
    %5185 = vmatmul.mubr.f32.gmra.mrb[0].mxu0 %v4501
    %v5186 = vpop.f32.mrb[0].mxu0
    %v5187 = vadd.f32 0.0, %v5186
    %v5188 = vpop.f32.mrb[0].mxu0
    %5189 = vmatprep.mubr.f32.mxu0 0.0
    %5190 = vmatmul.mubr.f32.gmra.mrb[0].mxu0 %v4502
    %v5191 = vpop.f32.mrb[0].mxu0
    %v5192 = vadd.f32 0.0, %v5191
    %v5193 = vpop.f32.mrb[0].mxu0
    %5194 = vmatprep.mubr.f32.mxu0 0.0
    %5195 = vmatmul.mubr.f32.gmra.mrb[0].mxu0 %v4503
    %v5196 = vpop.f32.mrb[0].mxu0
    %v5197 = vadd.f32 0.0, %v5196
    %v5198 = vpop.f32.mrb[0].mxu0
    %5199 = vmatprep.mubr.f32.mxu0 0.0
    %5200 = vmatmul.mubr.f32.gmra.mrb[0].mxu0 %v4504
    %v5201 = vpop.f32.mrb[0].mxu0
    %v5202 = vadd.f32 0.0, %v5201
    %v5203 = vpop.f32.mrb[0].mxu0
    %5204 = vmatprep.mubr.f32.mxu0 0.0
    %5205 = vmatmul.mubr.f32.gmra.mrb[0].mxu0 %v4505
    %v5206 = vpop.f32.mrb[0].mxu0
    %v5207 = vadd.f32 0.0, %v5206
    %v5208 = vpop.f32.mrb[0].mxu0
    %5209 = vmatprep.mubr.f32.mxu0 0.0
    %5210 = vmatmul.mubr.f32.gmra.mrb[0].mxu0 %v4506
    %v5211 = vpop.f32.mrb[0].mxu0
    %v5212 = vadd.f32 0.0, %v5211
    %v5213 = vpop.f32.mrb[0].mxu0
    %5214 = vmatprep.mubr.f32.mxu0 0.0
    %5215 = vmatmul.mubr.f32.gmra.mrb[0].mxu0 %v4507
    %v5216 = vpop.f32.mrb[0].mxu0
    %v5217 = vadd.f32 0.0, %v5216
    %v5218 = vpop.f32.mrb[0].mxu0
    %5219 = vmatprep.mubr.f32.mxu0 0.0
    %5220 = vmatmul.mubr.f32.gmra.mrb[0].mxu0 %v4508
    %v5221 = vpop.f32.mrb[0].mxu0
    %v5222 = vadd.f32 0.0, %v5221
    %v5223 = vpop.f32.mrb[0].mxu0
    %5224 = vmatprep.mubr.f32.mxu0 0.0
    %5225 = vmatmul.mubr.f32.gmra.mrb[0].mxu0 %v4509
    %v5226 = vpop.f32.mrb[0].mxu0
    %v5227 = vadd.f32 0.0, %v5226
    %v5228 = vpop.f32.mrb[0].mxu0
    %5229 = vmatprep.mubr.f32.mxu0 0.0
    %5230 = vmatmul.mubr.f32.gmra.mrb[0].mxu0 %v4510
    %v5231 = vpop.f32.mrb[0].mxu0
    %v5232 = vadd.f32 0.0, %v5231
    %v5233 = vpop.f32.mrb[0].mxu0
    %5234 = vmatprep.mubr.f32.mxu0 0.0
    %5235 = vmatmul.mubr.f32.gmra.mrb[0].mxu0 %v4511
    %v5236 = vpop.f32.mrb[0].mxu0
    %v5237 = vadd.f32 0.0, %v5236
    %v5238 = vpop.f32.mrb[0].mxu0
    %5239 = vmatprep.mubr.f32.mxu0 0.0
    %5240 = vmatmul.mubr.f32.gmra.mrb[0].mxu0 %v4512
    %v5241 = vpop.f32.mrb[0].mxu0
    %v5242 = vadd.f32 0.0, %v5241
    %v5243 = vpop.f32.mrb[0].mxu0
    %5244 = vmatprep.mubr.f32.mxu0 0.0
    %5245 = vmatmul.mubr.f32.gmra.mrb[0].mxu0 %v4513
    %v5246 = vpop.f32.mrb[0].mxu0
    %v5247 = vadd.f32 0.0, %v5246
    %v5248 = vpop.f32.mrb[0].mxu0
    %5249 = vmatprep.mubr.f32.mxu0 0.0
    %5250 = vmatmul.mubr.f32.gmra.mrb[0].mxu0 %v4514
    %v5251 = vpop.f32.mrb[0].mxu0
    %v5252 = vadd.f32 0.0, %v5251
    %v5253 = vpop.f32.mrb[0].mxu0
    %5254 = vmatprep.mubr.f32.mxu0 0.0
    %5255 = vmatmul.mubr.f32.gmra.mrb[0].mxu0 %v4515
    %v5256 = vpop.f32.mrb[0].mxu0
    %v5257 = vadd.f32 0.0, %v5256
    %v5258 = vpop.f32.mrb[0].mxu0
    %5259 = vmatprep.mubr.f32.mxu0 0.0
    %5260 = vmatmul.mubr.f32.gmra.mrb[0].mxu0 %v4516
    %v5261 = vpop.f32.mrb[0].mxu0
    %v5262 = vadd.f32 0.0, %v5261
    %v5263 = vpop.f32.mrb[0].mxu0
    %5264 = vmatprep.mubr.f32.mxu0 0.0
    %5265 = vmatmul.mubr.f32.gmra.mrb[0].mxu0 %v4517
    %v5266 = vpop.f32.mrb[0].mxu0
    %v5267 = vadd.f32 0.0, %v5266
    %v5268 = vpop.f32.mrb[0].mxu0
    %5269 = vmatprep.mubr.f32.mxu0 0.0
    %5270 = vmatmul.mubr.f32.gmra.mrb[0].mxu0 %v4518
    %v5271 = vpop.f32.mrb[0].mxu0
    %v5272 = vadd.f32 0.0, %v5271
    %v5273 = vpop.f32.mrb[0].mxu0
    %5274 = vmatprep.mubr.f32.mxu0 0.0
    %5275 = vmatmul.mubr.f32.gmra.mrb[0].mxu0 %v4487
    %v5276 = vpop.f32.mrb[0].mxu0
    %v5277 = vadd.f32 0.0, %v5276
    %v5278 = vpop.f32.mrb[0].mxu0
    %5279 = vmatprep.mubr.f32.mxu0 0.0
    %5280 = vmatmul.mubr.f32.gmra.mrb[0].mxu0 %v4488
    %v5281 = vpop.f32.mrb[0].mxu0
    %v5282 = vadd.f32 0.0, %v5281
    %v5283 = vpop.f32.mrb[0].mxu0
    %5284 = vdwg.mxu0
    %v5285 = vadd.f32 %v4902, %v5127
    %v5286 = vadd.f32 %v4907, %v5132
    %v5287 = vadd.f32 %v4912, %v5137
    %v5288 = vadd.f32 %v4917, %v5142
    %v5289 = vadd.f32 %v4922, %v5147
    %v5290 = vadd.f32 %v4927, %v5152
    %v5291 = vadd.f32 %v4932, %v5157
    %v5292 = vadd.f32 %v4937, %v5162
    %v5293 = vadd.f32 %v4942, %v5167
    %v5294 = vadd.f32 %v4947, %v5172
    %v5295 = vadd.f32 %v4952, %v5177
    %v5296 = vadd.f32 %v4957, %v5182
    %v5297 = vadd.f32 %v4962, %v5187
    %v5298 = vadd.f32 %v4967, %v5192
    %v5299 = vadd.f32 %v4972, %v5197
    %v5300 = vadd.f32 %v4977, %v5202
    %v5301 = vadd.f32 %v4982, %v5207
    %v5302 = vadd.f32 %v4987, %v5212
    %v5303 = vadd.f32 %v4992, %v5217
    %v5304 = vadd.f32 %v4997, %v5222
    %v5305 = vadd.f32 %v5002, %v5227
    %v5306 = vadd.f32 %v5007, %v5232
    %v5307 = vadd.f32 %v5012, %v5237
    %v5308 = vadd.f32 %v5017, %v5242
    %v5309 = vadd.f32 %v5022, %v5247
    %v5310 = vadd.f32 %v5027, %v5252
    %v5311 = vadd.f32 %v5032, %v5257
    %v5312 = vadd.f32 %v5037, %v5262
    %v5313 = vadd.f32 %v5042, %v5267
    %v5314 = vadd.f32 %v5047, %v5272
    %v5315 = vadd.f32 %v5052, %v5277
    %v5316 = vadd.f32 %v5057, %v5282
    %5317 = vmatprep.subr.mxu0 0.0
    %5318 = vmatpush1.msra.mxu0 %v4571
    %5319 = vmatprep.subr.mxu0 0.0
    %5320 = vmatpush1.msra.mxu0 %v4572
    %5321 = vmatprep.subr.mxu0 0.0
    %5322 = vmatpush1.msra.mxu0 %v4573
    %5323 = vmatprep.subr.mxu0 0.0
    %5324 = vmatpush1.msra.mxu0 %v4574
    %5325 = vmatprep.subr.mxu0 0.0
    %5326 = vmatpush1.msra.mxu0 %v4575
    %5327 = vmatprep.subr.mxu0 0.0
    %5328 = vmatpush1.msra.mxu0 %v4576
    %5329 = vmatprep.subr.mxu0 0.0
    %5330 = vmatpush1.msra.mxu0 %v4577
    %5331 = vmatprep.subr.mxu0 0.0
    %5332 = vmatpush1.msra.mxu0 %v4578
    %5333 = vmatprep.subr.mxu0 0.0
    %5334 = vmatpush1.msra.mxu0 %v4579
    %5335 = vmatprep.subr.mxu0 0.0
    %5336 = vmatpush1.msra.mxu0 %v4580
    %5337 = vmatprep.subr.mxu0 0.0
    %5338 = vmatpush1.msra.mxu0 %v4581
    %5339 = vmatprep.subr.mxu0 0.0
    %5340 = vmatpush1.msra.mxu0 %v4582
    %5341 = vmatprep.subr.mxu0 0.0
    %5342 = vmatpush1.msra.mxu0 %v4583
    %5343 = vmatprep.subr.mxu0 0.0
    %5344 = vmatpush1.msra.mxu0 %v4584
    %5345 = vmatprep.subr.mxu0 0.0
    %5346 = vmatpush1.msra.mxu0 %v4585
    %5347 = vmatprep.subr.mxu0 0.0
    %5348 = vmatpush1.msra.mxu0 %v4586
    %5349 = vmatprep.subr.mxu0 0.0
    %5350 = vmatpush1.msra.mxu0 0.0
    %5351 = vmatprep.subr.mxu0 0.0
    %5352 = vmatpush1.msra.mxu0 0.0
    %5353 = vmatprep.subr.mxu0 0.0
    %5354 = vmatpush1.msra.mxu0 0.0
    %5355 = vmatprep.subr.mxu0 0.0
    %5356 = vmatpush1.msra.mxu0 0.0
    %5357 = vmatprep.subr.mxu0 0.0
    %5358 = vmatpush1.msra.mxu0 0.0
    %5359 = vmatprep.subr.mxu0 0.0
    %5360 = vmatpush1.msra.mxu0 0.0
    %5361 = vmatprep.subr.mxu0 0.0
    %5362 = vmatpush1.msra.mxu0 0.0
    %5363 = vmatprep.subr.mxu0 0.0
    %5364 = vmatpush1.msra.mxu0 0.0
    %5365 = vmatprep.subr.mxu0 0.0
    %5366 = vmatpush1.msra.mxu0 0.0
    %5367 = vmatprep.subr.mxu0 0.0
    %5368 = vmatpush1.msra.mxu0 0.0
    %5369 = vmatprep.subr.mxu0 0.0
    %5370 = vmatpush1.msra.mxu0 0.0
    %5371 = vmatprep.subr.mxu0 0.0
    %5372 = vmatpush1.msra.mxu0 0.0
    %5373 = vmatprep.subr.mxu0 0.0
    %5374 = vmatpush1.msra.mxu0 0.0
    %5375 = vmatprep.subr.mxu0 0.0
    %5376 = vmatpush1.msra.mxu0 0.0
    %5377 = vmatprep.subr.mxu0 0.0
    %5378 = vmatpush1.msra.mxu0 0.0
    %5379 = vmatprep.subr.mxu0 0.0
    %5380 = vmatpush1.msra.mxu0 0.0
    %5381 = vmatprep.mubr.f32.mxu0 0.0
    %5382 = vmatmul.mubr.f32.gmra.mrb[0].mxu0 %v4490
    %v5383 = vpop.f32.mrb[0].mxu0
    %v5384 = vadd.f32 0.0, %v5383
    %v5385 = vpop.f32.mrb[0].mxu0
    %5386 = vmatprep.mubr.f32.mxu0 0.0
    %5387 = vmatmul.mubr.f32.gmra.mrb[0].mxu0 %v4491
    %v5388 = vpop.f32.mrb[0].mxu0
    %v5389 = vadd.f32 0.0, %v5388
    %v5390 = vpop.f32.mrb[0].mxu0
    %5391 = vmatprep.mubr.f32.mxu0 0.0
    %5392 = vmatmul.mubr.f32.gmra.mrb[0].mxu0 %v4492
    %v5393 = vpop.f32.mrb[0].mxu0
    %v5394 = vadd.f32 0.0, %v5393
    %v5395 = vpop.f32.mrb[0].mxu0
    %5396 = vmatprep.mubr.f32.mxu0 0.0
    %5397 = vmatmul.mubr.f32.gmra.mrb[0].mxu0 %v4493
    %v5398 = vpop.f32.mrb[0].mxu0
    %v5399 = vadd.f32 0.0, %v5398
    %v5400 = vpop.f32.mrb[0].mxu0
    %5401 = vmatprep.mubr.f32.mxu0 0.0
    %5402 = vmatmul.mubr.f32.gmra.mrb[0].mxu0 %v4494
    %v5403 = vpop.f32.mrb[0].mxu0
    %v5404 = vadd.f32 0.0, %v5403
    %v5405 = vpop.f32.mrb[0].mxu0
    %5406 = vmatprep.mubr.f32.mxu0 0.0
    %5407 = vmatmul.mubr.f32.gmra.mrb[0].mxu0 %v4495
    %v5408 = vpop.f32.mrb[0].mxu0
    %v5409 = vadd.f32 0.0, %v5408
    %v5410 = vpop.f32.mrb[0].mxu0
    %5411 = vmatprep.mubr.f32.mxu0 0.0
    %5412 = vmatmul.mubr.f32.gmra.mrb[0].mxu0 %v4496
    %v5413 = vpop.f32.mrb[0].mxu0
    %v5414 = vadd.f32 0.0, %v5413
    %v5415 = vpop.f32.mrb[0].mxu0
    %5416 = vmatprep.mubr.f32.mxu0 0.0
    %5417 = vmatmul.mubr.f32.gmra.mrb[0].mxu0 %v4497
    %v5418 = vpop.f32.mrb[0].mxu0
    %v5419 = vadd.f32 0.0, %v5418
    %v5420 = vpop.f32.mrb[0].mxu0
    %5421 = vmatprep.mubr.f32.mxu0 0.0
    %5422 = vmatmul.mubr.f32.gmra.mrb[0].mxu0 %v4498
    %v5423 = vpop.f32.mrb[0].mxu0
    %v5424 = vadd.f32 0.0, %v5423
    %v5425 = vpop.f32.mrb[0].mxu0
    %5426 = vmatprep.mubr.f32.mxu0 0.0
    %5427 = vmatmul.mubr.f32.gmra.mrb[0].mxu0 %v4499
    %v5428 = vpop.f32.mrb[0].mxu0
    %v5429 = vadd.f32 0.0, %v5428
    %v5430 = vpop.f32.mrb[0].mxu0
    %5431 = vmatprep.mubr.f32.mxu0 0.0
    %5432 = vmatmul.mubr.f32.gmra.mrb[0].mxu0 %v4500
    %v5433 = vpop.f32.mrb[0].mxu0
    %v5434 = vadd.f32 0.0, %v5433
    %v5435 = vpop.f32.mrb[0].mxu0
    %5436 = vmatprep.mubr.f32.mxu0 0.0
    %5437 = vmatmul.mubr.f32.gmra.mrb[0].mxu0 %v4501
    %v5438 = vpop.f32.mrb[0].mxu0
    %v5439 = vadd.f32 0.0, %v5438
    %v5440 = vpop.f32.mrb[0].mxu0
    %5441 = vmatprep.mubr.f32.mxu0 0.0
    %5442 = vmatmul.mubr.f32.gmra.mrb[0].mxu0 %v4502
    %v5443 = vpop.f32.mrb[0].mxu0
    %v5444 = vadd.f32 0.0, %v5443
    %v5445 = vpop.f32.mrb[0].mxu0
    %5446 = vmatprep.mubr.f32.mxu0 0.0
    %5447 = vmatmul.mubr.f32.gmra.mrb[0].mxu0 %v4503
    %v5448 = vpop.f32.mrb[0].mxu0
    %v5449 = vadd.f32 0.0, %v5448
    %v5450 = vpop.f32.mrb[0].mxu0
    %5451 = vmatprep.mubr.f32.mxu0 0.0
    %5452 = vmatmul.mubr.f32.gmra.mrb[0].mxu0 %v4504
    %v5453 = vpop.f32.mrb[0].mxu0
    %v5454 = vadd.f32 0.0, %v5453
    %v5455 = vpop.f32.mrb[0].mxu0
    %5456 = vmatprep.mubr.f32.mxu0 0.0
    %5457 = vmatmul.mubr.f32.gmra.mrb[0].mxu0 %v4505
    %v5458 = vpop.f32.mrb[0].mxu0
    %v5459 = vadd.f32 0.0, %v5458
    %v5460 = vpop.f32.mrb[0].mxu0
    %5461 = vmatprep.mubr.f32.mxu0 0.0
    %5462 = vmatmul.mubr.f32.gmra.mrb[0].mxu0 %v4506
    %v5463 = vpop.f32.mrb[0].mxu0
    %v5464 = vadd.f32 0.0, %v5463
    %v5465 = vpop.f32.mrb[0].mxu0
    %5466 = vmatprep.mubr.f32.mxu0 0.0
    %5467 = vmatmul.mubr.f32.gmra.mrb[0].mxu0 %v4507
    %v5468 = vpop.f32.mrb[0].mxu0
    %v5469 = vadd.f32 0.0, %v5468
    %v5470 = vpop.f32.mrb[0].mxu0
    %5471 = vmatprep.mubr.f32.mxu0 0.0
    %5472 = vmatmul.mubr.f32.gmra.mrb[0].mxu0 %v4508
    %v5473 = vpop.f32.mrb[0].mxu0
    %v5474 = vadd.f32 0.0, %v5473
    %v5475 = vpop.f32.mrb[0].mxu0
    %5476 = vmatprep.mubr.f32.mxu0 0.0
    %5477 = vmatmul.mubr.f32.gmra.mrb[0].mxu0 %v4509
    %v5478 = vpop.f32.mrb[0].mxu0
    %v5479 = vadd.f32 0.0, %v5478
    %v5480 = vpop.f32.mrb[0].mxu0
    %5481 = vmatprep.mubr.f32.mxu0 0.0
    %5482 = vmatmul.mubr.f32.gmra.mrb[0].mxu0 %v4510
    %v5483 = vpop.f32.mrb[0].mxu0
    %v5484 = vadd.f32 0.0, %v5483
    %v5485 = vpop.f32.mrb[0].mxu0
    %5486 = vmatprep.mubr.f32.mxu0 0.0
    %5487 = vmatmul.mubr.f32.gmra.mrb[0].mxu0 %v4511
    %v5488 = vpop.f32.mrb[0].mxu0
    %v5489 = vadd.f32 0.0, %v5488
    %v5490 = vpop.f32.mrb[0].mxu0
    %5491 = vmatprep.mubr.f32.mxu0 0.0
    %5492 = vmatmul.mubr.f32.gmra.mrb[0].mxu0 %v4512
    %v5493 = vpop.f32.mrb[0].mxu0
    %v5494 = vadd.f32 0.0, %v5493
    %v5495 = vpop.f32.mrb[0].mxu0
    %5496 = vmatprep.mubr.f32.mxu0 0.0
    %5497 = vmatmul.mubr.f32.gmra.mrb[0].mxu0 %v4513
    %v5498 = vpop.f32.mrb[0].mxu0
    %v5499 = vadd.f32 0.0, %v5498
    %v5500 = vpop.f32.mrb[0].mxu0
    %5501 = vmatprep.mubr.f32.mxu0 0.0
    %5502 = vmatmul.mubr.f32.gmra.mrb[0].mxu0 %v4514
    %v5503 = vpop.f32.mrb[0].mxu0
    %v5504 = vadd.f32 0.0, %v5503
    %v5505 = vpop.f32.mrb[0].mxu0
    %5506 = vmatprep.mubr.f32.mxu0 0.0
    %5507 = vmatmul.mubr.f32.gmra.mrb[0].mxu0 %v4515
    %v5508 = vpop.f32.mrb[0].mxu0
    %v5509 = vadd.f32 0.0, %v5508
    %v5510 = vpop.f32.mrb[0].mxu0
    %5511 = vmatprep.mubr.f32.mxu0 0.0
    %5512 = vmatmul.mubr.f32.gmra.mrb[0].mxu0 %v4516
    %v5513 = vpop.f32.mrb[0].mxu0
    %v5514 = vadd.f32 0.0, %v5513
    %v5515 = vpop.f32.mrb[0].mxu0
    %5516 = vmatprep.mubr.f32.mxu0 0.0
    %5517 = vmatmul.mubr.f32.gmra.mrb[0].mxu0 %v4517
    %v5518 = vpop.f32.mrb[0].mxu0
    %v5519 = vadd.f32 0.0, %v5518
    %v5520 = vpop.f32.mrb[0].mxu0
    %5521 = vmatprep.mubr.f32.mxu0 0.0
    %5522 = vmatmul.mubr.f32.gmra.mrb[0].mxu0 %v4518
    %v5523 = vpop.f32.mrb[0].mxu0
    %v5524 = vadd.f32 0.0, %v5523
    %v5525 = vpop.f32.mrb[0].mxu0
    %5526 = vmatprep.mubr.f32.mxu0 0.0
    %5527 = vmatmul.mubr.f32.gmra.mrb[0].mxu0 %v4487
    %v5528 = vpop.f32.mrb[0].mxu0
    %v5529 = vadd.f32 0.0, %v5528
    %v5530 = vpop.f32.mrb[0].mxu0
    %5531 = vmatprep.mubr.f32.mxu0 0.0
    %5532 = vmatmul.mubr.f32.gmra.mrb[0].mxu0 %v4488
    %v5533 = vpop.f32.mrb[0].mxu0
    %v5534 = vadd.f32 0.0, %v5533
    %v5535 = vpop.f32.mrb[0].mxu0
    %5536 = vmatprep.mubr.f32.mxu0 0.0
    %5537 = vmatmul.mubr.f32.gmra.mrb[0].mxu0 %v4489
    %v5538 = vpop.f32.mrb[0].mxu0
    %v5539 = vadd.f32 0.0, %v5538
    %v5540 = vpop.f32.mrb[0].mxu0
    %5541 = vdwg.mxu0
    %v5542 = vadd.f32 %v5285, %v5384
    %v5543 = vadd.f32 %v5286, %v5389
    %v5544 = vadd.f32 %v5287, %v5394
    %v5545 = vadd.f32 %v5288, %v5399
    %v5546 = vadd.f32 %v5289, %v5404
    %v5547 = vadd.f32 %v5290, %v5409
    %v5548 = vadd.f32 %v5291, %v5414
    %v5549 = vadd.f32 %v5292, %v5419
    %v5550 = vadd.f32 %v5293, %v5424
    %v5551 = vadd.f32 %v5294, %v5429
    %v5552 = vadd.f32 %v5295, %v5434
    %v5553 = vadd.f32 %v5296, %v5439
    %v5554 = vadd.f32 %v5297, %v5444
    %v5555 = vadd.f32 %v5298, %v5449
    %v5556 = vadd.f32 %v5299, %v5454
    %v5557 = vadd.f32 %v5300, %v5459
    %v5558 = vadd.f32 %v5301, %v5464
    %v5559 = vadd.f32 %v5302, %v5469
    %v5560 = vadd.f32 %v5303, %v5474
    %v5561 = vadd.f32 %v5304, %v5479
    %v5562 = vadd.f32 %v5305, %v5484
    %v5563 = vadd.f32 %v5306, %v5489
    %v5564 = vadd.f32 %v5307, %v5494
    %v5565 = vadd.f32 %v5308, %v5499
    %v5566 = vadd.f32 %v5309, %v5504
    %v5567 = vadd.f32 %v5310, %v5509
    %v5568 = vadd.f32 %v5311, %v5514
    %v5569 = vadd.f32 %v5312, %v5519
    %v5570 = vadd.f32 %v5313, %v5524
    %v5571 = vadd.f32 %v5314, %v5529
    %v5572 = vadd.f32 %v5315, %v5534
    %v5573 = vadd.f32 %v5316, %v5539
    %5574 = vmatprep.subr.mxu0 0.0
    %5575 = vmatpush1.msra.mxu0 %v4588
    %5576 = vmatprep.subr.mxu0 0.0
    %5577 = vmatpush1.msra.mxu0 %v4589
    %5578 = vmatprep.subr.mxu0 0.0
    %5579 = vmatpush1.msra.mxu0 %v4590
    %5580 = vmatprep.subr.mxu0 0.0
    %5581 = vmatpush1.msra.mxu0 %v4591
    %5582 = vmatprep.subr.mxu0 0.0
    %5583 = vmatpush1.msra.mxu0 %v4592
    %5584 = vmatprep.subr.mxu0 0.0
    %5585 = vmatpush1.msra.mxu0 %v4593
    %5586 = vmatprep.subr.mxu0 0.0
    %5587 = vmatpush1.msra.mxu0 %v4594
    %5588 = vmatprep.subr.mxu0 0.0
    %5589 = vmatpush1.msra.mxu0 %v4595
    %5590 = vmatprep.subr.mxu0 0.0
    %5591 = vmatpush1.msra.mxu0 %v4596
    %5592 = vmatprep.subr.mxu0 0.0
    %5593 = vmatpush1.msra.mxu0 %v4597
    %5594 = vmatprep.subr.mxu0 0.0
    %5595 = vmatpush1.msra.mxu0 %v4598
    %5596 = vmatprep.subr.mxu0 0.0
    %5597 = vmatpush1.msra.mxu0 %v4599
    %5598 = vmatprep.subr.mxu0 0.0
    %5599 = vmatpush1.msra.mxu0 %v4600
    %5600 = vmatprep.subr.mxu0 0.0
    %5601 = vmatpush1.msra.mxu0 %v4601
    %5602 = vmatprep.subr.mxu0 0.0
    %5603 = vmatpush1.msra.mxu0 %v4602
    %5604 = vmatprep.subr.mxu0 0.0
    %5605 = vmatpush1.msra.mxu0 %v4603
    %5606 = vmatprep.subr.mxu0 0.0
    %5607 = vmatpush1.msra.mxu0 0.0
    %5608 = vmatprep.subr.mxu0 0.0
    %5609 = vmatpush1.msra.mxu0 0.0
    %5610 = vmatprep.subr.mxu0 0.0
    %5611 = vmatpush1.msra.mxu0 0.0
    %5612 = vmatprep.subr.mxu0 0.0
    %5613 = vmatpush1.msra.mxu0 0.0
    %5614 = vmatprep.subr.mxu0 0.0
    %5615 = vmatpush1.msra.mxu0 0.0
    %5616 = vmatprep.subr.mxu0 0.0
    %5617 = vmatpush1.msra.mxu0 0.0
    %5618 = vmatprep.subr.mxu0 0.0
    %5619 = vmatpush1.msra.mxu0 0.0
    %5620 = vmatprep.subr.mxu0 0.0
    %5621 = vmatpush1.msra.mxu0 0.0
    %5622 = vmatprep.subr.mxu0 0.0
    %5623 = vmatpush1.msra.mxu0 0.0
    %5624 = vmatprep.subr.mxu0 0.0
    %5625 = vmatpush1.msra.mxu0 0.0
    %5626 = vmatprep.subr.mxu0 0.0
    %5627 = vmatpush1.msra.mxu0 0.0
    %5628 = vmatprep.subr.mxu0 0.0
    %5629 = vmatpush1.msra.mxu0 0.0
    %5630 = vmatprep.subr.mxu0 0.0
    %5631 = vmatpush1.msra.mxu0 0.0
    %5632 = vmatprep.subr.mxu0 0.0
    %5633 = vmatpush1.msra.mxu0 0.0
    %5634 = vmatprep.subr.mxu0 0.0
    %5635 = vmatpush1.msra.mxu0 0.0
    %5636 = vmatprep.subr.mxu0 0.0
    %5637 = vmatpush1.msra.mxu0 0.0
    %5638 = vmatprep.mubr.f32.mxu0 0.0
    %5639 = vmatmul.mubr.f32.gmra.mrb[0].mxu0 %v4491
    %v5640 = vpop.f32.mrb[0].mxu0
    %v5641 = vadd.f32 0.0, %v5640
    %v5642 = vpop.f32.mrb[0].mxu0
    %5643 = vmatprep.mubr.f32.mxu0 0.0
    %5644 = vmatmul.mubr.f32.gmra.mrb[0].mxu0 %v4492
    %v5645 = vpop.f32.mrb[0].mxu0
    %v5646 = vadd.f32 0.0, %v5645
    %v5647 = vpop.f32.mrb[0].mxu0
    %5648 = vmatprep.mubr.f32.mxu0 0.0
    %5649 = vmatmul.mubr.f32.gmra.mrb[0].mxu0 %v4493
    %v5650 = vpop.f32.mrb[0].mxu0
    %v5651 = vadd.f32 0.0, %v5650
    %v5652 = vpop.f32.mrb[0].mxu0
    %5653 = vmatprep.mubr.f32.mxu0 0.0
    %5654 = vmatmul.mubr.f32.gmra.mrb[0].mxu0 %v4494
    %v5655 = vpop.f32.mrb[0].mxu0
    %v5656 = vadd.f32 0.0, %v5655
    %v5657 = vpop.f32.mrb[0].mxu0
    %5658 = vmatprep.mubr.f32.mxu0 0.0
    %5659 = vmatmul.mubr.f32.gmra.mrb[0].mxu0 %v4495
    %v5660 = vpop.f32.mrb[0].mxu0
    %v5661 = vadd.f32 0.0, %v5660
    %v5662 = vpop.f32.mrb[0].mxu0
    %5663 = vmatprep.mubr.f32.mxu0 0.0
    %5664 = vmatmul.mubr.f32.gmra.mrb[0].mxu0 %v4496
    %v5665 = vpop.f32.mrb[0].mxu0
    %v5666 = vadd.f32 0.0, %v5665
    %v5667 = vpop.f32.mrb[0].mxu0
    %5668 = vmatprep.mubr.f32.mxu0 0.0
    %5669 = vmatmul.mubr.f32.gmra.mrb[0].mxu0 %v4497
    %v5670 = vpop.f32.mrb[0].mxu0
    %v5671 = vadd.f32 0.0, %v5670
    %v5672 = vpop.f32.mrb[0].mxu0
    %5673 = vmatprep.mubr.f32.mxu0 0.0
    %5674 = vmatmul.mubr.f32.gmra.mrb[0].mxu0 %v4498
    %v5675 = vpop.f32.mrb[0].mxu0
    %v5676 = vadd.f32 0.0, %v5675
    %v5677 = vpop.f32.mrb[0].mxu0
    %5678 = vmatprep.mubr.f32.mxu0 0.0
    %5679 = vmatmul.mubr.f32.gmra.mrb[0].mxu0 %v4499
    %v5680 = vpop.f32.mrb[0].mxu0
    %v5681 = vadd.f32 0.0, %v5680
    %v5682 = vpop.f32.mrb[0].mxu0
    %5683 = vmatprep.mubr.f32.mxu0 0.0
    %5684 = vmatmul.mubr.f32.gmra.mrb[0].mxu0 %v4500
    %v5685 = vpop.f32.mrb[0].mxu0
    %v5686 = vadd.f32 0.0, %v5685
    %v5687 = vpop.f32.mrb[0].mxu0
    %5688 = vmatprep.mubr.f32.mxu0 0.0
    %5689 = vmatmul.mubr.f32.gmra.mrb[0].mxu0 %v4501
    %v5690 = vpop.f32.mrb[0].mxu0
    %v5691 = vadd.f32 0.0, %v5690
    %v5692 = vpop.f32.mrb[0].mxu0
    %5693 = vmatprep.mubr.f32.mxu0 0.0
    %5694 = vmatmul.mubr.f32.gmra.mrb[0].mxu0 %v4502
    %v5695 = vpop.f32.mrb[0].mxu0
    %v5696 = vadd.f32 0.0, %v5695
    %v5697 = vpop.f32.mrb[0].mxu0
    %5698 = vmatprep.mubr.f32.mxu0 0.0
    %5699 = vmatmul.mubr.f32.gmra.mrb[0].mxu0 %v4503
    %v5700 = vpop.f32.mrb[0].mxu0
    %v5701 = vadd.f32 0.0, %v5700
    %v5702 = vpop.f32.mrb[0].mxu0
    %5703 = vmatprep.mubr.f32.mxu0 0.0
    %5704 = vmatmul.mubr.f32.gmra.mrb[0].mxu0 %v4504
    %v5705 = vpop.f32.mrb[0].mxu0
    %v5706 = vadd.f32 0.0, %v5705
    %v5707 = vpop.f32.mrb[0].mxu0
    %5708 = vmatprep.mubr.f32.mxu0 0.0
    %5709 = vmatmul.mubr.f32.gmra.mrb[0].mxu0 %v4505
    %v5710 = vpop.f32.mrb[0].mxu0
    %v5711 = vadd.f32 0.0, %v5710
    %v5712 = vpop.f32.mrb[0].mxu0
    %5713 = vmatprep.mubr.f32.mxu0 0.0
    %5714 = vmatmul.mubr.f32.gmra.mrb[0].mxu0 %v4506
    %v5715 = vpop.f32.mrb[0].mxu0
    %v5716 = vadd.f32 0.0, %v5715
    %v5717 = vpop.f32.mrb[0].mxu0
    %5718 = vmatprep.mubr.f32.mxu0 0.0
    %5719 = vmatmul.mubr.f32.gmra.mrb[0].mxu0 %v4507
    %v5720 = vpop.f32.mrb[0].mxu0
    %v5721 = vadd.f32 0.0, %v5720
    %v5722 = vpop.f32.mrb[0].mxu0
    %5723 = vmatprep.mubr.f32.mxu0 0.0
    %5724 = vmatmul.mubr.f32.gmra.mrb[0].mxu0 %v4508
    %v5725 = vpop.f32.mrb[0].mxu0
    %v5726 = vadd.f32 0.0, %v5725
    %v5727 = vpop.f32.mrb[0].mxu0
    %5728 = vmatprep.mubr.f32.mxu0 0.0
    %5729 = vmatmul.mubr.f32.gmra.mrb[0].mxu0 %v4509
    %v5730 = vpop.f32.mrb[0].mxu0
    %v5731 = vadd.f32 0.0, %v5730
    %v5732 = vpop.f32.mrb[0].mxu0
    %5733 = vmatprep.mubr.f32.mxu0 0.0
    %5734 = vmatmul.mubr.f32.gmra.mrb[0].mxu0 %v4510
    %v5735 = vpop.f32.mrb[0].mxu0
    %v5736 = vadd.f32 0.0, %v5735
    %v5737 = vpop.f32.mrb[0].mxu0
    %5738 = vmatprep.mubr.f32.mxu0 0.0
    %5739 = vmatmul.mubr.f32.gmra.mrb[0].mxu0 %v4511
    %v5740 = vpop.f32.mrb[0].mxu0
    %v5741 = vadd.f32 0.0, %v5740
    %v5742 = vpop.f32.mrb[0].mxu0
    %5743 = vmatprep.mubr.f32.mxu0 0.0
    %5744 = vmatmul.mubr.f32.gmra.mrb[0].mxu0 %v4512
    %v5745 = vpop.f32.mrb[0].mxu0
    %v5746 = vadd.f32 0.0, %v5745
    %v5747 = vpop.f32.mrb[0].mxu0
    %5748 = vmatprep.mubr.f32.mxu0 0.0
    %5749 = vmatmul.mubr.f32.gmra.mrb[0].mxu0 %v4513
    %v5750 = vpop.f32.mrb[0].mxu0
    %v5751 = vadd.f32 0.0, %v5750
    %v5752 = vpop.f32.mrb[0].mxu0
    %5753 = vmatprep.mubr.f32.mxu0 0.0
    %5754 = vmatmul.mubr.f32.gmra.mrb[0].mxu0 %v4514
    %v5755 = vpop.f32.mrb[0].mxu0
    %v5756 = vadd.f32 0.0, %v5755
    %v5757 = vpop.f32.mrb[0].mxu0
    %5758 = vmatprep.mubr.f32.mxu0 0.0
    %5759 = vmatmul.mubr.f32.gmra.mrb[0].mxu0 %v4515
    %v5760 = vpop.f32.mrb[0].mxu0
    %v5761 = vadd.f32 0.0, %v5760
    %v5762 = vpop.f32.mrb[0].mxu0
    %5763 = vmatprep.mubr.f32.mxu0 0.0
    %5764 = vmatmul.mubr.f32.gmra.mrb[0].mxu0 %v4516
    %v5765 = vpop.f32.mrb[0].mxu0
    %v5766 = vadd.f32 0.0, %v5765
    %v5767 = vpop.f32.mrb[0].mxu0
    %5768 = vmatprep.mubr.f32.mxu0 0.0
    %5769 = vmatmul.mubr.f32.gmra.mrb[0].mxu0 %v4517
    %v5770 = vpop.f32.mrb[0].mxu0
    %v5771 = vadd.f32 0.0, %v5770
    %v5772 = vpop.f32.mrb[0].mxu0
    %5773 = vmatprep.mubr.f32.mxu0 0.0
    %5774 = vmatmul.mubr.f32.gmra.mrb[0].mxu0 %v4518
    %v5775 = vpop.f32.mrb[0].mxu0
    %v5776 = vadd.f32 0.0, %v5775
    %v5777 = vpop.f32.mrb[0].mxu0
    %5778 = vmatprep.mubr.f32.mxu0 0.0
    %5779 = vmatmul.mubr.f32.gmra.mrb[0].mxu0 %v4487
    %v5780 = vpop.f32.mrb[0].mxu0
    %v5781 = vadd.f32 0.0, %v5780
    %v5782 = vpop.f32.mrb[0].mxu0
    %5783 = vmatprep.mubr.f32.mxu0 0.0
    %5784 = vmatmul.mubr.f32.gmra.mrb[0].mxu0 %v4488
    %v5785 = vpop.f32.mrb[0].mxu0
    %v5786 = vadd.f32 0.0, %v5785
    %v5787 = vpop.f32.mrb[0].mxu0
    %5788 = vmatprep.mubr.f32.mxu0 0.0
    %5789 = vmatmul.mubr.f32.gmra.mrb[0].mxu0 %v4489
    %v5790 = vpop.f32.mrb[0].mxu0
    %v5791 = vadd.f32 0.0, %v5790
    %v5792 = vpop.f32.mrb[0].mxu0
    %5793 = vmatprep.mubr.f32.mxu0 0.0
    %5794 = vmatmul.mubr.f32.gmra.mrb[0].mxu0 %v4490
    %v5795 = vpop.f32.mrb[0].mxu0
    %v5796 = vadd.f32 0.0, %v5795
    %v5797 = vpop.f32.mrb[0].mxu0
    %5798 = vdwg.mxu0
    %v5799 = vadd.f32 %v5542, %v5641
    %v5800 = vadd.f32 %v5543, %v5646
    %v5801 = vadd.f32 %v5544, %v5651
    %v5802 = vadd.f32 %v5545, %v5656
    %v5803 = vadd.f32 %v5546, %v5661
    %v5804 = vadd.f32 %v5547, %v5666
    %v5805 = vadd.f32 %v5548, %v5671
    %v5806 = vadd.f32 %v5549, %v5676
    %v5807 = vadd.f32 %v5550, %v5681
    %v5808 = vadd.f32 %v5551, %v5686
    %v5809 = vadd.f32 %v5552, %v5691
    %v5810 = vadd.f32 %v5553, %v5696
    %v5811 = vadd.f32 %v5554, %v5701
    %v5812 = vadd.f32 %v5555, %v5706
    %v5813 = vadd.f32 %v5556, %v5711
    %v5814 = vadd.f32 %v5557, %v5716
    %v5815 = vadd.f32 %v5558, %v5721
    %v5816 = vadd.f32 %v5559, %v5726
    %v5817 = vadd.f32 %v5560, %v5731
    %v5818 = vadd.f32 %v5561, %v5736
    %v5819 = vadd.f32 %v5562, %v5741
    %v5820 = vadd.f32 %v5563, %v5746
    %v5821 = vadd.f32 %v5564, %v5751
    %v5822 = vadd.f32 %v5565, %v5756
    %v5823 = vadd.f32 %v5566, %v5761
    %v5824 = vadd.f32 %v5567, %v5766
    %v5825 = vadd.f32 %v5568, %v5771
    %v5826 = vadd.f32 %v5569, %v5776
    %v5827 = vadd.f32 %v5570, %v5781
    %v5828 = vadd.f32 %v5571, %v5786
    %v5829 = vadd.f32 %v5572, %v5791
    %v5830 = vadd.f32 %v5573, %v5796
    %v5832 = vlaneseq
    %v5833 = vshrl.u32 %v5832, 7
    %v5834 = vsub.s32 0, %v5833
    %v5835 = vrot.slane %v4605, %v5834
    %v5837 = vadd.f32 %v5799, %v5835
    %v5838 = vadd.f32 %v5800, %v5835
    %v5839 = vadd.f32 %v5801, %v5835
    %v5840 = vadd.f32 %v5802, %v5835
    %v5841 = vadd.f32 %v5803, %v5835
    %v5842 = vadd.f32 %v5804, %v5835
    %v5843 = vadd.f32 %v5805, %v5835
    %v5844 = vadd.f32 %v5806, %v5835
    %v5845 = vadd.f32 %v5807, %v5835
    %v5846 = vadd.f32 %v5808, %v5835
    %v5847 = vadd.f32 %v5809, %v5835
    %v5848 = vadd.f32 %v5810, %v5835
    %v5849 = vadd.f32 %v5811, %v5835
    %v5850 = vadd.f32 %v5812, %v5835
    %v5851 = vadd.f32 %v5813, %v5835
    %v5852 = vadd.f32 %v5814, %v5835
    %v5853 = vadd.f32 %v5815, %v5835
    %v5854 = vadd.f32 %v5816, %v5835
    %v5855 = vadd.f32 %v5817, %v5835
    %v5856 = vadd.f32 %v5818, %v5835
    %v5857 = vadd.f32 %v5819, %v5835
    %v5858 = vadd.f32 %v5820, %v5835
    %v5859 = vadd.f32 %v5821, %v5835
    %v5860 = vadd.f32 %v5822, %v5835
    %v5861 = vadd.f32 %v5823, %v5835
    %v5862 = vadd.f32 %v5824, %v5835
    %v5863 = vadd.f32 %v5825, %v5835
    %v5864 = vadd.f32 %v5826, %v5835
    %v5865 = vadd.f32 %v5827, %v5835
    %v5866 = vadd.f32 %v5828, %v5835
    %v5867 = vadd.f32 %v5829, %v5835
    %v5868 = vadd.f32 %v5830, %v5835
    %v5869 = vmax.f32 %v5837, 0.0
    %v5870 = vmax.f32 %v5838, 0.0
    %v5871 = vmax.f32 %v5839, 0.0
    %v5872 = vmax.f32 %v5840, 0.0
    %v5873 = vmax.f32 %v5841, 0.0
    %v5874 = vmax.f32 %v5842, 0.0
    %v5875 = vmax.f32 %v5843, 0.0
    %v5876 = vmax.f32 %v5844, 0.0
    %v5877 = vmax.f32 %v5845, 0.0
    %v5878 = vmax.f32 %v5846, 0.0
    %v5879 = vmax.f32 %v5847, 0.0
    %v5880 = vmax.f32 %v5848, 0.0
    %v5881 = vmax.f32 %v5849, 0.0
    %v5882 = vmax.f32 %v5850, 0.0
    %v5883 = vmax.f32 %v5851, 0.0
    %v5884 = vmax.f32 %v5852, 0.0
    %v5885 = vmax.f32 %v5853, 0.0
    %v5886 = vmax.f32 %v5854, 0.0
    %v5887 = vmax.f32 %v5855, 0.0
    %v5888 = vmax.f32 %v5856, 0.0
    %v5889 = vmax.f32 %v5857, 0.0
    %v5890 = vmax.f32 %v5858, 0.0
    %v5891 = vmax.f32 %v5859, 0.0
    %v5892 = vmax.f32 %v5860, 0.0
    %v5893 = vmax.f32 %v5861, 0.0
    %v5894 = vmax.f32 %v5862, 0.0
    %v5895 = vmax.f32 %v5863, 0.0
    %v5896 = vmax.f32 %v5864, 0.0
    %v5897 = vmax.f32 %v5865, 0.0
    %v5898 = vmax.f32 %v5866, 0.0
    %v5899 = vmax.f32 %v5867, 0.0
    %v5900 = vmax.f32 %v5868, 0.0
    %v5902 = vlaneseq
    %v5903 = vshrl.u32 %v5902, 7
    %v5904 = vsub.s32 0, %v5903
    %v5905 = vrot.slane %v4607, %v5904
    %v5907 = vmul.f32 %v5869, %v5905
    %v5908 = vmul.f32 %v5870, %v5905
    %v5909 = vmul.f32 %v5871, %v5905
    %v5910 = vmul.f32 %v5872, %v5905
    %v5911 = vmul.f32 %v5873, %v5905
    %v5912 = vmul.f32 %v5874, %v5905
    %v5913 = vmul.f32 %v5875, %v5905
    %v5914 = vmul.f32 %v5876, %v5905
    %v5915 = vmul.f32 %v5877, %v5905
    %v5916 = vmul.f32 %v5878, %v5905
    %v5917 = vmul.f32 %v5879, %v5905
    %v5918 = vmul.f32 %v5880, %v5905
    %v5919 = vmul.f32 %v5881, %v5905
    %v5920 = vmul.f32 %v5882, %v5905
    %v5921 = vmul.f32 %v5883, %v5905
    %v5922 = vmul.f32 %v5884, %v5905
    %v5923 = vmul.f32 %v5885, %v5905
    %v5924 = vmul.f32 %v5886, %v5905
    %v5925 = vmul.f32 %v5887, %v5905
    %v5926 = vmul.f32 %v5888, %v5905
    %v5927 = vmul.f32 %v5889, %v5905
    %v5928 = vmul.f32 %v5890, %v5905
    %v5929 = vmul.f32 %v5891, %v5905
    %v5930 = vmul.f32 %v5892, %v5905
    %v5931 = vmul.f32 %v5893, %v5905
    %v5932 = vmul.f32 %v5894, %v5905
    %v5933 = vmul.f32 %v5895, %v5905
    %v5934 = vmul.f32 %v5896, %v5905
    %v5935 = vmul.f32 %v5897, %v5905
    %v5936 = vmul.f32 %v5898, %v5905
    %v5937 = vmul.f32 %v5899, %v5905
    %v5938 = vmul.f32 %v5900, %v5905
    %v5940 = vlaneseq
    %v5941 = vshrl.u32 %v5940, 7
    %v5942 = vsub.s32 0, %v5941
    %v5943 = vrot.slane %v4609, %v5942
    %v5945 = vadd.f32 %v5907, %v5943
    %v5946 = vadd.f32 %v5908, %v5943
    %v5947 = vadd.f32 %v5909, %v5943
    %v5948 = vadd.f32 %v5910, %v5943
    %v5949 = vadd.f32 %v5911, %v5943
    %v5950 = vadd.f32 %v5912, %v5943
    %v5951 = vadd.f32 %v5913, %v5943
    %v5952 = vadd.f32 %v5914, %v5943
    %v5953 = vadd.f32 %v5915, %v5943
    %v5954 = vadd.f32 %v5916, %v5943
    %v5955 = vadd.f32 %v5917, %v5943
    %v5956 = vadd.f32 %v5918, %v5943
    %v5957 = vadd.f32 %v5919, %v5943
    %v5958 = vadd.f32 %v5920, %v5943
    %v5959 = vadd.f32 %v5921, %v5943
    %v5960 = vadd.f32 %v5922, %v5943
    %v5961 = vadd.f32 %v5923, %v5943
    %v5962 = vadd.f32 %v5924, %v5943
    %v5963 = vadd.f32 %v5925, %v5943
    %v5964 = vadd.f32 %v5926, %v5943
    %v5965 = vadd.f32 %v5927, %v5943
    %v5966 = vadd.f32 %v5928, %v5943
    %v5967 = vadd.f32 %v5929, %v5943
    %v5968 = vadd.f32 %v5930, %v5943
    %v5969 = vadd.f32 %v5931, %v5943
    %v5970 = vadd.f32 %v5932, %v5943
    %v5971 = vadd.f32 %v5933, %v5943
    %v5972 = vadd.f32 %v5934, %v5943
    %v5973 = vadd.f32 %v5935, %v5943
    %v5974 = vadd.f32 %v5936, %v5943
    %v5975 = vadd.f32 %v5937, %v5943
    %v5976 = vadd.f32 %v5938, %v5943
    %v5977 = vld [vmem:[%s6] sm:$0xff]
    %v5978 = vld [vmem:[%s6 + $0x8] sm:$0xff]
    %v5979 = vld [vmem:[%s6 + $0x10] sm:$0xff]
    %v5980 = vld [vmem:[%s6 + $0x18] sm:$0xff]
    %v5981 = vld [vmem:[%s6 + $0x20] sm:$0xff]
    %v5982 = vld [vmem:[%s6 + $0x28] sm:$0xff]
    %v5983 = vld [vmem:[%s6 + $0x30] sm:$0xff]
    %v5984 = vld [vmem:[%s6 + $0x38] sm:$0xff]
    %v5985 = vld [vmem:[%s6 + $0x40] sm:$0xff]
    %v5986 = vld [vmem:[%s6 + $0x48] sm:$0xff]
    %v5987 = vld [vmem:[%s6 + $0x50] sm:$0xff]
    %v5988 = vld [vmem:[%s6 + $0x58] sm:$0xff]
    %v5989 = vld [vmem:[%s6 + $0x60] sm:$0xff]
    %v5990 = vld [vmem:[%s6 + $0x68] sm:$0xff]
    %v5991 = vld [vmem:[%s6 + $0x70] sm:$0xff]
    %v5992 = vld [vmem:[%s6 + $0x78] sm:$0xff]
    %v5993 = vld [vmem:[%s6 + $0x80] sm:$0xff]
    %v5994 = vld [vmem:[%s6 + $0x88] sm:$0xff]
    %v5995 = vld [vmem:[%s6 + $0x90] sm:$0xff]
    %v5996 = vld [vmem:[%s6 + $0x98] sm:$0xff]
    %v5997 = vld [vmem:[%s6 + $0xa0] sm:$0xff]
    %v5998 = vld [vmem:[%s6 + $0xa8] sm:$0xff]
    %v5999 = vld [vmem:[%s6 + $0xb0] sm:$0xff]
    %v6000 = vld [vmem:[%s6 + $0xb8] sm:$0xff]
    %v6001 = vld [vmem:[%s6 + $0xc0] sm:$0xff]
    %v6002 = vld [vmem:[%s6 + $0xc8] sm:$0xff]
    %v6003 = vld [vmem:[%s6 + $0xd0] sm:$0xff]
    %v6004 = vld [vmem:[%s6 + $0xd8] sm:$0xff]
    %v6005 = vld [vmem:[%s6 + $0xe0] sm:$0xff]
    %v6006 = vld [vmem:[%s6 + $0xe8] sm:$0xff]
    %v6007 = vld [vmem:[%s6 + $0xf0] sm:$0xff]
    %v6008 = vld [vmem:[%s6 + $0xf8] sm:$0xff]
    %v6009 = vld [vmem:[%s6 + $0x100] sm:$0xff]
    %v6010 = vld [vmem:[%s6 + $0x108] sm:$0xff]
    %v6011 = vld [vmem:[%s6 + $0x110] sm:$0xff]
    %v6012 = vld [vmem:[%s6 + $0x118] sm:$0xff]
    %v6013 = vld [vmem:[%s6 + $0x120] sm:$0xff]
    %v6014 = vld [vmem:[%s6 + $0x128] sm:$0xff]
    %v6015 = vld [vmem:[%s6 + $0x130] sm:$0xff]
    %v6016 = vld [vmem:[%s6 + $0x138] sm:$0xff]
    %v6017 = vld [vmem:[%s6 + $0x140] sm:$0xff]
    %v6018 = vld [vmem:[%s6 + $0x148] sm:$0xff]
    %v6019 = vld [vmem:[%s6 + $0x150] sm:$0xff]
    %v6020 = vld [vmem:[%s6 + $0x158] sm:$0xff]
    %v6021 = vld [vmem:[%s6 + $0x160] sm:$0xff]
    %v6022 = vld [vmem:[%s6 + $0x168] sm:$0xff]
    %v6023 = vld [vmem:[%s6 + $0x170] sm:$0xff]
    %v6024 = vld [vmem:[%s6 + $0x178] sm:$0xff]
    %v6025 = vld [vmem:[%s6 + $0x180] sm:$0xff]
    %v6026 = vld [vmem:[%s6 + $0x188] sm:$0xff]
    %v6027 = vld [vmem:[%s6 + $0x190] sm:$0xff]
    %v6028 = vld [vmem:[%s6 + $0x198] sm:$0xff]
    %v6029 = vld [vmem:[%s6 + $0x1a0] sm:$0xff]
    %v6030 = vld [vmem:[%s6 + $0x1a8] sm:$0xff]
    %v6031 = vld [vmem:[%s6 + $0x1b0] sm:$0xff]
    %v6032 = vld [vmem:[%s6 + $0x1b8] sm:$0xff]
    %v6033 = vld [vmem:[%s6 + $0x1c0] sm:$0xff]
    %v6034 = vld [vmem:[%s6 + $0x1c8] sm:$0xff]
    %v6035 = vld [vmem:[%s6 + $0x1d0] sm:$0xff]
    %v6036 = vld [vmem:[%s6 + $0x1d8] sm:$0xff]
    %v6037 = vld [vmem:[%s6 + $0x1e0] sm:$0xff]
    %v6038 = vld [vmem:[%s6 + $0x1e8] sm:$0xff]
    %v6039 = vld [vmem:[%s6 + $0x1f0] sm:$0xff]
    %v6040 = vld [vmem:[%s6 + $0x1f8] sm:$0xff]
    %v6041 = vld [vmem:[%s7] sm:$0xf]
    %v6043 = vlaneseq
    %v6044 = vshrl.u32 %v6043, 7
    %v6045 = vsub.s32 0, %v6044
    %v6046 = vrot.slane %v6041, %v6045
    %v6047 = vlaneseq
    %v6048 = vshrl.u32 %v6047, 7
    %v6049 = vsub.s32 1, %v6048
    %v6050 = vrot.slane %v6041, %v6049
    %v6051 = vlaneseq
    %v6052 = vshrl.u32 %v6051, 7
    %v6053 = vsub.s32 2, %v6052
    %v6054 = vrot.slane %v6041, %v6053
    %v6055 = vlaneseq
    %v6056 = vshrl.u32 %v6055, 7
    %v6057 = vsub.s32 3, %v6056
    %v6058 = vrot.slane %v6041, %v6057
    %6063 = vmatprep.subr.mxu0 %v5978
    %6064 = vmatpush1.msra.mxu0 %v5977
    %6065 = vmatprep.subr.mxu0 %v5982
    %6066 = vmatpush1.msra.mxu0 %v5981
    %6067 = vmatprep.subr.mxu0 %v5986
    %6068 = vmatpush1.msra.mxu0 %v5985
    %6069 = vmatprep.subr.mxu0 %v5990
    %6070 = vmatpush1.msra.mxu0 %v5989
    %6071 = vmatprep.subr.mxu0 %v5994
    %6072 = vmatpush1.msra.mxu0 %v5993
    %6073 = vmatprep.subr.mxu0 %v5998
    %6074 = vmatpush1.msra.mxu0 %v5997
    %6075 = vmatprep.subr.mxu0 %v6002
    %6076 = vmatpush1.msra.mxu0 %v6001
    %6077 = vmatprep.subr.mxu0 %v6006
    %6078 = vmatpush1.msra.mxu0 %v6005
    %6079 = vmatprep.subr.mxu0 %v6010
    %6080 = vmatpush1.msra.mxu0 %v6009
    %6081 = vmatprep.subr.mxu0 %v6014
    %6082 = vmatpush1.msra.mxu0 %v6013
    %6083 = vmatprep.subr.mxu0 %v6018
    %6084 = vmatpush1.msra.mxu0 %v6017
    %6085 = vmatprep.subr.mxu0 %v6022
    %6086 = vmatpush1.msra.mxu0 %v6021
    %6087 = vmatprep.subr.mxu0 %v6026
    %6088 = vmatpush1.msra.mxu0 %v6025
    %6089 = vmatprep.subr.mxu0 %v6030
    %6090 = vmatpush1.msra.mxu0 %v6029
    %6091 = vmatprep.subr.mxu0 %v6034
    %6092 = vmatpush1.msra.mxu0 %v6033
    %6093 = vmatprep.subr.mxu0 %v6038
    %6094 = vmatpush1.msra.mxu0 %v6037
    %6095 = vmatprep.subr.mxu0 0.0
    %6096 = vmatpush1.msra.mxu0 0.0
    %6097 = vmatprep.subr.mxu0 0.0
    %6098 = vmatpush1.msra.mxu0 0.0
    %6099 = vmatprep.subr.mxu0 0.0
    %6100 = vmatpush1.msra.mxu0 0.0
    %6101 = vmatprep.subr.mxu0 0.0
    %6102 = vmatpush1.msra.mxu0 0.0
    %6103 = vmatprep.subr.mxu0 0.0
    %6104 = vmatpush1.msra.mxu0 0.0
    %6105 = vmatprep.subr.mxu0 0.0
    %6106 = vmatpush1.msra.mxu0 0.0
    %6107 = vmatprep.subr.mxu0 0.0
    %6108 = vmatpush1.msra.mxu0 0.0
    %6109 = vmatprep.subr.mxu0 0.0
    %6110 = vmatpush1.msra.mxu0 0.0
    %6111 = vmatprep.subr.mxu0 0.0
    %6112 = vmatpush1.msra.mxu0 0.0
    %6113 = vmatprep.subr.mxu0 0.0
    %6114 = vmatpush1.msra.mxu0 0.0
    %6115 = vmatprep.subr.mxu0 0.0
    %6116 = vmatpush1.msra.mxu0 0.0
    %6117 = vmatprep.subr.mxu0 0.0
    %6118 = vmatpush1.msra.mxu0 0.0
    %6119 = vmatprep.subr.mxu0 0.0
    %6120 = vmatpush1.msra.mxu0 0.0
    %6121 = vmatprep.subr.mxu0 0.0
    %6122 = vmatpush1.msra.mxu0 0.0
    %6123 = vmatprep.subr.mxu0 0.0
    %6124 = vmatpush1.msra.mxu0 0.0
    %6125 = vmatprep.subr.mxu0 0.0
    %6126 = vmatpush1.msra.mxu0 0.0
    %6127 = vmatprep.mubr.f32.mxu0 0.0
    %6128 = vmatmul.mubr.f32.gmra.mrb[0].mxu0 %v5945
    %v6129 = vpop.f32.mrb[0].mxu0
    %v6130 = vadd.f32 %v6046, %v6129
    %v6131 = vpop.f32.mrb[0].mxu0
    %v6132 = vadd.f32 %v6050, %v6131
    %6133 = vmatprep.mubr.f32.mxu0 0.0
    %6134 = vmatmul.mubr.f32.gmra.mrb[0].mxu0 %v5946
    %v6135 = vpop.f32.mrb[0].mxu0
    %v6136 = vadd.f32 %v6046, %v6135
    %v6137 = vpop.f32.mrb[0].mxu0
    %v6138 = vadd.f32 %v6050, %v6137
    %6139 = vmatprep.mubr.f32.mxu0 0.0
    %6140 = vmatmul.mubr.f32.gmra.mrb[0].mxu0 %v5947
    %v6141 = vpop.f32.mrb[0].mxu0
    %v6142 = vadd.f32 %v6046, %v6141
    %v6143 = vpop.f32.mrb[0].mxu0
    %v6144 = vadd.f32 %v6050, %v6143
    %6145 = vmatprep.mubr.f32.mxu0 0.0
    %6146 = vmatmul.mubr.f32.gmra.mrb[0].mxu0 %v5948
    %v6147 = vpop.f32.mrb[0].mxu0
    %v6148 = vadd.f32 %v6046, %v6147
    %v6149 = vpop.f32.mrb[0].mxu0
    %v6150 = vadd.f32 %v6050, %v6149
    %6151 = vmatprep.mubr.f32.mxu0 0.0
    %6152 = vmatmul.mubr.f32.gmra.mrb[0].mxu0 %v5949
    %v6153 = vpop.f32.mrb[0].mxu0
    %v6154 = vadd.f32 %v6046, %v6153
    %v6155 = vpop.f32.mrb[0].mxu0
    %v6156 = vadd.f32 %v6050, %v6155
    %6157 = vmatprep.mubr.f32.mxu0 0.0
    %6158 = vmatmul.mubr.f32.gmra.mrb[0].mxu0 %v5950
    %v6159 = vpop.f32.mrb[0].mxu0
    %v6160 = vadd.f32 %v6046, %v6159
    %v6161 = vpop.f32.mrb[0].mxu0
    %v6162 = vadd.f32 %v6050, %v6161
    %6163 = vmatprep.mubr.f32.mxu0 0.0
    %6164 = vmatmul.mubr.f32.gmra.mrb[0].mxu0 %v5951
    %v6165 = vpop.f32.mrb[0].mxu0
    %v6166 = vadd.f32 %v6046, %v6165
    %v6167 = vpop.f32.mrb[0].mxu0
    %v6168 = vadd.f32 %v6050, %v6167
    %6169 = vmatprep.mubr.f32.mxu0 0.0
    %6170 = vmatmul.mubr.f32.gmra.mrb[0].mxu0 %v5952
    %v6171 = vpop.f32.mrb[0].mxu0
    %v6172 = vadd.f32 %v6046, %v6171
    %v6173 = vpop.f32.mrb[0].mxu0
    %v6174 = vadd.f32 %v6050, %v6173
    %6175 = vmatprep.mubr.f32.mxu0 0.0
    %6176 = vmatmul.mubr.f32.gmra.mrb[0].mxu0 %v5953
    %v6177 = vpop.f32.mrb[0].mxu0
    %v6178 = vadd.f32 %v6046, %v6177
    %v6179 = vpop.f32.mrb[0].mxu0
    %v6180 = vadd.f32 %v6050, %v6179
    %6181 = vmatprep.mubr.f32.mxu0 0.0
    %6182 = vmatmul.mubr.f32.gmra.mrb[0].mxu0 %v5954
    %v6183 = vpop.f32.mrb[0].mxu0
    %v6184 = vadd.f32 %v6046, %v6183
    %v6185 = vpop.f32.mrb[0].mxu0
    %v6186 = vadd.f32 %v6050, %v6185
    %6187 = vmatprep.mubr.f32.mxu0 0.0
    %6188 = vmatmul.mubr.f32.gmra.mrb[0].mxu0 %v5955
    %v6189 = vpop.f32.mrb[0].mxu0
    %v6190 = vadd.f32 %v6046, %v6189
    %v6191 = vpop.f32.mrb[0].mxu0
    %v6192 = vadd.f32 %v6050, %v6191
    %6193 = vmatprep.mubr.f32.mxu0 0.0
    %6194 = vmatmul.mubr.f32.gmra.mrb[0].mxu0 %v5956
    %v6195 = vpop.f32.mrb[0].mxu0
    %v6196 = vadd.f32 %v6046, %v6195
    %v6197 = vpop.f32.mrb[0].mxu0
    %v6198 = vadd.f32 %v6050, %v6197
    %6199 = vmatprep.mubr.f32.mxu0 0.0
    %6200 = vmatmul.mubr.f32.gmra.mrb[0].mxu0 %v5957
    %v6201 = vpop.f32.mrb[0].mxu0
    %v6202 = vadd.f32 %v6046, %v6201
    %v6203 = vpop.f32.mrb[0].mxu0
    %v6204 = vadd.f32 %v6050, %v6203
    %6205 = vmatprep.mubr.f32.mxu0 0.0
    %6206 = vmatmul.mubr.f32.gmra.mrb[0].mxu0 %v5958
    %v6207 = vpop.f32.mrb[0].mxu0
    %v6208 = vadd.f32 %v6046, %v6207
    %v6209 = vpop.f32.mrb[0].mxu0
    %v6210 = vadd.f32 %v6050, %v6209
    %6211 = vmatprep.mubr.f32.mxu0 0.0
    %6212 = vmatmul.mubr.f32.gmra.mrb[0].mxu0 %v5959
    %v6213 = vpop.f32.mrb[0].mxu0
    %v6214 = vadd.f32 %v6046, %v6213
    %v6215 = vpop.f32.mrb[0].mxu0
    %v6216 = vadd.f32 %v6050, %v6215
    %6217 = vmatprep.mubr.f32.mxu0 0.0
    %6218 = vmatmul.mubr.f32.gmra.mrb[0].mxu0 %v5960
    %v6219 = vpop.f32.mrb[0].mxu0
    %v6220 = vadd.f32 %v6046, %v6219
    %v6221 = vpop.f32.mrb[0].mxu0
    %v6222 = vadd.f32 %v6050, %v6221
    %6223 = vmatprep.mubr.f32.mxu0 0.0
    %6224 = vmatmul.mubr.f32.gmra.mrb[0].mxu0 %v5961
    %v6225 = vpop.f32.mrb[0].mxu0
    %v6226 = vadd.f32 %v6046, %v6225
    %v6227 = vpop.f32.mrb[0].mxu0
    %v6228 = vadd.f32 %v6050, %v6227
    %6229 = vmatprep.mubr.f32.mxu0 0.0
    %6230 = vmatmul.mubr.f32.gmra.mrb[0].mxu0 %v5962
    %v6231 = vpop.f32.mrb[0].mxu0
    %v6232 = vadd.f32 %v6046, %v6231
    %v6233 = vpop.f32.mrb[0].mxu0
    %v6234 = vadd.f32 %v6050, %v6233
    %6235 = vmatprep.mubr.f32.mxu0 0.0
    %6236 = vmatmul.mubr.f32.gmra.mrb[0].mxu0 %v5963
    %v6237 = vpop.f32.mrb[0].mxu0
    %v6238 = vadd.f32 %v6046, %v6237
    %v6239 = vpop.f32.mrb[0].mxu0
    %v6240 = vadd.f32 %v6050, %v6239
    %6241 = vmatprep.mubr.f32.mxu0 0.0
    %6242 = vmatmul.mubr.f32.gmra.mrb[0].mxu0 %v5964
    %v6243 = vpop.f32.mrb[0].mxu0
    %v6244 = vadd.f32 %v6046, %v6243
    %v6245 = vpop.f32.mrb[0].mxu0
    %v6246 = vadd.f32 %v6050, %v6245
    %6247 = vmatprep.mubr.f32.mxu0 0.0
    %6248 = vmatmul.mubr.f32.gmra.mrb[0].mxu0 %v5965
    %v6249 = vpop.f32.mrb[0].mxu0
    %v6250 = vadd.f32 %v6046, %v6249
    %v6251 = vpop.f32.mrb[0].mxu0
    %v6252 = vadd.f32 %v6050, %v6251
    %6253 = vmatprep.mubr.f32.mxu0 0.0
    %6254 = vmatmul.mubr.f32.gmra.mrb[0].mxu0 %v5966
    %v6255 = vpop.f32.mrb[0].mxu0
    %v6256 = vadd.f32 %v6046, %v6255
    %v6257 = vpop.f32.mrb[0].mxu0
    %v6258 = vadd.f32 %v6050, %v6257
    %6259 = vmatprep.mubr.f32.mxu0 0.0
    %6260 = vmatmul.mubr.f32.gmra.mrb[0].mxu0 %v5967
    %v6261 = vpop.f32.mrb[0].mxu0
    %v6262 = vadd.f32 %v6046, %v6261
    %v6263 = vpop.f32.mrb[0].mxu0
    %v6264 = vadd.f32 %v6050, %v6263
    %6265 = vmatprep.mubr.f32.mxu0 0.0
    %6266 = vmatmul.mubr.f32.gmra.mrb[0].mxu0 %v5968
    %v6267 = vpop.f32.mrb[0].mxu0
    %v6268 = vadd.f32 %v6046, %v6267
    %v6269 = vpop.f32.mrb[0].mxu0
    %v6270 = vadd.f32 %v6050, %v6269
    %6271 = vmatprep.mubr.f32.mxu0 0.0
    %6272 = vmatmul.mubr.f32.gmra.mrb[0].mxu0 %v5969
    %v6273 = vpop.f32.mrb[0].mxu0
    %v6274 = vadd.f32 %v6046, %v6273
    %v6275 = vpop.f32.mrb[0].mxu0
    %v6276 = vadd.f32 %v6050, %v6275
    %6277 = vmatprep.mubr.f32.mxu0 0.0
    %6278 = vmatmul.mubr.f32.gmra.mrb[0].mxu0 %v5970
    %v6279 = vpop.f32.mrb[0].mxu0
    %v6280 = vadd.f32 %v6046, %v6279
    %v6281 = vpop.f32.mrb[0].mxu0
    %v6282 = vadd.f32 %v6050, %v6281
    %6283 = vmatprep.mubr.f32.mxu0 0.0
    %6284 = vmatmul.mubr.f32.gmra.mrb[0].mxu0 %v5971
    %v6285 = vpop.f32.mrb[0].mxu0
    %v6286 = vadd.f32 %v6046, %v6285
    %v6287 = vpop.f32.mrb[0].mxu0
    %v6288 = vadd.f32 %v6050, %v6287
    %6289 = vmatprep.mubr.f32.mxu0 0.0
    %6290 = vmatmul.mubr.f32.gmra.mrb[0].mxu0 %v5972
    %v6291 = vpop.f32.mrb[0].mxu0
    %v6292 = vadd.f32 %v6046, %v6291
    %v6293 = vpop.f32.mrb[0].mxu0
    %v6294 = vadd.f32 %v6050, %v6293
    %6295 = vmatprep.mubr.f32.mxu0 0.0
    %6296 = vmatmul.mubr.f32.gmra.mrb[0].mxu0 %v5973
    %v6297 = vpop.f32.mrb[0].mxu0
    %v6298 = vadd.f32 %v6046, %v6297
    %v6299 = vpop.f32.mrb[0].mxu0
    %v6300 = vadd.f32 %v6050, %v6299
    %6301 = vmatprep.mubr.f32.mxu0 0.0
    %6302 = vmatmul.mubr.f32.gmra.mrb[0].mxu0 %v5974
    %v6303 = vpop.f32.mrb[0].mxu0
    %v6304 = vadd.f32 %v6046, %v6303
    %v6305 = vpop.f32.mrb[0].mxu0
    %v6306 = vadd.f32 %v6050, %v6305
    %6307 = vmatprep.mubr.f32.mxu0 0.0
    %6308 = vmatmul.mubr.f32.gmra.mrb[0].mxu0 %v5975
    %v6309 = vpop.f32.mrb[0].mxu0
    %v6310 = vadd.f32 %v6046, %v6309
    %v6311 = vpop.f32.mrb[0].mxu0
    %v6312 = vadd.f32 %v6050, %v6311
    %6313 = vmatprep.mubr.f32.mxu0 0.0
    %6314 = vmatmul.mubr.f32.gmra.mrb[0].mxu0 %v5976
    %v6315 = vpop.f32.mrb[0].mxu0
    %v6316 = vadd.f32 %v6046, %v6315
    %v6317 = vpop.f32.mrb[0].mxu0
    %v6318 = vadd.f32 %v6050, %v6317
    %6319 = vdwg.mxu0
    %6320 = vmatprep.subr.mxu0 %v5980
    %6321 = vmatpush1.msra.mxu0 %v5979
    %6322 = vmatprep.subr.mxu0 %v5984
    %6323 = vmatpush1.msra.mxu0 %v5983
    %6324 = vmatprep.subr.mxu0 %v5988
    %6325 = vmatpush1.msra.mxu0 %v5987
    %6326 = vmatprep.subr.mxu0 %v5992
    %6327 = vmatpush1.msra.mxu0 %v5991
    %6328 = vmatprep.subr.mxu0 %v5996
    %6329 = vmatpush1.msra.mxu0 %v5995
    %6330 = vmatprep.subr.mxu0 %v6000
    %6331 = vmatpush1.msra.mxu0 %v5999
    %6332 = vmatprep.subr.mxu0 %v6004
    %6333 = vmatpush1.msra.mxu0 %v6003
    %6334 = vmatprep.subr.mxu0 %v6008
    %6335 = vmatpush1.msra.mxu0 %v6007
    %6336 = vmatprep.subr.mxu0 %v6012
    %6337 = vmatpush1.msra.mxu0 %v6011
    %6338 = vmatprep.subr.mxu0 %v6016
    %6339 = vmatpush1.msra.mxu0 %v6015
    %6340 = vmatprep.subr.mxu0 %v6020
    %6341 = vmatpush1.msra.mxu0 %v6019
    %6342 = vmatprep.subr.mxu0 %v6024
    %6343 = vmatpush1.msra.mxu0 %v6023
    %6344 = vmatprep.subr.mxu0 %v6028
    %6345 = vmatpush1.msra.mxu0 %v6027
    %6346 = vmatprep.subr.mxu0 %v6032
    %6347 = vmatpush1.msra.mxu0 %v6031
    %6348 = vmatprep.subr.mxu0 %v6036
    %6349 = vmatpush1.msra.mxu0 %v6035
    %6350 = vmatprep.subr.mxu0 %v6040
    %6351 = vmatpush1.msra.mxu0 %v6039
    %6352 = vmatprep.subr.mxu0 0.0
    %6353 = vmatpush1.msra.mxu0 0.0
    %6354 = vmatprep.subr.mxu0 0.0
    %6355 = vmatpush1.msra.mxu0 0.0
    %6356 = vmatprep.subr.mxu0 0.0
    %6357 = vmatpush1.msra.mxu0 0.0
    %6358 = vmatprep.subr.mxu0 0.0
    %6359 = vmatpush1.msra.mxu0 0.0
    %6360 = vmatprep.subr.mxu0 0.0
    %6361 = vmatpush1.msra.mxu0 0.0
    %6362 = vmatprep.subr.mxu0 0.0
    %6363 = vmatpush1.msra.mxu0 0.0
    %6364 = vmatprep.subr.mxu0 0.0
    %6365 = vmatpush1.msra.mxu0 0.0
    %6366 = vmatprep.subr.mxu0 0.0
    %6367 = vmatpush1.msra.mxu0 0.0
    %6368 = vmatprep.subr.mxu0 0.0
    %6369 = vmatpush1.msra.mxu0 0.0
    %6370 = vmatprep.subr.mxu0 0.0
    %6371 = vmatpush1.msra.mxu0 0.0
    %6372 = vmatprep.subr.mxu0 0.0
    %6373 = vmatpush1.msra.mxu0 0.0
    %6374 = vmatprep.subr.mxu0 0.0
    %6375 = vmatpush1.msra.mxu0 0.0
    %6376 = vmatprep.subr.mxu0 0.0
    %6377 = vmatpush1.msra.mxu0 0.0
    %6378 = vmatprep.subr.mxu0 0.0
    %6379 = vmatpush1.msra.mxu0 0.0
    %6380 = vmatprep.subr.mxu0 0.0
    %6381 = vmatpush1.msra.mxu0 0.0
    %6382 = vmatprep.subr.mxu0 0.0
    %6383 = vmatpush1.msra.mxu0 0.0
    %6384 = vmatprep.mubr.f32.mxu0 0.0
    %6385 = vmatmul.mubr.f32.gmra.mrb[0].mxu0 %v5945
    %v6386 = vpop.f32.mrb[0].mxu0
    %v6387 = vadd.f32 %v6054, %v6386
    %v6388 = vpop.f32.mrb[0].mxu0
    %v6389 = vadd.f32 %v6058, %v6388
    %6390 = vmatprep.mubr.f32.mxu0 0.0
    %6391 = vmatmul.mubr.f32.gmra.mrb[0].mxu0 %v5946
    %v6392 = vpop.f32.mrb[0].mxu0
    %v6393 = vadd.f32 %v6054, %v6392
    %v6394 = vpop.f32.mrb[0].mxu0
    %v6395 = vadd.f32 %v6058, %v6394
    %6396 = vmatprep.mubr.f32.mxu0 0.0
    %6397 = vmatmul.mubr.f32.gmra.mrb[0].mxu0 %v5947
    %v6398 = vpop.f32.mrb[0].mxu0
    %v6399 = vadd.f32 %v6054, %v6398
    %v6400 = vpop.f32.mrb[0].mxu0
    %v6401 = vadd.f32 %v6058, %v6400
    %6402 = vmatprep.mubr.f32.mxu0 0.0
    %6403 = vmatmul.mubr.f32.gmra.mrb[0].mxu0 %v5948
    %v6404 = vpop.f32.mrb[0].mxu0
    %v6405 = vadd.f32 %v6054, %v6404
    %v6406 = vpop.f32.mrb[0].mxu0
    %v6407 = vadd.f32 %v6058, %v6406
    %6408 = vmatprep.mubr.f32.mxu0 0.0
    %6409 = vmatmul.mubr.f32.gmra.mrb[0].mxu0 %v5949
    %v6410 = vpop.f32.mrb[0].mxu0
    %v6411 = vadd.f32 %v6054, %v6410
    %v6412 = vpop.f32.mrb[0].mxu0
    %v6413 = vadd.f32 %v6058, %v6412
    %6414 = vmatprep.mubr.f32.mxu0 0.0
    %6415 = vmatmul.mubr.f32.gmra.mrb[0].mxu0 %v5950
    %v6416 = vpop.f32.mrb[0].mxu0
    %v6417 = vadd.f32 %v6054, %v6416
    %v6418 = vpop.f32.mrb[0].mxu0
    %v6419 = vadd.f32 %v6058, %v6418
    %6420 = vmatprep.mubr.f32.mxu0 0.0
    %6421 = vmatmul.mubr.f32.gmra.mrb[0].mxu0 %v5951
    %v6422 = vpop.f32.mrb[0].mxu0
    %v6423 = vadd.f32 %v6054, %v6422
    %v6424 = vpop.f32.mrb[0].mxu0
    %v6425 = vadd.f32 %v6058, %v6424
    %6426 = vmatprep.mubr.f32.mxu0 0.0
    %6427 = vmatmul.mubr.f32.gmra.mrb[0].mxu0 %v5952
    %v6428 = vpop.f32.mrb[0].mxu0
    %v6429 = vadd.f32 %v6054, %v6428
    %v6430 = vpop.f32.mrb[0].mxu0
    %v6431 = vadd.f32 %v6058, %v6430
    %6432 = vmatprep.mubr.f32.mxu0 0.0
    %6433 = vmatmul.mubr.f32.gmra.mrb[0].mxu0 %v5953
    %v6434 = vpop.f32.mrb[0].mxu0
    %v6435 = vadd.f32 %v6054, %v6434
    %v6436 = vpop.f32.mrb[0].mxu0
    %v6437 = vadd.f32 %v6058, %v6436
    %6438 = vmatprep.mubr.f32.mxu0 0.0
    %6439 = vmatmul.mubr.f32.gmra.mrb[0].mxu0 %v5954
    %v6440 = vpop.f32.mrb[0].mxu0
    %v6441 = vadd.f32 %v6054, %v6440
    %v6442 = vpop.f32.mrb[0].mxu0
    %v6443 = vadd.f32 %v6058, %v6442
    %6444 = vmatprep.mubr.f32.mxu0 0.0
    %6445 = vmatmul.mubr.f32.gmra.mrb[0].mxu0 %v5955
    %v6446 = vpop.f32.mrb[0].mxu0
    %v6447 = vadd.f32 %v6054, %v6446
    %v6448 = vpop.f32.mrb[0].mxu0
    %v6449 = vadd.f32 %v6058, %v6448
    %6450 = vmatprep.mubr.f32.mxu0 0.0
    %6451 = vmatmul.mubr.f32.gmra.mrb[0].mxu0 %v5956
    %v6452 = vpop.f32.mrb[0].mxu0
    %v6453 = vadd.f32 %v6054, %v6452
    %v6454 = vpop.f32.mrb[0].mxu0
    %v6455 = vadd.f32 %v6058, %v6454
    %6456 = vmatprep.mubr.f32.mxu0 0.0
    %6457 = vmatmul.mubr.f32.gmra.mrb[0].mxu0 %v5957
    %v6458 = vpop.f32.mrb[0].mxu0
    %v6459 = vadd.f32 %v6054, %v6458
    %v6460 = vpop.f32.mrb[0].mxu0
    %v6461 = vadd.f32 %v6058, %v6460
    %6462 = vmatprep.mubr.f32.mxu0 0.0
    %6463 = vmatmul.mubr.f32.gmra.mrb[0].mxu0 %v5958
    %v6464 = vpop.f32.mrb[0].mxu0
    %v6465 = vadd.f32 %v6054, %v6464
    %v6466 = vpop.f32.mrb[0].mxu0
    %v6467 = vadd.f32 %v6058, %v6466
    %6468 = vmatprep.mubr.f32.mxu0 0.0
    %6469 = vmatmul.mubr.f32.gmra.mrb[0].mxu0 %v5959
    %v6470 = vpop.f32.mrb[0].mxu0
    %v6471 = vadd.f32 %v6054, %v6470
    %v6472 = vpop.f32.mrb[0].mxu0
    %v6473 = vadd.f32 %v6058, %v6472
    %6474 = vmatprep.mubr.f32.mxu0 0.0
    %6475 = vmatmul.mubr.f32.gmra.mrb[0].mxu0 %v5960
    %v6476 = vpop.f32.mrb[0].mxu0
    %v6477 = vadd.f32 %v6054, %v6476
    %v6478 = vpop.f32.mrb[0].mxu0
    %v6479 = vadd.f32 %v6058, %v6478
    %6480 = vmatprep.mubr.f32.mxu0 0.0
    %6481 = vmatmul.mubr.f32.gmra.mrb[0].mxu0 %v5961
    %v6482 = vpop.f32.mrb[0].mxu0
    %v6483 = vadd.f32 %v6054, %v6482
    %v6484 = vpop.f32.mrb[0].mxu0
    %v6485 = vadd.f32 %v6058, %v6484
    %6486 = vmatprep.mubr.f32.mxu0 0.0
    %6487 = vmatmul.mubr.f32.gmra.mrb[0].mxu0 %v5962
    %v6488 = vpop.f32.mrb[0].mxu0
    %v6489 = vadd.f32 %v6054, %v6488
    %v6490 = vpop.f32.mrb[0].mxu0
    %v6491 = vadd.f32 %v6058, %v6490
    %6492 = vmatprep.mubr.f32.mxu0 0.0
    %6493 = vmatmul.mubr.f32.gmra.mrb[0].mxu0 %v5963
    %v6494 = vpop.f32.mrb[0].mxu0
    %v6495 = vadd.f32 %v6054, %v6494
    %v6496 = vpop.f32.mrb[0].mxu0
    %v6497 = vadd.f32 %v6058, %v6496
    %6498 = vmatprep.mubr.f32.mxu0 0.0
    %6499 = vmatmul.mubr.f32.gmra.mrb[0].mxu0 %v5964
    %v6500 = vpop.f32.mrb[0].mxu0
    %v6501 = vadd.f32 %v6054, %v6500
    %v6502 = vpop.f32.mrb[0].mxu0
    %v6503 = vadd.f32 %v6058, %v6502
    %6504 = vmatprep.mubr.f32.mxu0 0.0
    %6505 = vmatmul.mubr.f32.gmra.mrb[0].mxu0 %v5965
    %v6506 = vpop.f32.mrb[0].mxu0
    %v6507 = vadd.f32 %v6054, %v6506
    %v6508 = vpop.f32.mrb[0].mxu0
    %v6509 = vadd.f32 %v6058, %v6508
    %6510 = vmatprep.mubr.f32.mxu0 0.0
    %6511 = vmatmul.mubr.f32.gmra.mrb[0].mxu0 %v5966
    %v6512 = vpop.f32.mrb[0].mxu0
    %v6513 = vadd.f32 %v6054, %v6512
    %v6514 = vpop.f32.mrb[0].mxu0
    %v6515 = vadd.f32 %v6058, %v6514
    %6516 = vmatprep.mubr.f32.mxu0 0.0
    %6517 = vmatmul.mubr.f32.gmra.mrb[0].mxu0 %v5967
    %v6518 = vpop.f32.mrb[0].mxu0
    %v6519 = vadd.f32 %v6054, %v6518
    %v6520 = vpop.f32.mrb[0].mxu0
    %v6521 = vadd.f32 %v6058, %v6520
    %6522 = vmatprep.mubr.f32.mxu0 0.0
    %6523 = vmatmul.mubr.f32.gmra.mrb[0].mxu0 %v5968
    %v6524 = vpop.f32.mrb[0].mxu0
    %v6525 = vadd.f32 %v6054, %v6524
    %v6526 = vpop.f32.mrb[0].mxu0
    %v6527 = vadd.f32 %v6058, %v6526
    %6528 = vmatprep.mubr.f32.mxu0 0.0
    %6529 = vmatmul.mubr.f32.gmra.mrb[0].mxu0 %v5969
    %v6530 = vpop.f32.mrb[0].mxu0
    %v6531 = vadd.f32 %v6054, %v6530
    %v6532 = vpop.f32.mrb[0].mxu0
    %v6533 = vadd.f32 %v6058, %v6532
    %6534 = vmatprep.mubr.f32.mxu0 0.0
    %6535 = vmatmul.mubr.f32.gmra.mrb[0].mxu0 %v5970
    %v6536 = vpop.f32.mrb[0].mxu0
    %v6537 = vadd.f32 %v6054, %v6536
    %v6538 = vpop.f32.mrb[0].mxu0
    %v6539 = vadd.f32 %v6058, %v6538
    %6540 = vmatprep.mubr.f32.mxu0 0.0
    %6541 = vmatmul.mubr.f32.gmra.mrb[0].mxu0 %v5971
    %v6542 = vpop.f32.mrb[0].mxu0
    %v6543 = vadd.f32 %v6054, %v6542
    %v6544 = vpop.f32.mrb[0].mxu0
    %v6545 = vadd.f32 %v6058, %v6544
    %6546 = vmatprep.mubr.f32.mxu0 0.0
    %6547 = vmatmul.mubr.f32.gmra.mrb[0].mxu0 %v5972
    %v6548 = vpop.f32.mrb[0].mxu0
    %v6549 = vadd.f32 %v6054, %v6548
    %v6550 = vpop.f32.mrb[0].mxu0
    %v6551 = vadd.f32 %v6058, %v6550
    %6552 = vmatprep.mubr.f32.mxu0 0.0
    %6553 = vmatmul.mubr.f32.gmra.mrb[0].mxu0 %v5973
    %v6554 = vpop.f32.mrb[0].mxu0
    %v6555 = vadd.f32 %v6054, %v6554
    %v6556 = vpop.f32.mrb[0].mxu0
    %v6557 = vadd.f32 %v6058, %v6556
    %6558 = vmatprep.mubr.f32.mxu0 0.0
    %6559 = vmatmul.mubr.f32.gmra.mrb[0].mxu0 %v5974
    %v6560 = vpop.f32.mrb[0].mxu0
    %v6561 = vadd.f32 %v6054, %v6560
    %v6562 = vpop.f32.mrb[0].mxu0
    %v6563 = vadd.f32 %v6058, %v6562
    %6564 = vmatprep.mubr.f32.mxu0 0.0
    %6565 = vmatmul.mubr.f32.gmra.mrb[0].mxu0 %v5975
    %v6566 = vpop.f32.mrb[0].mxu0
    %v6567 = vadd.f32 %v6054, %v6566
    %v6568 = vpop.f32.mrb[0].mxu0
    %v6569 = vadd.f32 %v6058, %v6568
    %6570 = vmatprep.mubr.f32.mxu0 0.0
    %6571 = vmatmul.mubr.f32.gmra.mrb[0].mxu0 %v5976
    %v6572 = vpop.f32.mrb[0].mxu0
    %v6573 = vadd.f32 %v6054, %v6572
    %v6574 = vpop.f32.mrb[0].mxu0
    %v6575 = vadd.f32 %v6058, %v6574
    %6576 = vdwg.mxu0
    %6577 = vst [vmem:[#allocation2] sm:$0xff] %v6130
    %6578 = vst [vmem:[#allocation2 + $0x8] sm:$0xff] %v6132
    %6579 = vst [vmem:[#allocation2 + $0x10] sm:$0xff] %v6387
    %6580 = vst [vmem:[#allocation2 + $0x18] sm:$0xff] %v6389
    %6581 = vst [vmem:[#allocation2 + $0x20] sm:$0xff] %v6136
    %6582 = vst [vmem:[#allocation2 + $0x28] sm:$0xff] %v6138
    %6583 = vst [vmem:[#allocation2 + $0x30] sm:$0xff] %v6393
    %6584 = vst [vmem:[#allocation2 + $0x38] sm:$0xff] %v6395
    %6585 = vst [vmem:[#allocation2 + $0x40] sm:$0xff] %v6142
    %6586 = vst [vmem:[#allocation2 + $0x48] sm:$0xff] %v6144
    %6587 = vst [vmem:[#allocation2 + $0x50] sm:$0xff] %v6399
    %6588 = vst [vmem:[#allocation2 + $0x58] sm:$0xff] %v6401
    %6589 = vst [vmem:[#allocation2 + $0x60] sm:$0xff] %v6148
    %6590 = vst [vmem:[#allocation2 + $0x68] sm:$0xff] %v6150
    %6591 = vst [vmem:[#allocation2 + $0x70] sm:$0xff] %v6405
    %6592 = vst [vmem:[#allocation2 + $0x78] sm:$0xff] %v6407
    %6593 = vst [vmem:[#allocation2 + $0x80] sm:$0xff] %v6154
    %6594 = vst [vmem:[#allocation2 + $0x88] sm:$0xff] %v6156
    %6595 = vst [vmem:[#allocation2 + $0x90] sm:$0xff] %v6411
    %6596 = vst [vmem:[#allocation2 + $0x98] sm:$0xff] %v6413
    %6597 = vst [vmem:[#allocation2 + $0xa0] sm:$0xff] %v6160
    %6598 = vst [vmem:[#allocation2 + $0xa8] sm:$0xff] %v6162
    %6599 = vst [vmem:[#allocation2 + $0xb0] sm:$0xff] %v6417
    %6600 = vst [vmem:[#allocation2 + $0xb8] sm:$0xff] %v6419
    %6601 = vst [vmem:[#allocation2 + $0xc0] sm:$0xff] %v6166
    %6602 = vst [vmem:[#allocation2 + $0xc8] sm:$0xff] %v6168
    %6603 = vst [vmem:[#allocation2 + $0xd0] sm:$0xff] %v6423
    %6604 = vst [vmem:[#allocation2 + $0xd8] sm:$0xff] %v6425
    %6605 = vst [vmem:[#allocation2 + $0xe0] sm:$0xff] %v6172
    %6606 = vst [vmem:[#allocation2 + $0xe8] sm:$0xff] %v6174
    %6607 = vst [vmem:[#allocation2 + $0xf0] sm:$0xff] %v6429
    %6608 = vst [vmem:[#allocation2 + $0xf8] sm:$0xff] %v6431
    %6609 = vst [vmem:[#allocation2 + $0x100] sm:$0xff] %v6178
    %6610 = vst [vmem:[#allocation2 + $0x108] sm:$0xff] %v6180
    %6611 = vst [vmem:[#allocation2 + $0x110] sm:$0xff] %v6435
    %6612 = vst [vmem:[#allocation2 + $0x118] sm:$0xff] %v6437
    %6613 = vst [vmem:[#allocation2 + $0x120] sm:$0xff] %v6184
    %6614 = vst [vmem:[#allocation2 + $0x128] sm:$0xff] %v6186
    %6615 = vst [vmem:[#allocation2 + $0x130] sm:$0xff] %v6441
    %6616 = vst [vmem:[#allocation2 + $0x138] sm:$0xff] %v6443
    %6617 = vst [vmem:[#allocation2 + $0x140] sm:$0xff] %v6190
    %6618 = vst [vmem:[#allocation2 + $0x148] sm:$0xff] %v6192
    %6619 = vst [vmem:[#allocation2 + $0x150] sm:$0xff] %v6447
    %6620 = vst [vmem:[#allocation2 + $0x158] sm:$0xff] %v6449
    %6621 = vst [vmem:[#allocation2 + $0x160] sm:$0xff] %v6196
    %6622 = vst [vmem:[#allocation2 + $0x168] sm:$0xff] %v6198
    %6623 = vst [vmem:[#allocation2 + $0x170] sm:$0xff] %v6453
    %6624 = vst [vmem:[#allocation2 + $0x178] sm:$0xff] %v6455
    %6625 = vst [vmem:[#allocation2 + $0x180] sm:$0xff] %v6202
    %6626 = vst [vmem:[#allocation2 + $0x188] sm:$0xff] %v6204
    %6627 = vst [vmem:[#allocation2 + $0x190] sm:$0xff] %v6459
    %6628 = vst [vmem:[#allocation2 + $0x198] sm:$0xff] %v6461
    %6629 = vst [vmem:[#allocation2 + $0x1a0] sm:$0xff] %v6208
    %6630 = vst [vmem:[#allocation2 + $0x1a8] sm:$0xff] %v6210
    %6631 = vst [vmem:[#allocation2 + $0x1b0] sm:$0xff] %v6465
    %6632 = vst [vmem:[#allocation2 + $0x1b8] sm:$0xff] %v6467
    %6633 = vst [vmem:[#allocation2 + $0x1c0] sm:$0xff] %v6214
    %6634 = vst [vmem:[#allocation2 + $0x1c8] sm:$0xff] %v6216
    %6635 = vst [vmem:[#allocation2 + $0x1d0] sm:$0xff] %v6471
    %6636 = vst [vmem:[#allocation2 + $0x1d8] sm:$0xff] %v6473
    %6637 = vst [vmem:[#allocation2 + $0x1e0] sm:$0xff] %v6220
    %6638 = vst [vmem:[#allocation2 + $0x1e8] sm:$0xff] %v6222
    %6639 = vst [vmem:[#allocation2 + $0x1f0] sm:$0xff] %v6477
    %6640 = vst [vmem:[#allocation2 + $0x1f8] sm:$0xff] %v6479
    %6641 = vst [vmem:[#allocation2 + $0x200] sm:$0xff] %v6226
    %6642 = vst [vmem:[#allocation2 + $0x208] sm:$0xff] %v6228
    %6643 = vst [vmem:[#allocation2 + $0x210] sm:$0xff] %v6483
    %6644 = vst [vmem:[#allocation2 + $0x218] sm:$0xff] %v6485
    %6645 = vst [vmem:[#allocation2 + $0x220] sm:$0xff] %v6232
    %6646 = vst [vmem:[#allocation2 + $0x228] sm:$0xff] %v6234
    %6647 = vst [vmem:[#allocation2 + $0x230] sm:$0xff] %v6489
    %6648 = vst [vmem:[#allocation2 + $0x238] sm:$0xff] %v6491
    %6649 = vst [vmem:[#allocation2 + $0x240] sm:$0xff] %v6238
    %6650 = vst [vmem:[#allocation2 + $0x248] sm:$0xff] %v6240
    %6651 = vst [vmem:[#allocation2 + $0x250] sm:$0xff] %v6495
    %6652 = vst [vmem:[#allocation2 + $0x258] sm:$0xff] %v6497
    %6653 = vst [vmem:[#allocation2 + $0x260] sm:$0xff] %v6244
    %6654 = vst [vmem:[#allocation2 + $0x268] sm:$0xff] %v6246
    %6655 = vst [vmem:[#allocation2 + $0x270] sm:$0xff] %v6501
    %6656 = vst [vmem:[#allocation2 + $0x278] sm:$0xff] %v6503
    %6657 = vst [vmem:[#allocation2 + $0x280] sm:$0xff] %v6250
    %6658 = vst [vmem:[#allocation2 + $0x288] sm:$0xff] %v6252
    %6659 = vst [vmem:[#allocation2 + $0x290] sm:$0xff] %v6507
    %6660 = vst [vmem:[#allocation2 + $0x298] sm:$0xff] %v6509
    %6661 = vst [vmem:[#allocation2 + $0x2a0] sm:$0xff] %v6256
    %6662 = vst [vmem:[#allocation2 + $0x2a8] sm:$0xff] %v6258
    %6663 = vst [vmem:[#allocation2 + $0x2b0] sm:$0xff] %v6513
    %6664 = vst [vmem:[#allocation2 + $0x2b8] sm:$0xff] %v6515
    %6665 = vst [vmem:[#allocation2 + $0x2c0] sm:$0xff] %v6262
    %6666 = vst [vmem:[#allocation2 + $0x2c8] sm:$0xff] %v6264
    %6667 = vst [vmem:[#allocation2 + $0x2d0] sm:$0xff] %v6519
    %6668 = vst [vmem:[#allocation2 + $0x2d8] sm:$0xff] %v6521
    %6669 = vst [vmem:[#allocation2 + $0x2e0] sm:$0xff] %v6268
    %6670 = vst [vmem:[#allocation2 + $0x2e8] sm:$0xff] %v6270
    %6671 = vst [vmem:[#allocation2 + $0x2f0] sm:$0xff] %v6525
    %6672 = vst [vmem:[#allocation2 + $0x2f8] sm:$0xff] %v6527
    %6673 = vst [vmem:[#allocation2 + $0x300] sm:$0xff] %v6274
    %6674 = vst [vmem:[#allocation2 + $0x308] sm:$0xff] %v6276
    %6675 = vst [vmem:[#allocation2 + $0x310] sm:$0xff] %v6531
    %6676 = vst [vmem:[#allocation2 + $0x318] sm:$0xff] %v6533
    %6677 = vst [vmem:[#allocation2 + $0x320] sm:$0xff] %v6280
    %6678 = vst [vmem:[#allocation2 + $0x328] sm:$0xff] %v6282
    %6679 = vst [vmem:[#allocation2 + $0x330] sm:$0xff] %v6537
    %6680 = vst [vmem:[#allocation2 + $0x338] sm:$0xff] %v6539
    %6681 = vst [vmem:[#allocation2 + $0x340] sm:$0xff] %v6286
    %6682 = vst [vmem:[#allocation2 + $0x348] sm:$0xff] %v6288
    %6683 = vst [vmem:[#allocation2 + $0x350] sm:$0xff] %v6543
    %6684 = vst [vmem:[#allocation2 + $0x358] sm:$0xff] %v6545
    %6685 = vst [vmem:[#allocation2 + $0x360] sm:$0xff] %v6292
    %6686 = vst [vmem:[#allocation2 + $0x368] sm:$0xff] %v6294
    %6687 = vst [vmem:[#allocation2 + $0x370] sm:$0xff] %v6549
    %6688 = vst [vmem:[#allocation2 + $0x378] sm:$0xff] %v6551
    %6689 = vst [vmem:[#allocation2 + $0x380] sm:$0xff] %v6298
    %6690 = vst [vmem:[#allocation2 + $0x388] sm:$0xff] %v6300
    %6691 = vst [vmem:[#allocation2 + $0x390] sm:$0xff] %v6555
    %6692 = vst [vmem:[#allocation2 + $0x398] sm:$0xff] %v6557
    %6693 = vst [vmem:[#allocation2 + $0x3a0] sm:$0xff] %v6304
    %6694 = vst [vmem:[#allocation2 + $0x3a8] sm:$0xff] %v6306
    %6695 = vst [vmem:[#allocation2 + $0x3b0] sm:$0xff] %v6561
    %6696 = vst [vmem:[#allocation2 + $0x3b8] sm:$0xff] %v6563
    %6697 = vst [vmem:[#allocation2 + $0x3c0] sm:$0xff] %v6310
    %6698 = vst [vmem:[#allocation2 + $0x3c8] sm:$0xff] %v6312
    %6699 = vst [vmem:[#allocation2 + $0x3d0] sm:$0xff] %v6567
    %6700 = vst [vmem:[#allocation2 + $0x3d8] sm:$0xff] %v6569
    %6701 = vst [vmem:[#allocation2 + $0x3e0] sm:$0xff] %v6316
    %6702 = vst [vmem:[#allocation2 + $0x3e8] sm:$0xff] %v6318
    %6703 = vst [vmem:[#allocation2 + $0x3f0] sm:$0xff] %v6573
    %6704 = vst [vmem:[#allocation2 + $0x3f8] sm:$0xff] %v6575
    loop: start=0, step=1, limit=4
    $region74: #{forward.1} parent=1 // loop_pre_header
      _
    $region75: #{forward.1} parent=1 // loop_header
      %s6706 = sphi 0, %s6710
      %p6707 = scmp.ge.s32.totalorder %s6706, 4
      %v6711 = vphi 0.0, %v8150
      %v6712 = vphi 0.0, %v8148
      %v6713 = vphi 0.0, %v8316
      %v6714 = vphi 0.0, %v8314
    $region76: #{forward.1} parent=1 // loop_header_branch
      %6709 = sbr.rel (%p6707) target = $region80
    $region77: #{forward.1} parent=1 // loop_body
      %s6715 = smul.u32 %s6706, 32
      %s6716 = sshra.s32 %s6715, 3
      %s6717 = sand.u32 %s6715, 7
      %s6718 = smul.u32 %s6716, 4
      %s6719 = smul.addr %s6718, 8
      %s6720 = scalar_lea.vmem [#allocation2], %s6719
      %v6721 = vld [vmem:[%s6720] sm:$0xff]
      %v6722 = vld [vmem:[%s6720 + $0x8] sm:$0xff]
      %v6723 = vld [vmem:[%s6720 + $0x10] sm:$0xff]
      %v6724 = vld [vmem:[%s6720 + $0x18] sm:$0xff]
      %v6725 = vld [vmem:[#allocation5] sm:$0xff]
      %v6726 = vld [vmem:[#allocation5 + $0x8] sm:$0xff]
      %v6727 = vld [vmem:[#allocation5 + $0x10] sm:$0xff]
      %v6728 = vld [vmem:[#allocation5 + $0x18] sm:$0xff]
      %v6729 = vld [vmem:[#allocation5 + $0x20] sm:$0xff]
      %v6730 = vld [vmem:[#allocation5 + $0x28] sm:$0xff]
      %v6731 = vld [vmem:[#allocation5 + $0x30] sm:$0xff]
      %v6732 = vld [vmem:[#allocation5 + $0x38] sm:$0xff]
      %v6733 = vld [vmem:[#allocation5 + $0x40] sm:$0xff]
      %v6734 = vld [vmem:[#allocation5 + $0x48] sm:$0xff]
      %v6735 = vld [vmem:[#allocation5 + $0x50] sm:$0xff]
      %v6736 = vld [vmem:[#allocation5 + $0x58] sm:$0xff]
      %v6737 = vld [vmem:[#allocation5 + $0x60] sm:$0xff]
      %v6738 = vld [vmem:[#allocation5 + $0x68] sm:$0xff]
      %v6739 = vld [vmem:[#allocation5 + $0x70] sm:$0xff]
      %v6740 = vld [vmem:[#allocation5 + $0x78] sm:$0xff]
      %v6741 = vld [vmem:[#allocation5 + $0x80] sm:$0xff]
      %v6742 = vld [vmem:[#allocation5 + $0x88] sm:$0xff]
      %v6743 = vld [vmem:[#allocation5 + $0x90] sm:$0xff]
      %v6744 = vld [vmem:[#allocation5 + $0x98] sm:$0xff]
      %v6745 = vld [vmem:[#allocation5 + $0xa0] sm:$0xff]
      %v6746 = vld [vmem:[#allocation5 + $0xa8] sm:$0xff]
      %v6747 = vld [vmem:[#allocation5 + $0xb0] sm:$0xff]
      %v6748 = vld [vmem:[#allocation5 + $0xb8] sm:$0xff]
      %v6749 = vld [vmem:[#allocation5 + $0xc0] sm:$0xff]
      %v6750 = vld [vmem:[#allocation5 + $0xc8] sm:$0xff]
      %v6751 = vld [vmem:[#allocation5 + $0xd0] sm:$0xff]
      %v6752 = vld [vmem:[#allocation5 + $0xd8] sm:$0xff]
      %v6753 = vld [vmem:[#allocation5 + $0xe0] sm:$0xff]
      %v6754 = vld [vmem:[#allocation5 + $0xe8] sm:$0xff]
      %v6755 = vld [vmem:[#allocation5 + $0xf0] sm:$0xff]
      %v6756 = vld [vmem:[#allocation5 + $0xf8] sm:$0xff]
      %v6757 = vld [vmem:[#allocation5 + $0x100] sm:$0xff]
      %v6758 = vld [vmem:[#allocation5 + $0x108] sm:$0xff]
      %v6759 = vld [vmem:[#allocation5 + $0x110] sm:$0xff]
      %v6760 = vld [vmem:[#allocation5 + $0x118] sm:$0xff]
      %v6761 = vld [vmem:[#allocation5 + $0x120] sm:$0xff]
      %v6762 = vld [vmem:[#allocation5 + $0x128] sm:$0xff]
      %v6763 = vld [vmem:[#allocation5 + $0x130] sm:$0xff]
      %v6764 = vld [vmem:[#allocation5 + $0x138] sm:$0xff]
      %v6765 = vld [vmem:[#allocation5 + $0x140] sm:$0xff]
      %v6766 = vld [vmem:[#allocation5 + $0x148] sm:$0xff]
      %v6767 = vld [vmem:[#allocation5 + $0x150] sm:$0xff]
      %v6768 = vld [vmem:[#allocation5 + $0x158] sm:$0xff]
      %v6769 = vld [vmem:[#allocation5 + $0x160] sm:$0xff]
      %v6770 = vld [vmem:[#allocation5 + $0x168] sm:$0xff]
      %v6771 = vld [vmem:[#allocation5 + $0x170] sm:$0xff]
      %v6772 = vld [vmem:[#allocation5 + $0x178] sm:$0xff]
      %v6773 = vld [vmem:[#allocation5 + $0x180] sm:$0xff]
      %v6774 = vld [vmem:[#allocation5 + $0x188] sm:$0xff]
      %v6775 = vld [vmem:[#allocation5 + $0x190] sm:$0xff]
      %v6776 = vld [vmem:[#allocation5 + $0x198] sm:$0xff]
      %v6777 = vld [vmem:[#allocation5 + $0x1a0] sm:$0xff]
      %v6778 = vld [vmem:[#allocation5 + $0x1a8] sm:$0xff]
      %v6779 = vld [vmem:[#allocation5 + $0x1b0] sm:$0xff]
      %v6780 = vld [vmem:[#allocation5 + $0x1b8] sm:$0xff]
      %v6781 = vld [vmem:[#allocation5 + $0x1c0] sm:$0xff]
      %v6782 = vld [vmem:[#allocation5 + $0x1c8] sm:$0xff]
      %v6783 = vld [vmem:[#allocation5 + $0x1d0] sm:$0xff]
      %v6784 = vld [vmem:[#allocation5 + $0x1d8] sm:$0xff]
      %v6785 = vld [vmem:[#allocation5 + $0x1e0] sm:$0xff]
      %v6786 = vld [vmem:[#allocation5 + $0x1e8] sm:$0xff]
      %v6787 = vld [vmem:[#allocation5 + $0x1f0] sm:$0xff]
      %v6788 = vld [vmem:[#allocation5 + $0x1f8] sm:$0xff]
      %6789 = vmatprep.subr.mxu0 %v6726
      %6790 = vmatpush1.msra.mxu0 %v6725
      %6791 = vmatprep.subr.mxu0 %v6730
      %6792 = vmatpush1.msra.mxu0 %v6729
      %6793 = vmatprep.subr.mxu0 %v6734
      %6794 = vmatpush1.msra.mxu0 %v6733
      %6795 = vmatprep.subr.mxu0 %v6738
      %6796 = vmatpush1.msra.mxu0 %v6737
      %6797 = vmatprep.subr.mxu0 %v6742
      %6798 = vmatpush1.msra.mxu0 %v6741
      %6799 = vmatprep.subr.mxu0 %v6746
      %6800 = vmatpush1.msra.mxu0 %v6745
      %6801 = vmatprep.subr.mxu0 %v6750
      %6802 = vmatpush1.msra.mxu0 %v6749
      %6803 = vmatprep.subr.mxu0 %v6754
      %6804 = vmatpush1.msra.mxu0 %v6753
      %6805 = vmatprep.subr.mxu0 %v6758
      %6806 = vmatpush1.msra.mxu0 %v6757
      %6807 = vmatprep.subr.mxu0 %v6762
      %6808 = vmatpush1.msra.mxu0 %v6761
      %6809 = vmatprep.subr.mxu0 %v6766
      %6810 = vmatpush1.msra.mxu0 %v6765
      %6811 = vmatprep.subr.mxu0 %v6770
      %6812 = vmatpush1.msra.mxu0 %v6769
      %6813 = vmatprep.subr.mxu0 %v6774
      %6814 = vmatpush1.msra.mxu0 %v6773
      %6815 = vmatprep.subr.mxu0 %v6778
      %6816 = vmatpush1.msra.mxu0 %v6777
      %6817 = vmatprep.subr.mxu0 %v6782
      %6818 = vmatpush1.msra.mxu0 %v6781
      %6819 = vmatprep.subr.mxu0 %v6786
      %6820 = vmatpush1.msra.mxu0 %v6785
      %6821 = vmatprep.subr.mxu0 0.0
      %6822 = vmatpush1.msra.mxu0 0.0
      %6823 = vmatprep.subr.mxu0 0.0
      %6824 = vmatpush1.msra.mxu0 0.0
      %6825 = vmatprep.subr.mxu0 0.0
      %6826 = vmatpush1.msra.mxu0 0.0
      %6827 = vmatprep.subr.mxu0 0.0
      %6828 = vmatpush1.msra.mxu0 0.0
      %6829 = vmatprep.subr.mxu0 0.0
      %6830 = vmatpush1.msra.mxu0 0.0
      %6831 = vmatprep.subr.mxu0 0.0
      %6832 = vmatpush1.msra.mxu0 0.0
      %6833 = vmatprep.subr.mxu0 0.0
      %6834 = vmatpush1.msra.mxu0 0.0
      %6835 = vmatprep.subr.mxu0 0.0
      %6836 = vmatpush1.msra.mxu0 0.0
      %6837 = vmatprep.subr.mxu0 0.0
      %6838 = vmatpush1.msra.mxu0 0.0
      %6839 = vmatprep.subr.mxu0 0.0
      %6840 = vmatpush1.msra.mxu0 0.0
      %6841 = vmatprep.subr.mxu0 0.0
      %6842 = vmatpush1.msra.mxu0 0.0
      %6843 = vmatprep.subr.mxu0 0.0
      %6844 = vmatpush1.msra.mxu0 0.0
      %6845 = vmatprep.subr.mxu0 0.0
      %6846 = vmatpush1.msra.mxu0 0.0
      %6847 = vmatprep.subr.mxu0 0.0
      %6848 = vmatpush1.msra.mxu0 0.0
      %6849 = vmatprep.subr.mxu0 0.0
      %6850 = vmatpush1.msra.mxu0 0.0
      %6851 = vmatprep.subr.mxu0 0.0
      %6852 = vmatpush1.msra.mxu0 0.0
      %6853 = vmatprep.mubr.f32.mxu0 0.0
      %6854 = vmatmul.mubr.f32.gmra.mrb[0].mxu0 %v6711
      %v6855 = vpop.f32.mrb[0].mxu0
      %v6856 = vadd.f32 0.0, %v6855
      %v6857 = vpop.f32.mrb[0].mxu0
      %v6858 = vadd.f32 0.0, %v6857
      %6859 = vdwg.mxu0
      %6860 = vmatprep.subr.mxu0 %v6728
      %6861 = vmatpush1.msra.mxu0 %v6727
      %6862 = vmatprep.subr.mxu0 %v6732
      %6863 = vmatpush1.msra.mxu0 %v6731
      %6864 = vmatprep.subr.mxu0 %v6736
      %6865 = vmatpush1.msra.mxu0 %v6735
      %6866 = vmatprep.subr.mxu0 %v6740
      %6867 = vmatpush1.msra.mxu0 %v6739
      %6868 = vmatprep.subr.mxu0 %v6744
      %6869 = vmatpush1.msra.mxu0 %v6743
      %6870 = vmatprep.subr.mxu0 %v6748
      %6871 = vmatpush1.msra.mxu0 %v6747
      %6872 = vmatprep.subr.mxu0 %v6752
      %6873 = vmatpush1.msra.mxu0 %v6751
      %6874 = vmatprep.subr.mxu0 %v6756
      %6875 = vmatpush1.msra.mxu0 %v6755
      %6876 = vmatprep.subr.mxu0 %v6760
      %6877 = vmatpush1.msra.mxu0 %v6759
      %6878 = vmatprep.subr.mxu0 %v6764
      %6879 = vmatpush1.msra.mxu0 %v6763
      %6880 = vmatprep.subr.mxu0 %v6768
      %6881 = vmatpush1.msra.mxu0 %v6767
      %6882 = vmatprep.subr.mxu0 %v6772
      %6883 = vmatpush1.msra.mxu0 %v6771
      %6884 = vmatprep.subr.mxu0 %v6776
      %6885 = vmatpush1.msra.mxu0 %v6775
      %6886 = vmatprep.subr.mxu0 %v6780
      %6887 = vmatpush1.msra.mxu0 %v6779
      %6888 = vmatprep.subr.mxu0 %v6784
      %6889 = vmatpush1.msra.mxu0 %v6783
      %6890 = vmatprep.subr.mxu0 %v6788
      %6891 = vmatpush1.msra.mxu0 %v6787
      %6892 = vmatprep.subr.mxu0 0.0
      %6893 = vmatpush1.msra.mxu0 0.0
      %6894 = vmatprep.subr.mxu0 0.0
      %6895 = vmatpush1.msra.mxu0 0.0
      %6896 = vmatprep.subr.mxu0 0.0
      %6897 = vmatpush1.msra.mxu0 0.0
      %6898 = vmatprep.subr.mxu0 0.0
      %6899 = vmatpush1.msra.mxu0 0.0
      %6900 = vmatprep.subr.mxu0 0.0
      %6901 = vmatpush1.msra.mxu0 0.0
      %6902 = vmatprep.subr.mxu0 0.0
      %6903 = vmatpush1.msra.mxu0 0.0
      %6904 = vmatprep.subr.mxu0 0.0
      %6905 = vmatpush1.msra.mxu0 0.0
      %6906 = vmatprep.subr.mxu0 0.0
      %6907 = vmatpush1.msra.mxu0 0.0
      %6908 = vmatprep.subr.mxu0 0.0
      %6909 = vmatpush1.msra.mxu0 0.0
      %6910 = vmatprep.subr.mxu0 0.0
      %6911 = vmatpush1.msra.mxu0 0.0
      %6912 = vmatprep.subr.mxu0 0.0
      %6913 = vmatpush1.msra.mxu0 0.0
      %6914 = vmatprep.subr.mxu0 0.0
      %6915 = vmatpush1.msra.mxu0 0.0
      %6916 = vmatprep.subr.mxu0 0.0
      %6917 = vmatpush1.msra.mxu0 0.0
      %6918 = vmatprep.subr.mxu0 0.0
      %6919 = vmatpush1.msra.mxu0 0.0
      %6920 = vmatprep.subr.mxu0 0.0
      %6921 = vmatpush1.msra.mxu0 0.0
      %6922 = vmatprep.subr.mxu0 0.0
      %6923 = vmatpush1.msra.mxu0 0.0
      %6924 = vmatprep.mubr.f32.mxu0 0.0
      %6925 = vmatmul.mubr.f32.gmra.mrb[0].mxu0 %v6711
      %v6926 = vpop.f32.mrb[0].mxu0
      %v6927 = vadd.f32 0.0, %v6926
      %v6928 = vpop.f32.mrb[0].mxu0
      %v6929 = vadd.f32 0.0, %v6928
      %6930 = vdwg.mxu0
      %v6931 = vadd.f32 %v6721, %v6856
      %v6932 = vadd.f32 %v6722, %v6858
      %v6933 = vadd.f32 %v6723, %v6927
      %v6934 = vadd.f32 %v6724, %v6929
      %v6935 = vxor.u32 %v6931, 2147483648
      %v6936 = vmul.f32 %v6935, 1.442695
      %v6937 = vpow.pop %v6936
      %v6938 = vadd.f32 %v6937, 1.0
      %v6939 = vrcp.pop %v6938
      %v6940 = vmul.f32 1.0, %v6939
      %v6941 = vxor.u32 %v6932, 2147483648
      %v6942 = vmul.f32 %v6941, 1.442695
      %v6943 = vpow.pop %v6942
      %v6944 = vadd.f32 %v6943, 1.0
      %v6945 = vrcp.pop %v6944
      %v6946 = vmul.f32 1.0, %v6945
      %v6947 = vtanh.pop %v6933
      %v6948 = vxor.u32 %v6934, 2147483648
      %v6949 = vmul.f32 %v6948, 1.442695
      %v6950 = vpow.pop %v6949
      %v6951 = vadd.f32 %v6950, 1.0
      %v6952 = vrcp.pop %v6951
      %v6953 = vmul.f32 1.0, %v6952
      %v6954 = vmul.f32 %v6946, %v6712
      %v6955 = vmul.f32 %v6940, %v6947
      %v6956 = vadd.f32 %v6954, %v6955
      %v6957 = vtanh.pop %v6956
      %v6958 = vmul.f32 %v6953, %v6957
      %v6959 = vld [vmem:[#allocation7] sm:$0xff]
      %v6960 = vld [vmem:[#allocation7 + $0x8] sm:$0xff]
      %v6961 = vld [vmem:[#allocation7 + $0x10] sm:$0xff]
      %v6962 = vld [vmem:[#allocation7 + $0x18] sm:$0xff]
      %v6963 = vld [vmem:[#allocation7 + $0x20] sm:$0xff]
      %v6964 = vld [vmem:[#allocation7 + $0x28] sm:$0xff]
      %v6965 = vld [vmem:[#allocation7 + $0x30] sm:$0xff]
      %v6966 = vld [vmem:[#allocation7 + $0x38] sm:$0xff]
      %v6967 = vld [vmem:[#allocation7 + $0x40] sm:$0xff]
      %v6968 = vld [vmem:[#allocation7 + $0x48] sm:$0xff]
      %v6969 = vld [vmem:[#allocation7 + $0x50] sm:$0xff]
      %v6970 = vld [vmem:[#allocation7 + $0x58] sm:$0xff]
      %v6971 = vld [vmem:[#allocation7 + $0x60] sm:$0xff]
      %v6972 = vld [vmem:[#allocation7 + $0x68] sm:$0xff]
      %v6973 = vld [vmem:[#allocation7 + $0x70] sm:$0xff]
      %v6974 = vld [vmem:[#allocation7 + $0x78] sm:$0xff]
      %v6975 = vld [vmem:[#allocation7 + $0x80] sm:$0xff]
      %v6976 = vld [vmem:[#allocation7 + $0x88] sm:$0xff]
      %v6977 = vld [vmem:[#allocation7 + $0x90] sm:$0xff]
      %v6978 = vld [vmem:[#allocation7 + $0x98] sm:$0xff]
      %v6979 = vld [vmem:[#allocation7 + $0xa0] sm:$0xff]
      %v6980 = vld [vmem:[#allocation7 + $0xa8] sm:$0xff]
      %v6981 = vld [vmem:[#allocation7 + $0xb0] sm:$0xff]
      %v6982 = vld [vmem:[#allocation7 + $0xb8] sm:$0xff]
      %v6983 = vld [vmem:[#allocation7 + $0xc0] sm:$0xff]
      %v6984 = vld [vmem:[#allocation7 + $0xc8] sm:$0xff]
      %v6985 = vld [vmem:[#allocation7 + $0xd0] sm:$0xff]
      %v6986 = vld [vmem:[#allocation7 + $0xd8] sm:$0xff]
      %v6987 = vld [vmem:[#allocation7 + $0xe0] sm:$0xff]
      %v6988 = vld [vmem:[#allocation7 + $0xe8] sm:$0xff]
      %v6989 = vld [vmem:[#allocation7 + $0xf0] sm:$0xff]
      %v6990 = vld [vmem:[#allocation7 + $0xf8] sm:$0xff]
      %v6991 = vld [vmem:[#allocation7 + $0x100] sm:$0xff]
      %v6992 = vld [vmem:[#allocation7 + $0x108] sm:$0xff]
      %v6993 = vld [vmem:[#allocation7 + $0x110] sm:$0xff]
      %v6994 = vld [vmem:[#allocation7 + $0x118] sm:$0xff]
      %v6995 = vld [vmem:[#allocation7 + $0x120] sm:$0xff]
      %v6996 = vld [vmem:[#allocation7 + $0x128] sm:$0xff]
      %v6997 = vld [vmem:[#allocation7 + $0x130] sm:$0xff]
      %v6998 = vld [vmem:[#allocation7 + $0x138] sm:$0xff]
      %v6999 = vld [vmem:[#allocation7 + $0x140] sm:$0xff]
      %v7000 = vld [vmem:[#allocation7 + $0x148] sm:$0xff]
      %v7001 = vld [vmem:[#allocation7 + $0x150] sm:$0xff]
      %v7002 = vld [vmem:[#allocation7 + $0x158] sm:$0xff]
      %v7003 = vld [vmem:[#allocation7 + $0x160] sm:$0xff]
      %v7004 = vld [vmem:[#allocation7 + $0x168] sm:$0xff]
      %v7005 = vld [vmem:[#allocation7 + $0x170] sm:$0xff]
      %v7006 = vld [vmem:[#allocation7 + $0x178] sm:$0xff]
      %v7007 = vld [vmem:[#allocation7 + $0x180] sm:$0xff]
      %v7008 = vld [vmem:[#allocation7 + $0x188] sm:$0xff]
      %v7009 = vld [vmem:[#allocation7 + $0x190] sm:$0xff]
      %v7010 = vld [vmem:[#allocation7 + $0x198] sm:$0xff]
      %v7011 = vld [vmem:[#allocation7 + $0x1a0] sm:$0xff]
      %v7012 = vld [vmem:[#allocation7 + $0x1a8] sm:$0xff]
      %v7013 = vld [vmem:[#allocation7 + $0x1b0] sm:$0xff]
      %v7014 = vld [vmem:[#allocation7 + $0x1b8] sm:$0xff]
      %v7015 = vld [vmem:[#allocation7 + $0x1c0] sm:$0xff]
      %v7016 = vld [vmem:[#allocation7 + $0x1c8] sm:$0xff]
      %v7017 = vld [vmem:[#allocation7 + $0x1d0] sm:$0xff]
      %v7018 = vld [vmem:[#allocation7 + $0x1d8] sm:$0xff]
      %v7019 = vld [vmem:[#allocation7 + $0x1e0] sm:$0xff]
      %v7020 = vld [vmem:[#allocation7 + $0x1e8] sm:$0xff]
      %v7021 = vld [vmem:[#allocation7 + $0x1f0] sm:$0xff]
      %v7022 = vld [vmem:[#allocation7 + $0x1f8] sm:$0xff]
      %v7023 = vld [vmem:[#allocation7 + $0x200] sm:$0xff]
      %v7024 = vld [vmem:[#allocation7 + $0x208] sm:$0xff]
      %v7025 = vld [vmem:[#allocation7 + $0x210] sm:$0xff]
      %v7026 = vld [vmem:[#allocation7 + $0x218] sm:$0xff]
      %v7027 = vld [vmem:[#allocation7 + $0x220] sm:$0xff]
      %v7028 = vld [vmem:[#allocation7 + $0x228] sm:$0xff]
      %v7029 = vld [vmem:[#allocation7 + $0x230] sm:$0xff]
      %v7030 = vld [vmem:[#allocation7 + $0x238] sm:$0xff]
      %v7031 = vld [vmem:[#allocation7 + $0x240] sm:$0xff]
      %v7032 = vld [vmem:[#allocation7 + $0x248] sm:$0xff]
      %v7033 = vld [vmem:[#allocation7 + $0x250] sm:$0xff]
      %v7034 = vld [vmem:[#allocation7 + $0x258] sm:$0xff]
      %v7035 = vld [vmem:[#allocation7 + $0x260] sm:$0xff]
      %v7036 = vld [vmem:[#allocation7 + $0x268] sm:$0xff]
      %v7037 = vld [vmem:[#allocation7 + $0x270] sm:$0xff]
      %v7038 = vld [vmem:[#allocation7 + $0x278] sm:$0xff]
      %v7039 = vld [vmem:[#allocation7 + $0x280] sm:$0xff]
      %v7040 = vld [vmem:[#allocation7 + $0x288] sm:$0xff]
      %v7041 = vld [vmem:[#allocation7 + $0x290] sm:$0xff]
      %v7042 = vld [vmem:[#allocation7 + $0x298] sm:$0xff]
      %v7043 = vld [vmem:[#allocation7 + $0x2a0] sm:$0xff]
      %v7044 = vld [vmem:[#allocation7 + $0x2a8] sm:$0xff]
      %v7045 = vld [vmem:[#allocation7 + $0x2b0] sm:$0xff]
      %v7046 = vld [vmem:[#allocation7 + $0x2b8] sm:$0xff]
      %v7047 = vld [vmem:[#allocation7 + $0x2c0] sm:$0xff]
      %v7048 = vld [vmem:[#allocation7 + $0x2c8] sm:$0xff]
      %v7049 = vld [vmem:[#allocation7 + $0x2d0] sm:$0xff]
      %v7050 = vld [vmem:[#allocation7 + $0x2d8] sm:$0xff]
      %v7051 = vld [vmem:[#allocation7 + $0x2e0] sm:$0xff]
      %v7052 = vld [vmem:[#allocation7 + $0x2e8] sm:$0xff]
      %v7053 = vld [vmem:[#allocation7 + $0x2f0] sm:$0xff]
      %v7054 = vld [vmem:[#allocation7 + $0x2f8] sm:$0xff]
      %v7055 = vld [vmem:[#allocation7 + $0x300] sm:$0xff]
      %v7056 = vld [vmem:[#allocation7 + $0x308] sm:$0xff]
      %v7057 = vld [vmem:[#allocation7 + $0x310] sm:$0xff]
      %v7058 = vld [vmem:[#allocation7 + $0x318] sm:$0xff]
      %v7059 = vld [vmem:[#allocation7 + $0x320] sm:$0xff]
      %v7060 = vld [vmem:[#allocation7 + $0x328] sm:$0xff]
      %v7061 = vld [vmem:[#allocation7 + $0x330] sm:$0xff]
      %v7062 = vld [vmem:[#allocation7 + $0x338] sm:$0xff]
      %v7063 = vld [vmem:[#allocation7 + $0x340] sm:$0xff]
      %v7064 = vld [vmem:[#allocation7 + $0x348] sm:$0xff]
      %v7065 = vld [vmem:[#allocation7 + $0x350] sm:$0xff]
      %v7066 = vld [vmem:[#allocation7 + $0x358] sm:$0xff]
      %v7067 = vld [vmem:[#allocation7 + $0x360] sm:$0xff]
      %v7068 = vld [vmem:[#allocation7 + $0x368] sm:$0xff]
      %v7069 = vld [vmem:[#allocation7 + $0x370] sm:$0xff]
      %v7070 = vld [vmem:[#allocation7 + $0x378] sm:$0xff]
      %v7071 = vld [vmem:[#allocation7 + $0x380] sm:$0xff]
      %v7072 = vld [vmem:[#allocation7 + $0x388] sm:$0xff]
      %v7073 = vld [vmem:[#allocation7 + $0x390] sm:$0xff]
      %v7074 = vld [vmem:[#allocation7 + $0x398] sm:$0xff]
      %v7075 = vld [vmem:[#allocation7 + $0x3a0] sm:$0xff]
      %v7076 = vld [vmem:[#allocation7 + $0x3a8] sm:$0xff]
      %v7077 = vld [vmem:[#allocation7 + $0x3b0] sm:$0xff]
      %v7078 = vld [vmem:[#allocation7 + $0x3b8] sm:$0xff]
      %v7079 = vld [vmem:[#allocation7 + $0x3c0] sm:$0xff]
      %v7080 = vld [vmem:[#allocation7 + $0x3c8] sm:$0xff]
      %v7081 = vld [vmem:[#allocation7 + $0x3d0] sm:$0xff]
      %v7082 = vld [vmem:[#allocation7 + $0x3d8] sm:$0xff]
      %v7083 = vld [vmem:[#allocation7 + $0x3e0] sm:$0xff]
      %v7084 = vld [vmem:[#allocation7 + $0x3e8] sm:$0xff]
      %v7085 = vld [vmem:[#allocation7 + $0x3f0] sm:$0xff]
      %v7086 = vld [vmem:[#allocation7 + $0x3f8] sm:$0xff]
      %v7087 = vld [vmem:[%s10] sm:$0xf]
      %v7089 = vlaneseq
      %v7090 = vshrl.u32 %v7089, 7
      %v7091 = vsub.s32 0, %v7090
      %v7092 = vrot.slane %v7087, %v7091
      %v7093 = vlaneseq
      %v7094 = vshrl.u32 %v7093, 7
      %v7095 = vsub.s32 1, %v7094
      %v7096 = vrot.slane %v7087, %v7095
      %v7097 = vlaneseq
      %v7098 = vshrl.u32 %v7097, 7
      %v7099 = vsub.s32 2, %v7098
      %v7100 = vrot.slane %v7087, %v7099
      %v7101 = vlaneseq
      %v7102 = vshrl.u32 %v7101, 7
      %v7103 = vsub.s32 3, %v7102
      %v7104 = vrot.slane %v7087, %v7103
      %7109 = vmatprep.subr.mxu0 %v6960
      %7110 = vmatpush1.msra.mxu0 %v6959
      %7111 = vmatprep.subr.mxu0 %v6964
      %7112 = vmatpush1.msra.mxu0 %v6963
      %7113 = vmatprep.subr.mxu0 %v6968
      %7114 = vmatpush1.msra.mxu0 %v6967
      %7115 = vmatprep.subr.mxu0 %v6972
      %7116 = vmatpush1.msra.mxu0 %v6971
      %7117 = vmatprep.subr.mxu0 %v6976
      %7118 = vmatpush1.msra.mxu0 %v6975
      %7119 = vmatprep.subr.mxu0 %v6980
      %7120 = vmatpush1.msra.mxu0 %v6979
      %7121 = vmatprep.subr.mxu0 %v6984
      %7122 = vmatpush1.msra.mxu0 %v6983
      %7123 = vmatprep.subr.mxu0 %v6988
      %7124 = vmatpush1.msra.mxu0 %v6987
      %7125 = vmatprep.subr.mxu0 %v6992
      %7126 = vmatpush1.msra.mxu0 %v6991
      %7127 = vmatprep.subr.mxu0 %v6996
      %7128 = vmatpush1.msra.mxu0 %v6995
      %7129 = vmatprep.subr.mxu0 %v7000
      %7130 = vmatpush1.msra.mxu0 %v6999
      %7131 = vmatprep.subr.mxu0 %v7004
      %7132 = vmatpush1.msra.mxu0 %v7003
      %7133 = vmatprep.subr.mxu0 %v7008
      %7134 = vmatpush1.msra.mxu0 %v7007
      %7135 = vmatprep.subr.mxu0 %v7012
      %7136 = vmatpush1.msra.mxu0 %v7011
      %7137 = vmatprep.subr.mxu0 %v7016
      %7138 = vmatpush1.msra.mxu0 %v7015
      %7139 = vmatprep.subr.mxu0 %v7020
      %7140 = vmatpush1.msra.mxu0 %v7019
      %7141 = vmatprep.subr.mxu0 %v7024
      %7142 = vmatpush1.msra.mxu0 %v7023
      %7143 = vmatprep.subr.mxu0 %v7028
      %7144 = vmatpush1.msra.mxu0 %v7027
      %7145 = vmatprep.subr.mxu0 %v7032
      %7146 = vmatpush1.msra.mxu0 %v7031
      %7147 = vmatprep.subr.mxu0 %v7036
      %7148 = vmatpush1.msra.mxu0 %v7035
      %7149 = vmatprep.subr.mxu0 %v7040
      %7150 = vmatpush1.msra.mxu0 %v7039
      %7151 = vmatprep.subr.mxu0 %v7044
      %7152 = vmatpush1.msra.mxu0 %v7043
      %7153 = vmatprep.subr.mxu0 %v7048
      %7154 = vmatpush1.msra.mxu0 %v7047
      %7155 = vmatprep.subr.mxu0 %v7052
      %7156 = vmatpush1.msra.mxu0 %v7051
      %7157 = vmatprep.subr.mxu0 %v7056
      %7158 = vmatpush1.msra.mxu0 %v7055
      %7159 = vmatprep.subr.mxu0 %v7060
      %7160 = vmatpush1.msra.mxu0 %v7059
      %7161 = vmatprep.subr.mxu0 %v7064
      %7162 = vmatpush1.msra.mxu0 %v7063
      %7163 = vmatprep.subr.mxu0 %v7068
      %7164 = vmatpush1.msra.mxu0 %v7067
      %7165 = vmatprep.subr.mxu0 %v7072
      %7166 = vmatpush1.msra.mxu0 %v7071
      %7167 = vmatprep.subr.mxu0 %v7076
      %7168 = vmatpush1.msra.mxu0 %v7075
      %7169 = vmatprep.subr.mxu0 %v7080
      %7170 = vmatpush1.msra.mxu0 %v7079
      %7171 = vmatprep.subr.mxu0 %v7084
      %7172 = vmatpush1.msra.mxu0 %v7083
      %7173 = vmatprep.mubr.f32.mxu0 %v6713
      %7174 = vmatmul.mubr.f32.gmra.mrb[0].mxu0 %v6958
      %v7175 = vpop.f32.mrb[0].mxu0
      %v7176 = vadd.f32 %v7092, %v7175
      %v7177 = vpop.f32.mrb[0].mxu0
      %v7178 = vadd.f32 %v7096, %v7177
      %7179 = vdwg.mxu0
      %7180 = vmatprep.subr.mxu0 %v6962
      %7181 = vmatpush1.msra.mxu0 %v6961
      %7182 = vmatprep.subr.mxu0 %v6966
      %7183 = vmatpush1.msra.mxu0 %v6965
      %7184 = vmatprep.subr.mxu0 %v6970
      %7185 = vmatpush1.msra.mxu0 %v6969
      %7186 = vmatprep.subr.mxu0 %v6974
      %7187 = vmatpush1.msra.mxu0 %v6973
      %7188 = vmatprep.subr.mxu0 %v6978
      %7189 = vmatpush1.msra.mxu0 %v6977
      %7190 = vmatprep.subr.mxu0 %v6982
      %7191 = vmatpush1.msra.mxu0 %v6981
      %7192 = vmatprep.subr.mxu0 %v6986
      %7193 = vmatpush1.msra.mxu0 %v6985
      %7194 = vmatprep.subr.mxu0 %v6990
      %7195 = vmatpush1.msra.mxu0 %v6989
      %7196 = vmatprep.subr.mxu0 %v6994
      %7197 = vmatpush1.msra.mxu0 %v6993
      %7198 = vmatprep.subr.mxu0 %v6998
      %7199 = vmatpush1.msra.mxu0 %v6997
      %7200 = vmatprep.subr.mxu0 %v7002
      %7201 = vmatpush1.msra.mxu0 %v7001
      %7202 = vmatprep.subr.mxu0 %v7006
      %7203 = vmatpush1.msra.mxu0 %v7005
      %7204 = vmatprep.subr.mxu0 %v7010
      %7205 = vmatpush1.msra.mxu0 %v7009
      %7206 = vmatprep.subr.mxu0 %v7014
      %7207 = vmatpush1.msra.mxu0 %v7013
      %7208 = vmatprep.subr.mxu0 %v7018
      %7209 = vmatpush1.msra.mxu0 %v7017
      %7210 = vmatprep.subr.mxu0 %v7022
      %7211 = vmatpush1.msra.mxu0 %v7021
      %7212 = vmatprep.subr.mxu0 %v7026
      %7213 = vmatpush1.msra.mxu0 %v7025
      %7214 = vmatprep.subr.mxu0 %v7030
      %7215 = vmatpush1.msra.mxu0 %v7029
      %7216 = vmatprep.subr.mxu0 %v7034
      %7217 = vmatpush1.msra.mxu0 %v7033
      %7218 = vmatprep.subr.mxu0 %v7038
      %7219 = vmatpush1.msra.mxu0 %v7037
      %7220 = vmatprep.subr.mxu0 %v7042
      %7221 = vmatpush1.msra.mxu0 %v7041
      %7222 = vmatprep.subr.mxu0 %v7046
      %7223 = vmatpush1.msra.mxu0 %v7045
      %7224 = vmatprep.subr.mxu0 %v7050
      %7225 = vmatpush1.msra.mxu0 %v7049
      %7226 = vmatprep.subr.mxu0 %v7054
      %7227 = vmatpush1.msra.mxu0 %v7053
      %7228 = vmatprep.subr.mxu0 %v7058
      %7229 = vmatpush1.msra.mxu0 %v7057
      %7230 = vmatprep.subr.mxu0 %v7062
      %7231 = vmatpush1.msra.mxu0 %v7061
      %7232 = vmatprep.subr.mxu0 %v7066
      %7233 = vmatpush1.msra.mxu0 %v7065
      %7234 = vmatprep.subr.mxu0 %v7070
      %7235 = vmatpush1.msra.mxu0 %v7069
      %7236 = vmatprep.subr.mxu0 %v7074
      %7237 = vmatpush1.msra.mxu0 %v7073
      %7238 = vmatprep.subr.mxu0 %v7078
      %7239 = vmatpush1.msra.mxu0 %v7077
      %7240 = vmatprep.subr.mxu0 %v7082
      %7241 = vmatpush1.msra.mxu0 %v7081
      %7242 = vmatprep.subr.mxu0 %v7086
      %7243 = vmatpush1.msra.mxu0 %v7085
      %7244 = vmatprep.mubr.f32.mxu0 %v6713
      %7245 = vmatmul.mubr.f32.gmra.mrb[0].mxu0 %v6958
      %v7246 = vpop.f32.mrb[0].mxu0
      %v7247 = vadd.f32 %v7100, %v7246
      %v7248 = vpop.f32.mrb[0].mxu0
      %v7249 = vadd.f32 %v7104, %v7248
      %7250 = vdwg.mxu0
      %v7251 = vxor.u32 %v7176, 2147483648
      %v7252 = vmul.f32 %v7251, 1.442695
      %v7253 = vpow.pop %v7252
      %v7254 = vadd.f32 %v7253, 1.0
      %v7255 = vrcp.pop %v7254
      %v7256 = vmul.f32 1.0, %v7255
      %v7257 = vxor.u32 %v7178, 2147483648
      %v7258 = vmul.f32 %v7257, 1.442695
      %v7259 = vpow.pop %v7258
      %v7260 = vadd.f32 %v7259, 1.0
      %v7261 = vrcp.pop %v7260
      %v7262 = vmul.f32 1.0, %v7261
      %v7263 = vtanh.pop %v7247
      %v7264 = vxor.u32 %v7249, 2147483648
      %v7265 = vmul.f32 %v7264, 1.442695
      %v7266 = vpow.pop %v7265
      %v7267 = vadd.f32 %v7266, 1.0
      %v7268 = vrcp.pop %v7267
      %v7269 = vmul.f32 1.0, %v7268
      %v7270 = vmul.f32 %v7262, %v6714
      %v7271 = vmul.f32 %v7256, %v7263
      %v7272 = vadd.f32 %v7270, %v7271
      %v7273 = vtanh.pop %v7272
      %v7274 = vmul.f32 %v7269, %v7273
      %s7275 = smul.u32 %s6706, 4
      %s7276 = sadd.s32 %s7275, 1
      %s7277 = smul.u32 %s7276, 8
      %s7278 = sshra.s32 %s7277, 3
      %s7279 = sand.u32 %s7277, 7
      %s7280 = smul.u32 %s7278, 4
      %s7281 = smul.addr %s7280, 8
      %s7282 = scalar_lea.vmem [#allocation2], %s7281
      %v7283 = vld [vmem:[%s7282] sm:$0xff]
      %v7284 = vld [vmem:[%s7282 + $0x8] sm:$0xff]
      %v7285 = vld [vmem:[%s7282 + $0x10] sm:$0xff]
      %v7286 = vld [vmem:[%s7282 + $0x18] sm:$0xff]
      %7287 = vmatprep.subr.mxu0 %v6726
      %7288 = vmatpush1.msra.mxu0 %v6725
      %7289 = vmatprep.subr.mxu0 %v6730
      %7290 = vmatpush1.msra.mxu0 %v6729
      %7291 = vmatprep.subr.mxu0 %v6734
      %7292 = vmatpush1.msra.mxu0 %v6733
      %7293 = vmatprep.subr.mxu0 %v6738
      %7294 = vmatpush1.msra.mxu0 %v6737
      %7295 = vmatprep.subr.mxu0 %v6742
      %7296 = vmatpush1.msra.mxu0 %v6741
      %7297 = vmatprep.subr.mxu0 %v6746
      %7298 = vmatpush1.msra.mxu0 %v6745
      %7299 = vmatprep.subr.mxu0 %v6750
      %7300 = vmatpush1.msra.mxu0 %v6749
      %7301 = vmatprep.subr.mxu0 %v6754
      %7302 = vmatpush1.msra.mxu0 %v6753
      %7303 = vmatprep.subr.mxu0 %v6758
      %7304 = vmatpush1.msra.mxu0 %v6757
      %7305 = vmatprep.subr.mxu0 %v6762
      %7306 = vmatpush1.msra.mxu0 %v6761
      %7307 = vmatprep.subr.mxu0 %v6766
      %7308 = vmatpush1.msra.mxu0 %v6765
      %7309 = vmatprep.subr.mxu0 %v6770
      %7310 = vmatpush1.msra.mxu0 %v6769
      %7311 = vmatprep.subr.mxu0 %v6774
      %7312 = vmatpush1.msra.mxu0 %v6773
      %7313 = vmatprep.subr.mxu0 %v6778
      %7314 = vmatpush1.msra.mxu0 %v6777
      %7315 = vmatprep.subr.mxu0 %v6782
      %7316 = vmatpush1.msra.mxu0 %v6781
      %7317 = vmatprep.subr.mxu0 %v6786
      %7318 = vmatpush1.msra.mxu0 %v6785
      %7319 = vmatprep.subr.mxu0 0.0
      %7320 = vmatpush1.msra.mxu0 0.0
      %7321 = vmatprep.subr.mxu0 0.0
      %7322 = vmatpush1.msra.mxu0 0.0
      %7323 = vmatprep.subr.mxu0 0.0
      %7324 = vmatpush1.msra.mxu0 0.0
      %7325 = vmatprep.subr.mxu0 0.0
      %7326 = vmatpush1.msra.mxu0 0.0
      %7327 = vmatprep.subr.mxu0 0.0
      %7328 = vmatpush1.msra.mxu0 0.0
      %7329 = vmatprep.subr.mxu0 0.0
      %7330 = vmatpush1.msra.mxu0 0.0
      %7331 = vmatprep.subr.mxu0 0.0
      %7332 = vmatpush1.msra.mxu0 0.0
      %7333 = vmatprep.subr.mxu0 0.0
      %7334 = vmatpush1.msra.mxu0 0.0
      %7335 = vmatprep.subr.mxu0 0.0
      %7336 = vmatpush1.msra.mxu0 0.0
      %7337 = vmatprep.subr.mxu0 0.0
      %7338 = vmatpush1.msra.mxu0 0.0
      %7339 = vmatprep.subr.mxu0 0.0
      %7340 = vmatpush1.msra.mxu0 0.0
      %7341 = vmatprep.subr.mxu0 0.0
      %7342 = vmatpush1.msra.mxu0 0.0
      %7343 = vmatprep.subr.mxu0 0.0
      %7344 = vmatpush1.msra.mxu0 0.0
      %7345 = vmatprep.subr.mxu0 0.0
      %7346 = vmatpush1.msra.mxu0 0.0
      %7347 = vmatprep.subr.mxu0 0.0
      %7348 = vmatpush1.msra.mxu0 0.0
      %7349 = vmatprep.subr.mxu0 0.0
      %7350 = vmatpush1.msra.mxu0 0.0
      %7351 = vmatprep.mubr.f32.mxu0 0.0
      %7352 = vmatmul.mubr.f32.gmra.mrb[0].mxu0 %v6958
      %v7353 = vpop.f32.mrb[0].mxu0
      %v7354 = vadd.f32 0.0, %v7353
      %v7355 = vpop.f32.mrb[0].mxu0
      %v7356 = vadd.f32 0.0, %v7355
      %7357 = vdwg.mxu0
      %7358 = vmatprep.subr.mxu0 %v6728
      %7359 = vmatpush1.msra.mxu0 %v6727
      %7360 = vmatprep.subr.mxu0 %v6732
      %7361 = vmatpush1.msra.mxu0 %v6731
      %7362 = vmatprep.subr.mxu0 %v6736
      %7363 = vmatpush1.msra.mxu0 %v6735
      %7364 = vmatprep.subr.mxu0 %v6740
      %7365 = vmatpush1.msra.mxu0 %v6739
      %7366 = vmatprep.subr.mxu0 %v6744
      %7367 = vmatpush1.msra.mxu0 %v6743
      %7368 = vmatprep.subr.mxu0 %v6748
      %7369 = vmatpush1.msra.mxu0 %v6747
      %7370 = vmatprep.subr.mxu0 %v6752
      %7371 = vmatpush1.msra.mxu0 %v6751
      %7372 = vmatprep.subr.mxu0 %v6756
      %7373 = vmatpush1.msra.mxu0 %v6755
      %7374 = vmatprep.subr.mxu0 %v6760
      %7375 = vmatpush1.msra.mxu0 %v6759
      %7376 = vmatprep.subr.mxu0 %v6764
      %7377 = vmatpush1.msra.mxu0 %v6763
      %7378 = vmatprep.subr.mxu0 %v6768
      %7379 = vmatpush1.msra.mxu0 %v6767
      %7380 = vmatprep.subr.mxu0 %v6772
      %7381 = vmatpush1.msra.mxu0 %v6771
      %7382 = vmatprep.subr.mxu0 %v6776
      %7383 = vmatpush1.msra.mxu0 %v6775
      %7384 = vmatprep.subr.mxu0 %v6780
      %7385 = vmatpush1.msra.mxu0 %v6779
      %7386 = vmatprep.subr.mxu0 %v6784
      %7387 = vmatpush1.msra.mxu0 %v6783
      %7388 = vmatprep.subr.mxu0 %v6788
      %7389 = vmatpush1.msra.mxu0 %v6787
      %7390 = vmatprep.subr.mxu0 0.0
      %7391 = vmatpush1.msra.mxu0 0.0
      %7392 = vmatprep.subr.mxu0 0.0
      %7393 = vmatpush1.msra.mxu0 0.0
      %7394 = vmatprep.subr.mxu0 0.0
      %7395 = vmatpush1.msra.mxu0 0.0
      %7396 = vmatprep.subr.mxu0 0.0
      %7397 = vmatpush1.msra.mxu0 0.0
      %7398 = vmatprep.subr.mxu0 0.0
      %7399 = vmatpush1.msra.mxu0 0.0
      %7400 = vmatprep.subr.mxu0 0.0
      %7401 = vmatpush1.msra.mxu0 0.0
      %7402 = vmatprep.subr.mxu0 0.0
      %7403 = vmatpush1.msra.mxu0 0.0
      %7404 = vmatprep.subr.mxu0 0.0
      %7405 = vmatpush1.msra.mxu0 0.0
      %7406 = vmatprep.subr.mxu0 0.0
      %7407 = vmatpush1.msra.mxu0 0.0
      %7408 = vmatprep.subr.mxu0 0.0
      %7409 = vmatpush1.msra.mxu0 0.0
      %7410 = vmatprep.subr.mxu0 0.0
      %7411 = vmatpush1.msra.mxu0 0.0
      %7412 = vmatprep.subr.mxu0 0.0
      %7413 = vmatpush1.msra.mxu0 0.0
      %7414 = vmatprep.subr.mxu0 0.0
      %7415 = vmatpush1.msra.mxu0 0.0
      %7416 = vmatprep.subr.mxu0 0.0
      %7417 = vmatpush1.msra.mxu0 0.0
      %7418 = vmatprep.subr.mxu0 0.0
      %7419 = vmatpush1.msra.mxu0 0.0
      %7420 = vmatprep.subr.mxu0 0.0
      %7421 = vmatpush1.msra.mxu0 0.0
      %7422 = vmatprep.mubr.f32.mxu0 0.0
      %7423 = vmatmul.mubr.f32.gmra.mrb[0].mxu0 %v6958
      %v7424 = vpop.f32.mrb[0].mxu0
      %v7425 = vadd.f32 0.0, %v7424
      %v7426 = vpop.f32.mrb[0].mxu0
      %v7427 = vadd.f32 0.0, %v7426
      %7428 = vdwg.mxu0
      %v7429 = vadd.f32 %v7283, %v7354
      %v7430 = vadd.f32 %v7284, %v7356
      %v7431 = vadd.f32 %v7285, %v7425
      %v7432 = vadd.f32 %v7286, %v7427
      %v7433 = vxor.u32 %v7429, 2147483648
      %v7434 = vmul.f32 %v7433, 1.442695
      %v7435 = vpow.pop %v7434
      %v7436 = vadd.f32 %v7435, 1.0
      %v7437 = vrcp.pop %v7436
      %v7438 = vmul.f32 1.0, %v7437
      %v7439 = vxor.u32 %v7430, 2147483648
      %v7440 = vmul.f32 %v7439, 1.442695
      %v7441 = vpow.pop %v7440
      %v7442 = vadd.f32 %v7441, 1.0
      %v7443 = vrcp.pop %v7442
      %v7444 = vmul.f32 1.0, %v7443
      %v7445 = vtanh.pop %v7431
      %v7446 = vxor.u32 %v7432, 2147483648
      %v7447 = vmul.f32 %v7446, 1.442695
      %v7448 = vpow.pop %v7447
      %v7449 = vadd.f32 %v7448, 1.0
      %v7450 = vrcp.pop %v7449
      %v7451 = vmul.f32 1.0, %v7450
      %v7452 = vmul.f32 %v7444, %v6956
      %v7453 = vmul.f32 %v7438, %v7445
      %v7454 = vadd.f32 %v7452, %v7453
      %v7455 = vtanh.pop %v7454
      %v7456 = vmul.f32 %v7451, %v7455
      %7457 = vmatprep.subr.mxu0 %v6960
      %7458 = vmatpush1.msra.mxu0 %v6959
      %7459 = vmatprep.subr.mxu0 %v6964
      %7460 = vmatpush1.msra.mxu0 %v6963
      %7461 = vmatprep.subr.mxu0 %v6968
      %7462 = vmatpush1.msra.mxu0 %v6967
      %7463 = vmatprep.subr.mxu0 %v6972
      %7464 = vmatpush1.msra.mxu0 %v6971
      %7465 = vmatprep.subr.mxu0 %v6976
      %7466 = vmatpush1.msra.mxu0 %v6975
      %7467 = vmatprep.subr.mxu0 %v6980
      %7468 = vmatpush1.msra.mxu0 %v6979
      %7469 = vmatprep.subr.mxu0 %v6984
      %7470 = vmatpush1.msra.mxu0 %v6983
      %7471 = vmatprep.subr.mxu0 %v6988
      %7472 = vmatpush1.msra.mxu0 %v6987
      %7473 = vmatprep.subr.mxu0 %v6992
      %7474 = vmatpush1.msra.mxu0 %v6991
      %7475 = vmatprep.subr.mxu0 %v6996
      %7476 = vmatpush1.msra.mxu0 %v6995
      %7477 = vmatprep.subr.mxu0 %v7000
      %7478 = vmatpush1.msra.mxu0 %v6999
      %7479 = vmatprep.subr.mxu0 %v7004
      %7480 = vmatpush1.msra.mxu0 %v7003
      %7481 = vmatprep.subr.mxu0 %v7008
      %7482 = vmatpush1.msra.mxu0 %v7007
      %7483 = vmatprep.subr.mxu0 %v7012
      %7484 = vmatpush1.msra.mxu0 %v7011
      %7485 = vmatprep.subr.mxu0 %v7016
      %7486 = vmatpush1.msra.mxu0 %v7015
      %7487 = vmatprep.subr.mxu0 %v7020
      %7488 = vmatpush1.msra.mxu0 %v7019
      %7489 = vmatprep.subr.mxu0 %v7024
      %7490 = vmatpush1.msra.mxu0 %v7023
      %7491 = vmatprep.subr.mxu0 %v7028
      %7492 = vmatpush1.msra.mxu0 %v7027
      %7493 = vmatprep.subr.mxu0 %v7032
      %7494 = vmatpush1.msra.mxu0 %v7031
      %7495 = vmatprep.subr.mxu0 %v7036
      %7496 = vmatpush1.msra.mxu0 %v7035
      %7497 = vmatprep.subr.mxu0 %v7040
      %7498 = vmatpush1.msra.mxu0 %v7039
      %7499 = vmatprep.subr.mxu0 %v7044
      %7500 = vmatpush1.msra.mxu0 %v7043
      %7501 = vmatprep.subr.mxu0 %v7048
      %7502 = vmatpush1.msra.mxu0 %v7047
      %7503 = vmatprep.subr.mxu0 %v7052
      %7504 = vmatpush1.msra.mxu0 %v7051
      %7505 = vmatprep.subr.mxu0 %v7056
      %7506 = vmatpush1.msra.mxu0 %v7055
      %7507 = vmatprep.subr.mxu0 %v7060
      %7508 = vmatpush1.msra.mxu0 %v7059
      %7509 = vmatprep.subr.mxu0 %v7064
      %7510 = vmatpush1.msra.mxu0 %v7063
      %7511 = vmatprep.subr.mxu0 %v7068
      %7512 = vmatpush1.msra.mxu0 %v7067
      %7513 = vmatprep.subr.mxu0 %v7072
      %7514 = vmatpush1.msra.mxu0 %v7071
      %7515 = vmatprep.subr.mxu0 %v7076
      %7516 = vmatpush1.msra.mxu0 %v7075
      %7517 = vmatprep.subr.mxu0 %v7080
      %7518 = vmatpush1.msra.mxu0 %v7079
      %7519 = vmatprep.subr.mxu0 %v7084
      %7520 = vmatpush1.msra.mxu0 %v7083
      %7521 = vmatprep.mubr.f32.mxu0 %v7274
      %7522 = vmatmul.mubr.f32.gmra.mrb[0].mxu0 %v7456
      %v7523 = vpop.f32.mrb[0].mxu0
      %v7524 = vadd.f32 %v7092, %v7523
      %v7525 = vpop.f32.mrb[0].mxu0
      %v7526 = vadd.f32 %v7096, %v7525
      %7527 = vdwg.mxu0
      %7528 = vmatprep.subr.mxu0 %v6962
      %7529 = vmatpush1.msra.mxu0 %v6961
      %7530 = vmatprep.subr.mxu0 %v6966
      %7531 = vmatpush1.msra.mxu0 %v6965
      %7532 = vmatprep.subr.mxu0 %v6970
      %7533 = vmatpush1.msra.mxu0 %v6969
      %7534 = vmatprep.subr.mxu0 %v6974
      %7535 = vmatpush1.msra.mxu0 %v6973
      %7536 = vmatprep.subr.mxu0 %v6978
      %7537 = vmatpush1.msra.mxu0 %v6977
      %7538 = vmatprep.subr.mxu0 %v6982
      %7539 = vmatpush1.msra.mxu0 %v6981
      %7540 = vmatprep.subr.mxu0 %v6986
      %7541 = vmatpush1.msra.mxu0 %v6985
      %7542 = vmatprep.subr.mxu0 %v6990
      %7543 = vmatpush1.msra.mxu0 %v6989
      %7544 = vmatprep.subr.mxu0 %v6994
      %7545 = vmatpush1.msra.mxu0 %v6993
      %7546 = vmatprep.subr.mxu0 %v6998
      %7547 = vmatpush1.msra.mxu0 %v6997
      %7548 = vmatprep.subr.mxu0 %v7002
      %7549 = vmatpush1.msra.mxu0 %v7001
      %7550 = vmatprep.subr.mxu0 %v7006
      %7551 = vmatpush1.msra.mxu0 %v7005
      %7552 = vmatprep.subr.mxu0 %v7010
      %7553 = vmatpush1.msra.mxu0 %v7009
      %7554 = vmatprep.subr.mxu0 %v7014
      %7555 = vmatpush1.msra.mxu0 %v7013
      %7556 = vmatprep.subr.mxu0 %v7018
      %7557 = vmatpush1.msra.mxu0 %v7017
      %7558 = vmatprep.subr.mxu0 %v7022
      %7559 = vmatpush1.msra.mxu0 %v7021
      %7560 = vmatprep.subr.mxu0 %v7026
      %7561 = vmatpush1.msra.mxu0 %v7025
      %7562 = vmatprep.subr.mxu0 %v7030
      %7563 = vmatpush1.msra.mxu0 %v7029
      %7564 = vmatprep.subr.mxu0 %v7034
      %7565 = vmatpush1.msra.mxu0 %v7033
      %7566 = vmatprep.subr.mxu0 %v7038
      %7567 = vmatpush1.msra.mxu0 %v7037
      %7568 = vmatprep.subr.mxu0 %v7042
      %7569 = vmatpush1.msra.mxu0 %v7041
      %7570 = vmatprep.subr.mxu0 %v7046
      %7571 = vmatpush1.msra.mxu0 %v7045
      %7572 = vmatprep.subr.mxu0 %v7050
      %7573 = vmatpush1.msra.mxu0 %v7049
      %7574 = vmatprep.subr.mxu0 %v7054
      %7575 = vmatpush1.msra.mxu0 %v7053
      %7576 = vmatprep.subr.mxu0 %v7058
      %7577 = vmatpush1.msra.mxu0 %v7057
      %7578 = vmatprep.subr.mxu0 %v7062
      %7579 = vmatpush1.msra.mxu0 %v7061
      %7580 = vmatprep.subr.mxu0 %v7066
      %7581 = vmatpush1.msra.mxu0 %v7065
      %7582 = vmatprep.subr.mxu0 %v7070
      %7583 = vmatpush1.msra.mxu0 %v7069
      %7584 = vmatprep.subr.mxu0 %v7074
      %7585 = vmatpush1.msra.mxu0 %v7073
      %7586 = vmatprep.subr.mxu0 %v7078
      %7587 = vmatpush1.msra.mxu0 %v7077
      %7588 = vmatprep.subr.mxu0 %v7082
      %7589 = vmatpush1.msra.mxu0 %v7081
      %7590 = vmatprep.subr.mxu0 %v7086
      %7591 = vmatpush1.msra.mxu0 %v7085
      %7592 = vmatprep.mubr.f32.mxu0 %v7274
      %7593 = vmatmul.mubr.f32.gmra.mrb[0].mxu0 %v7456
      %v7594 = vpop.f32.mrb[0].mxu0
      %v7595 = vadd.f32 %v7100, %v7594
      %v7596 = vpop.f32.mrb[0].mxu0
      %v7597 = vadd.f32 %v7104, %v7596
      %7598 = vdwg.mxu0
      %v7599 = vxor.u32 %v7524, 2147483648
      %v7600 = vmul.f32 %v7599, 1.442695
      %v7601 = vpow.pop %v7600
      %v7602 = vadd.f32 %v7601, 1.0
      %v7603 = vrcp.pop %v7602
      %v7604 = vmul.f32 1.0, %v7603
      %v7605 = vxor.u32 %v7526, 2147483648
      %v7606 = vmul.f32 %v7605, 1.442695
      %v7607 = vpow.pop %v7606
      %v7608 = vadd.f32 %v7607, 1.0
      %v7609 = vrcp.pop %v7608
      %v7610 = vmul.f32 1.0, %v7609
      %v7611 = vtanh.pop %v7595
      %v7612 = vxor.u32 %v7597, 2147483648
      %v7613 = vmul.f32 %v7612, 1.442695
      %v7614 = vpow.pop %v7613
      %v7615 = vadd.f32 %v7614, 1.0
      %v7616 = vrcp.pop %v7615
      %v7617 = vmul.f32 1.0, %v7616
      %v7618 = vmul.f32 %v7610, %v7272
      %v7619 = vmul.f32 %v7604, %v7611
      %v7620 = vadd.f32 %v7618, %v7619
      %v7621 = vtanh.pop %v7620
      %v7622 = vmul.f32 %v7617, %v7621
      %s7623 = sadd.s32 %s7275, 2
      %s7624 = smul.u32 %s7623, 8
      %s7625 = sshra.s32 %s7624, 3
      %s7626 = sand.u32 %s7624, 7
      %s7627 = smul.u32 %s7625, 4
      %s7628 = smul.addr %s7627, 8
      %s7629 = scalar_lea.vmem [#allocation2], %s7628
      %v7630 = vld [vmem:[%s7629] sm:$0xff]
      %v7631 = vld [vmem:[%s7629 + $0x8] sm:$0xff]
      %v7632 = vld [vmem:[%s7629 + $0x10] sm:$0xff]
      %v7633 = vld [vmem:[%s7629 + $0x18] sm:$0xff]
      %7634 = vmatprep.subr.mxu0 %v6726
      %7635 = vmatpush1.msra.mxu0 %v6725
      %7636 = vmatprep.subr.mxu0 %v6730
      %7637 = vmatpush1.msra.mxu0 %v6729
      %7638 = vmatprep.subr.mxu0 %v6734
      %7639 = vmatpush1.msra.mxu0 %v6733
      %7640 = vmatprep.subr.mxu0 %v6738
      %7641 = vmatpush1.msra.mxu0 %v6737
      %7642 = vmatprep.subr.mxu0 %v6742
      %7643 = vmatpush1.msra.mxu0 %v6741
      %7644 = vmatprep.subr.mxu0 %v6746
      %7645 = vmatpush1.msra.mxu0 %v6745
      %7646 = vmatprep.subr.mxu0 %v6750
      %7647 = vmatpush1.msra.mxu0 %v6749
      %7648 = vmatprep.subr.mxu0 %v6754
      %7649 = vmatpush1.msra.mxu0 %v6753
      %7650 = vmatprep.subr.mxu0 %v6758
      %7651 = vmatpush1.msra.mxu0 %v6757
      %7652 = vmatprep.subr.mxu0 %v6762
      %7653 = vmatpush1.msra.mxu0 %v6761
      %7654 = vmatprep.subr.mxu0 %v6766
      %7655 = vmatpush1.msra.mxu0 %v6765
      %7656 = vmatprep.subr.mxu0 %v6770
      %7657 = vmatpush1.msra.mxu0 %v6769
      %7658 = vmatprep.subr.mxu0 %v6774
      %7659 = vmatpush1.msra.mxu0 %v6773
      %7660 = vmatprep.subr.mxu0 %v6778
      %7661 = vmatpush1.msra.mxu0 %v6777
      %7662 = vmatprep.subr.mxu0 %v6782
      %7663 = vmatpush1.msra.mxu0 %v6781
      %7664 = vmatprep.subr.mxu0 %v6786
      %7665 = vmatpush1.msra.mxu0 %v6785
      %7666 = vmatprep.subr.mxu0 0.0
      %7667 = vmatpush1.msra.mxu0 0.0
      %7668 = vmatprep.subr.mxu0 0.0
      %7669 = vmatpush1.msra.mxu0 0.0
      %7670 = vmatprep.subr.mxu0 0.0
      %7671 = vmatpush1.msra.mxu0 0.0
      %7672 = vmatprep.subr.mxu0 0.0
      %7673 = vmatpush1.msra.mxu0 0.0
      %7674 = vmatprep.subr.mxu0 0.0
      %7675 = vmatpush1.msra.mxu0 0.0
      %7676 = vmatprep.subr.mxu0 0.0
      %7677 = vmatpush1.msra.mxu0 0.0
      %7678 = vmatprep.subr.mxu0 0.0
      %7679 = vmatpush1.msra.mxu0 0.0
      %7680 = vmatprep.subr.mxu0 0.0
      %7681 = vmatpush1.msra.mxu0 0.0
      %7682 = vmatprep.subr.mxu0 0.0
      %7683 = vmatpush1.msra.mxu0 0.0
      %7684 = vmatprep.subr.mxu0 0.0
      %7685 = vmatpush1.msra.mxu0 0.0
      %7686 = vmatprep.subr.mxu0 0.0
      %7687 = vmatpush1.msra.mxu0 0.0
      %7688 = vmatprep.subr.mxu0 0.0
      %7689 = vmatpush1.msra.mxu0 0.0
      %7690 = vmatprep.subr.mxu0 0.0
      %7691 = vmatpush1.msra.mxu0 0.0
      %7692 = vmatprep.subr.mxu0 0.0
      %7693 = vmatpush1.msra.mxu0 0.0
      %7694 = vmatprep.subr.mxu0 0.0
      %7695 = vmatpush1.msra.mxu0 0.0
      %7696 = vmatprep.subr.mxu0 0.0
      %7697 = vmatpush1.msra.mxu0 0.0
      %7698 = vmatprep.mubr.f32.mxu0 0.0
      %7699 = vmatmul.mubr.f32.gmra.mrb[0].mxu0 %v7456
      %v7700 = vpop.f32.mrb[0].mxu0
      %v7701 = vadd.f32 0.0, %v7700
      %v7702 = vpop.f32.mrb[0].mxu0
      %v7703 = vadd.f32 0.0, %v7702
      %7704 = vdwg.mxu0
      %7705 = vmatprep.subr.mxu0 %v6728
      %7706 = vmatpush1.msra.mxu0 %v6727
      %7707 = vmatprep.subr.mxu0 %v6732
      %7708 = vmatpush1.msra.mxu0 %v6731
      %7709 = vmatprep.subr.mxu0 %v6736
      %7710 = vmatpush1.msra.mxu0 %v6735
      %7711 = vmatprep.subr.mxu0 %v6740
      %7712 = vmatpush1.msra.mxu0 %v6739
      %7713 = vmatprep.subr.mxu0 %v6744
      %7714 = vmatpush1.msra.mxu0 %v6743
      %7715 = vmatprep.subr.mxu0 %v6748
      %7716 = vmatpush1.msra.mxu0 %v6747
      %7717 = vmatprep.subr.mxu0 %v6752
      %7718 = vmatpush1.msra.mxu0 %v6751
      %7719 = vmatprep.subr.mxu0 %v6756
      %7720 = vmatpush1.msra.mxu0 %v6755
      %7721 = vmatprep.subr.mxu0 %v6760
      %7722 = vmatpush1.msra.mxu0 %v6759
      %7723 = vmatprep.subr.mxu0 %v6764
      %7724 = vmatpush1.msra.mxu0 %v6763
      %7725 = vmatprep.subr.mxu0 %v6768
      %7726 = vmatpush1.msra.mxu0 %v6767
      %7727 = vmatprep.subr.mxu0 %v6772
      %7728 = vmatpush1.msra.mxu0 %v6771
      %7729 = vmatprep.subr.mxu0 %v6776
      %7730 = vmatpush1.msra.mxu0 %v6775
      %7731 = vmatprep.subr.mxu0 %v6780
      %7732 = vmatpush1.msra.mxu0 %v6779
      %7733 = vmatprep.subr.mxu0 %v6784
      %7734 = vmatpush1.msra.mxu0 %v6783
      %7735 = vmatprep.subr.mxu0 %v6788
      %7736 = vmatpush1.msra.mxu0 %v6787
      %7737 = vmatprep.subr.mxu0 0.0
      %7738 = vmatpush1.msra.mxu0 0.0
      %7739 = vmatprep.subr.mxu0 0.0
      %7740 = vmatpush1.msra.mxu0 0.0
      %7741 = vmatprep.subr.mxu0 0.0
      %7742 = vmatpush1.msra.mxu0 0.0
      %7743 = vmatprep.subr.mxu0 0.0
      %7744 = vmatpush1.msra.mxu0 0.0
      %7745 = vmatprep.subr.mxu0 0.0
      %7746 = vmatpush1.msra.mxu0 0.0
      %7747 = vmatprep.subr.mxu0 0.0
      %7748 = vmatpush1.msra.mxu0 0.0
      %7749 = vmatprep.subr.mxu0 0.0
      %7750 = vmatpush1.msra.mxu0 0.0
      %7751 = vmatprep.subr.mxu0 0.0
      %7752 = vmatpush1.msra.mxu0 0.0
      %7753 = vmatprep.subr.mxu0 0.0
      %7754 = vmatpush1.msra.mxu0 0.0
      %7755 = vmatprep.subr.mxu0 0.0
      %7756 = vmatpush1.msra.mxu0 0.0
      %7757 = vmatprep.subr.mxu0 0.0
      %7758 = vmatpush1.msra.mxu0 0.0
      %7759 = vmatprep.subr.mxu0 0.0
      %7760 = vmatpush1.msra.mxu0 0.0
      %7761 = vmatprep.subr.mxu0 0.0
      %7762 = vmatpush1.msra.mxu0 0.0
      %7763 = vmatprep.subr.mxu0 0.0
      %7764 = vmatpush1.msra.mxu0 0.0
      %7765 = vmatprep.subr.mxu0 0.0
      %7766 = vmatpush1.msra.mxu0 0.0
      %7767 = vmatprep.subr.mxu0 0.0
      %7768 = vmatpush1.msra.mxu0 0.0
      %7769 = vmatprep.mubr.f32.mxu0 0.0
      %7770 = vmatmul.mubr.f32.gmra.mrb[0].mxu0 %v7456
      %v7771 = vpop.f32.mrb[0].mxu0
      %v7772 = vadd.f32 0.0, %v7771
      %v7773 = vpop.f32.mrb[0].mxu0
      %v7774 = vadd.f32 0.0, %v7773
      %7775 = vdwg.mxu0
      %v7776 = vadd.f32 %v7630, %v7701
      %v7777 = vadd.f32 %v7631, %v7703
      %v7778 = vadd.f32 %v7632, %v7772
      %v7779 = vadd.f32 %v7633, %v7774
      %v7780 = vxor.u32 %v7776, 2147483648
      %v7781 = vmul.f32 %v7780, 1.442695
      %v7782 = vpow.pop %v7781
      %v7783 = vadd.f32 %v7782, 1.0
      %v7784 = vrcp.pop %v7783
      %v7785 = vmul.f32 1.0, %v7784
      %v7786 = vxor.u32 %v7777, 2147483648
      %v7787 = vmul.f32 %v7786, 1.442695
      %v7788 = vpow.pop %v7787
      %v7789 = vadd.f32 %v7788, 1.0
      %v7790 = vrcp.pop %v7789
      %v7791 = vmul.f32 1.0, %v7790
      %v7792 = vtanh.pop %v7778
      %v7793 = vxor.u32 %v7779, 2147483648
      %v7794 = vmul.f32 %v7793, 1.442695
      %v7795 = vpow.pop %v7794
      %v7796 = vadd.f32 %v7795, 1.0
      %v7797 = vrcp.pop %v7796
      %v7798 = vmul.f32 1.0, %v7797
      %v7799 = vmul.f32 %v7791, %v7454
      %v7800 = vmul.f32 %v7785, %v7792
      %v7801 = vadd.f32 %v7799, %v7800
      %v7802 = vtanh.pop %v7801
      %v7803 = vmul.f32 %v7798, %v7802
      %7804 = vmatprep.subr.mxu0 %v6960
      %7805 = vmatpush1.msra.mxu0 %v6959
      %7806 = vmatprep.subr.mxu0 %v6964
      %7807 = vmatpush1.msra.mxu0 %v6963
      %7808 = vmatprep.subr.mxu0 %v6968
      %7809 = vmatpush1.msra.mxu0 %v6967
      %7810 = vmatprep.subr.mxu0 %v6972
      %7811 = vmatpush1.msra.mxu0 %v6971
      %7812 = vmatprep.subr.mxu0 %v6976
      %7813 = vmatpush1.msra.mxu0 %v6975
      %7814 = vmatprep.subr.mxu0 %v6980
      %7815 = vmatpush1.msra.mxu0 %v6979
      %7816 = vmatprep.subr.mxu0 %v6984
      %7817 = vmatpush1.msra.mxu0 %v6983
      %7818 = vmatprep.subr.mxu0 %v6988
      %7819 = vmatpush1.msra.mxu0 %v6987
      %7820 = vmatprep.subr.mxu0 %v6992
      %7821 = vmatpush1.msra.mxu0 %v6991
      %7822 = vmatprep.subr.mxu0 %v6996
      %7823 = vmatpush1.msra.mxu0 %v6995
      %7824 = vmatprep.subr.mxu0 %v7000
      %7825 = vmatpush1.msra.mxu0 %v6999
      %7826 = vmatprep.subr.mxu0 %v7004
      %7827 = vmatpush1.msra.mxu0 %v7003
      %7828 = vmatprep.subr.mxu0 %v7008
      %7829 = vmatpush1.msra.mxu0 %v7007
      %7830 = vmatprep.subr.mxu0 %v7012
      %7831 = vmatpush1.msra.mxu0 %v7011
      %7832 = vmatprep.subr.mxu0 %v7016
      %7833 = vmatpush1.msra.mxu0 %v7015
      %7834 = vmatprep.subr.mxu0 %v7020
      %7835 = vmatpush1.msra.mxu0 %v7019
      %7836 = vmatprep.subr.mxu0 %v7024
      %7837 = vmatpush1.msra.mxu0 %v7023
      %7838 = vmatprep.subr.mxu0 %v7028
      %7839 = vmatpush1.msra.mxu0 %v7027
      %7840 = vmatprep.subr.mxu0 %v7032
      %7841 = vmatpush1.msra.mxu0 %v7031
      %7842 = vmatprep.subr.mxu0 %v7036
      %7843 = vmatpush1.msra.mxu0 %v7035
      %7844 = vmatprep.subr.mxu0 %v7040
      %7845 = vmatpush1.msra.mxu0 %v7039
      %7846 = vmatprep.subr.mxu0 %v7044
      %7847 = vmatpush1.msra.mxu0 %v7043
      %7848 = vmatprep.subr.mxu0 %v7048
      %7849 = vmatpush1.msra.mxu0 %v7047
      %7850 = vmatprep.subr.mxu0 %v7052
      %7851 = vmatpush1.msra.mxu0 %v7051
      %7852 = vmatprep.subr.mxu0 %v7056
      %7853 = vmatpush1.msra.mxu0 %v7055
      %7854 = vmatprep.subr.mxu0 %v7060
      %7855 = vmatpush1.msra.mxu0 %v7059
      %7856 = vmatprep.subr.mxu0 %v7064
      %7857 = vmatpush1.msra.mxu0 %v7063
      %7858 = vmatprep.subr.mxu0 %v7068
      %7859 = vmatpush1.msra.mxu0 %v7067
      %7860 = vmatprep.subr.mxu0 %v7072
      %7861 = vmatpush1.msra.mxu0 %v7071
      %7862 = vmatprep.subr.mxu0 %v7076
      %7863 = vmatpush1.msra.mxu0 %v7075
      %7864 = vmatprep.subr.mxu0 %v7080
      %7865 = vmatpush1.msra.mxu0 %v7079
      %7866 = vmatprep.subr.mxu0 %v7084
      %7867 = vmatpush1.msra.mxu0 %v7083
      %7868 = vmatprep.mubr.f32.mxu0 %v7622
      %7869 = vmatmul.mubr.f32.gmra.mrb[0].mxu0 %v7803
      %v7870 = vpop.f32.mrb[0].mxu0
      %v7871 = vadd.f32 %v7092, %v7870
      %v7872 = vpop.f32.mrb[0].mxu0
      %v7873 = vadd.f32 %v7096, %v7872
      %7874 = vdwg.mxu0
      %7875 = vmatprep.subr.mxu0 %v6962
      %7876 = vmatpush1.msra.mxu0 %v6961
      %7877 = vmatprep.subr.mxu0 %v6966
      %7878 = vmatpush1.msra.mxu0 %v6965
      %7879 = vmatprep.subr.mxu0 %v6970
      %7880 = vmatpush1.msra.mxu0 %v6969
      %7881 = vmatprep.subr.mxu0 %v6974
      %7882 = vmatpush1.msra.mxu0 %v6973
      %7883 = vmatprep.subr.mxu0 %v6978
      %7884 = vmatpush1.msra.mxu0 %v6977
      %7885 = vmatprep.subr.mxu0 %v6982
      %7886 = vmatpush1.msra.mxu0 %v6981
      %7887 = vmatprep.subr.mxu0 %v6986
      %7888 = vmatpush1.msra.mxu0 %v6985
      %7889 = vmatprep.subr.mxu0 %v6990
      %7890 = vmatpush1.msra.mxu0 %v6989
      %7891 = vmatprep.subr.mxu0 %v6994
      %7892 = vmatpush1.msra.mxu0 %v6993
      %7893 = vmatprep.subr.mxu0 %v6998
      %7894 = vmatpush1.msra.mxu0 %v6997
      %7895 = vmatprep.subr.mxu0 %v7002
      %7896 = vmatpush1.msra.mxu0 %v7001
      %7897 = vmatprep.subr.mxu0 %v7006
      %7898 = vmatpush1.msra.mxu0 %v7005
      %7899 = vmatprep.subr.mxu0 %v7010
      %7900 = vmatpush1.msra.mxu0 %v7009
      %7901 = vmatprep.subr.mxu0 %v7014
      %7902 = vmatpush1.msra.mxu0 %v7013
      %7903 = vmatprep.subr.mxu0 %v7018
      %7904 = vmatpush1.msra.mxu0 %v7017
      %7905 = vmatprep.subr.mxu0 %v7022
      %7906 = vmatpush1.msra.mxu0 %v7021
      %7907 = vmatprep.subr.mxu0 %v7026
      %7908 = vmatpush1.msra.mxu0 %v7025
      %7909 = vmatprep.subr.mxu0 %v7030
      %7910 = vmatpush1.msra.mxu0 %v7029
      %7911 = vmatprep.subr.mxu0 %v7034
      %7912 = vmatpush1.msra.mxu0 %v7033
      %7913 = vmatprep.subr.mxu0 %v7038
      %7914 = vmatpush1.msra.mxu0 %v7037
      %7915 = vmatprep.subr.mxu0 %v7042
      %7916 = vmatpush1.msra.mxu0 %v7041
      %7917 = vmatprep.subr.mxu0 %v7046
      %7918 = vmatpush1.msra.mxu0 %v7045
      %7919 = vmatprep.subr.mxu0 %v7050
      %7920 = vmatpush1.msra.mxu0 %v7049
      %7921 = vmatprep.subr.mxu0 %v7054
      %7922 = vmatpush1.msra.mxu0 %v7053
      %7923 = vmatprep.subr.mxu0 %v7058
      %7924 = vmatpush1.msra.mxu0 %v7057
      %7925 = vmatprep.subr.mxu0 %v7062
      %7926 = vmatpush1.msra.mxu0 %v7061
      %7927 = vmatprep.subr.mxu0 %v7066
      %7928 = vmatpush1.msra.mxu0 %v7065
      %7929 = vmatprep.subr.mxu0 %v7070
      %7930 = vmatpush1.msra.mxu0 %v7069
      %7931 = vmatprep.subr.mxu0 %v7074
      %7932 = vmatpush1.msra.mxu0 %v7073
      %7933 = vmatprep.subr.mxu0 %v7078
      %7934 = vmatpush1.msra.mxu0 %v7077
      %7935 = vmatprep.subr.mxu0 %v7082
      %7936 = vmatpush1.msra.mxu0 %v7081
      %7937 = vmatprep.subr.mxu0 %v7086
      %7938 = vmatpush1.msra.mxu0 %v7085
      %7939 = vmatprep.mubr.f32.mxu0 %v7622
      %7940 = vmatmul.mubr.f32.gmra.mrb[0].mxu0 %v7803
      %v7941 = vpop.f32.mrb[0].mxu0
      %v7942 = vadd.f32 %v7100, %v7941
      %v7943 = vpop.f32.mrb[0].mxu0
      %v7944 = vadd.f32 %v7104, %v7943
      %7945 = vdwg.mxu0
      %v7946 = vxor.u32 %v7871, 2147483648
      %v7947 = vmul.f32 %v7946, 1.442695
      %v7948 = vpow.pop %v7947
      %v7949 = vadd.f32 %v7948, 1.0
      %v7950 = vrcp.pop %v7949
      %v7951 = vmul.f32 1.0, %v7950
      %v7952 = vxor.u32 %v7873, 2147483648
      %v7953 = vmul.f32 %v7952, 1.442695
      %v7954 = vpow.pop %v7953
      %v7955 = vadd.f32 %v7954, 1.0
      %v7956 = vrcp.pop %v7955
      %v7957 = vmul.f32 1.0, %v7956
      %v7958 = vtanh.pop %v7942
      %v7959 = vxor.u32 %v7944, 2147483648
      %v7960 = vmul.f32 %v7959, 1.442695
      %v7961 = vpow.pop %v7960
      %v7962 = vadd.f32 %v7961, 1.0
      %v7963 = vrcp.pop %v7962
      %v7964 = vmul.f32 1.0, %v7963
      %v7965 = vmul.f32 %v7957, %v7620
      %v7966 = vmul.f32 %v7951, %v7958
      %v7967 = vadd.f32 %v7965, %v7966
      %v7968 = vtanh.pop %v7967
      %v7969 = vmul.f32 %v7964, %v7968
      %s7970 = sadd.s32 %s7275, 3
      %s7971 = smul.u32 %s7970, 8
      %s7972 = sshra.s32 %s7971, 3
      %s7973 = sand.u32 %s7971, 7
      %s7974 = smul.u32 %s7972, 4
      %s7975 = smul.addr %s7974, 8
      %s7976 = scalar_lea.vmem [#allocation2], %s7975
      %v7977 = vld [vmem:[%s7976] sm:$0xff]
      %v7978 = vld [vmem:[%s7976 + $0x8] sm:$0xff]
      %v7979 = vld [vmem:[%s7976 + $0x10] sm:$0xff]
      %v7980 = vld [vmem:[%s7976 + $0x18] sm:$0xff]
      %7981 = vmatprep.subr.mxu0 %v6726
      %7982 = vmatpush1.msra.mxu0 %v6725
      %7983 = vmatprep.subr.mxu0 %v6730
      %7984 = vmatpush1.msra.mxu0 %v6729
      %7985 = vmatprep.subr.mxu0 %v6734
      %7986 = vmatpush1.msra.mxu0 %v6733
      %7987 = vmatprep.subr.mxu0 %v6738
      %7988 = vmatpush1.msra.mxu0 %v6737
      %7989 = vmatprep.subr.mxu0 %v6742
      %7990 = vmatpush1.msra.mxu0 %v6741
      %7991 = vmatprep.subr.mxu0 %v6746
      %7992 = vmatpush1.msra.mxu0 %v6745
      %7993 = vmatprep.subr.mxu0 %v6750
      %7994 = vmatpush1.msra.mxu0 %v6749
      %7995 = vmatprep.subr.mxu0 %v6754
      %7996 = vmatpush1.msra.mxu0 %v6753
      %7997 = vmatprep.subr.mxu0 %v6758
      %7998 = vmatpush1.msra.mxu0 %v6757
      %7999 = vmatprep.subr.mxu0 %v6762
      %8000 = vmatpush1.msra.mxu0 %v6761
      %8001 = vmatprep.subr.mxu0 %v6766
      %8002 = vmatpush1.msra.mxu0 %v6765
      %8003 = vmatprep.subr.mxu0 %v6770
      %8004 = vmatpush1.msra.mxu0 %v6769
      %8005 = vmatprep.subr.mxu0 %v6774
      %8006 = vmatpush1.msra.mxu0 %v6773
      %8007 = vmatprep.subr.mxu0 %v6778
      %8008 = vmatpush1.msra.mxu0 %v6777
      %8009 = vmatprep.subr.mxu0 %v6782
      %8010 = vmatpush1.msra.mxu0 %v6781
      %8011 = vmatprep.subr.mxu0 %v6786
      %8012 = vmatpush1.msra.mxu0 %v6785
      %8013 = vmatprep.subr.mxu0 0.0
      %8014 = vmatpush1.msra.mxu0 0.0
      %8015 = vmatprep.subr.mxu0 0.0
      %8016 = vmatpush1.msra.mxu0 0.0
      %8017 = vmatprep.subr.mxu0 0.0
      %8018 = vmatpush1.msra.mxu0 0.0
      %8019 = vmatprep.subr.mxu0 0.0
      %8020 = vmatpush1.msra.mxu0 0.0
      %8021 = vmatprep.subr.mxu0 0.0
      %8022 = vmatpush1.msra.mxu0 0.0
      %8023 = vmatprep.subr.mxu0 0.0
      %8024 = vmatpush1.msra.mxu0 0.0
      %8025 = vmatprep.subr.mxu0 0.0
      %8026 = vmatpush1.msra.mxu0 0.0
      %8027 = vmatprep.subr.mxu0 0.0
      %8028 = vmatpush1.msra.mxu0 0.0
      %8029 = vmatprep.subr.mxu0 0.0
      %8030 = vmatpush1.msra.mxu0 0.0
      %8031 = vmatprep.subr.mxu0 0.0
      %8032 = vmatpush1.msra.mxu0 0.0
      %8033 = vmatprep.subr.mxu0 0.0
      %8034 = vmatpush1.msra.mxu0 0.0
      %8035 = vmatprep.subr.mxu0 0.0
      %8036 = vmatpush1.msra.mxu0 0.0
      %8037 = vmatprep.subr.mxu0 0.0
      %8038 = vmatpush1.msra.mxu0 0.0
      %8039 = vmatprep.subr.mxu0 0.0
      %8040 = vmatpush1.msra.mxu0 0.0
      %8041 = vmatprep.subr.mxu0 0.0
      %8042 = vmatpush1.msra.mxu0 0.0
      %8043 = vmatprep.subr.mxu0 0.0
      %8044 = vmatpush1.msra.mxu0 0.0
      %8045 = vmatprep.mubr.f32.mxu0 0.0
      %8046 = vmatmul.mubr.f32.gmra.mrb[0].mxu0 %v7803
      %v8047 = vpop.f32.mrb[0].mxu0
      %v8048 = vadd.f32 0.0, %v8047
      %v8049 = vpop.f32.mrb[0].mxu0
      %v8050 = vadd.f32 0.0, %v8049
      %8051 = vdwg.mxu0
      %8052 = vmatprep.subr.mxu0 %v6728
      %8053 = vmatpush1.msra.mxu0 %v6727
      %8054 = vmatprep.subr.mxu0 %v6732
      %8055 = vmatpush1.msra.mxu0 %v6731
      %8056 = vmatprep.subr.mxu0 %v6736
      %8057 = vmatpush1.msra.mxu0 %v6735
      %8058 = vmatprep.subr.mxu0 %v6740
      %8059 = vmatpush1.msra.mxu0 %v6739
      %8060 = vmatprep.subr.mxu0 %v6744
      %8061 = vmatpush1.msra.mxu0 %v6743
      %8062 = vmatprep.subr.mxu0 %v6748
      %8063 = vmatpush1.msra.mxu0 %v6747
      %8064 = vmatprep.subr.mxu0 %v6752
      %8065 = vmatpush1.msra.mxu0 %v6751
      %8066 = vmatprep.subr.mxu0 %v6756
      %8067 = vmatpush1.msra.mxu0 %v6755
      %8068 = vmatprep.subr.mxu0 %v6760
      %8069 = vmatpush1.msra.mxu0 %v6759
      %8070 = vmatprep.subr.mxu0 %v6764
      %8071 = vmatpush1.msra.mxu0 %v6763
      %8072 = vmatprep.subr.mxu0 %v6768
      %8073 = vmatpush1.msra.mxu0 %v6767
      %8074 = vmatprep.subr.mxu0 %v6772
      %8075 = vmatpush1.msra.mxu0 %v6771
      %8076 = vmatprep.subr.mxu0 %v6776
      %8077 = vmatpush1.msra.mxu0 %v6775
      %8078 = vmatprep.subr.mxu0 %v6780
      %8079 = vmatpush1.msra.mxu0 %v6779
      %8080 = vmatprep.subr.mxu0 %v6784
      %8081 = vmatpush1.msra.mxu0 %v6783
      %8082 = vmatprep.subr.mxu0 %v6788
      %8083 = vmatpush1.msra.mxu0 %v6787
      %8084 = vmatprep.subr.mxu0 0.0
      %8085 = vmatpush1.msra.mxu0 0.0
      %8086 = vmatprep.subr.mxu0 0.0
      %8087 = vmatpush1.msra.mxu0 0.0
      %8088 = vmatprep.subr.mxu0 0.0
      %8089 = vmatpush1.msra.mxu0 0.0
      %8090 = vmatprep.subr.mxu0 0.0
      %8091 = vmatpush1.msra.mxu0 0.0
      %8092 = vmatprep.subr.mxu0 0.0
      %8093 = vmatpush1.msra.mxu0 0.0
      %8094 = vmatprep.subr.mxu0 0.0
      %8095 = vmatpush1.msra.mxu0 0.0
      %8096 = vmatprep.subr.mxu0 0.0
      %8097 = vmatpush1.msra.mxu0 0.0
      %8098 = vmatprep.subr.mxu0 0.0
      %8099 = vmatpush1.msra.mxu0 0.0
      %8100 = vmatprep.subr.mxu0 0.0
      %8101 = vmatpush1.msra.mxu0 0.0
      %8102 = vmatprep.subr.mxu0 0.0
      %8103 = vmatpush1.msra.mxu0 0.0
      %8104 = vmatprep.subr.mxu0 0.0
      %8105 = vmatpush1.msra.mxu0 0.0
      %8106 = vmatprep.subr.mxu0 0.0
      %8107 = vmatpush1.msra.mxu0 0.0
      %8108 = vmatprep.subr.mxu0 0.0
      %8109 = vmatpush1.msra.mxu0 0.0
      %8110 = vmatprep.subr.mxu0 0.0
      %8111 = vmatpush1.msra.mxu0 0.0
      %8112 = vmatprep.subr.mxu0 0.0
      %8113 = vmatpush1.msra.mxu0 0.0
      %8114 = vmatprep.subr.mxu0 0.0
      %8115 = vmatpush1.msra.mxu0 0.0
      %8116 = vmatprep.mubr.f32.mxu0 0.0
      %8117 = vmatmul.mubr.f32.gmra.mrb[0].mxu0 %v7803
      %v8118 = vpop.f32.mrb[0].mxu0
      %v8119 = vadd.f32 0.0, %v8118
      %v8120 = vpop.f32.mrb[0].mxu0
      %v8121 = vadd.f32 0.0, %v8120
      %8122 = vdwg.mxu0
      %v8123 = vadd.f32 %v7977, %v8048
      %v8124 = vadd.f32 %v7978, %v8050
      %v8125 = vadd.f32 %v7979, %v8119
      %v8126 = vadd.f32 %v7980, %v8121
      %v8127 = vxor.u32 %v8123, 2147483648
      %v8128 = vmul.f32 %v8127, 1.442695
      %v8129 = vpow.pop %v8128
      %v8130 = vadd.f32 %v8129, 1.0
      %v8131 = vrcp.pop %v8130
      %v8132 = vmul.f32 1.0, %v8131
      %v8133 = vxor.u32 %v8124, 2147483648
      %v8134 = vmul.f32 %v8133, 1.442695
      %v8135 = vpow.pop %v8134
      %v8136 = vadd.f32 %v8135, 1.0
      %v8137 = vrcp.pop %v8136
      %v8138 = vmul.f32 1.0, %v8137
      %v8139 = vtanh.pop %v8125
      %v8140 = vxor.u32 %v8126, 2147483648
      %v8141 = vmul.f32 %v8140, 1.442695
      %v8142 = vpow.pop %v8141
      %v8143 = vadd.f32 %v8142, 1.0
      %v8144 = vrcp.pop %v8143
      %v8145 = vmul.f32 1.0, %v8144
      %v8146 = vmul.f32 %v8138, %v7801
      %v8147 = vmul.f32 %v8132, %v8139
      %v8148 = vadd.f32 %v8146, %v8147
      %v8149 = vtanh.pop %v8148
      %v8150 = vmul.f32 %v8145, %v8149
      %8151 = vmatprep.subr.mxu0 %v6960
      %8152 = vmatpush1.msra.mxu0 %v6959
      %8153 = vmatprep.subr.mxu0 %v6964
      %8154 = vmatpush1.msra.mxu0 %v6963
      %8155 = vmatprep.subr.mxu0 %v6968
      %8156 = vmatpush1.msra.mxu0 %v6967
      %8157 = vmatprep.subr.mxu0 %v6972
      %8158 = vmatpush1.msra.mxu0 %v6971
      %8159 = vmatprep.subr.mxu0 %v6976
      %8160 = vmatpush1.msra.mxu0 %v6975
      %8161 = vmatprep.subr.mxu0 %v6980
      %8162 = vmatpush1.msra.mxu0 %v6979
      %8163 = vmatprep.subr.mxu0 %v6984
      %8164 = vmatpush1.msra.mxu0 %v6983
      %8165 = vmatprep.subr.mxu0 %v6988
      %8166 = vmatpush1.msra.mxu0 %v6987
      %8167 = vmatprep.subr.mxu0 %v6992
      %8168 = vmatpush1.msra.mxu0 %v6991
      %8169 = vmatprep.subr.mxu0 %v6996
      %8170 = vmatpush1.msra.mxu0 %v6995
      %8171 = vmatprep.subr.mxu0 %v7000
      %8172 = vmatpush1.msra.mxu0 %v6999
      %8173 = vmatprep.subr.mxu0 %v7004
      %8174 = vmatpush1.msra.mxu0 %v7003
      %8175 = vmatprep.subr.mxu0 %v7008
      %8176 = vmatpush1.msra.mxu0 %v7007
      %8177 = vmatprep.subr.mxu0 %v7012
      %8178 = vmatpush1.msra.mxu0 %v7011
      %8179 = vmatprep.subr.mxu0 %v7016
      %8180 = vmatpush1.msra.mxu0 %v7015
      %8181 = vmatprep.subr.mxu0 %v7020
      %8182 = vmatpush1.msra.mxu0 %v7019
      %8183 = vmatprep.subr.mxu0 %v7024
      %8184 = vmatpush1.msra.mxu0 %v7023
      %8185 = vmatprep.subr.mxu0 %v7028
      %8186 = vmatpush1.msra.mxu0 %v7027
      %8187 = vmatprep.subr.mxu0 %v7032
      %8188 = vmatpush1.msra.mxu0 %v7031
      %8189 = vmatprep.subr.mxu0 %v7036
      %8190 = vmatpush1.msra.mxu0 %v7035
      %8191 = vmatprep.subr.mxu0 %v7040
      %8192 = vmatpush1.msra.mxu0 %v7039
      %8193 = vmatprep.subr.mxu0 %v7044
      %8194 = vmatpush1.msra.mxu0 %v7043
      %8195 = vmatprep.subr.mxu0 %v7048
      %8196 = vmatpush1.msra.mxu0 %v7047
      %8197 = vmatprep.subr.mxu0 %v7052
      %8198 = vmatpush1.msra.mxu0 %v7051
      %8199 = vmatprep.subr.mxu0 %v7056
      %8200 = vmatpush1.msra.mxu0 %v7055
      %8201 = vmatprep.subr.mxu0 %v7060
      %8202 = vmatpush1.msra.mxu0 %v7059
      %8203 = vmatprep.subr.mxu0 %v7064
      %8204 = vmatpush1.msra.mxu0 %v7063
      %8205 = vmatprep.subr.mxu0 %v7068
      %8206 = vmatpush1.msra.mxu0 %v7067
      %8207 = vmatprep.subr.mxu0 %v7072
      %8208 = vmatpush1.msra.mxu0 %v7071
      %8209 = vmatprep.subr.mxu0 %v7076
      %8210 = vmatpush1.msra.mxu0 %v7075
      %8211 = vmatprep.subr.mxu0 %v7080
      %8212 = vmatpush1.msra.mxu0 %v7079
      %8213 = vmatprep.subr.mxu0 %v7084
      %8214 = vmatpush1.msra.mxu0 %v7083
      %8215 = vmatprep.mubr.f32.mxu0 %v7969
      %8216 = vmatmul.mubr.f32.gmra.mrb[0].mxu0 %v8150
      %v8217 = vpop.f32.mrb[0].mxu0
      %v8218 = vadd.f32 %v7092, %v8217
      %v8219 = vpop.f32.mrb[0].mxu0
      %v8220 = vadd.f32 %v7096, %v8219
      %8221 = vdwg.mxu0
      %8222 = vmatprep.subr.mxu0 %v6962
      %8223 = vmatpush1.msra.mxu0 %v6961
      %8224 = vmatprep.subr.mxu0 %v6966
      %8225 = vmatpush1.msra.mxu0 %v6965
      %8226 = vmatprep.subr.mxu0 %v6970
      %8227 = vmatpush1.msra.mxu0 %v6969
      %8228 = vmatprep.subr.mxu0 %v6974
      %8229 = vmatpush1.msra.mxu0 %v6973
      %8230 = vmatprep.subr.mxu0 %v6978
      %8231 = vmatpush1.msra.mxu0 %v6977
      %8232 = vmatprep.subr.mxu0 %v6982
      %8233 = vmatpush1.msra.mxu0 %v6981
      %8234 = vmatprep.subr.mxu0 %v6986
      %8235 = vmatpush1.msra.mxu0 %v6985
      %8236 = vmatprep.subr.mxu0 %v6990
      %8237 = vmatpush1.msra.mxu0 %v6989
      %8238 = vmatprep.subr.mxu0 %v6994
      %8239 = vmatpush1.msra.mxu0 %v6993
      %8240 = vmatprep.subr.mxu0 %v6998
      %8241 = vmatpush1.msra.mxu0 %v6997
      %8242 = vmatprep.subr.mxu0 %v7002
      %8243 = vmatpush1.msra.mxu0 %v7001
      %8244 = vmatprep.subr.mxu0 %v7006
      %8245 = vmatpush1.msra.mxu0 %v7005
      %8246 = vmatprep.subr.mxu0 %v7010
      %8247 = vmatpush1.msra.mxu0 %v7009
      %8248 = vmatprep.subr.mxu0 %v7014
      %8249 = vmatpush1.msra.mxu0 %v7013
      %8250 = vmatprep.subr.mxu0 %v7018
      %8251 = vmatpush1.msra.mxu0 %v7017
      %8252 = vmatprep.subr.mxu0 %v7022
      %8253 = vmatpush1.msra.mxu0 %v7021
      %8254 = vmatprep.subr.mxu0 %v7026
      %8255 = vmatpush1.msra.mxu0 %v7025
      %8256 = vmatprep.subr.mxu0 %v7030
      %8257 = vmatpush1.msra.mxu0 %v7029
      %8258 = vmatprep.subr.mxu0 %v7034
      %8259 = vmatpush1.msra.mxu0 %v7033
      %8260 = vmatprep.subr.mxu0 %v7038
      %8261 = vmatpush1.msra.mxu0 %v7037
      %8262 = vmatprep.subr.mxu0 %v7042
      %8263 = vmatpush1.msra.mxu0 %v7041
      %8264 = vmatprep.subr.mxu0 %v7046
      %8265 = vmatpush1.msra.mxu0 %v7045
      %8266 = vmatprep.subr.mxu0 %v7050
      %8267 = vmatpush1.msra.mxu0 %v7049
      %8268 = vmatprep.subr.mxu0 %v7054
      %8269 = vmatpush1.msra.mxu0 %v7053
      %8270 = vmatprep.subr.mxu0 %v7058
      %8271 = vmatpush1.msra.mxu0 %v7057
      %8272 = vmatprep.subr.mxu0 %v7062
      %8273 = vmatpush1.msra.mxu0 %v7061
      %8274 = vmatprep.subr.mxu0 %v7066
      %8275 = vmatpush1.msra.mxu0 %v7065
      %8276 = vmatprep.subr.mxu0 %v7070
      %8277 = vmatpush1.msra.mxu0 %v7069
      %8278 = vmatprep.subr.mxu0 %v7074
      %8279 = vmatpush1.msra.mxu0 %v7073
      %8280 = vmatprep.subr.mxu0 %v7078
      %8281 = vmatpush1.msra.mxu0 %v7077
      %8282 = vmatprep.subr.mxu0 %v7082
      %8283 = vmatpush1.msra.mxu0 %v7081
      %8284 = vmatprep.subr.mxu0 %v7086
      %8285 = vmatpush1.msra.mxu0 %v7085
      %8286 = vmatprep.mubr.f32.mxu0 %v7969
      %8287 = vmatmul.mubr.f32.gmra.mrb[0].mxu0 %v8150
      %v8288 = vpop.f32.mrb[0].mxu0
      %v8289 = vadd.f32 %v7100, %v8288
      %v8290 = vpop.f32.mrb[0].mxu0
      %v8291 = vadd.f32 %v7104, %v8290
      %8292 = vdwg.mxu0
      %v8293 = vxor.u32 %v8218, 2147483648
      %v8294 = vmul.f32 %v8293, 1.442695
      %v8295 = vpow.pop %v8294
      %v8296 = vadd.f32 %v8295, 1.0
      %v8297 = vrcp.pop %v8296
      %v8298 = vmul.f32 1.0, %v8297
      %v8299 = vxor.u32 %v8220, 2147483648
      %v8300 = vmul.f32 %v8299, 1.442695
      %v8301 = vpow.pop %v8300
      %v8302 = vadd.f32 %v8301, 1.0
      %v8303 = vrcp.pop %v8302
      %v8304 = vmul.f32 1.0, %v8303
      %v8305 = vtanh.pop %v8289
      %v8306 = vxor.u32 %v8291, 2147483648
      %v8307 = vmul.f32 %v8306, 1.442695
      %v8308 = vpow.pop %v8307
      %v8309 = vadd.f32 %v8308, 1.0
      %v8310 = vrcp.pop %v8309
      %v8311 = vmul.f32 1.0, %v8310
      %v8312 = vmul.f32 %v8304, %v7967
      %v8313 = vmul.f32 %v8298, %v8305
      %v8314 = vadd.f32 %v8312, %v8313
      %v8315 = vtanh.pop %v8314
      %v8316 = vmul.f32 %v8311, %v8315
    $region78: #{forward.1} parent=1 // loop_footer
      %s6710 = sadd.s32 1, %s6706
    $region79: #{forward.1} parent=1 // loop_footer_branch
      %6705 = sbr.rel target = $region75
    $region80: #{forward.1} parent=1 // loop_exit
      _
    %v8317 = vld [vmem:[%s11] sm:$0xff]
    %v8318 = vld [vmem:[%s11 + $0x8] sm:$0xff]
    %v8319 = vld [vmem:[%s11 + $0x10] sm:$0xff]
    %v8320 = vld [vmem:[%s11 + $0x18] sm:$0xff]
    %v8321 = vld [vmem:[%s11 + $0x20] sm:$0xff]
    %v8322 = vld [vmem:[%s11 + $0x28] sm:$0xff]
    %v8323 = vld [vmem:[%s11 + $0x30] sm:$0xff]
    %v8324 = vld [vmem:[%s11 + $0x38] sm:$0xff]
    %v8325 = vld [vmem:[%s11 + $0x40] sm:$0xff]
    %v8326 = vld [vmem:[%s11 + $0x48] sm:$0xff]
    %v8327 = vld [vmem:[%s11 + $0x50] sm:$0xff]
    %v8328 = vld [vmem:[%s11 + $0x58] sm:$0xff]
    %v8329 = vld [vmem:[%s11 + $0x60] sm:$0xff]
    %v8330 = vld [vmem:[%s11 + $0x68] sm:$0xff]
    %v8331 = vld [vmem:[%s11 + $0x70] sm:$0xff]
    %v8332 = vld [vmem:[%s11 + $0x78] sm:$0xff]
    %v8333 = vld [vmem:[%s12] sm:$0x1]
    %v8335 = vlaneseq
    %v8336 = vshrl.u32 %v8335, 7
    %v8337 = vsub.s32 0, %v8336
    %v8338 = vrot.slane %v8333, %v8337
    %8340 = vmatprep.subr.mxu0 0.0
    %8341 = vmatpush1.msra.mxu0 %v8317
    %8342 = vmatprep.subr.mxu0 0.0
    %8343 = vmatpush1.msra.mxu0 %v8318
    %8344 = vmatprep.subr.mxu0 0.0
    %8345 = vmatpush1.msra.mxu0 %v8319
    %8346 = vmatprep.subr.mxu0 0.0
    %8347 = vmatpush1.msra.mxu0 %v8320
    %8348 = vmatprep.subr.mxu0 0.0
    %8349 = vmatpush1.msra.mxu0 %v8321
    %8350 = vmatprep.subr.mxu0 0.0
    %8351 = vmatpush1.msra.mxu0 %v8322
    %8352 = vmatprep.subr.mxu0 0.0
    %8353 = vmatpush1.msra.mxu0 %v8323
    %8354 = vmatprep.subr.mxu0 0.0
    %8355 = vmatpush1.msra.mxu0 %v8324
    %8356 = vmatprep.subr.mxu0 0.0
    %8357 = vmatpush1.msra.mxu0 %v8325
    %8358 = vmatprep.subr.mxu0 0.0
    %8359 = vmatpush1.msra.mxu0 %v8326
    %8360 = vmatprep.subr.mxu0 0.0
    %8361 = vmatpush1.msra.mxu0 %v8327
    %8362 = vmatprep.subr.mxu0 0.0
    %8363 = vmatpush1.msra.mxu0 %v8328
    %8364 = vmatprep.subr.mxu0 0.0
    %8365 = vmatpush1.msra.mxu0 %v8329
    %8366 = vmatprep.subr.mxu0 0.0
    %8367 = vmatpush1.msra.mxu0 %v8330
    %8368 = vmatprep.subr.mxu0 0.0
    %8369 = vmatpush1.msra.mxu0 %v8331
    %8370 = vmatprep.subr.mxu0 0.0
    %8371 = vmatpush1.msra.mxu0 %v8332
    %8372 = vmatprep.subr.mxu0 0.0
    %8373 = vmatpush1.msra.mxu0 0.0
    %8374 = vmatprep.subr.mxu0 0.0
    %8375 = vmatpush1.msra.mxu0 0.0
    %8376 = vmatprep.subr.mxu0 0.0
    %8377 = vmatpush1.msra.mxu0 0.0
    %8378 = vmatprep.subr.mxu0 0.0
    %8379 = vmatpush1.msra.mxu0 0.0
    %8380 = vmatprep.subr.mxu0 0.0
    %8381 = vmatpush1.msra.mxu0 0.0
    %8382 = vmatprep.subr.mxu0 0.0
    %8383 = vmatpush1.msra.mxu0 0.0
    %8384 = vmatprep.subr.mxu0 0.0
    %8385 = vmatpush1.msra.mxu0 0.0
    %8386 = vmatprep.subr.mxu0 0.0
    %8387 = vmatpush1.msra.mxu0 0.0
    %8388 = vmatprep.subr.mxu0 0.0
    %8389 = vmatpush1.msra.mxu0 0.0
    %8390 = vmatprep.subr.mxu0 0.0
    %8391 = vmatpush1.msra.mxu0 0.0
    %8392 = vmatprep.subr.mxu0 0.0
    %8393 = vmatpush1.msra.mxu0 0.0
    %8394 = vmatprep.subr.mxu0 0.0
    %8395 = vmatpush1.msra.mxu0 0.0
    %8396 = vmatprep.subr.mxu0 0.0
    %8397 = vmatpush1.msra.mxu0 0.0
    %8398 = vmatprep.subr.mxu0 0.0
    %8399 = vmatpush1.msra.mxu0 0.0
    %8400 = vmatprep.subr.mxu0 0.0
    %8401 = vmatpush1.msra.mxu0 0.0
    %8402 = vmatprep.subr.mxu0 0.0
    %8403 = vmatpush1.msra.mxu0 0.0
    %8404 = vmatprep.mubr.f32.mxu0 0.0
    %8405 = vmatmul.mubr.f32.gmra.mrb[0].mxu0 %v6713
    %v8406 = vpop.f32.mrb[0].mxu0
    %v8407 = vadd.f32 %v8338, %v8406
    %v8408 = vpop.f32.mrb[0].mxu0
    %8409 = vdwg.mxu0
    %v8410 = vmax.f32 %v8407, 0.0
    %v8411 = vld [vmem:[%s13] sm:$0x3f]
    %v8412 = vld [vmem:[%s14] sm:$0x1]
    %v8414 = vlaneseq
    %v8415 = vshrl.u32 %v8414, 7
    %v8416 = vsub.s32 0, %v8415
    %v8417 = vrot.slane %v8412, %v8416
    %vm8419 = vcmask 48128
    %v8421 = vsel %vm8419, %v8410, 0
    %vm8423 = vcmask 1045504
    %v8425 = vsel %vm8423, %v8411, 0
    %8427 = vmatprep.subr.mxu0 0.0
    %8428 = vmatpush1.msra.mxu0 %v8425
    %8429 = vmatprep.subr.mxu0 0.0
    %8430 = vmatpush1.msra.mxu0 0.0
    %8431 = vmatprep.subr.mxu0 0.0
    %8432 = vmatpush1.msra.mxu0 0.0
    %8433 = vmatprep.subr.mxu0 0.0
    %8434 = vmatpush1.msra.mxu0 0.0
    %8435 = vmatprep.subr.mxu0 0.0
    %8436 = vmatpush1.msra.mxu0 0.0
    %8437 = vmatprep.subr.mxu0 0.0
    %8438 = vmatpush1.msra.mxu0 0.0
    %8439 = vmatprep.subr.mxu0 0.0
    %8440 = vmatpush1.msra.mxu0 0.0
    %8441 = vmatprep.subr.mxu0 0.0
    %8442 = vmatpush1.msra.mxu0 0.0
    %8443 = vmatprep.subr.mxu0 0.0
    %8444 = vmatpush1.msra.mxu0 0.0
    %8445 = vmatprep.subr.mxu0 0.0
    %8446 = vmatpush1.msra.mxu0 0.0
    %8447 = vmatprep.subr.mxu0 0.0
    %8448 = vmatpush1.msra.mxu0 0.0
    %8449 = vmatprep.subr.mxu0 0.0
    %8450 = vmatpush1.msra.mxu0 0.0
    %8451 = vmatprep.subr.mxu0 0.0
    %8452 = vmatpush1.msra.mxu0 0.0
    %8453 = vmatprep.subr.mxu0 0.0
    %8454 = vmatpush1.msra.mxu0 0.0
    %8455 = vmatprep.subr.mxu0 0.0
    %8456 = vmatpush1.msra.mxu0 0.0
    %8457 = vmatprep.subr.mxu0 0.0
    %8458 = vmatpush1.msra.mxu0 0.0
    %8459 = vmatprep.subr.mxu0 0.0
    %8460 = vmatpush1.msra.mxu0 0.0
    %8461 = vmatprep.subr.mxu0 0.0
    %8462 = vmatpush1.msra.mxu0 0.0
    %8463 = vmatprep.subr.mxu0 0.0
    %8464 = vmatpush1.msra.mxu0 0.0
    %8465 = vmatprep.subr.mxu0 0.0
    %8466 = vmatpush1.msra.mxu0 0.0
    %8467 = vmatprep.subr.mxu0 0.0
    %8468 = vmatpush1.msra.mxu0 0.0
    %8469 = vmatprep.subr.mxu0 0.0
    %8470 = vmatpush1.msra.mxu0 0.0
    %8471 = vmatprep.subr.mxu0 0.0
    %8472 = vmatpush1.msra.mxu0 0.0
    %8473 = vmatprep.subr.mxu0 0.0
    %8474 = vmatpush1.msra.mxu0 0.0
    %8475 = vmatprep.subr.mxu0 0.0
    %8476 = vmatpush1.msra.mxu0 0.0
    %8477 = vmatprep.subr.mxu0 0.0
    %8478 = vmatpush1.msra.mxu0 0.0
    %8479 = vmatprep.subr.mxu0 0.0
    %8480 = vmatpush1.msra.mxu0 0.0
    %8481 = vmatprep.subr.mxu0 0.0
    %8482 = vmatpush1.msra.mxu0 0.0
    %8483 = vmatprep.subr.mxu0 0.0
    %8484 = vmatpush1.msra.mxu0 0.0
    %8485 = vmatprep.subr.mxu0 0.0
    %8486 = vmatpush1.msra.mxu0 0.0
    %8487 = vmatprep.subr.mxu0 0.0
    %8488 = vmatpush1.msra.mxu0 0.0
    %8489 = vmatprep.subr.mxu0 0.0
    %8490 = vmatpush1.msra.mxu0 0.0
    %8491 = vmatprep.mubr.f32.mxu0 0.0
    %8492 = vmatmul.mubr.f32.gmra.mrb[0].mxu0 %v8421
    %v8493 = vpop.f32.mrb[0].mxu0
    %v8494 = vadd.f32 %v8417, %v8493
    %v8495 = vpop.f32.mrb[0].mxu0
    %8496 = vdwg.mxu0
    %8497 = vst.msk [vmem:[%s15] sm:$0xff] %vm8419, %v8494
    // Predicated region
    $region81: #{forward.1} parent=1 // pred_check
      _
    $region82: #{forward.1} parent=1 // pred_check_branch
      %8499 = sbr.rel (0) target = $region84
    $region83: #{forward.1} parent=1 // pred_region
      _
    $region84: #{forward.1} parent=1 // pred_fallthru
      _
    // Predicated region
    $region85: #{forward.1} parent=1 // pred_check
      _
    $region86: #{forward.1} parent=1 // pred_check_branch
      %8501 = sbr.rel (0) target = $region88
    $region87: #{forward.1} parent=1 // pred_region
      _
    $region88: #{forward.1} parent=1 // pred_fallthru
      _
    %8502 = vsyncpa [#allocation4], 1
    %8503 = vsyncpa [#allocation6], 1

</llo_original>
